<compile_context>
chip_gen: v5e
topology: v5e:2x2
jax: 0.10.0
libtpu: 0.0.40
codegen_flags: <defaults>
</compile_context>

<pallas_src>
import functools

import jax
import jax.numpy as jnp
from jax.experimental import pallas as pl
from jax.experimental.pallas import tpu as pltpu


# Left margin (columns) of the padded conv1-output scratch: chosen = 8 so the
# interior store lands on a sublane-tile-aligned offset (unmasked store).
_WPAD_OFF = 8


def _fused_forward_kernel(x_ref, w1_ref, b1_ref, w2_ref, b2_ref, w3_ref, b3_ref,
                          o_ref, a1pad_ref, *, n, h, w, cin, c1, c2, k, dout):
    """conv1(+LeakyReLU) -> conv2(stride2, +ReLU) -> flatten -> linear(+Tanh).

    x_ref     : [n, h+2, w+2, cin]       spatially pre-padded NHWC input (pad=1)
    w1_ref    : [k*k, cin, c1]           conv1 taps, tap index = kh*k + kw
    b1_ref    : [1, c1]
    w2_ref    : [k*k, c1, c2]            conv2 taps
    b2_ref    : [1, c2]
    w3_ref    : [c2, (h//2)*(w//2), dout]  per-channel blocks of the linear weight
    b3_ref    : [1, dout]
    o_ref     : [n, dout]
    a1pad_ref : VMEM scratch [n, h+2, _WPAD_OFF + w, c1] (zero-padded conv1 out)
    """
    m1 = n * h * w
    # ---- Conv1: 3x3 / stride 1 / pad 1 as 9 shifted [m1,cin]@[cin,c1] matmuls.
    acc1 = jnp.zeros((m1, c1), jnp.float32)
    for i in range(k):
        for j in range(k):
            slab = x_ref[:, pl.ds(i, h), pl.ds(j, w), :].reshape(m1, cin)
            acc1 = acc1 + jnp.dot(slab, w1_ref[i * k + j],
                                  preferred_element_type=jnp.float32)
    a1 = acc1 + b1_ref[...]
    a1 = jnp.where(a1 > 0, a1, jnp.float32(0.01) * a1)          # LeakyReLU(0.01)

    # ---- Zero-pad conv1 output into VMEM scratch (pad=1 for conv2).
    # Interior column offset = 8 -> sublane-tile-aligned store.
    a1pad_ref[...] = jnp.zeros_like(a1pad_ref)
    a1pad_ref[:, pl.ds(1, h), pl.ds(_WPAD_OFF, w), :] = a1.reshape(n, h, w, c1)

    # ---- Conv2: 3x3 / stride 2 / pad 1 as 9 strided-shifted matmuls.
    h2, w2 = h // 2, w // 2
    m2 = n * h2 * w2
    acc2 = jnp.zeros((m2, c2), jnp.float32)
    for i in range(k):
        for j in range(k):
            slab = a1pad_ref[:, pl.ds(i, h2, 2),
                             pl.ds(_WPAD_OFF - 1 + j, w2, 2), :].reshape(m2, c1)
            acc2 = acc2 + jnp.dot(slab, w2_ref[i * k + j],
                                  preferred_element_type=jnp.float32)
    a2 = jnp.maximum(acc2 + b2_ref[...], 0.0)     # [m2, c2], rows ordered (n, h2, w2)

    # ---- Flatten (PyTorch NCHW order) + Linear + Tanh.
    # Contract channel-by-channel against build-time pre-packed weight blocks,
    # so no lane<->sublane flattening reshape is ever needed in-kernel.
    a2t = a2.T                                    # [c2, m2]  (spatial axis lane-dense)
    hw = h2 * w2
    for nn in range(n):
        acc = b3_ref[...]                         # [1, dout]
        for cc in range(c2):
            acc = acc + jnp.dot(a2t[cc:cc + 1, nn * hw:(nn + 1) * hw], w3_ref[cc],
                                preferred_element_type=jnp.float32)
        o_ref[nn:nn + 1, :] = jnp.tanh(acc)


def _full_spec(shape):
    nd = len(shape)
    return pl.BlockSpec(shape, lambda i: (0,) * nd)


def fused_forward(xpad, w1p, b1p, w2p, b2p, w3p, b3p):
    """Single fused pallas_call covering the entire layer stack."""
    n, hp, wp, cin = xpad.shape
    h, w = hp - 2, wp - 2
    kk, _, c1 = w1p.shape
    k = int(round(kk ** 0.5))
    c2 = w2p.shape[2]
    dout = w3p.shape[2]

    kernel = functools.partial(_fused_forward_kernel, n=n, h=h, w=w, cin=cin,
                               c1=c1, c2=c2, k=k, dout=dout)
    return pl.pallas_call(
        kernel,
        out_shape=jax.ShapeDtypeStruct((n, dout), jnp.float32),
        grid_spec=pltpu.PrefetchScalarGridSpec(
            num_scalar_prefetch=0,
            grid=(1,),   # everything fits in VMEM; work is far below step overhead
            in_specs=[_full_spec(xpad.shape), _full_spec(w1p.shape),
                      _full_spec(b1p.shape), _full_spec(w2p.shape),
                      _full_spec(b2p.shape), _full_spec(w3p.shape),
                      _full_spec(b3p.shape)],
            out_specs=_full_spec((n, dout)),
            scratch_shapes=[pltpu.VMEM((n, h + 2, _WPAD_OFF + w, c1), jnp.float32)],
        ),
        compiler_params=pltpu.CompilerParams(
            dimension_semantics=("arbitrary",)),
    )(xpad, w1p, b1p, w2p, b2p, w3p, b3p)


def _forward_impl(params, x):
    """jit-compiled: tiny NCHW->NHWC + pad prologue, then one fused kernel."""
    w1p, b1p, w2p, b2p, w3p, b3p = params
    x_nhwc = jnp.transpose(jnp.asarray(x, jnp.float32), (0, 2, 3, 1))
    xpad = jnp.pad(x_nhwc, ((0, 0), (1, 1), (1, 1), (0, 0)))
    return fused_forward(xpad, w1p, b1p, w2p, b2p, w3p, b3p)


class BaseVariationalPallas:
    """Pallas mirror of BaseVariational.forward for a concrete layer stack."""

    def __init__(self, w1, b1, w2, b2, w3, b3):
        cout1, cin1, kh, kw = w1.shape
        cout2, cin2, _, _ = w2.shape
        dout, din = w3.shape
        assert kh == kw and cin2 == cout1 and din % cout2 == 0
        hw = din // cout2
        # ---- Weight pre-packing hoisted to build time (done once). ----
        # Conv taps as ready [cin, cout] GEMM operands, tap index = kh*k + kw.
        self.w1p = jnp.asarray(w1, jnp.float32).transpose(2, 3, 1, 0).reshape(kh * kw, cin1, cout1)
        self.b1p = jnp.asarray(b1, jnp.float32).reshape(1, cout1)
        self.w2p = jnp.asarray(w2, jnp.float32).transpose(2, 3, 1, 0).reshape(kh * kw, cin2, cout2)
        self.b2p = jnp.asarray(b2, jnp.float32).reshape(1, cout2)
        # Linear [dout, c*hw] (PyTorch NCHW flatten order) -> per-channel blocks
        # [c2, hw, dout] so the kernel contracts channel-by-channel.
        self.w3p = jnp.asarray(w3, jnp.float32).reshape(dout, cout2, hw).transpose(1, 2, 0)
        self.b3p = jnp.asarray(b3, jnp.float32).reshape(1, dout)
        self._params = (self.w1p, self.b1p, self.w2p, self.b2p, self.w3p, self.b3p)
        self._forward_jit = jax.jit(_forward_impl)

    def forward(self, x, debug=False):
        out = self._forward_jit(self._params, x)
        if debug:
            print("fused forward (conv+conv+flatten+linear) -> shape {}".format(out.shape))
        return out

    def predict(self, x, num_forward_passes=10):
        # The layer stack is deterministic (no sampling/dropout layers), so the
        # average of `num_forward_passes` identical passes equals one pass.
        # TODO(synk): if stochastic BayesianLayer-s are added, re-draw noise per
        # pass inside a jitted fori_loop instead of this shortcut.
        del num_forward_passes
        return self.forward(x)

    # TODO(synk): kl_loss() requires BayesianLayer, which is not defined in the
    # reference module; omitted.


def _reference_forward(x, w1, b1, w2, b2, w3, b3):
    """Pure-JAX reference of the same stack (correctness guard only)."""
    prec = jax.lax.Precision.HIGHEST
    dn = ("NCHW", "OIHW", "NCHW")
    y = jax.lax.conv_general_dilated(x, w1, window_strides=(1, 1),
                                     padding=((1, 1), (1, 1)),
                                     dimension_numbers=dn, precision=prec)
    y = y + b1.reshape(1, -1, 1, 1)
    y = jnp.where(y > 0, y, 0.01 * y)
    y = jax.lax.conv_general_dilated(y, w2, window_strides=(2, 2),
                                     padding=((1, 1), (1, 1)),
                                     dimension_numbers=dn, precision=prec)
    y = y + b2.reshape(1, -1, 1, 1)
    y = jnp.maximum(y, 0.0)
    y = y.reshape(y.shape[0], -1)
    return jnp.tanh(jnp.dot(y, w3.T, precision=prec) + b3)


if __name__ == "__main__":
    key = jax.random.PRNGKey(0)
    k1, k2, k3, k4, k5, k6, kx = jax.random.split(key, 7)

    # Conv2d(4 -> 8, k=3, s=1, p=1) + LeakyReLU
    w1 = 0.1 * jax.random.normal(k1, (8, 4, 3, 3), jnp.float32)
    b1 = 0.01 * jax.random.normal(k2, (8,), jnp.float32)
    # Conv2d(8 -> 8, k=3, s=2, p=1) + ReLU
    w2 = 0.1 * jax.random.normal(k3, (8, 8, 3, 3), jnp.float32)
    b2 = 0.01 * jax.random.normal(k4, (8,), jnp.float32)
    # Linear(8*8*8 -> 32) + Tanh
    w3 = 0.05 * jax.random.normal(k5, (32, 8 * 8 * 8), jnp.float32)
    b3 = 0.01 * jax.random.normal(k6, (32,), jnp.float32)

    model = BaseVariationalPallas(w1, b1, w2, b2, w3, b3)

    x = jax.random.normal(kx, (2, 4, 16, 16), jnp.float32)   # NCHW (PyTorch layout)

    out = jax.block_until_ready(model.forward(x))
    assert out.shape == (2, 32), out.shape
    assert bool(jnp.all(jnp.isfinite(out)))

    ref = _reference_forward(x, w1, b1, w2, b2, w3, b3)
    max_err = float(jnp.max(jnp.abs(out - ref)))
    assert jnp.allclose(out, ref, atol=1e-2, rtol=1e-2), max_err

    pred = jax.block_until_ready(model.predict(x))
    assert pred.shape == (2, 32)

    print("KERNEL_OK")
</pallas_src>

<mosaic_0001>
module attributes {stable_mosaic.version = 11 : i64} {
  func.func @_fused_forward_kernel(%arg0: i32, %arg1: memref<2x18x18x4xf32, #tpu.memory_space<vmem>>, %arg2: memref<9x4x8xf32, #tpu.memory_space<vmem>>, %arg3: memref<1x8xf32, #tpu.memory_space<vmem>>, %arg4: memref<9x8x8xf32, #tpu.memory_space<vmem>>, %arg5: memref<1x8xf32, #tpu.memory_space<vmem>>, %arg6: memref<8x64x32xf32, #tpu.memory_space<vmem>>, %arg7: memref<1x32xf32, #tpu.memory_space<vmem>>, %arg8: memref<2x32xf32, #tpu.memory_space<vmem>>, %arg9: memref<2x18x24x8xf32, #tpu.memory_space<vmem>>) attributes {dimension_semantics = [#tpu.dimension_semantics<arbitrary>], iteration_bounds = array<i64: 1>, scalar_prefetch = 0 : i64, scratch_operands = 1 : i64, tpu.core_type = #tpu.core_type<tc>, window_params = [{pipeline_mode = #tpu.pipeline_mode<synchronous>, transform_indices = @transform_0, window_bounds = array<i64: 2, 18, 18, 4>}, {pipeline_mode = #tpu.pipeline_mode<synchronous>, transform_indices = @transform_1, window_bounds = array<i64: 9, 4, 8>}, {pipeline_mode = #tpu.pipeline_mode<synchronous>, transform_indices = @transform_2, window_bounds = array<i64: 1, 8>}, {pipeline_mode = #tpu.pipeline_mode<synchronous>, transform_indices = @transform_3, window_bounds = array<i64: 9, 8, 8>}, {pipeline_mode = #tpu.pipeline_mode<synchronous>, transform_indices = @transform_4, window_bounds = array<i64: 1, 8>}, {pipeline_mode = #tpu.pipeline_mode<synchronous>, transform_indices = @transform_5, window_bounds = array<i64: 8, 64, 32>}, {pipeline_mode = #tpu.pipeline_mode<synchronous>, transform_indices = @transform_6, window_bounds = array<i64: 1, 32>}, {pipeline_mode = #tpu.pipeline_mode<synchronous>, transform_indices = @transform_7, window_bounds = array<i64: 2, 32>}]} {
    %cst = arith.constant 0.000000e+00 : f32
    %0 = vector.broadcast %cst : f32 to vector<512x8xf32>
    %c0 = arith.constant 0 : index
    %c0_0 = arith.constant 0 : index
    %c0_1 = arith.constant 0 : index
    %c0_2 = arith.constant 0 : index
    %1 = vector.load %arg1[%c0, %c0_0, %c0_1, %c0_2] : memref<2x18x18x4xf32, #tpu.memory_space<vmem>>, vector<2x16x16x4xf32>
    %2 = vector.shape_cast %1 : vector<2x16x16x4xf32> to vector<512x4xf32>
    %c0_3 = arith.constant 0 : index
    %c0_4 = arith.constant 0 : index
    %c0_5 = arith.constant 0 : index
    %3 = vector.load %arg2[%c0_3, %c0_4, %c0_5] : memref<9x4x8xf32, #tpu.memory_space<vmem>>, vector<1x4x8xf32>
    %4 = vector.shape_cast %3 : vector<1x4x8xf32> to vector<4x8xf32>
    %cst_6 = arith.constant dense<0.000000e+00> : vector<512x8xf32>
    %5 = tpu.matmul %2, %4, %cst_6 {dimension_numbers = #tpu.dot_dimension_numbers<[1], [0], [0], [1], [0, 0, 1, 1], [], []>} : vector<512x4xf32>, vector<4x8xf32>, vector<512x8xf32> -> vector<512x8xf32>
    %6 = arith.addf %0, %5 : vector<512x8xf32>
    %c0_7 = arith.constant 0 : index
    %c0_8 = arith.constant 0 : index
    %c1 = arith.constant 1 : index
    %c0_9 = arith.constant 0 : index
    %7 = vector.load %arg1[%c0_7, %c0_8, %c1, %c0_9] : memref<2x18x18x4xf32, #tpu.memory_space<vmem>>, vector<2x16x16x4xf32>
    %8 = vector.shape_cast %7 : vector<2x16x16x4xf32> to vector<512x4xf32>
    %c1_10 = arith.constant 1 : index
    %c0_11 = arith.constant 0 : index
    %c0_12 = arith.constant 0 : index
    %9 = vector.load %arg2[%c1_10, %c0_11, %c0_12] : memref<9x4x8xf32, #tpu.memory_space<vmem>>, vector<1x4x8xf32>
    %10 = vector.shape_cast %9 : vector<1x4x8xf32> to vector<4x8xf32>
    %cst_13 = arith.constant dense<0.000000e+00> : vector<512x8xf32>
    %11 = tpu.matmul %8, %10, %cst_13 {dimension_numbers = #tpu.dot_dimension_numbers<[1], [0], [0], [1], [0, 0, 1, 1], [], []>} : vector<512x4xf32>, vector<4x8xf32>, vector<512x8xf32> -> vector<512x8xf32>
    %12 = arith.addf %6, %11 : vector<512x8xf32>
    %c0_14 = arith.constant 0 : index
    %c0_15 = arith.constant 0 : index
    %c2 = arith.constant 2 : index
    %c0_16 = arith.constant 0 : index
    %13 = vector.load %arg1[%c0_14, %c0_15, %c2, %c0_16] : memref<2x18x18x4xf32, #tpu.memory_space<vmem>>, vector<2x16x16x4xf32>
    %14 = vector.shape_cast %13 : vector<2x16x16x4xf32> to vector<512x4xf32>
    %c2_17 = arith.constant 2 : index
    %c0_18 = arith.constant 0 : index
    %c0_19 = arith.constant 0 : index
    %15 = vector.load %arg2[%c2_17, %c0_18, %c0_19] : memref<9x4x8xf32, #tpu.memory_space<vmem>>, vector<1x4x8xf32>
    %16 = vector.shape_cast %15 : vector<1x4x8xf32> to vector<4x8xf32>
    %cst_20 = arith.constant dense<0.000000e+00> : vector<512x8xf32>
    %17 = tpu.matmul %14, %16, %cst_20 {dimension_numbers = #tpu.dot_dimension_numbers<[1], [0], [0], [1], [0, 0, 1, 1], [], []>} : vector<512x4xf32>, vector<4x8xf32>, vector<512x8xf32> -> vector<512x8xf32>
    %18 = arith.addf %12, %17 : vector<512x8xf32>
    %c0_21 = arith.constant 0 : index
    %c1_22 = arith.constant 1 : index
    %c0_23 = arith.constant 0 : index
    %c0_24 = arith.constant 0 : index
    %19 = vector.load %arg1[%c0_21, %c1_22, %c0_23, %c0_24] : memref<2x18x18x4xf32, #tpu.memory_space<vmem>>, vector<2x16x16x4xf32>
    %20 = vector.shape_cast %19 : vector<2x16x16x4xf32> to vector<512x4xf32>
    %c3 = arith.constant 3 : index
    %c0_25 = arith.constant 0 : index
    %c0_26 = arith.constant 0 : index
    %21 = vector.load %arg2[%c3, %c0_25, %c0_26] : memref<9x4x8xf32, #tpu.memory_space<vmem>>, vector<1x4x8xf32>
    %22 = vector.shape_cast %21 : vector<1x4x8xf32> to vector<4x8xf32>
    %cst_27 = arith.constant dense<0.000000e+00> : vector<512x8xf32>
    %23 = tpu.matmul %20, %22, %cst_27 {dimension_numbers = #tpu.dot_dimension_numbers<[1], [0], [0], [1], [0, 0, 1, 1], [], []>} : vector<512x4xf32>, vector<4x8xf32>, vector<512x8xf32> -> vector<512x8xf32>
    %24 = arith.addf %18, %23 : vector<512x8xf32>
    %c0_28 = arith.constant 0 : index
    %c1_29 = arith.constant 1 : index
    %c1_30 = arith.constant 1 : index
    %c0_31 = arith.constant 0 : index
    %25 = vector.load %arg1[%c0_28, %c1_29, %c1_30, %c0_31] : memref<2x18x18x4xf32, #tpu.memory_space<vmem>>, vector<2x16x16x4xf32>
    %26 = vector.shape_cast %25 : vector<2x16x16x4xf32> to vector<512x4xf32>
    %c4 = arith.constant 4 : index
    %c0_32 = arith.constant 0 : index
    %c0_33 = arith.constant 0 : index
    %27 = vector.load %arg2[%c4, %c0_32, %c0_33] : memref<9x4x8xf32, #tpu.memory_space<vmem>>, vector<1x4x8xf32>
    %28 = vector.shape_cast %27 : vector<1x4x8xf32> to vector<4x8xf32>
    %cst_34 = arith.constant dense<0.000000e+00> : vector<512x8xf32>
    %29 = tpu.matmul %26, %28, %cst_34 {dimension_numbers = #tpu.dot_dimension_numbers<[1], [0], [0], [1], [0, 0, 1, 1], [], []>} : vector<512x4xf32>, vector<4x8xf32>, vector<512x8xf32> -> vector<512x8xf32>
    %30 = arith.addf %24, %29 : vector<512x8xf32>
    %c0_35 = arith.constant 0 : index
    %c1_36 = arith.constant 1 : index
    %c2_37 = arith.constant 2 : index
    %c0_38 = arith.constant 0 : index
    %31 = vector.load %arg1[%c0_35, %c1_36, %c2_37, %c0_38] : memref<2x18x18x4xf32, #tpu.memory_space<vmem>>, vector<2x16x16x4xf32>
    %32 = vector.shape_cast %31 : vector<2x16x16x4xf32> to vector<512x4xf32>
    %c5 = arith.constant 5 : index
    %c0_39 = arith.constant 0 : index
    %c0_40 = arith.constant 0 : index
    %33 = vector.load %arg2[%c5, %c0_39, %c0_40] : memref<9x4x8xf32, #tpu.memory_space<vmem>>, vector<1x4x8xf32>
    %34 = vector.shape_cast %33 : vector<1x4x8xf32> to vector<4x8xf32>
    %cst_41 = arith.constant dense<0.000000e+00> : vector<512x8xf32>
    %35 = tpu.matmul %32, %34, %cst_41 {dimension_numbers = #tpu.dot_dimension_numbers<[1], [0], [0], [1], [0, 0, 1, 1], [], []>} : vector<512x4xf32>, vector<4x8xf32>, vector<512x8xf32> -> vector<512x8xf32>
    %36 = arith.addf %30, %35 : vector<512x8xf32>
    %c0_42 = arith.constant 0 : index
    %c2_43 = arith.constant 2 : index
    %c0_44 = arith.constant 0 : index
    %c0_45 = arith.constant 0 : index
    %37 = vector.load %arg1[%c0_42, %c2_43, %c0_44, %c0_45] : memref<2x18x18x4xf32, #tpu.memory_space<vmem>>, vector<2x16x16x4xf32>
    %38 = vector.shape_cast %37 : vector<2x16x16x4xf32> to vector<512x4xf32>
    %c6 = arith.constant 6 : index
    %c0_46 = arith.constant 0 : index
    %c0_47 = arith.constant 0 : index
    %39 = vector.load %arg2[%c6, %c0_46, %c0_47] : memref<9x4x8xf32, #tpu.memory_space<vmem>>, vector<1x4x8xf32>
    %40 = vector.shape_cast %39 : vector<1x4x8xf32> to vector<4x8xf32>
    %cst_48 = arith.constant dense<0.000000e+00> : vector<512x8xf32>
    %41 = tpu.matmul %38, %40, %cst_48 {dimension_numbers = #tpu.dot_dimension_numbers<[1], [0], [0], [1], [0, 0, 1, 1], [], []>} : vector<512x4xf32>, vector<4x8xf32>, vector<512x8xf32> -> vector<512x8xf32>
    %42 = arith.addf %36, %41 : vector<512x8xf32>
    %c0_49 = arith.constant 0 : index
    %c2_50 = arith.constant 2 : index
    %c1_51 = arith.constant 1 : index
    %c0_52 = arith.constant 0 : index
    %43 = vector.load %arg1[%c0_49, %c2_50, %c1_51, %c0_52] : memref<2x18x18x4xf32, #tpu.memory_space<vmem>>, vector<2x16x16x4xf32>
    %44 = vector.shape_cast %43 : vector<2x16x16x4xf32> to vector<512x4xf32>
    %c7 = arith.constant 7 : index
    %c0_53 = arith.constant 0 : index
    %c0_54 = arith.constant 0 : index
    %45 = vector.load %arg2[%c7, %c0_53, %c0_54] : memref<9x4x8xf32, #tpu.memory_space<vmem>>, vector<1x4x8xf32>
    %46 = vector.shape_cast %45 : vector<1x4x8xf32> to vector<4x8xf32>
    %cst_55 = arith.constant dense<0.000000e+00> : vector<512x8xf32>
    %47 = tpu.matmul %44, %46, %cst_55 {dimension_numbers = #tpu.dot_dimension_numbers<[1], [0], [0], [1], [0, 0, 1, 1], [], []>} : vector<512x4xf32>, vector<4x8xf32>, vector<512x8xf32> -> vector<512x8xf32>
    %48 = arith.addf %42, %47 : vector<512x8xf32>
    %c0_56 = arith.constant 0 : index
    %c2_57 = arith.constant 2 : index
    %c2_58 = arith.constant 2 : index
    %c0_59 = arith.constant 0 : index
    %49 = vector.load %arg1[%c0_56, %c2_57, %c2_58, %c0_59] : memref<2x18x18x4xf32, #tpu.memory_space<vmem>>, vector<2x16x16x4xf32>
    %50 = vector.shape_cast %49 : vector<2x16x16x4xf32> to vector<512x4xf32>
    %c8 = arith.constant 8 : index
    %c0_60 = arith.constant 0 : index
    %c0_61 = arith.constant 0 : index
    %51 = vector.load %arg2[%c8, %c0_60, %c0_61] : memref<9x4x8xf32, #tpu.memory_space<vmem>>, vector<1x4x8xf32>
    %52 = vector.shape_cast %51 : vector<1x4x8xf32> to vector<4x8xf32>
    %cst_62 = arith.constant dense<0.000000e+00> : vector<512x8xf32>
    %53 = tpu.matmul %50, %52, %cst_62 {dimension_numbers = #tpu.dot_dimension_numbers<[1], [0], [0], [1], [0, 0, 1, 1], [], []>} : vector<512x4xf32>, vector<4x8xf32>, vector<512x8xf32> -> vector<512x8xf32>
    %54 = arith.addf %48, %53 : vector<512x8xf32>
    %c0_63 = arith.constant 0 : index
    %c0_64 = arith.constant 0 : index
    %55 = vector.load %arg3[%c0_63, %c0_64] : memref<1x8xf32, #tpu.memory_space<vmem>>, vector<1x8xf32>
    %56 = vector.broadcast %55 : vector<1x8xf32> to vector<512x8xf32>
    %57 = arith.addf %54, %56 : vector<512x8xf32>
    %cst_65 = arith.constant 0.000000e+00 : f32
    %58 = vector.broadcast %cst_65 : f32 to vector<512x8xf32>
    %59 = arith.cmpf ogt, %57, %58 : vector<512x8xf32>
    %cst_66 = arith.constant 0.00999999977 : f32
    %60 = vector.broadcast %cst_66 : f32 to vector<512x8xf32>
    %61 = arith.mulf %60, %57 : vector<512x8xf32>
    %62 = arith.select %59, %57, %61 : vector<512x8xi1>, vector<512x8xf32>
    %cst_67 = arith.constant 0.000000e+00 : f32
    %63 = vector.broadcast %cst_67 : f32 to vector<2x18x24x8xf32>
    %c0_68 = arith.constant 0 : index
    %c0_69 = arith.constant 0 : index
    %c0_70 = arith.constant 0 : index
    %c0_71 = arith.constant 0 : index
    %64 = vector.load %arg9[%c0_68, %c0_69, %c0_70, %c0_71] : memref<2x18x24x8xf32, #tpu.memory_space<vmem>>, vector<2x18x24x8xf32>
    tpu.vector_store %arg9[%c0_68, %c0_69, %c0_70, %c0_71], %63 {strides = array<i32>} : memref<2x18x24x8xf32, #tpu.memory_space<vmem>>, vector<2x18x24x8xf32>,
    %65 = vector.shape_cast %62 : vector<512x8xf32> to vector<2x16x16x8xf32>
    %c0_72 = arith.constant 0 : index
    %c1_73 = arith.constant 1 : index
    %c8_74 = arith.constant 8 : index
    %c0_75 = arith.constant 0 : index
    %66 = vector.load %arg9[%c0_72, %c1_73, %c8_74, %c0_75] : memref<2x18x24x8xf32, #tpu.memory_space<vmem>>, vector<2x16x16x8xf32>
    tpu.vector_store %arg9[%c0_72, %c1_73, %c8_74, %c0_75], %65 {strides = array<i32>} : memref<2x18x24x8xf32, #tpu.memory_space<vmem>>, vector<2x16x16x8xf32>,
    %cst_76 = arith.constant 0.000000e+00 : f32
    %67 = vector.broadcast %cst_76 : f32 to vector<128x8xf32>
    %c0_77 = arith.constant 0 : index
    %c0_78 = arith.constant 0 : index
    %c7_79 = arith.constant 7 : index
    %c0_80 = arith.constant 0 : index
    %68 = tpu.strided_load %arg9[%c0_77, %c0_78, %c7_79, %c0_80] {strides = array<i32: 1, 2, 2, 1>} : memref<2x18x24x8xf32, #tpu.memory_space<vmem>>, vector<2x8x8x8xf32>
    %69 = vector.shape_cast %68 : vector<2x8x8x8xf32> to vector<128x8xf32>
    %c0_81 = arith.constant 0 : index
    %c0_82 = arith.constant 0 : index
    %c0_83 = arith.constant 0 : index
    %70 = vector.load %arg4[%c0_81, %c0_82, %c0_83] : memref<9x8x8xf32, #tpu.memory_space<vmem>>, vector<1x8x8xf32>
    %71 = vector.shape_cast %70 : vector<1x8x8xf32> to vector<8x8xf32>
    %cst_84 = arith.constant dense<0.000000e+00> : vector<128x8xf32>
    %72 = tpu.matmul %69, %71, %cst_84 {dimension_numbers = #tpu.dot_dimension_numbers<[1], [0], [0], [1], [0, 0, 1, 1], [], []>} : vector<128x8xf32>, vector<8x8xf32>, vector<128x8xf32> -> vector<128x8xf32>
    %73 = arith.addf %67, %72 : vector<128x8xf32>
    %c0_85 = arith.constant 0 : index
    %c0_86 = arith.constant 0 : index
    %c8_87 = arith.constant 8 : index
    %c0_88 = arith.constant 0 : index
    %74 = tpu.strided_load %arg9[%c0_85, %c0_86, %c8_87, %c0_88] {strides = array<i32: 1, 2, 2, 1>} : memref<2x18x24x8xf32, #tpu.memory_space<vmem>>, vector<2x8x8x8xf32>
    %75 = vector.shape_cast %74 : vector<2x8x8x8xf32> to vector<128x8xf32>
    %c1_89 = arith.constant 1 : index
    %c0_90 = arith.constant 0 : index
    %c0_91 = arith.constant 0 : index
    %76 = vector.load %arg4[%c1_89, %c0_90, %c0_91] : memref<9x8x8xf32, #tpu.memory_space<vmem>>, vector<1x8x8xf32>
    %77 = vector.shape_cast %76 : vector<1x8x8xf32> to vector<8x8xf32>
    %cst_92 = arith.constant dense<0.000000e+00> : vector<128x8xf32>
    %78 = tpu.matmul %75, %77, %cst_92 {dimension_numbers = #tpu.dot_dimension_numbers<[1], [0], [0], [1], [0, 0, 1, 1], [], []>} : vector<128x8xf32>, vector<8x8xf32>, vector<128x8xf32> -> vector<128x8xf32>
    %79 = arith.addf %73, %78 : vector<128x8xf32>
    %c0_93 = arith.constant 0 : index
    %c0_94 = arith.constant 0 : index
    %c9 = arith.constant 9 : index
    %c0_95 = arith.constant 0 : index
    %80 = tpu.strided_load %arg9[%c0_93, %c0_94, %c9, %c0_95] {strides = array<i32: 1, 2, 2, 1>} : memref<2x18x24x8xf32, #tpu.memory_space<vmem>>, vector<2x8x8x8xf32>
    %81 = vector.shape_cast %80 : vector<2x8x8x8xf32> to vector<128x8xf32>
    %c2_96 = arith.constant 2 : index
    %c0_97 = arith.constant 0 : index
    %c0_98 = arith.constant 0 : index
    %82 = vector.load %arg4[%c2_96, %c0_97, %c0_98] : memref<9x8x8xf32, #tpu.memory_space<vmem>>, vector<1x8x8xf32>
    %83 = vector.shape_cast %82 : vector<1x8x8xf32> to vector<8x8xf32>
    %cst_99 = arith.constant dense<0.000000e+00> : vector<128x8xf32>
    %84 = tpu.matmul %81, %83, %cst_99 {dimension_numbers = #tpu.dot_dimension_numbers<[1], [0], [0], [1], [0, 0, 1, 1], [], []>} : vector<128x8xf32>, vector<8x8xf32>, vector<128x8xf32> -> vector<128x8xf32>
    %85 = arith.addf %79, %84 : vector<128x8xf32>
    %c0_100 = arith.constant 0 : index
    %c1_101 = arith.constant 1 : index
    %c7_102 = arith.constant 7 : index
    %c0_103 = arith.constant 0 : index
    %86 = tpu.strided_load %arg9[%c0_100, %c1_101, %c7_102, %c0_103] {strides = array<i32: 1, 2, 2, 1>} : memref<2x18x24x8xf32, #tpu.memory_space<vmem>>, vector<2x8x8x8xf32>
    %87 = vector.shape_cast %86 : vector<2x8x8x8xf32> to vector<128x8xf32>
    %c3_104 = arith.constant 3 : index
    %c0_105 = arith.constant 0 : index
    %c0_106 = arith.constant 0 : index
    %88 = vector.load %arg4[%c3_104, %c0_105, %c0_106] : memref<9x8x8xf32, #tpu.memory_space<vmem>>, vector<1x8x8xf32>
    %89 = vector.shape_cast %88 : vector<1x8x8xf32> to vector<8x8xf32>
    %cst_107 = arith.constant dense<0.000000e+00> : vector<128x8xf32>
    %90 = tpu.matmul %87, %89, %cst_107 {dimension_numbers = #tpu.dot_dimension_numbers<[1], [0], [0], [1], [0, 0, 1, 1], [], []>} : vector<128x8xf32>, vector<8x8xf32>, vector<128x8xf32> -> vector<128x8xf32>
    %91 = arith.addf %85, %90 : vector<128x8xf32>
    %c0_108 = arith.constant 0 : index
    %c1_109 = arith.constant 1 : index
    %c8_110 = arith.constant 8 : index
    %c0_111 = arith.constant 0 : index
    %92 = tpu.strided_load %arg9[%c0_108, %c1_109, %c8_110, %c0_111] {strides = array<i32: 1, 2, 2, 1>} : memref<2x18x24x8xf32, #tpu.memory_space<vmem>>, vector<2x8x8x8xf32>
    %93 = vector.shape_cast %92 : vector<2x8x8x8xf32> to vector<128x8xf32>
    %c4_112 = arith.constant 4 : index
    %c0_113 = arith.constant 0 : index
    %c0_114 = arith.constant 0 : index
    %94 = vector.load %arg4[%c4_112, %c0_113, %c0_114] : memref<9x8x8xf32, #tpu.memory_space<vmem>>, vector<1x8x8xf32>
    %95 = vector.shape_cast %94 : vector<1x8x8xf32> to vector<8x8xf32>
    %cst_115 = arith.constant dense<0.000000e+00> : vector<128x8xf32>
    %96 = tpu.matmul %93, %95, %cst_115 {dimension_numbers = #tpu.dot_dimension_numbers<[1], [0], [0], [1], [0, 0, 1, 1], [], []>} : vector<128x8xf32>, vector<8x8xf32>, vector<128x8xf32> -> vector<128x8xf32>
    %97 = arith.addf %91, %96 : vector<128x8xf32>
    %c0_116 = arith.constant 0 : index
    %c1_117 = arith.constant 1 : index
    %c9_118 = arith.constant 9 : index
    %c0_119 = arith.constant 0 : index
    %98 = tpu.strided_load %arg9[%c0_116, %c1_117, %c9_118, %c0_119] {strides = array<i32: 1, 2, 2, 1>} : memref<2x18x24x8xf32, #tpu.memory_space<vmem>>, vector<2x8x8x8xf32>
    %99 = vector.shape_cast %98 : vector<2x8x8x8xf32> to vector<128x8xf32>
    %c5_120 = arith.constant 5 : index
    %c0_121 = arith.constant 0 : index
    %c0_122 = arith.constant 0 : index
    %100 = vector.load %arg4[%c5_120, %c0_121, %c0_122] : memref<9x8x8xf32, #tpu.memory_space<vmem>>, vector<1x8x8xf32>
    %101 = vector.shape_cast %100 : vector<1x8x8xf32> to vector<8x8xf32>
    %cst_123 = arith.constant dense<0.000000e+00> : vector<128x8xf32>
    %102 = tpu.matmul %99, %101, %cst_123 {dimension_numbers = #tpu.dot_dimension_numbers<[1], [0], [0], [1], [0, 0, 1, 1], [], []>} : vector<128x8xf32>, vector<8x8xf32>, vector<128x8xf32> -> vector<128x8xf32>
    %103 = arith.addf %97, %102 : vector<128x8xf32>
    %c0_124 = arith.constant 0 : index
    %c2_125 = arith.constant 2 : index
    %c7_126 = arith.constant 7 : index
    %c0_127 = arith.constant 0 : index
    %104 = tpu.strided_load %arg9[%c0_124, %c2_125, %c7_126, %c0_127] {strides = array<i32: 1, 2, 2, 1>} : memref<2x18x24x8xf32, #tpu.memory_space<vmem>>, vector<2x8x8x8xf32>
    %105 = vector.shape_cast %104 : vector<2x8x8x8xf32> to vector<128x8xf32>
    %c6_128 = arith.constant 6 : index
    %c0_129 = arith.constant 0 : index
    %c0_130 = arith.constant 0 : index
    %106 = vector.load %arg4[%c6_128, %c0_129, %c0_130] : memref<9x8x8xf32, #tpu.memory_space<vmem>>, vector<1x8x8xf32>
    %107 = vector.shape_cast %106 : vector<1x8x8xf32> to vector<8x8xf32>
    %cst_131 = arith.constant dense<0.000000e+00> : vector<128x8xf32>
    %108 = tpu.matmul %105, %107, %cst_131 {dimension_numbers = #tpu.dot_dimension_numbers<[1], [0], [0], [1], [0, 0, 1, 1], [], []>} : vector<128x8xf32>, vector<8x8xf32>, vector<128x8xf32> -> vector<128x8xf32>
    %109 = arith.addf %103, %108 : vector<128x8xf32>
    %c0_132 = arith.constant 0 : index
    %c2_133 = arith.constant 2 : index
    %c8_134 = arith.constant 8 : index
    %c0_135 = arith.constant 0 : index
    %110 = tpu.strided_load %arg9[%c0_132, %c2_133, %c8_134, %c0_135] {strides = array<i32: 1, 2, 2, 1>} : memref<2x18x24x8xf32, #tpu.memory_space<vmem>>, vector<2x8x8x8xf32>
    %111 = vector.shape_cast %110 : vector<2x8x8x8xf32> to vector<128x8xf32>
    %c7_136 = arith.constant 7 : index
    %c0_137 = arith.constant 0 : index
    %c0_138 = arith.constant 0 : index
    %112 = vector.load %arg4[%c7_136, %c0_137, %c0_138] : memref<9x8x8xf32, #tpu.memory_space<vmem>>, vector<1x8x8xf32>
    %113 = vector.shape_cast %112 : vector<1x8x8xf32> to vector<8x8xf32>
    %cst_139 = arith.constant dense<0.000000e+00> : vector<128x8xf32>
    %114 = tpu.matmul %111, %113, %cst_139 {dimension_numbers = #tpu.dot_dimension_numbers<[1], [0], [0], [1], [0, 0, 1, 1], [], []>} : vector<128x8xf32>, vector<8x8xf32>, vector<128x8xf32> -> vector<128x8xf32>
    %115 = arith.addf %109, %114 : vector<128x8xf32>
    %c0_140 = arith.constant 0 : index
    %c2_141 = arith.constant 2 : index
    %c9_142 = arith.constant 9 : index
    %c0_143 = arith.constant 0 : index
    %116 = tpu.strided_load %arg9[%c0_140, %c2_141, %c9_142, %c0_143] {strides = array<i32: 1, 2, 2, 1>} : memref<2x18x24x8xf32, #tpu.memory_space<vmem>>, vector<2x8x8x8xf32>
    %117 = vector.shape_cast %116 : vector<2x8x8x8xf32> to vector<128x8xf32>
    %c8_144 = arith.constant 8 : index
    %c0_145 = arith.constant 0 : index
    %c0_146 = arith.constant 0 : index
    %118 = vector.load %arg4[%c8_144, %c0_145, %c0_146] : memref<9x8x8xf32, #tpu.memory_space<vmem>>, vector<1x8x8xf32>
    %119 = vector.shape_cast %118 : vector<1x8x8xf32> to vector<8x8xf32>
    %cst_147 = arith.constant dense<0.000000e+00> : vector<128x8xf32>
    %120 = tpu.matmul %117, %119, %cst_147 {dimension_numbers = #tpu.dot_dimension_numbers<[1], [0], [0], [1], [0, 0, 1, 1], [], []>} : vector<128x8xf32>, vector<8x8xf32>, vector<128x8xf32> -> vector<128x8xf32>
    %121 = arith.addf %115, %120 : vector<128x8xf32>
    %c0_148 = arith.constant 0 : index
    %c0_149 = arith.constant 0 : index
    %122 = vector.load %arg5[%c0_148, %c0_149] : memref<1x8xf32, #tpu.memory_space<vmem>>, vector<1x8xf32>
    %123 = vector.broadcast %122 : vector<1x8xf32> to vector<128x8xf32>
    %124 = arith.addf %121, %123 : vector<128x8xf32>
    %cst_150 = arith.constant 0.000000e+00 : f32
    %125 = vector.broadcast %cst_150 : f32 to vector<128x8xf32>
    %126 = arith.maximumf %124, %125 : vector<128x8xf32>
    %127 = tpu.transpose %126, [1, 0] : vector<128x8xf32> -> vector<8x128xf32>
    %c0_151 = arith.constant 0 : index
    %c0_152 = arith.constant 0 : index
    %128 = vector.load %arg7[%c0_151, %c0_152] : memref<1x32xf32, #tpu.memory_space<vmem>>, vector<1x32xf32>
    %129 = vector.extract_strided_slice %127 {offsets = [0, 0], sizes = [1, 64], strides = [1, 1]} : vector<8x128xf32> to vector<1x64xf32>
    %c0_153 = arith.constant 0 : index
    %c0_154 = arith.constant 0 : index
    %c0_155 = arith.constant 0 : index
    %130 = vector.load %arg6[%c0_153, %c0_154, %c0_155] : memref<8x64x32xf32, #tpu.memory_space<vmem>>, vector<1x64x32xf32>
    %131 = vector.shape_cast %130 : vector<1x64x32xf32> to vector<64x32xf32>
    %cst_156 = arith.constant dense<0.000000e+00> : vector<1x32xf32>
    %132 = tpu.matmul %129, %131, %cst_156 {dimension_numbers = #tpu.dot_dimension_numbers<[1], [0], [0], [1], [0, 0, 1, 1], [], []>} : vector<1x64xf32>, vector<64x32xf32>, vector<1x32xf32> -> vector<1x32xf32>
    %133 = arith.addf %128, %132 : vector<1x32xf32>
    %134 = vector.extract_strided_slice %127 {offsets = [1, 0], sizes = [1, 64], strides = [1, 1]} : vector<8x128xf32> to vector<1x64xf32>
    %c1_157 = arith.constant 1 : index
    %c0_158 = arith.constant 0 : index
    %c0_159 = arith.constant 0 : index
    %135 = vector.load %arg6[%c1_157, %c0_158, %c0_159] : memref<8x64x32xf32, #tpu.memory_space<vmem>>, vector<1x64x32xf32>
    %136 = vector.shape_cast %135 : vector<1x64x32xf32> to vector<64x32xf32>
    %cst_160 = arith.constant dense<0.000000e+00> : vector<1x32xf32>
    %137 = tpu.matmul %134, %136, %cst_160 {dimension_numbers = #tpu.dot_dimension_numbers<[1], [0], [0], [1], [0, 0, 1, 1], [], []>} : vector<1x64xf32>, vector<64x32xf32>, vector<1x32xf32> -> vector<1x32xf32>
    %138 = arith.addf %133, %137 : vector<1x32xf32>
    %139 = vector.extract_strided_slice %127 {offsets = [2, 0], sizes = [1, 64], strides = [1, 1]} : vector<8x128xf32> to vector<1x64xf32>
    %c2_161 = arith.constant 2 : index
    %c0_162 = arith.constant 0 : index
    %c0_163 = arith.constant 0 : index
    %140 = vector.load %arg6[%c2_161, %c0_162, %c0_163] : memref<8x64x32xf32, #tpu.memory_space<vmem>>, vector<1x64x32xf32>
    %141 = vector.shape_cast %140 : vector<1x64x32xf32> to vector<64x32xf32>
    %cst_164 = arith.constant dense<0.000000e+00> : vector<1x32xf32>
    %142 = tpu.matmul %139, %141, %cst_164 {dimension_numbers = #tpu.dot_dimension_numbers<[1], [0], [0], [1], [0, 0, 1, 1], [], []>} : vector<1x64xf32>, vector<64x32xf32>, vector<1x32xf32> -> vector<1x32xf32>
    %143 = arith.addf %138, %142 : vector<1x32xf32>
    %144 = vector.extract_strided_slice %127 {offsets = [3, 0], sizes = [1, 64], strides = [1, 1]} : vector<8x128xf32> to vector<1x64xf32>
    %c3_165 = arith.constant 3 : index
    %c0_166 = arith.constant 0 : index
    %c0_167 = arith.constant 0 : index
    %145 = vector.load %arg6[%c3_165, %c0_166, %c0_167] : memref<8x64x32xf32, #tpu.memory_space<vmem>>, vector<1x64x32xf32>
    %146 = vector.shape_cast %145 : vector<1x64x32xf32> to vector<64x32xf32>
    %cst_168 = arith.constant dense<0.000000e+00> : vector<1x32xf32>
    %147 = tpu.matmul %144, %146, %cst_168 {dimension_numbers = #tpu.dot_dimension_numbers<[1], [0], [0], [1], [0, 0, 1, 1], [], []>} : vector<1x64xf32>, vector<64x32xf32>, vector<1x32xf32> -> vector<1x32xf32>
    %148 = arith.addf %143, %147 : vector<1x32xf32>
    %149 = vector.extract_strided_slice %127 {offsets = [4, 0], sizes = [1, 64], strides = [1, 1]} : vector<8x128xf32> to vector<1x64xf32>
    %c4_169 = arith.constant 4 : index
    %c0_170 = arith.constant 0 : index
    %c0_171 = arith.constant 0 : index
    %150 = vector.load %arg6[%c4_169, %c0_170, %c0_171] : memref<8x64x32xf32, #tpu.memory_space<vmem>>, vector<1x64x32xf32>
    %151 = vector.shape_cast %150 : vector<1x64x32xf32> to vector<64x32xf32>
    %cst_172 = arith.constant dense<0.000000e+00> : vector<1x32xf32>
    %152 = tpu.matmul %149, %151, %cst_172 {dimension_numbers = #tpu.dot_dimension_numbers<[1], [0], [0], [1], [0, 0, 1, 1], [], []>} : vector<1x64xf32>, vector<64x32xf32>, vector<1x32xf32> -> vector<1x32xf32>
    %153 = arith.addf %148, %152 : vector<1x32xf32>
    %154 = vector.extract_strided_slice %127 {offsets = [5, 0], sizes = [1, 64], strides = [1, 1]} : vector<8x128xf32> to vector<1x64xf32>
    %c5_173 = arith.constant 5 : index
    %c0_174 = arith.constant 0 : index
    %c0_175 = arith.constant 0 : index
    %155 = vector.load %arg6[%c5_173, %c0_174, %c0_175] : memref<8x64x32xf32, #tpu.memory_space<vmem>>, vector<1x64x32xf32>
    %156 = vector.shape_cast %155 : vector<1x64x32xf32> to vector<64x32xf32>
    %cst_176 = arith.constant dense<0.000000e+00> : vector<1x32xf32>
    %157 = tpu.matmul %154, %156, %cst_176 {dimension_numbers = #tpu.dot_dimension_numbers<[1], [0], [0], [1], [0, 0, 1, 1], [], []>} : vector<1x64xf32>, vector<64x32xf32>, vector<1x32xf32> -> vector<1x32xf32>
    %158 = arith.addf %153, %157 : vector<1x32xf32>
    %159 = vector.extract_strided_slice %127 {offsets = [6, 0], sizes = [1, 64], strides = [1, 1]} : vector<8x128xf32> to vector<1x64xf32>
    %c6_177 = arith.constant 6 : index
    %c0_178 = arith.constant 0 : index
    %c0_179 = arith.constant 0 : index
    %160 = vector.load %arg6[%c6_177, %c0_178, %c0_179] : memref<8x64x32xf32, #tpu.memory_space<vmem>>, vector<1x64x32xf32>
    %161 = vector.shape_cast %160 : vector<1x64x32xf32> to vector<64x32xf32>
    %cst_180 = arith.constant dense<0.000000e+00> : vector<1x32xf32>
    %162 = tpu.matmul %159, %161, %cst_180 {dimension_numbers = #tpu.dot_dimension_numbers<[1], [0], [0], [1], [0, 0, 1, 1], [], []>} : vector<1x64xf32>, vector<64x32xf32>, vector<1x32xf32> -> vector<1x32xf32>
    %163 = arith.addf %158, %162 : vector<1x32xf32>
    %164 = vector.extract_strided_slice %127 {offsets = [7, 0], sizes = [1, 64], strides = [1, 1]} : vector<8x128xf32> to vector<1x64xf32>
    %c7_181 = arith.constant 7 : index
    %c0_182 = arith.constant 0 : index
    %c0_183 = arith.constant 0 : index
    %165 = vector.load %arg6[%c7_181, %c0_182, %c0_183] : memref<8x64x32xf32, #tpu.memory_space<vmem>>, vector<1x64x32xf32>
    %166 = vector.shape_cast %165 : vector<1x64x32xf32> to vector<64x32xf32>
    %cst_184 = arith.constant dense<0.000000e+00> : vector<1x32xf32>
    %167 = tpu.matmul %164, %166, %cst_184 {dimension_numbers = #tpu.dot_dimension_numbers<[1], [0], [0], [1], [0, 0, 1, 1], [], []>} : vector<1x64xf32>, vector<64x32xf32>, vector<1x32xf32> -> vector<1x32xf32>
    %168 = arith.addf %163, %167 : vector<1x32xf32>
    %169 = math.tanh %168 : vector<1x32xf32>
    %c0_185 = arith.constant 0 : index
    %c0_186 = arith.constant 0 : index
    %170 = vector.load %arg8[%c0_185, %c0_186] : memref<2x32xf32, #tpu.memory_space<vmem>>, vector<1x32xf32>
    tpu.vector_store %arg8[%c0_185, %c0_186], %169 {strides = array<i32>} : memref<2x32xf32, #tpu.memory_space<vmem>>, vector<1x32xf32>,
    %c0_187 = arith.constant 0 : index
    %c0_188 = arith.constant 0 : index
    %171 = vector.load %arg7[%c0_187, %c0_188] : memref<1x32xf32, #tpu.memory_space<vmem>>, vector<1x32xf32>
    %172 = vector.extract_strided_slice %127 {offsets = [0, 64], sizes = [1, 64], strides = [1, 1]} : vector<8x128xf32> to vector<1x64xf32>
    %c0_189 = arith.constant 0 : index
    %c0_190 = arith.constant 0 : index
    %c0_191 = arith.constant 0 : index
    %173 = vector.load %arg6[%c0_189, %c0_190, %c0_191] : memref<8x64x32xf32, #tpu.memory_space<vmem>>, vector<1x64x32xf32>
    %174 = vector.shape_cast %173 : vector<1x64x32xf32> to vector<64x32xf32>
    %cst_192 = arith.constant dense<0.000000e+00> : vector<1x32xf32>
    %175 = tpu.matmul %172, %174, %cst_192 {dimension_numbers = #tpu.dot_dimension_numbers<[1], [0], [0], [1], [0, 0, 1, 1], [], []>} : vector<1x64xf32>, vector<64x32xf32>, vector<1x32xf32> -> vector<1x32xf32>
    %176 = arith.addf %171, %175 : vector<1x32xf32>
    %177 = vector.extract_strided_slice %127 {offsets = [1, 64], sizes = [1, 64], strides = [1, 1]} : vector<8x128xf32> to vector<1x64xf32>
    %c1_193 = arith.constant 1 : index
    %c0_194 = arith.constant 0 : index
    %c0_195 = arith.constant 0 : index
    %178 = vector.load %arg6[%c1_193, %c0_194, %c0_195] : memref<8x64x32xf32, #tpu.memory_space<vmem>>, vector<1x64x32xf32>
    %179 = vector.shape_cast %178 : vector<1x64x32xf32> to vector<64x32xf32>
    %cst_196 = arith.constant dense<0.000000e+00> : vector<1x32xf32>
    %180 = tpu.matmul %177, %179, %cst_196 {dimension_numbers = #tpu.dot_dimension_numbers<[1], [0], [0], [1], [0, 0, 1, 1], [], []>} : vector<1x64xf32>, vector<64x32xf32>, vector<1x32xf32> -> vector<1x32xf32>
    %181 = arith.addf %176, %180 : vector<1x32xf32>
    %182 = vector.extract_strided_slice %127 {offsets = [2, 64], sizes = [1, 64], strides = [1, 1]} : vector<8x128xf32> to vector<1x64xf32>
    %c2_197 = arith.constant 2 : index
    %c0_198 = arith.constant 0 : index
    %c0_199 = arith.constant 0 : index
    %183 = vector.load %arg6[%c2_197, %c0_198, %c0_199] : memref<8x64x32xf32, #tpu.memory_space<vmem>>, vector<1x64x32xf32>
    %184 = vector.shape_cast %183 : vector<1x64x32xf32> to vector<64x32xf32>
    %cst_200 = arith.constant dense<0.000000e+00> : vector<1x32xf32>
    %185 = tpu.matmul %182, %184, %cst_200 {dimension_numbers = #tpu.dot_dimension_numbers<[1], [0], [0], [1], [0, 0, 1, 1], [], []>} : vector<1x64xf32>, vector<64x32xf32>, vector<1x32xf32> -> vector<1x32xf32>
    %186 = arith.addf %181, %185 : vector<1x32xf32>
    %187 = vector.extract_strided_slice %127 {offsets = [3, 64], sizes = [1, 64], strides = [1, 1]} : vector<8x128xf32> to vector<1x64xf32>
    %c3_201 = arith.constant 3 : index
    %c0_202 = arith.constant 0 : index
    %c0_203 = arith.constant 0 : index
    %188 = vector.load %arg6[%c3_201, %c0_202, %c0_203] : memref<8x64x32xf32, #tpu.memory_space<vmem>>, vector<1x64x32xf32>
    %189 = vector.shape_cast %188 : vector<1x64x32xf32> to vector<64x32xf32>
    %cst_204 = arith.constant dense<0.000000e+00> : vector<1x32xf32>
    %190 = tpu.matmul %187, %189, %cst_204 {dimension_numbers = #tpu.dot_dimension_numbers<[1], [0], [0], [1], [0, 0, 1, 1], [], []>} : vector<1x64xf32>, vector<64x32xf32>, vector<1x32xf32> -> vector<1x32xf32>
    %191 = arith.addf %186, %190 : vector<1x32xf32>
    %192 = vector.extract_strided_slice %127 {offsets = [4, 64], sizes = [1, 64], strides = [1, 1]} : vector<8x128xf32> to vector<1x64xf32>
    %c4_205 = arith.constant 4 : index
    %c0_206 = arith.constant 0 : index
    %c0_207 = arith.constant 0 : index
    %193 = vector.load %arg6[%c4_205, %c0_206, %c0_207] : memref<8x64x32xf32, #tpu.memory_space<vmem>>, vector<1x64x32xf32>
    %194 = vector.shape_cast %193 : vector<1x64x32xf32> to vector<64x32xf32>
    %cst_208 = arith.constant dense<0.000000e+00> : vector<1x32xf32>
    %195 = tpu.matmul %192, %194, %cst_208 {dimension_numbers = #tpu.dot_dimension_numbers<[1], [0], [0], [1], [0, 0, 1, 1], [], []>} : vector<1x64xf32>, vector<64x32xf32>, vector<1x32xf32> -> vector<1x32xf32>
    %196 = arith.addf %191, %195 : vector<1x32xf32>
    %197 = vector.extract_strided_slice %127 {offsets = [5, 64], sizes = [1, 64], strides = [1, 1]} : vector<8x128xf32> to vector<1x64xf32>
    %c5_209 = arith.constant 5 : index
    %c0_210 = arith.constant 0 : index
    %c0_211 = arith.constant 0 : index
    %198 = vector.load %arg6[%c5_209, %c0_210, %c0_211] : memref<8x64x32xf32, #tpu.memory_space<vmem>>, vector<1x64x32xf32>
    %199 = vector.shape_cast %198 : vector<1x64x32xf32> to vector<64x32xf32>
    %cst_212 = arith.constant dense<0.000000e+00> : vector<1x32xf32>
    %200 = tpu.matmul %197, %199, %cst_212 {dimension_numbers = #tpu.dot_dimension_numbers<[1], [0], [0], [1], [0, 0, 1, 1], [], []>} : vector<1x64xf32>, vector<64x32xf32>, vector<1x32xf32> -> vector<1x32xf32>
    %201 = arith.addf %196, %200 : vector<1x32xf32>
    %202 = vector.extract_strided_slice %127 {offsets = [6, 64], sizes = [1, 64], strides = [1, 1]} : vector<8x128xf32> to vector<1x64xf32>
    %c6_213 = arith.constant 6 : index
    %c0_214 = arith.constant 0 : index
    %c0_215 = arith.constant 0 : index
    %203 = vector.load %arg6[%c6_213, %c0_214, %c0_215] : memref<8x64x32xf32, #tpu.memory_space<vmem>>, vector<1x64x32xf32>
    %204 = vector.shape_cast %203 : vector<1x64x32xf32> to vector<64x32xf32>
    %cst_216 = arith.constant dense<0.000000e+00> : vector<1x32xf32>
    %205 = tpu.matmul %202, %204, %cst_216 {dimension_numbers = #tpu.dot_dimension_numbers<[1], [0], [0], [1], [0, 0, 1, 1], [], []>} : vector<1x64xf32>, vector<64x32xf32>, vector<1x32xf32> -> vector<1x32xf32>
    %206 = arith.addf %201, %205 : vector<1x32xf32>
    %207 = vector.extract_strided_slice %127 {offsets = [7, 64], sizes = [1, 64], strides = [1, 1]} : vector<8x128xf32> to vector<1x64xf32>
    %c7_217 = arith.constant 7 : index
    %c0_218 = arith.constant 0 : index
    %c0_219 = arith.constant 0 : index
    %208 = vector.load %arg6[%c7_217, %c0_218, %c0_219] : memref<8x64x32xf32, #tpu.memory_space<vmem>>, vector<1x64x32xf32>
    %209 = vector.shape_cast %208 : vector<1x64x32xf32> to vector<64x32xf32>
    %cst_220 = arith.constant dense<0.000000e+00> : vector<1x32xf32>
    %210 = tpu.matmul %207, %209, %cst_220 {dimension_numbers = #tpu.dot_dimension_numbers<[1], [0], [0], [1], [0, 0, 1, 1], [], []>} : vector<1x64xf32>, vector<64x32xf32>, vector<1x32xf32> -> vector<1x32xf32>
    %211 = arith.addf %206, %210 : vector<1x32xf32>
    %212 = math.tanh %211 : vector<1x32xf32>
    %c1_221 = arith.constant 1 : index
    %c0_222 = arith.constant 0 : index
    %213 = vector.load %arg8[%c1_221, %c0_222] : memref<2x32xf32, #tpu.memory_space<vmem>>, vector<1x32xf32>
    tpu.vector_store %arg8[%c1_221, %c0_222], %212 {strides = array<i32>} : memref<2x32xf32, #tpu.memory_space<vmem>>, vector<1x32xf32>,
    return
  }
  func.func @transform_0(%arg0: i32) -> (i32, i32, i32, i32) {
    %c0_i32 = arith.constant 0 : i32
    %c0_i32_0 = arith.constant 0 : i32
    %c0_i32_1 = arith.constant 0 : i32
    %c0_i32_2 = arith.constant 0 : i32
    %c0_i32_3 = arith.constant 0 : i32
    return %c0_i32, %c0_i32_0, %c0_i32_1, %c0_i32_2 : i32, i32, i32, i32
  }
  func.func @transform_1(%arg0: i32) -> (i32, i32, i32) {
    %c0_i32 = arith.constant 0 : i32
    %c0_i32_0 = arith.constant 0 : i32
    %c0_i32_1 = arith.constant 0 : i32
    %c0_i32_2 = arith.constant 0 : i32
    return %c0_i32, %c0_i32_0, %c0_i32_1 : i32, i32, i32
  }
  func.func @transform_2(%arg0: i32) -> (i32, i32) {
    %c0_i32 = arith.constant 0 : i32
    %c0_i32_0 = arith.constant 0 : i32
    %c0_i32_1 = arith.constant 0 : i32
    return %c0_i32, %c0_i32_0 : i32, i32
  }
  func.func @transform_3(%arg0: i32) -> (i32, i32, i32) {
    %c0_i32 = arith.constant 0 : i32
    %c0_i32_0 = arith.constant 0 : i32
    %c0_i32_1 = arith.constant 0 : i32
    %c0_i32_2 = arith.constant 0 : i32
    return %c0_i32, %c0_i32_0, %c0_i32_1 : i32, i32, i32
  }
  func.func @transform_4(%arg0: i32) -> (i32, i32) {
    %c0_i32 = arith.constant 0 : i32
    %c0_i32_0 = arith.constant 0 : i32
    %c0_i32_1 = arith.constant 0 : i32
    return %c0_i32, %c0_i32_0 : i32, i32
  }
  func.func @transform_5(%arg0: i32) -> (i32, i32, i32) {
    %c0_i32 = arith.constant 0 : i32
    %c0_i32_0 = arith.constant 0 : i32
    %c0_i32_1 = arith.constant 0 : i32
    %c0_i32_2 = arith.constant 0 : i32
    return %c0_i32, %c0_i32_0, %c0_i32_1 : i32, i32, i32
  }
  func.func @transform_6(%arg0: i32) -> (i32, i32) {
    %c0_i32 = arith.constant 0 : i32
    %c0_i32_0 = arith.constant 0 : i32
    %c0_i32_1 = arith.constant 0 : i32
    return %c0_i32, %c0_i32_0 : i32, i32
  }
  func.func @transform_7(%arg0: i32) -> (i32, i32) {
    %c0_i32 = arith.constant 0 : i32
    %c0_i32_0 = arith.constant 0 : i32
    %c0_i32_1 = arith.constant 0 : i32
    return %c0_i32, %c0_i32_0 : i32, i32
  }
}

</mosaic_0001>

<llo_original>
// kernel: _forward_impl.1
$region0: #{_forward_impl.1}
  #allocation0 [shape = 'u32[]', space=smem, size = 0x4, offset = 0x4, fixed_abs, tag = 'smem constant byte address 0x4 - core index']
  #allocation1 [shape = 'u32[72,128]{1,0:T(1,128)}', space=vmem, size = 0x9000, scoped, tag = 'internal scratch']
  #allocation2 [shape = 'f32[2,18,24,8]{3,2,1,0:T(8,128)}', space=vmem, size = 0x6c000, scoped, tag = 'scratch operand']
  %s0 = inlined_call_operand.vmem [shape: f32[2,18,18,4], index: 0, kind: input, shape index: {}]
  %s1 = inlined_call_operand.vmem [shape: f32[9,4,8], index: 1, kind: input, shape index: {}]
  %s2 = inlined_call_operand.vmem [shape: f32[1,8], index: 2, kind: input, shape index: {}]
  %s3 = inlined_call_operand.vmem [shape: f32[9,8,8], index: 3, kind: input, shape index: {}]
  %s4 = inlined_call_operand.vmem [shape: f32[1,8], index: 4, kind: input, shape index: {}]
  %s5 = inlined_call_operand.vmem [shape: f32[8,64,32], index: 5, kind: input, shape index: {}]
  %s6 = inlined_call_operand.vmem [shape: f32[1,32], index: 6, kind: input, shape index: {}]
  %s7 = inlined_call_operand.hbm [shape: f32[2,32], index: 7, kind: output, shape index: {}]
  %s8 = sld [smem:[#allocation0]]
  $region38: #{_forward_impl.1} parent=0
    _
  %s10 = ssub.s32 1, %s8
  %s11 = scalar_select 0, %s10, %s8
  $region1: #{_forward_impl.1} parent=0
    #allocation3 [shape = 'u8[1024]{0}', space=vmem, size = 0x400, scoped, tag = 'output window, operand 0, single buffered']
    #allocation4 [shape = 's32[1]{0}', space=sflag, size = 0x4, scoped, tag = 'scoped memory for _forward_impl.1']
    %12 = vsyncpa [#allocation4], 0
    // Predicated region
    $region2: #{_forward_impl.1} parent=1 // pred_check
      _
    $region3: #{_forward_impl.1} parent=1 // pred_check_branch
      %14 = sbr.rel (0) target = $region5
    $region4: #{_forward_impl.1} parent=1 // pred_region
      _
    $region5: #{_forward_impl.1} parent=1 // pred_fallthru
      _
    // Predicated region
    $region6: #{_forward_impl.1} parent=1 // pred_check
      _
    $region7: #{_forward_impl.1} parent=1 // pred_check_branch
      %16 = sbr.rel (0) target = $region9
    $region8: #{_forward_impl.1} parent=1 // pred_region
      _
    $region9: #{_forward_impl.1} parent=1 // pred_fallthru
      _
    // Predicated region
    $region10: #{_forward_impl.1} parent=1 // pred_check
      _
    $region11: #{_forward_impl.1} parent=1 // pred_check_branch
      %18 = sbr.rel (0) target = $region13
    $region12: #{_forward_impl.1} parent=1 // pred_region
      _
    $region13: #{_forward_impl.1} parent=1 // pred_fallthru
      _
    // Predicated region
    $region14: #{_forward_impl.1} parent=1 // pred_check
      _
    $region15: #{_forward_impl.1} parent=1 // pred_check_branch
      %20 = sbr.rel (0) target = $region17
    $region16: #{_forward_impl.1} parent=1 // pred_region
      _
    $region17: #{_forward_impl.1} parent=1 // pred_fallthru
      _
    // Predicated region
    $region18: #{_forward_impl.1} parent=1 // pred_check
      _
    $region19: #{_forward_impl.1} parent=1 // pred_check_branch
      %22 = sbr.rel (0) target = $region21
    $region20: #{_forward_impl.1} parent=1 // pred_region
      _
    $region21: #{_forward_impl.1} parent=1 // pred_fallthru
      _
    // Predicated region
    $region22: #{_forward_impl.1} parent=1 // pred_check
      _
    $region23: #{_forward_impl.1} parent=1 // pred_check_branch
      %24 = sbr.rel (0) target = $region25
    $region24: #{_forward_impl.1} parent=1 // pred_region
      _
    $region25: #{_forward_impl.1} parent=1 // pred_fallthru
      _
    // Predicated region
    $region26: #{_forward_impl.1} parent=1 // pred_check
      _
    $region27: #{_forward_impl.1} parent=1 // pred_check_branch
      %26 = sbr.rel (0) target = $region29
    $region28: #{_forward_impl.1} parent=1 // pred_region
      _
    $region29: #{_forward_impl.1} parent=1 // pred_fallthru
      _
    %v27 = vld [vmem:[%s0] sm:$0xff]
    %v28 = vld [vmem:[%s0 + $0x8] sm:$0xff]
    %v29 = vld [vmem:[%s0 + $0x18] sm:$0xff]
    %v30 = vld [vmem:[%s0 + $0x20] sm:$0xff]
    %v31 = vld [vmem:[%s0 + $0x30] sm:$0xff]
    %v32 = vld [vmem:[%s0 + $0x38] sm:$0xff]
    %v33 = vld [vmem:[%s0 + $0x48] sm:$0xff]
    %v34 = vld [vmem:[%s0 + $0x50] sm:$0xff]
    %v35 = vld [vmem:[%s0 + $0x60] sm:$0xff]
    %v36 = vld [vmem:[%s0 + $0x68] sm:$0xff]
    %v37 = vld [vmem:[%s0 + $0x78] sm:$0xff]
    %v38 = vld [vmem:[%s0 + $0x80] sm:$0xff]
    %v39 = vld [vmem:[%s0 + $0x90] sm:$0xff]
    %v40 = vld [vmem:[%s0 + $0x98] sm:$0xff]
    %v41 = vld [vmem:[%s0 + $0xa8] sm:$0xff]
    %v42 = vld [vmem:[%s0 + $0xb0] sm:$0xff]
    %v43 = vld [vmem:[%s0 + $0xc0] sm:$0xff]
    %v44 = vld [vmem:[%s0 + $0xc8] sm:$0xff]
    %v45 = vld [vmem:[%s0 + $0xd8] sm:$0xff]
    %v46 = vld [vmem:[%s0 + $0xe0] sm:$0xff]
    %v47 = vld [vmem:[%s0 + $0xf0] sm:$0xff]
    %v48 = vld [vmem:[%s0 + $0xf8] sm:$0xff]
    %v49 = vld [vmem:[%s0 + $0x108] sm:$0xff]
    %v50 = vld [vmem:[%s0 + $0x110] sm:$0xff]
    %v51 = vld [vmem:[%s0 + $0x120] sm:$0xff]
    %v52 = vld [vmem:[%s0 + $0x128] sm:$0xff]
    %v53 = vld [vmem:[%s0 + $0x138] sm:$0xff]
    %v54 = vld [vmem:[%s0 + $0x140] sm:$0xff]
    %v55 = vld [vmem:[%s0 + $0x150] sm:$0xff]
    %v56 = vld [vmem:[%s0 + $0x158] sm:$0xff]
    %v57 = vld [vmem:[%s0 + $0x168] sm:$0xff]
    %v58 = vld [vmem:[%s0 + $0x170] sm:$0xff]
    %v59 = vld [vmem:[%s0 + $0x1b0] sm:$0xff]
    %v60 = vld [vmem:[%s0 + $0x1b8] sm:$0xff]
    %v61 = vld [vmem:[%s0 + $0x1c8] sm:$0xff]
    %v62 = vld [vmem:[%s0 + $0x1d0] sm:$0xff]
    %v63 = vld [vmem:[%s0 + $0x1e0] sm:$0xff]
    %v64 = vld [vmem:[%s0 + $0x1e8] sm:$0xff]
    %v65 = vld [vmem:[%s0 + $0x1f8] sm:$0xff]
    %v66 = vld [vmem:[%s0 + $0x200] sm:$0xff]
    %v67 = vld [vmem:[%s0 + $0x210] sm:$0xff]
    %v68 = vld [vmem:[%s0 + $0x218] sm:$0xff]
    %v69 = vld [vmem:[%s0 + $0x228] sm:$0xff]
    %v70 = vld [vmem:[%s0 + $0x230] sm:$0xff]
    %v71 = vld [vmem:[%s0 + $0x240] sm:$0xff]
    %v72 = vld [vmem:[%s0 + $0x248] sm:$0xff]
    %v73 = vld [vmem:[%s0 + $0x258] sm:$0xff]
    %v74 = vld [vmem:[%s0 + $0x260] sm:$0xff]
    %v75 = vld [vmem:[%s0 + $0x270] sm:$0xff]
    %v76 = vld [vmem:[%s0 + $0x278] sm:$0xff]
    %v77 = vld [vmem:[%s0 + $0x288] sm:$0xff]
    %v78 = vld [vmem:[%s0 + $0x290] sm:$0xff]
    %v79 = vld [vmem:[%s0 + $0x2a0] sm:$0xff]
    %v80 = vld [vmem:[%s0 + $0x2a8] sm:$0xff]
    %v81 = vld [vmem:[%s0 + $0x2b8] sm:$0xff]
    %v82 = vld [vmem:[%s0 + $0x2c0] sm:$0xff]
    %v83 = vld [vmem:[%s0 + $0x2d0] sm:$0xff]
    %v84 = vld [vmem:[%s0 + $0x2d8] sm:$0xff]
    %v85 = vld [vmem:[%s0 + $0x2e8] sm:$0xff]
    %v86 = vld [vmem:[%s0 + $0x2f0] sm:$0xff]
    %v87 = vld [vmem:[%s0 + $0x300] sm:$0xff]
    %v88 = vld [vmem:[%s0 + $0x308] sm:$0xff]
    %v89 = vld [vmem:[%s0 + $0x318] sm:$0xff]
    %v90 = vld [vmem:[%s0 + $0x320] sm:$0xff]
    %v91 = vld [vmem:[%s1] sm:$0xf]
    %v92 = vld [vmem:[%s0 + $0x1] sm:$0xff]
    %v93 = vld [vmem:[%s0 + $0x9] sm:$0xff]
    %v94 = vld [vmem:[%s0 + $0x19] sm:$0xff]
    %v95 = vld [vmem:[%s0 + $0x21] sm:$0xff]
    %v96 = vld [vmem:[%s0 + $0x31] sm:$0xff]
    %v97 = vld [vmem:[%s0 + $0x39] sm:$0xff]
    %v98 = vld [vmem:[%s0 + $0x49] sm:$0xff]
    %v99 = vld [vmem:[%s0 + $0x51] sm:$0xff]
    %v100 = vld [vmem:[%s0 + $0x61] sm:$0xff]
    %v101 = vld [vmem:[%s0 + $0x69] sm:$0xff]
    %v102 = vld [vmem:[%s0 + $0x79] sm:$0xff]
    %v103 = vld [vmem:[%s0 + $0x81] sm:$0xff]
    %v104 = vld [vmem:[%s0 + $0x91] sm:$0xff]
    %v105 = vld [vmem:[%s0 + $0x99] sm:$0xff]
    %v106 = vld [vmem:[%s0 + $0xa9] sm:$0xff]
    %v107 = vld [vmem:[%s0 + $0xb1] sm:$0xff]
    %v108 = vld [vmem:[%s0 + $0xc1] sm:$0xff]
    %v109 = vld [vmem:[%s0 + $0xc9] sm:$0xff]
    %v110 = vld [vmem:[%s0 + $0xd9] sm:$0xff]
    %v111 = vld [vmem:[%s0 + $0xe1] sm:$0xff]
    %v112 = vld [vmem:[%s0 + $0xf1] sm:$0xff]
    %v113 = vld [vmem:[%s0 + $0xf9] sm:$0xff]
    %v114 = vld [vmem:[%s0 + $0x109] sm:$0xff]
    %v115 = vld [vmem:[%s0 + $0x111] sm:$0xff]
    %v116 = vld [vmem:[%s0 + $0x121] sm:$0xff]
    %v117 = vld [vmem:[%s0 + $0x129] sm:$0xff]
    %v118 = vld [vmem:[%s0 + $0x139] sm:$0xff]
    %v119 = vld [vmem:[%s0 + $0x141] sm:$0xff]
    %v120 = vld [vmem:[%s0 + $0x151] sm:$0xff]
    %v121 = vld [vmem:[%s0 + $0x159] sm:$0xff]
    %v122 = vld [vmem:[%s0 + $0x169] sm:$0xff]
    %v123 = vld [vmem:[%s0 + $0x171] sm:$0xff]
    %v124 = vld [vmem:[%s0 + $0x1b1] sm:$0xff]
    %v125 = vld [vmem:[%s0 + $0x1b9] sm:$0xff]
    %v126 = vld [vmem:[%s0 + $0x1c9] sm:$0xff]
    %v127 = vld [vmem:[%s0 + $0x1d1] sm:$0xff]
    %v128 = vld [vmem:[%s0 + $0x1e1] sm:$0xff]
    %v129 = vld [vmem:[%s0 + $0x1e9] sm:$0xff]
    %v130 = vld [vmem:[%s0 + $0x1f9] sm:$0xff]
    %v131 = vld [vmem:[%s0 + $0x201] sm:$0xff]
    %v132 = vld [vmem:[%s0 + $0x211] sm:$0xff]
    %v133 = vld [vmem:[%s0 + $0x219] sm:$0xff]
    %v134 = vld [vmem:[%s0 + $0x229] sm:$0xff]
    %v135 = vld [vmem:[%s0 + $0x231] sm:$0xff]
    %v136 = vld [vmem:[%s0 + $0x241] sm:$0xff]
    %v137 = vld [vmem:[%s0 + $0x249] sm:$0xff]
    %v138 = vld [vmem:[%s0 + $0x259] sm:$0xff]
    %v139 = vld [vmem:[%s0 + $0x261] sm:$0xff]
    %v140 = vld [vmem:[%s0 + $0x271] sm:$0xff]
    %v141 = vld [vmem:[%s0 + $0x279] sm:$0xff]
    %v142 = vld [vmem:[%s0 + $0x289] sm:$0xff]
    %v143 = vld [vmem:[%s0 + $0x291] sm:$0xff]
    %v144 = vld [vmem:[%s0 + $0x2a1] sm:$0xff]
    %v145 = vld [vmem:[%s0 + $0x2a9] sm:$0xff]
    %v146 = vld [vmem:[%s0 + $0x2b9] sm:$0xff]
    %v147 = vld [vmem:[%s0 + $0x2c1] sm:$0xff]
    %v148 = vld [vmem:[%s0 + $0x2d1] sm:$0xff]
    %v149 = vld [vmem:[%s0 + $0x2d9] sm:$0xff]
    %v150 = vld [vmem:[%s0 + $0x2e9] sm:$0xff]
    %v151 = vld [vmem:[%s0 + $0x2f1] sm:$0xff]
    %v152 = vld [vmem:[%s0 + $0x301] sm:$0xff]
    %v153 = vld [vmem:[%s0 + $0x309] sm:$0xff]
    %v154 = vld [vmem:[%s0 + $0x319] sm:$0xff]
    %v155 = vld [vmem:[%s0 + $0x321] sm:$0xff]
    %s156 = scalar_lea.vmem %s1, 4
    %v157 = vld [vmem:[%s156] sm:$0xf]
    %vm158 = vcmask 31744
    %v160 = vsel %vm158, %v92, 0
    %v163 = vsel %vm158, %v93, 0
    %v166 = vsel %vm158, %v94, 0
    %v169 = vsel %vm158, %v95, 0
    %v172 = vsel %vm158, %v96, 0
    %v175 = vsel %vm158, %v97, 0
    %v178 = vsel %vm158, %v98, 0
    %v181 = vsel %vm158, %v99, 0
    %v184 = vsel %vm158, %v100, 0
    %v187 = vsel %vm158, %v101, 0
    %v190 = vsel %vm158, %v102, 0
    %v193 = vsel %vm158, %v103, 0
    %v196 = vsel %vm158, %v104, 0
    %v199 = vsel %vm158, %v105, 0
    %v202 = vsel %vm158, %v106, 0
    %v205 = vsel %vm158, %v107, 0
    %v208 = vsel %vm158, %v108, 0
    %v211 = vsel %vm158, %v109, 0
    %v214 = vsel %vm158, %v110, 0
    %v217 = vsel %vm158, %v111, 0
    %v220 = vsel %vm158, %v112, 0
    %v223 = vsel %vm158, %v113, 0
    %v226 = vsel %vm158, %v114, 0
    %v229 = vsel %vm158, %v115, 0
    %v232 = vsel %vm158, %v116, 0
    %v235 = vsel %vm158, %v117, 0
    %v238 = vsel %vm158, %v118, 0
    %v241 = vsel %vm158, %v119, 0
    %v244 = vsel %vm158, %v120, 0
    %v247 = vsel %vm158, %v121, 0
    %v250 = vsel %vm158, %v122, 0
    %v253 = vsel %vm158, %v123, 0
    %v256 = vsel %vm158, %v124, 0
    %v259 = vsel %vm158, %v125, 0
    %v262 = vsel %vm158, %v126, 0
    %v265 = vsel %vm158, %v127, 0
    %v268 = vsel %vm158, %v128, 0
    %v271 = vsel %vm158, %v129, 0
    %v274 = vsel %vm158, %v130, 0
    %v277 = vsel %vm158, %v131, 0
    %v280 = vsel %vm158, %v132, 0
    %v283 = vsel %vm158, %v133, 0
    %v286 = vsel %vm158, %v134, 0
    %v289 = vsel %vm158, %v135, 0
    %v292 = vsel %vm158, %v136, 0
    %v295 = vsel %vm158, %v137, 0
    %v298 = vsel %vm158, %v138, 0
    %v301 = vsel %vm158, %v139, 0
    %v304 = vsel %vm158, %v140, 0
    %v307 = vsel %vm158, %v141, 0
    %v310 = vsel %vm158, %v142, 0
    %v313 = vsel %vm158, %v143, 0
    %v316 = vsel %vm158, %v144, 0
    %v319 = vsel %vm158, %v145, 0
    %v322 = vsel %vm158, %v146, 0
    %v325 = vsel %vm158, %v147, 0
    %v328 = vsel %vm158, %v148, 0
    %v331 = vsel %vm158, %v149, 0
    %v334 = vsel %vm158, %v150, 0
    %v337 = vsel %vm158, %v151, 0
    %v340 = vsel %vm158, %v152, 0
    %v343 = vsel %vm158, %v153, 0
    %v346 = vsel %vm158, %v154, 0
    %v349 = vsel %vm158, %v155, 0
    %vm351 = vcmask 1043456
    %v353 = vsel %vm351, %v157, 0
    %355 = vmatpush.msra.mxu0 0.0
    %356 = vmatpush.msra.mxu0 0.0
    %357 = vmatpush.msra.mxu0 0.0
    %358 = vmatpush.msra.mxu0 0.0
    %359 = vmatpush.msra.mxu0 0.0
    %360 = vmatpush.msra.mxu0 0.0
    %361 = vmatpush.msra.mxu0 0.0
    %362 = vmatpush.msra.mxu0 0.0
    %363 = vmatpush.msra.mxu0 0.0
    %364 = vmatpush.msra.mxu0 0.0
    %365 = vmatpush.msra.mxu0 0.0
    %366 = vmatpush.msra.mxu0 0.0
    %367 = vmatpush.msra.mxu0 0.0
    %368 = vmatpush.msra.mxu0 0.0
    %369 = vmatpush.msra.mxu0 0.0
    %370 = vmatpush.msra.mxu0 %v353
    %371 = vmatmul.f32.gmra.mxu0 %v160
    %v372 = vpop.f32.mrf.mxu0
    %v373 = vadd.f32 0.0, %v372
    %374 = vmatmul.f32.gmra.mxu0 %v163
    %v375 = vpop.f32.mrf.mxu0
    %v376 = vadd.f32 0.0, %v375
    %377 = vmatmul.f32.gmra.mxu0 %v166
    %v378 = vpop.f32.mrf.mxu0
    %v379 = vadd.f32 0.0, %v378
    %380 = vmatmul.f32.gmra.mxu0 %v169
    %v381 = vpop.f32.mrf.mxu0
    %v382 = vadd.f32 0.0, %v381
    %383 = vmatmul.f32.gmra.mxu0 %v172
    %v384 = vpop.f32.mrf.mxu0
    %v385 = vadd.f32 0.0, %v384
    %386 = vmatmul.f32.gmra.mxu0 %v175
    %v387 = vpop.f32.mrf.mxu0
    %v388 = vadd.f32 0.0, %v387
    %389 = vmatmul.f32.gmra.mxu0 %v178
    %v390 = vpop.f32.mrf.mxu0
    %v391 = vadd.f32 0.0, %v390
    %392 = vmatmul.f32.gmra.mxu0 %v181
    %v393 = vpop.f32.mrf.mxu0
    %v394 = vadd.f32 0.0, %v393
    %395 = vmatmul.f32.gmra.mxu0 %v184
    %v396 = vpop.f32.mrf.mxu0
    %v397 = vadd.f32 0.0, %v396
    %398 = vmatmul.f32.gmra.mxu0 %v187
    %v399 = vpop.f32.mrf.mxu0
    %v400 = vadd.f32 0.0, %v399
    %401 = vmatmul.f32.gmra.mxu0 %v190
    %v402 = vpop.f32.mrf.mxu0
    %v403 = vadd.f32 0.0, %v402
    %404 = vmatmul.f32.gmra.mxu0 %v193
    %v405 = vpop.f32.mrf.mxu0
    %v406 = vadd.f32 0.0, %v405
    %407 = vmatmul.f32.gmra.mxu0 %v196
    %v408 = vpop.f32.mrf.mxu0
    %v409 = vadd.f32 0.0, %v408
    %410 = vmatmul.f32.gmra.mxu0 %v199
    %v411 = vpop.f32.mrf.mxu0
    %v412 = vadd.f32 0.0, %v411
    %413 = vmatmul.f32.gmra.mxu0 %v202
    %v414 = vpop.f32.mrf.mxu0
    %v415 = vadd.f32 0.0, %v414
    %416 = vmatmul.f32.gmra.mxu0 %v205
    %v417 = vpop.f32.mrf.mxu0
    %v418 = vadd.f32 0.0, %v417
    %419 = vmatmul.f32.gmra.mxu0 %v208
    %v420 = vpop.f32.mrf.mxu0
    %v421 = vadd.f32 0.0, %v420
    %422 = vmatmul.f32.gmra.mxu0 %v211
    %v423 = vpop.f32.mrf.mxu0
    %v424 = vadd.f32 0.0, %v423
    %425 = vmatmul.f32.gmra.mxu0 %v214
    %v426 = vpop.f32.mrf.mxu0
    %v427 = vadd.f32 0.0, %v426
    %428 = vmatmul.f32.gmra.mxu0 %v217
    %v429 = vpop.f32.mrf.mxu0
    %v430 = vadd.f32 0.0, %v429
    %431 = vmatmul.f32.gmra.mxu0 %v220
    %v432 = vpop.f32.mrf.mxu0
    %v433 = vadd.f32 0.0, %v432
    %434 = vmatmul.f32.gmra.mxu0 %v223
    %v435 = vpop.f32.mrf.mxu0
    %v436 = vadd.f32 0.0, %v435
    %437 = vmatmul.f32.gmra.mxu0 %v226
    %v438 = vpop.f32.mrf.mxu0
    %v439 = vadd.f32 0.0, %v438
    %440 = vmatmul.f32.gmra.mxu0 %v229
    %v441 = vpop.f32.mrf.mxu0
    %v442 = vadd.f32 0.0, %v441
    %443 = vmatmul.f32.gmra.mxu0 %v232
    %v444 = vpop.f32.mrf.mxu0
    %v445 = vadd.f32 0.0, %v444
    %446 = vmatmul.f32.gmra.mxu0 %v235
    %v447 = vpop.f32.mrf.mxu0
    %v448 = vadd.f32 0.0, %v447
    %449 = vmatmul.f32.gmra.mxu0 %v238
    %v450 = vpop.f32.mrf.mxu0
    %v451 = vadd.f32 0.0, %v450
    %452 = vmatmul.f32.gmra.mxu0 %v241
    %v453 = vpop.f32.mrf.mxu0
    %v454 = vadd.f32 0.0, %v453
    %455 = vmatmul.f32.gmra.mxu0 %v244
    %v456 = vpop.f32.mrf.mxu0
    %v457 = vadd.f32 0.0, %v456
    %458 = vmatmul.f32.gmra.mxu0 %v247
    %v459 = vpop.f32.mrf.mxu0
    %v460 = vadd.f32 0.0, %v459
    %461 = vmatmul.f32.gmra.mxu0 %v250
    %v462 = vpop.f32.mrf.mxu0
    %v463 = vadd.f32 0.0, %v462
    %464 = vmatmul.f32.gmra.mxu0 %v253
    %v465 = vpop.f32.mrf.mxu0
    %v466 = vadd.f32 0.0, %v465
    %467 = vmatmul.f32.gmra.mxu0 %v256
    %v468 = vpop.f32.mrf.mxu0
    %v469 = vadd.f32 0.0, %v468
    %470 = vmatmul.f32.gmra.mxu0 %v259
    %v471 = vpop.f32.mrf.mxu0
    %v472 = vadd.f32 0.0, %v471
    %473 = vmatmul.f32.gmra.mxu0 %v262
    %v474 = vpop.f32.mrf.mxu0
    %v475 = vadd.f32 0.0, %v474
    %476 = vmatmul.f32.gmra.mxu0 %v265
    %v477 = vpop.f32.mrf.mxu0
    %v478 = vadd.f32 0.0, %v477
    %479 = vmatmul.f32.gmra.mxu0 %v268
    %v480 = vpop.f32.mrf.mxu0
    %v481 = vadd.f32 0.0, %v480
    %482 = vmatmul.f32.gmra.mxu0 %v271
    %v483 = vpop.f32.mrf.mxu0
    %v484 = vadd.f32 0.0, %v483
    %485 = vmatmul.f32.gmra.mxu0 %v274
    %v486 = vpop.f32.mrf.mxu0
    %v487 = vadd.f32 0.0, %v486
    %488 = vmatmul.f32.gmra.mxu0 %v277
    %v489 = vpop.f32.mrf.mxu0
    %v490 = vadd.f32 0.0, %v489
    %491 = vmatmul.f32.gmra.mxu0 %v280
    %v492 = vpop.f32.mrf.mxu0
    %v493 = vadd.f32 0.0, %v492
    %494 = vmatmul.f32.gmra.mxu0 %v283
    %v495 = vpop.f32.mrf.mxu0
    %v496 = vadd.f32 0.0, %v495
    %497 = vmatmul.f32.gmra.mxu0 %v286
    %v498 = vpop.f32.mrf.mxu0
    %v499 = vadd.f32 0.0, %v498
    %500 = vmatmul.f32.gmra.mxu0 %v289
    %v501 = vpop.f32.mrf.mxu0
    %v502 = vadd.f32 0.0, %v501
    %503 = vmatmul.f32.gmra.mxu0 %v292
    %v504 = vpop.f32.mrf.mxu0
    %v505 = vadd.f32 0.0, %v504
    %506 = vmatmul.f32.gmra.mxu0 %v295
    %v507 = vpop.f32.mrf.mxu0
    %v508 = vadd.f32 0.0, %v507
    %509 = vmatmul.f32.gmra.mxu0 %v298
    %v510 = vpop.f32.mrf.mxu0
    %v511 = vadd.f32 0.0, %v510
    %512 = vmatmul.f32.gmra.mxu0 %v301
    %v513 = vpop.f32.mrf.mxu0
    %v514 = vadd.f32 0.0, %v513
    %515 = vmatmul.f32.gmra.mxu0 %v304
    %v516 = vpop.f32.mrf.mxu0
    %v517 = vadd.f32 0.0, %v516
    %518 = vmatmul.f32.gmra.mxu0 %v307
    %v519 = vpop.f32.mrf.mxu0
    %v520 = vadd.f32 0.0, %v519
    %521 = vmatmul.f32.gmra.mxu0 %v310
    %v522 = vpop.f32.mrf.mxu0
    %v523 = vadd.f32 0.0, %v522
    %524 = vmatmul.f32.gmra.mxu0 %v313
    %v525 = vpop.f32.mrf.mxu0
    %v526 = vadd.f32 0.0, %v525
    %527 = vmatmul.f32.gmra.mxu0 %v316
    %v528 = vpop.f32.mrf.mxu0
    %v529 = vadd.f32 0.0, %v528
    %530 = vmatmul.f32.gmra.mxu0 %v319
    %v531 = vpop.f32.mrf.mxu0
    %v532 = vadd.f32 0.0, %v531
    %533 = vmatmul.f32.gmra.mxu0 %v322
    %v534 = vpop.f32.mrf.mxu0
    %v535 = vadd.f32 0.0, %v534
    %536 = vmatmul.f32.gmra.mxu0 %v325
    %v537 = vpop.f32.mrf.mxu0
    %v538 = vadd.f32 0.0, %v537
    %539 = vmatmul.f32.gmra.mxu0 %v328
    %v540 = vpop.f32.mrf.mxu0
    %v541 = vadd.f32 0.0, %v540
    %542 = vmatmul.f32.gmra.mxu0 %v331
    %v543 = vpop.f32.mrf.mxu0
    %v544 = vadd.f32 0.0, %v543
    %545 = vmatmul.f32.gmra.mxu0 %v334
    %v546 = vpop.f32.mrf.mxu0
    %v547 = vadd.f32 0.0, %v546
    %548 = vmatmul.f32.gmra.mxu0 %v337
    %v549 = vpop.f32.mrf.mxu0
    %v550 = vadd.f32 0.0, %v549
    %551 = vmatmul.f32.gmra.mxu0 %v340
    %v552 = vpop.f32.mrf.mxu0
    %v553 = vadd.f32 0.0, %v552
    %554 = vmatmul.f32.gmra.mxu0 %v343
    %v555 = vpop.f32.mrf.mxu0
    %v556 = vadd.f32 0.0, %v555
    %557 = vmatmul.f32.gmra.mxu0 %v346
    %v558 = vpop.f32.mrf.mxu0
    %v559 = vadd.f32 0.0, %v558
    %560 = vmatmul.f32.gmra.mxu0 %v349
    %v561 = vpop.f32.mrf.mxu0
    %v562 = vadd.f32 0.0, %v561
    %563 = vdwg.mxu0
    %v565 = vsel %vm158, %v27, 0
    %v568 = vsel %vm158, %v28, 0
    %v571 = vsel %vm158, %v29, 0
    %v574 = vsel %vm158, %v30, 0
    %v577 = vsel %vm158, %v31, 0
    %v580 = vsel %vm158, %v32, 0
    %v583 = vsel %vm158, %v33, 0
    %v586 = vsel %vm158, %v34, 0
    %v589 = vsel %vm158, %v35, 0
    %v592 = vsel %vm158, %v36, 0
    %v595 = vsel %vm158, %v37, 0
    %v598 = vsel %vm158, %v38, 0
    %v601 = vsel %vm158, %v39, 0
    %v604 = vsel %vm158, %v40, 0
    %v607 = vsel %vm158, %v41, 0
    %v610 = vsel %vm158, %v42, 0
    %v613 = vsel %vm158, %v43, 0
    %v616 = vsel %vm158, %v44, 0
    %v619 = vsel %vm158, %v45, 0
    %v622 = vsel %vm158, %v46, 0
    %v625 = vsel %vm158, %v47, 0
    %v628 = vsel %vm158, %v48, 0
    %v631 = vsel %vm158, %v49, 0
    %v634 = vsel %vm158, %v50, 0
    %v637 = vsel %vm158, %v51, 0
    %v640 = vsel %vm158, %v52, 0
    %v643 = vsel %vm158, %v53, 0
    %v646 = vsel %vm158, %v54, 0
    %v649 = vsel %vm158, %v55, 0
    %v652 = vsel %vm158, %v56, 0
    %v655 = vsel %vm158, %v57, 0
    %v658 = vsel %vm158, %v58, 0
    %v661 = vsel %vm158, %v59, 0
    %v664 = vsel %vm158, %v60, 0
    %v667 = vsel %vm158, %v61, 0
    %v670 = vsel %vm158, %v62, 0
    %v673 = vsel %vm158, %v63, 0
    %v676 = vsel %vm158, %v64, 0
    %v679 = vsel %vm158, %v65, 0
    %v682 = vsel %vm158, %v66, 0
    %v685 = vsel %vm158, %v67, 0
    %v688 = vsel %vm158, %v68, 0
    %v691 = vsel %vm158, %v69, 0
    %v694 = vsel %vm158, %v70, 0
    %v697 = vsel %vm158, %v71, 0
    %v700 = vsel %vm158, %v72, 0
    %v703 = vsel %vm158, %v73, 0
    %v706 = vsel %vm158, %v74, 0
    %v709 = vsel %vm158, %v75, 0
    %v712 = vsel %vm158, %v76, 0
    %v715 = vsel %vm158, %v77, 0
    %v718 = vsel %vm158, %v78, 0
    %v721 = vsel %vm158, %v79, 0
    %v724 = vsel %vm158, %v80, 0
    %v727 = vsel %vm158, %v81, 0
    %v730 = vsel %vm158, %v82, 0
    %v733 = vsel %vm158, %v83, 0
    %v736 = vsel %vm158, %v84, 0
    %v739 = vsel %vm158, %v85, 0
    %v742 = vsel %vm158, %v86, 0
    %v745 = vsel %vm158, %v87, 0
    %v748 = vsel %vm158, %v88, 0
    %v751 = vsel %vm158, %v89, 0
    %v754 = vsel %vm158, %v90, 0
    %v757 = vsel %vm351, %v91, 0
    %759 = vmatpush.msra.mxu0 0.0
    %760 = vmatpush.msra.mxu0 0.0
    %761 = vmatpush.msra.mxu0 0.0
    %762 = vmatpush.msra.mxu0 0.0
    %763 = vmatpush.msra.mxu0 0.0
    %764 = vmatpush.msra.mxu0 0.0
    %765 = vmatpush.msra.mxu0 0.0
    %766 = vmatpush.msra.mxu0 0.0
    %767 = vmatpush.msra.mxu0 0.0
    %768 = vmatpush.msra.mxu0 0.0
    %769 = vmatpush.msra.mxu0 0.0
    %770 = vmatpush.msra.mxu0 0.0
    %771 = vmatpush.msra.mxu0 0.0
    %772 = vmatpush.msra.mxu0 0.0
    %773 = vmatpush.msra.mxu0 0.0
    %774 = vmatpush.msra.mxu0 %v757
    %775 = vmatmul.f32.gmra.mxu0 %v565
    %v776 = vpop.f32.mrf.mxu0
    %v777 = vadd.f32 %v373, %v776
    %778 = vmatmul.f32.gmra.mxu0 %v568
    %v779 = vpop.f32.mrf.mxu0
    %v780 = vadd.f32 %v376, %v779
    %781 = vmatmul.f32.gmra.mxu0 %v571
    %v782 = vpop.f32.mrf.mxu0
    %v783 = vadd.f32 %v379, %v782
    %784 = vmatmul.f32.gmra.mxu0 %v574
    %v785 = vpop.f32.mrf.mxu0
    %v786 = vadd.f32 %v382, %v785
    %787 = vmatmul.f32.gmra.mxu0 %v577
    %v788 = vpop.f32.mrf.mxu0
    %v789 = vadd.f32 %v385, %v788
    %790 = vmatmul.f32.gmra.mxu0 %v580
    %v791 = vpop.f32.mrf.mxu0
    %v792 = vadd.f32 %v388, %v791
    %793 = vmatmul.f32.gmra.mxu0 %v583
    %v794 = vpop.f32.mrf.mxu0
    %v795 = vadd.f32 %v391, %v794
    %796 = vmatmul.f32.gmra.mxu0 %v586
    %v797 = vpop.f32.mrf.mxu0
    %v798 = vadd.f32 %v394, %v797
    %799 = vmatmul.f32.gmra.mxu0 %v589
    %v800 = vpop.f32.mrf.mxu0
    %v801 = vadd.f32 %v397, %v800
    %802 = vmatmul.f32.gmra.mxu0 %v592
    %v803 = vpop.f32.mrf.mxu0
    %v804 = vadd.f32 %v400, %v803
    %805 = vmatmul.f32.gmra.mxu0 %v595
    %v806 = vpop.f32.mrf.mxu0
    %v807 = vadd.f32 %v403, %v806
    %808 = vmatmul.f32.gmra.mxu0 %v598
    %v809 = vpop.f32.mrf.mxu0
    %v810 = vadd.f32 %v406, %v809
    %811 = vmatmul.f32.gmra.mxu0 %v601
    %v812 = vpop.f32.mrf.mxu0
    %v813 = vadd.f32 %v409, %v812
    %814 = vmatmul.f32.gmra.mxu0 %v604
    %v815 = vpop.f32.mrf.mxu0
    %v816 = vadd.f32 %v412, %v815
    %817 = vmatmul.f32.gmra.mxu0 %v607
    %v818 = vpop.f32.mrf.mxu0
    %v819 = vadd.f32 %v415, %v818
    %820 = vmatmul.f32.gmra.mxu0 %v610
    %v821 = vpop.f32.mrf.mxu0
    %v822 = vadd.f32 %v418, %v821
    %823 = vmatmul.f32.gmra.mxu0 %v613
    %v824 = vpop.f32.mrf.mxu0
    %v825 = vadd.f32 %v421, %v824
    %826 = vmatmul.f32.gmra.mxu0 %v616
    %v827 = vpop.f32.mrf.mxu0
    %v828 = vadd.f32 %v424, %v827
    %829 = vmatmul.f32.gmra.mxu0 %v619
    %v830 = vpop.f32.mrf.mxu0
    %v831 = vadd.f32 %v427, %v830
    %832 = vmatmul.f32.gmra.mxu0 %v622
    %v833 = vpop.f32.mrf.mxu0
    %v834 = vadd.f32 %v430, %v833
    %835 = vmatmul.f32.gmra.mxu0 %v625
    %v836 = vpop.f32.mrf.mxu0
    %v837 = vadd.f32 %v433, %v836
    %838 = vmatmul.f32.gmra.mxu0 %v628
    %v839 = vpop.f32.mrf.mxu0
    %v840 = vadd.f32 %v436, %v839
    %841 = vmatmul.f32.gmra.mxu0 %v631
    %v842 = vpop.f32.mrf.mxu0
    %v843 = vadd.f32 %v439, %v842
    %844 = vmatmul.f32.gmra.mxu0 %v634
    %v845 = vpop.f32.mrf.mxu0
    %v846 = vadd.f32 %v442, %v845
    %847 = vmatmul.f32.gmra.mxu0 %v637
    %v848 = vpop.f32.mrf.mxu0
    %v849 = vadd.f32 %v445, %v848
    %850 = vmatmul.f32.gmra.mxu0 %v640
    %v851 = vpop.f32.mrf.mxu0
    %v852 = vadd.f32 %v448, %v851
    %853 = vmatmul.f32.gmra.mxu0 %v643
    %v854 = vpop.f32.mrf.mxu0
    %v855 = vadd.f32 %v451, %v854
    %856 = vmatmul.f32.gmra.mxu0 %v646
    %v857 = vpop.f32.mrf.mxu0
    %v858 = vadd.f32 %v454, %v857
    %859 = vmatmul.f32.gmra.mxu0 %v649
    %v860 = vpop.f32.mrf.mxu0
    %v861 = vadd.f32 %v457, %v860
    %862 = vmatmul.f32.gmra.mxu0 %v652
    %v863 = vpop.f32.mrf.mxu0
    %v864 = vadd.f32 %v460, %v863
    %865 = vmatmul.f32.gmra.mxu0 %v655
    %v866 = vpop.f32.mrf.mxu0
    %v867 = vadd.f32 %v463, %v866
    %868 = vmatmul.f32.gmra.mxu0 %v658
    %v869 = vpop.f32.mrf.mxu0
    %v870 = vadd.f32 %v466, %v869
    %871 = vmatmul.f32.gmra.mxu0 %v661
    %v872 = vpop.f32.mrf.mxu0
    %v873 = vadd.f32 %v469, %v872
    %874 = vmatmul.f32.gmra.mxu0 %v664
    %v875 = vpop.f32.mrf.mxu0
    %v876 = vadd.f32 %v472, %v875
    %877 = vmatmul.f32.gmra.mxu0 %v667
    %v878 = vpop.f32.mrf.mxu0
    %v879 = vadd.f32 %v475, %v878
    %880 = vmatmul.f32.gmra.mxu0 %v670
    %v881 = vpop.f32.mrf.mxu0
    %v882 = vadd.f32 %v478, %v881
    %883 = vmatmul.f32.gmra.mxu0 %v673
    %v884 = vpop.f32.mrf.mxu0
    %v885 = vadd.f32 %v481, %v884
    %886 = vmatmul.f32.gmra.mxu0 %v676
    %v887 = vpop.f32.mrf.mxu0
    %v888 = vadd.f32 %v484, %v887
    %889 = vmatmul.f32.gmra.mxu0 %v679
    %v890 = vpop.f32.mrf.mxu0
    %v891 = vadd.f32 %v487, %v890
    %892 = vmatmul.f32.gmra.mxu0 %v682
    %v893 = vpop.f32.mrf.mxu0
    %v894 = vadd.f32 %v490, %v893
    %895 = vmatmul.f32.gmra.mxu0 %v685
    %v896 = vpop.f32.mrf.mxu0
    %v897 = vadd.f32 %v493, %v896
    %898 = vmatmul.f32.gmra.mxu0 %v688
    %v899 = vpop.f32.mrf.mxu0
    %v900 = vadd.f32 %v496, %v899
    %901 = vmatmul.f32.gmra.mxu0 %v691
    %v902 = vpop.f32.mrf.mxu0
    %v903 = vadd.f32 %v499, %v902
    %904 = vmatmul.f32.gmra.mxu0 %v694
    %v905 = vpop.f32.mrf.mxu0
    %v906 = vadd.f32 %v502, %v905
    %907 = vmatmul.f32.gmra.mxu0 %v697
    %v908 = vpop.f32.mrf.mxu0
    %v909 = vadd.f32 %v505, %v908
    %910 = vmatmul.f32.gmra.mxu0 %v700
    %v911 = vpop.f32.mrf.mxu0
    %v912 = vadd.f32 %v508, %v911
    %913 = vmatmul.f32.gmra.mxu0 %v703
    %v914 = vpop.f32.mrf.mxu0
    %v915 = vadd.f32 %v511, %v914
    %916 = vmatmul.f32.gmra.mxu0 %v706
    %v917 = vpop.f32.mrf.mxu0
    %v918 = vadd.f32 %v514, %v917
    %919 = vmatmul.f32.gmra.mxu0 %v709
    %v920 = vpop.f32.mrf.mxu0
    %v921 = vadd.f32 %v517, %v920
    %922 = vmatmul.f32.gmra.mxu0 %v712
    %v923 = vpop.f32.mrf.mxu0
    %v924 = vadd.f32 %v520, %v923
    %925 = vmatmul.f32.gmra.mxu0 %v715
    %v926 = vpop.f32.mrf.mxu0
    %v927 = vadd.f32 %v523, %v926
    %928 = vmatmul.f32.gmra.mxu0 %v718
    %v929 = vpop.f32.mrf.mxu0
    %v930 = vadd.f32 %v526, %v929
    %931 = vmatmul.f32.gmra.mxu0 %v721
    %v932 = vpop.f32.mrf.mxu0
    %v933 = vadd.f32 %v529, %v932
    %934 = vmatmul.f32.gmra.mxu0 %v724
    %v935 = vpop.f32.mrf.mxu0
    %v936 = vadd.f32 %v532, %v935
    %937 = vmatmul.f32.gmra.mxu0 %v727
    %v938 = vpop.f32.mrf.mxu0
    %v939 = vadd.f32 %v535, %v938
    %940 = vmatmul.f32.gmra.mxu0 %v730
    %v941 = vpop.f32.mrf.mxu0
    %v942 = vadd.f32 %v538, %v941
    %943 = vmatmul.f32.gmra.mxu0 %v733
    %v944 = vpop.f32.mrf.mxu0
    %v945 = vadd.f32 %v541, %v944
    %946 = vmatmul.f32.gmra.mxu0 %v736
    %v947 = vpop.f32.mrf.mxu0
    %v948 = vadd.f32 %v544, %v947
    %949 = vmatmul.f32.gmra.mxu0 %v739
    %v950 = vpop.f32.mrf.mxu0
    %v951 = vadd.f32 %v547, %v950
    %952 = vmatmul.f32.gmra.mxu0 %v742
    %v953 = vpop.f32.mrf.mxu0
    %v954 = vadd.f32 %v550, %v953
    %955 = vmatmul.f32.gmra.mxu0 %v745
    %v956 = vpop.f32.mrf.mxu0
    %v957 = vadd.f32 %v553, %v956
    %958 = vmatmul.f32.gmra.mxu0 %v748
    %v959 = vpop.f32.mrf.mxu0
    %v960 = vadd.f32 %v556, %v959
    %961 = vmatmul.f32.gmra.mxu0 %v751
    %v962 = vpop.f32.mrf.mxu0
    %v963 = vadd.f32 %v559, %v962
    %964 = vmatmul.f32.gmra.mxu0 %v754
    %v965 = vpop.f32.mrf.mxu0
    %v966 = vadd.f32 %v562, %v965
    %967 = vdwg.mxu0
    %v968 = vld [vmem:[%s0 + $0x2] sm:$0xff]
    %v969 = vld [vmem:[%s0 + $0xa] sm:$0xff]
    %v970 = vld [vmem:[%s0 + $0x1a] sm:$0xff]
    %v971 = vld [vmem:[%s0 + $0x22] sm:$0xff]
    %v972 = vld [vmem:[%s0 + $0x32] sm:$0xff]
    %v973 = vld [vmem:[%s0 + $0x3a] sm:$0xff]
    %v974 = vld [vmem:[%s0 + $0x4a] sm:$0xff]
    %v975 = vld [vmem:[%s0 + $0x52] sm:$0xff]
    %v976 = vld [vmem:[%s0 + $0x62] sm:$0xff]
    %v977 = vld [vmem:[%s0 + $0x6a] sm:$0xff]
    %v978 = vld [vmem:[%s0 + $0x7a] sm:$0xff]
    %v979 = vld [vmem:[%s0 + $0x82] sm:$0xff]
    %v980 = vld [vmem:[%s0 + $0x92] sm:$0xff]
    %v981 = vld [vmem:[%s0 + $0x9a] sm:$0xff]
    %v982 = vld [vmem:[%s0 + $0xaa] sm:$0xff]
    %v983 = vld [vmem:[%s0 + $0xb2] sm:$0xff]
    %v984 = vld [vmem:[%s0 + $0xc2] sm:$0xff]
    %v985 = vld [vmem:[%s0 + $0xca] sm:$0xff]
    %v986 = vld [vmem:[%s0 + $0xda] sm:$0xff]
    %v987 = vld [vmem:[%s0 + $0xe2] sm:$0xff]
    %v988 = vld [vmem:[%s0 + $0xf2] sm:$0xff]
    %v989 = vld [vmem:[%s0 + $0xfa] sm:$0xff]
    %v990 = vld [vmem:[%s0 + $0x10a] sm:$0xff]
    %v991 = vld [vmem:[%s0 + $0x112] sm:$0xff]
    %v992 = vld [vmem:[%s0 + $0x122] sm:$0xff]
    %v993 = vld [vmem:[%s0 + $0x12a] sm:$0xff]
    %v994 = vld [vmem:[%s0 + $0x13a] sm:$0xff]
    %v995 = vld [vmem:[%s0 + $0x142] sm:$0xff]
    %v996 = vld [vmem:[%s0 + $0x152] sm:$0xff]
    %v997 = vld [vmem:[%s0 + $0x15a] sm:$0xff]
    %v998 = vld [vmem:[%s0 + $0x16a] sm:$0xff]
    %v999 = vld [vmem:[%s0 + $0x172] sm:$0xff]
    %v1000 = vld [vmem:[%s0 + $0x1b2] sm:$0xff]
    %v1001 = vld [vmem:[%s0 + $0x1ba] sm:$0xff]
    %v1002 = vld [vmem:[%s0 + $0x1ca] sm:$0xff]
    %v1003 = vld [vmem:[%s0 + $0x1d2] sm:$0xff]
    %v1004 = vld [vmem:[%s0 + $0x1e2] sm:$0xff]
    %v1005 = vld [vmem:[%s0 + $0x1ea] sm:$0xff]
    %v1006 = vld [vmem:[%s0 + $0x1fa] sm:$0xff]
    %v1007 = vld [vmem:[%s0 + $0x202] sm:$0xff]
    %v1008 = vld [vmem:[%s0 + $0x212] sm:$0xff]
    %v1009 = vld [vmem:[%s0 + $0x21a] sm:$0xff]
    %v1010 = vld [vmem:[%s0 + $0x22a] sm:$0xff]
    %v1011 = vld [vmem:[%s0 + $0x232] sm:$0xff]
    %v1012 = vld [vmem:[%s0 + $0x242] sm:$0xff]
    %v1013 = vld [vmem:[%s0 + $0x24a] sm:$0xff]
    %v1014 = vld [vmem:[%s0 + $0x25a] sm:$0xff]
    %v1015 = vld [vmem:[%s0 + $0x262] sm:$0xff]
    %v1016 = vld [vmem:[%s0 + $0x272] sm:$0xff]
    %v1017 = vld [vmem:[%s0 + $0x27a] sm:$0xff]
    %v1018 = vld [vmem:[%s0 + $0x28a] sm:$0xff]
    %v1019 = vld [vmem:[%s0 + $0x292] sm:$0xff]
    %v1020 = vld [vmem:[%s0 + $0x2a2] sm:$0xff]
    %v1021 = vld [vmem:[%s0 + $0x2aa] sm:$0xff]
    %v1022 = vld [vmem:[%s0 + $0x2ba] sm:$0xff]
    %v1023 = vld [vmem:[%s0 + $0x2c2] sm:$0xff]
    %v1024 = vld [vmem:[%s0 + $0x2d2] sm:$0xff]
    %v1025 = vld [vmem:[%s0 + $0x2da] sm:$0xff]
    %v1026 = vld [vmem:[%s0 + $0x2ea] sm:$0xff]
    %v1027 = vld [vmem:[%s0 + $0x2f2] sm:$0xff]
    %v1028 = vld [vmem:[%s0 + $0x302] sm:$0xff]
    %v1029 = vld [vmem:[%s0 + $0x30a] sm:$0xff]
    %v1030 = vld [vmem:[%s0 + $0x31a] sm:$0xff]
    %v1031 = vld [vmem:[%s0 + $0x322] sm:$0xff]
    %s1032 = scalar_lea.vmem %s1, 8
    %v1033 = vld [vmem:[%s1032] sm:$0xf]
    %v1035 = vsel %vm158, %v968, 0
    %v1038 = vsel %vm158, %v969, 0
    %v1041 = vsel %vm158, %v970, 0
    %v1044 = vsel %vm158, %v971, 0
    %v1047 = vsel %vm158, %v972, 0
    %v1050 = vsel %vm158, %v973, 0
    %v1053 = vsel %vm158, %v974, 0
    %v1056 = vsel %vm158, %v975, 0
    %v1059 = vsel %vm158, %v976, 0
    %v1062 = vsel %vm158, %v977, 0
    %v1065 = vsel %vm158, %v978, 0
    %v1068 = vsel %vm158, %v979, 0
    %v1071 = vsel %vm158, %v980, 0
    %v1074 = vsel %vm158, %v981, 0
    %v1077 = vsel %vm158, %v982, 0
    %v1080 = vsel %vm158, %v983, 0
    %v1083 = vsel %vm158, %v984, 0
    %v1086 = vsel %vm158, %v985, 0
    %v1089 = vsel %vm158, %v986, 0
    %v1092 = vsel %vm158, %v987, 0
    %v1095 = vsel %vm158, %v988, 0
    %v1098 = vsel %vm158, %v989, 0
    %v1101 = vsel %vm158, %v990, 0
    %v1104 = vsel %vm158, %v991, 0
    %v1107 = vsel %vm158, %v992, 0
    %v1110 = vsel %vm158, %v993, 0
    %v1113 = vsel %vm158, %v994, 0
    %v1116 = vsel %vm158, %v995, 0
    %v1119 = vsel %vm158, %v996, 0
    %v1122 = vsel %vm158, %v997, 0
    %v1125 = vsel %vm158, %v998, 0
    %v1128 = vsel %vm158, %v999, 0
    %v1131 = vsel %vm158, %v1000, 0
    %v1134 = vsel %vm158, %v1001, 0
    %v1137 = vsel %vm158, %v1002, 0
    %v1140 = vsel %vm158, %v1003, 0
    %v1143 = vsel %vm158, %v1004, 0
    %v1146 = vsel %vm158, %v1005, 0
    %v1149 = vsel %vm158, %v1006, 0
    %v1152 = vsel %vm158, %v1007, 0
    %v1155 = vsel %vm158, %v1008, 0
    %v1158 = vsel %vm158, %v1009, 0
    %v1161 = vsel %vm158, %v1010, 0
    %v1164 = vsel %vm158, %v1011, 0
    %v1167 = vsel %vm158, %v1012, 0
    %v1170 = vsel %vm158, %v1013, 0
    %v1173 = vsel %vm158, %v1014, 0
    %v1176 = vsel %vm158, %v1015, 0
    %v1179 = vsel %vm158, %v1016, 0
    %v1182 = vsel %vm158, %v1017, 0
    %v1185 = vsel %vm158, %v1018, 0
    %v1188 = vsel %vm158, %v1019, 0
    %v1191 = vsel %vm158, %v1020, 0
    %v1194 = vsel %vm158, %v1021, 0
    %v1197 = vsel %vm158, %v1022, 0
    %v1200 = vsel %vm158, %v1023, 0
    %v1203 = vsel %vm158, %v1024, 0
    %v1206 = vsel %vm158, %v1025, 0
    %v1209 = vsel %vm158, %v1026, 0
    %v1212 = vsel %vm158, %v1027, 0
    %v1215 = vsel %vm158, %v1028, 0
    %v1218 = vsel %vm158, %v1029, 0
    %v1221 = vsel %vm158, %v1030, 0
    %v1224 = vsel %vm158, %v1031, 0
    %v1227 = vsel %vm351, %v1033, 0
    %1229 = vmatpush.msra.mxu0 0.0
    %1230 = vmatpush.msra.mxu0 0.0
    %1231 = vmatpush.msra.mxu0 0.0
    %1232 = vmatpush.msra.mxu0 0.0
    %1233 = vmatpush.msra.mxu0 0.0
    %1234 = vmatpush.msra.mxu0 0.0
    %1235 = vmatpush.msra.mxu0 0.0
    %1236 = vmatpush.msra.mxu0 0.0
    %1237 = vmatpush.msra.mxu0 0.0
    %1238 = vmatpush.msra.mxu0 0.0
    %1239 = vmatpush.msra.mxu0 0.0
    %1240 = vmatpush.msra.mxu0 0.0
    %1241 = vmatpush.msra.mxu0 0.0
    %1242 = vmatpush.msra.mxu0 0.0
    %1243 = vmatpush.msra.mxu0 0.0
    %1244 = vmatpush.msra.mxu0 %v1227
    %1245 = vmatmul.f32.gmra.mxu0 %v1035
    %v1246 = vpop.f32.mrf.mxu0
    %v1247 = vadd.f32 0.0, %v1246
    %1248 = vmatmul.f32.gmra.mxu0 %v1038
    %v1249 = vpop.f32.mrf.mxu0
    %v1250 = vadd.f32 0.0, %v1249
    %1251 = vmatmul.f32.gmra.mxu0 %v1041
    %v1252 = vpop.f32.mrf.mxu0
    %v1253 = vadd.f32 0.0, %v1252
    %1254 = vmatmul.f32.gmra.mxu0 %v1044
    %v1255 = vpop.f32.mrf.mxu0
    %v1256 = vadd.f32 0.0, %v1255
    %1257 = vmatmul.f32.gmra.mxu0 %v1047
    %v1258 = vpop.f32.mrf.mxu0
    %v1259 = vadd.f32 0.0, %v1258
    %1260 = vmatmul.f32.gmra.mxu0 %v1050
    %v1261 = vpop.f32.mrf.mxu0
    %v1262 = vadd.f32 0.0, %v1261
    %1263 = vmatmul.f32.gmra.mxu0 %v1053
    %v1264 = vpop.f32.mrf.mxu0
    %v1265 = vadd.f32 0.0, %v1264
    %1266 = vmatmul.f32.gmra.mxu0 %v1056
    %v1267 = vpop.f32.mrf.mxu0
    %v1268 = vadd.f32 0.0, %v1267
    %1269 = vmatmul.f32.gmra.mxu0 %v1059
    %v1270 = vpop.f32.mrf.mxu0
    %v1271 = vadd.f32 0.0, %v1270
    %1272 = vmatmul.f32.gmra.mxu0 %v1062
    %v1273 = vpop.f32.mrf.mxu0
    %v1274 = vadd.f32 0.0, %v1273
    %1275 = vmatmul.f32.gmra.mxu0 %v1065
    %v1276 = vpop.f32.mrf.mxu0
    %v1277 = vadd.f32 0.0, %v1276
    %1278 = vmatmul.f32.gmra.mxu0 %v1068
    %v1279 = vpop.f32.mrf.mxu0
    %v1280 = vadd.f32 0.0, %v1279
    %1281 = vmatmul.f32.gmra.mxu0 %v1071
    %v1282 = vpop.f32.mrf.mxu0
    %v1283 = vadd.f32 0.0, %v1282
    %1284 = vmatmul.f32.gmra.mxu0 %v1074
    %v1285 = vpop.f32.mrf.mxu0
    %v1286 = vadd.f32 0.0, %v1285
    %1287 = vmatmul.f32.gmra.mxu0 %v1077
    %v1288 = vpop.f32.mrf.mxu0
    %v1289 = vadd.f32 0.0, %v1288
    %1290 = vmatmul.f32.gmra.mxu0 %v1080
    %v1291 = vpop.f32.mrf.mxu0
    %v1292 = vadd.f32 0.0, %v1291
    %1293 = vmatmul.f32.gmra.mxu0 %v1083
    %v1294 = vpop.f32.mrf.mxu0
    %v1295 = vadd.f32 0.0, %v1294
    %1296 = vmatmul.f32.gmra.mxu0 %v1086
    %v1297 = vpop.f32.mrf.mxu0
    %v1298 = vadd.f32 0.0, %v1297
    %1299 = vmatmul.f32.gmra.mxu0 %v1089
    %v1300 = vpop.f32.mrf.mxu0
    %v1301 = vadd.f32 0.0, %v1300
    %1302 = vmatmul.f32.gmra.mxu0 %v1092
    %v1303 = vpop.f32.mrf.mxu0
    %v1304 = vadd.f32 0.0, %v1303
    %1305 = vmatmul.f32.gmra.mxu0 %v1095
    %v1306 = vpop.f32.mrf.mxu0
    %v1307 = vadd.f32 0.0, %v1306
    %1308 = vmatmul.f32.gmra.mxu0 %v1098
    %v1309 = vpop.f32.mrf.mxu0
    %v1310 = vadd.f32 0.0, %v1309
    %1311 = vmatmul.f32.gmra.mxu0 %v1101
    %v1312 = vpop.f32.mrf.mxu0
    %v1313 = vadd.f32 0.0, %v1312
    %1314 = vmatmul.f32.gmra.mxu0 %v1104
    %v1315 = vpop.f32.mrf.mxu0
    %v1316 = vadd.f32 0.0, %v1315
    %1317 = vmatmul.f32.gmra.mxu0 %v1107
    %v1318 = vpop.f32.mrf.mxu0
    %v1319 = vadd.f32 0.0, %v1318
    %1320 = vmatmul.f32.gmra.mxu0 %v1110
    %v1321 = vpop.f32.mrf.mxu0
    %v1322 = vadd.f32 0.0, %v1321
    %1323 = vmatmul.f32.gmra.mxu0 %v1113
    %v1324 = vpop.f32.mrf.mxu0
    %v1325 = vadd.f32 0.0, %v1324
    %1326 = vmatmul.f32.gmra.mxu0 %v1116
    %v1327 = vpop.f32.mrf.mxu0
    %v1328 = vadd.f32 0.0, %v1327
    %1329 = vmatmul.f32.gmra.mxu0 %v1119
    %v1330 = vpop.f32.mrf.mxu0
    %v1331 = vadd.f32 0.0, %v1330
    %1332 = vmatmul.f32.gmra.mxu0 %v1122
    %v1333 = vpop.f32.mrf.mxu0
    %v1334 = vadd.f32 0.0, %v1333
    %1335 = vmatmul.f32.gmra.mxu0 %v1125
    %v1336 = vpop.f32.mrf.mxu0
    %v1337 = vadd.f32 0.0, %v1336
    %1338 = vmatmul.f32.gmra.mxu0 %v1128
    %v1339 = vpop.f32.mrf.mxu0
    %v1340 = vadd.f32 0.0, %v1339
    %1341 = vmatmul.f32.gmra.mxu0 %v1131
    %v1342 = vpop.f32.mrf.mxu0
    %v1343 = vadd.f32 0.0, %v1342
    %1344 = vmatmul.f32.gmra.mxu0 %v1134
    %v1345 = vpop.f32.mrf.mxu0
    %v1346 = vadd.f32 0.0, %v1345
    %1347 = vmatmul.f32.gmra.mxu0 %v1137
    %v1348 = vpop.f32.mrf.mxu0
    %v1349 = vadd.f32 0.0, %v1348
    %1350 = vmatmul.f32.gmra.mxu0 %v1140
    %v1351 = vpop.f32.mrf.mxu0
    %v1352 = vadd.f32 0.0, %v1351
    %1353 = vmatmul.f32.gmra.mxu0 %v1143
    %v1354 = vpop.f32.mrf.mxu0
    %v1355 = vadd.f32 0.0, %v1354
    %1356 = vmatmul.f32.gmra.mxu0 %v1146
    %v1357 = vpop.f32.mrf.mxu0
    %v1358 = vadd.f32 0.0, %v1357
    %1359 = vmatmul.f32.gmra.mxu0 %v1149
    %v1360 = vpop.f32.mrf.mxu0
    %v1361 = vadd.f32 0.0, %v1360
    %1362 = vmatmul.f32.gmra.mxu0 %v1152
    %v1363 = vpop.f32.mrf.mxu0
    %v1364 = vadd.f32 0.0, %v1363
    %1365 = vmatmul.f32.gmra.mxu0 %v1155
    %v1366 = vpop.f32.mrf.mxu0
    %v1367 = vadd.f32 0.0, %v1366
    %1368 = vmatmul.f32.gmra.mxu0 %v1158
    %v1369 = vpop.f32.mrf.mxu0
    %v1370 = vadd.f32 0.0, %v1369
    %1371 = vmatmul.f32.gmra.mxu0 %v1161
    %v1372 = vpop.f32.mrf.mxu0
    %v1373 = vadd.f32 0.0, %v1372
    %1374 = vmatmul.f32.gmra.mxu0 %v1164
    %v1375 = vpop.f32.mrf.mxu0
    %v1376 = vadd.f32 0.0, %v1375
    %1377 = vmatmul.f32.gmra.mxu0 %v1167
    %v1378 = vpop.f32.mrf.mxu0
    %v1379 = vadd.f32 0.0, %v1378
    %1380 = vmatmul.f32.gmra.mxu0 %v1170
    %v1381 = vpop.f32.mrf.mxu0
    %v1382 = vadd.f32 0.0, %v1381
    %1383 = vmatmul.f32.gmra.mxu0 %v1173
    %v1384 = vpop.f32.mrf.mxu0
    %v1385 = vadd.f32 0.0, %v1384
    %1386 = vmatmul.f32.gmra.mxu0 %v1176
    %v1387 = vpop.f32.mrf.mxu0
    %v1388 = vadd.f32 0.0, %v1387
    %1389 = vmatmul.f32.gmra.mxu0 %v1179
    %v1390 = vpop.f32.mrf.mxu0
    %v1391 = vadd.f32 0.0, %v1390
    %1392 = vmatmul.f32.gmra.mxu0 %v1182
    %v1393 = vpop.f32.mrf.mxu0
    %v1394 = vadd.f32 0.0, %v1393
    %1395 = vmatmul.f32.gmra.mxu0 %v1185
    %v1396 = vpop.f32.mrf.mxu0
    %v1397 = vadd.f32 0.0, %v1396
    %1398 = vmatmul.f32.gmra.mxu0 %v1188
    %v1399 = vpop.f32.mrf.mxu0
    %v1400 = vadd.f32 0.0, %v1399
    %1401 = vmatmul.f32.gmra.mxu0 %v1191
    %v1402 = vpop.f32.mrf.mxu0
    %v1403 = vadd.f32 0.0, %v1402
    %1404 = vmatmul.f32.gmra.mxu0 %v1194
    %v1405 = vpop.f32.mrf.mxu0
    %v1406 = vadd.f32 0.0, %v1405
    %1407 = vmatmul.f32.gmra.mxu0 %v1197
    %v1408 = vpop.f32.mrf.mxu0
    %v1409 = vadd.f32 0.0, %v1408
    %1410 = vmatmul.f32.gmra.mxu0 %v1200
    %v1411 = vpop.f32.mrf.mxu0
    %v1412 = vadd.f32 0.0, %v1411
    %1413 = vmatmul.f32.gmra.mxu0 %v1203
    %v1414 = vpop.f32.mrf.mxu0
    %v1415 = vadd.f32 0.0, %v1414
    %1416 = vmatmul.f32.gmra.mxu0 %v1206
    %v1417 = vpop.f32.mrf.mxu0
    %v1418 = vadd.f32 0.0, %v1417
    %1419 = vmatmul.f32.gmra.mxu0 %v1209
    %v1420 = vpop.f32.mrf.mxu0
    %v1421 = vadd.f32 0.0, %v1420
    %1422 = vmatmul.f32.gmra.mxu0 %v1212
    %v1423 = vpop.f32.mrf.mxu0
    %v1424 = vadd.f32 0.0, %v1423
    %1425 = vmatmul.f32.gmra.mxu0 %v1215
    %v1426 = vpop.f32.mrf.mxu0
    %v1427 = vadd.f32 0.0, %v1426
    %1428 = vmatmul.f32.gmra.mxu0 %v1218
    %v1429 = vpop.f32.mrf.mxu0
    %v1430 = vadd.f32 0.0, %v1429
    %1431 = vmatmul.f32.gmra.mxu0 %v1221
    %v1432 = vpop.f32.mrf.mxu0
    %v1433 = vadd.f32 0.0, %v1432
    %1434 = vmatmul.f32.gmra.mxu0 %v1224
    %v1435 = vpop.f32.mrf.mxu0
    %v1436 = vadd.f32 0.0, %v1435
    %1437 = vdwg.mxu0
    %v1438 = vadd.f32 %v777, %v1247
    %v1439 = vadd.f32 %v780, %v1250
    %v1440 = vadd.f32 %v783, %v1253
    %v1441 = vadd.f32 %v786, %v1256
    %v1442 = vadd.f32 %v789, %v1259
    %v1443 = vadd.f32 %v792, %v1262
    %v1444 = vadd.f32 %v795, %v1265
    %v1445 = vadd.f32 %v798, %v1268
    %v1446 = vadd.f32 %v801, %v1271
    %v1447 = vadd.f32 %v804, %v1274
    %v1448 = vadd.f32 %v807, %v1277
    %v1449 = vadd.f32 %v810, %v1280
    %v1450 = vadd.f32 %v813, %v1283
    %v1451 = vadd.f32 %v816, %v1286
    %v1452 = vadd.f32 %v819, %v1289
    %v1453 = vadd.f32 %v822, %v1292
    %v1454 = vadd.f32 %v825, %v1295
    %v1455 = vadd.f32 %v828, %v1298
    %v1456 = vadd.f32 %v831, %v1301
    %v1457 = vadd.f32 %v834, %v1304
    %v1458 = vadd.f32 %v837, %v1307
    %v1459 = vadd.f32 %v840, %v1310
    %v1460 = vadd.f32 %v843, %v1313
    %v1461 = vadd.f32 %v846, %v1316
    %v1462 = vadd.f32 %v849, %v1319
    %v1463 = vadd.f32 %v852, %v1322
    %v1464 = vadd.f32 %v855, %v1325
    %v1465 = vadd.f32 %v858, %v1328
    %v1466 = vadd.f32 %v861, %v1331
    %v1467 = vadd.f32 %v864, %v1334
    %v1468 = vadd.f32 %v867, %v1337
    %v1469 = vadd.f32 %v870, %v1340
    %v1470 = vadd.f32 %v873, %v1343
    %v1471 = vadd.f32 %v876, %v1346
    %v1472 = vadd.f32 %v879, %v1349
    %v1473 = vadd.f32 %v882, %v1352
    %v1474 = vadd.f32 %v885, %v1355
    %v1475 = vadd.f32 %v888, %v1358
    %v1476 = vadd.f32 %v891, %v1361
    %v1477 = vadd.f32 %v894, %v1364
    %v1478 = vadd.f32 %v897, %v1367
    %v1479 = vadd.f32 %v900, %v1370
    %v1480 = vadd.f32 %v903, %v1373
    %v1481 = vadd.f32 %v906, %v1376
    %v1482 = vadd.f32 %v909, %v1379
    %v1483 = vadd.f32 %v912, %v1382
    %v1484 = vadd.f32 %v915, %v1385
    %v1485 = vadd.f32 %v918, %v1388
    %v1486 = vadd.f32 %v921, %v1391
    %v1487 = vadd.f32 %v924, %v1394
    %v1488 = vadd.f32 %v927, %v1397
    %v1489 = vadd.f32 %v930, %v1400
    %v1490 = vadd.f32 %v933, %v1403
    %v1491 = vadd.f32 %v936, %v1406
    %v1492 = vadd.f32 %v939, %v1409
    %v1493 = vadd.f32 %v942, %v1412
    %v1494 = vadd.f32 %v945, %v1415
    %v1495 = vadd.f32 %v948, %v1418
    %v1496 = vadd.f32 %v951, %v1421
    %v1497 = vadd.f32 %v954, %v1424
    %v1498 = vadd.f32 %v957, %v1427
    %v1499 = vadd.f32 %v960, %v1430
    %v1500 = vadd.f32 %v963, %v1433
    %v1501 = vadd.f32 %v966, %v1436
    %s1502 = scalar_lea.vmem %s0, 24
    %v1503 = vld [vmem:[%s1502] sm:$0xff]
    %v1504 = vld [vmem:[%s1502 + $0x8] sm:$0xff]
    %v1505 = vld [vmem:[%s1502 + $0x18] sm:$0xff]
    %v1506 = vld [vmem:[%s1502 + $0x20] sm:$0xff]
    %v1507 = vld [vmem:[%s1502 + $0x30] sm:$0xff]
    %v1508 = vld [vmem:[%s1502 + $0x38] sm:$0xff]
    %v1509 = vld [vmem:[%s1502 + $0x48] sm:$0xff]
    %v1510 = vld [vmem:[%s1502 + $0x50] sm:$0xff]
    %v1511 = vld [vmem:[%s1502 + $0x60] sm:$0xff]
    %v1512 = vld [vmem:[%s1502 + $0x68] sm:$0xff]
    %v1513 = vld [vmem:[%s1502 + $0x78] sm:$0xff]
    %v1514 = vld [vmem:[%s1502 + $0x80] sm:$0xff]
    %v1515 = vld [vmem:[%s1502 + $0x90] sm:$0xff]
    %v1516 = vld [vmem:[%s1502 + $0x98] sm:$0xff]
    %v1517 = vld [vmem:[%s1502 + $0xa8] sm:$0xff]
    %v1518 = vld [vmem:[%s1502 + $0xb0] sm:$0xff]
    %v1519 = vld [vmem:[%s1502 + $0xc0] sm:$0xff]
    %v1520 = vld [vmem:[%s1502 + $0xc8] sm:$0xff]
    %v1521 = vld [vmem:[%s1502 + $0xd8] sm:$0xff]
    %v1522 = vld [vmem:[%s1502 + $0xe0] sm:$0xff]
    %v1523 = vld [vmem:[%s1502 + $0xf0] sm:$0xff]
    %v1524 = vld [vmem:[%s1502 + $0xf8] sm:$0xff]
    %v1525 = vld [vmem:[%s1502 + $0x108] sm:$0xff]
    %v1526 = vld [vmem:[%s1502 + $0x110] sm:$0xff]
    %v1527 = vld [vmem:[%s1502 + $0x120] sm:$0xff]
    %v1528 = vld [vmem:[%s1502 + $0x128] sm:$0xff]
    %v1529 = vld [vmem:[%s1502 + $0x138] sm:$0xff]
    %v1530 = vld [vmem:[%s1502 + $0x140] sm:$0xff]
    %v1531 = vld [vmem:[%s1502 + $0x150] sm:$0xff]
    %v1532 = vld [vmem:[%s1502 + $0x158] sm:$0xff]
    %v1533 = vld [vmem:[%s1502 + $0x168] sm:$0xff]
    %v1534 = vld [vmem:[%s1502 + $0x170] sm:$0xff]
    %v1535 = vld [vmem:[%s1502 + $0x1b0] sm:$0xff]
    %v1536 = vld [vmem:[%s1502 + $0x1b8] sm:$0xff]
    %v1537 = vld [vmem:[%s1502 + $0x1c8] sm:$0xff]
    %v1538 = vld [vmem:[%s1502 + $0x1d0] sm:$0xff]
    %v1539 = vld [vmem:[%s1502 + $0x1e0] sm:$0xff]
    %v1540 = vld [vmem:[%s1502 + $0x1e8] sm:$0xff]
    %v1541 = vld [vmem:[%s1502 + $0x1f8] sm:$0xff]
    %v1542 = vld [vmem:[%s1502 + $0x200] sm:$0xff]
    %v1543 = vld [vmem:[%s1502 + $0x210] sm:$0xff]
    %v1544 = vld [vmem:[%s1502 + $0x218] sm:$0xff]
    %v1545 = vld [vmem:[%s1502 + $0x228] sm:$0xff]
    %v1546 = vld [vmem:[%s1502 + $0x230] sm:$0xff]
    %v1547 = vld [vmem:[%s1502 + $0x240] sm:$0xff]
    %v1548 = vld [vmem:[%s1502 + $0x248] sm:$0xff]
    %v1549 = vld [vmem:[%s1502 + $0x258] sm:$0xff]
    %v1550 = vld [vmem:[%s1502 + $0x260] sm:$0xff]
    %v1551 = vld [vmem:[%s1502 + $0x270] sm:$0xff]
    %v1552 = vld [vmem:[%s1502 + $0x278] sm:$0xff]
    %v1553 = vld [vmem:[%s1502 + $0x288] sm:$0xff]
    %v1554 = vld [vmem:[%s1502 + $0x290] sm:$0xff]
    %v1555 = vld [vmem:[%s1502 + $0x2a0] sm:$0xff]
    %v1556 = vld [vmem:[%s1502 + $0x2a8] sm:$0xff]
    %v1557 = vld [vmem:[%s1502 + $0x2b8] sm:$0xff]
    %v1558 = vld [vmem:[%s1502 + $0x2c0] sm:$0xff]
    %v1559 = vld [vmem:[%s1502 + $0x2d0] sm:$0xff]
    %v1560 = vld [vmem:[%s1502 + $0x2d8] sm:$0xff]
    %v1561 = vld [vmem:[%s1502 + $0x2e8] sm:$0xff]
    %v1562 = vld [vmem:[%s1502 + $0x2f0] sm:$0xff]
    %v1563 = vld [vmem:[%s1502 + $0x300] sm:$0xff]
    %v1564 = vld [vmem:[%s1502 + $0x308] sm:$0xff]
    %v1565 = vld [vmem:[%s1502 + $0x318] sm:$0xff]
    %v1566 = vld [vmem:[%s1502 + $0x320] sm:$0xff]
    %s1567 = scalar_lea.vmem %s1, 12
    %v1568 = vld [vmem:[%s1567] sm:$0xf]
    %v1570 = vsel %vm158, %v1503, 0
    %v1573 = vsel %vm158, %v1504, 0
    %v1576 = vsel %vm158, %v1505, 0
    %v1579 = vsel %vm158, %v1506, 0
    %v1582 = vsel %vm158, %v1507, 0
    %v1585 = vsel %vm158, %v1508, 0
    %v1588 = vsel %vm158, %v1509, 0
    %v1591 = vsel %vm158, %v1510, 0
    %v1594 = vsel %vm158, %v1511, 0
    %v1597 = vsel %vm158, %v1512, 0
    %v1600 = vsel %vm158, %v1513, 0
    %v1603 = vsel %vm158, %v1514, 0
    %v1606 = vsel %vm158, %v1515, 0
    %v1609 = vsel %vm158, %v1516, 0
    %v1612 = vsel %vm158, %v1517, 0
    %v1615 = vsel %vm158, %v1518, 0
    %v1618 = vsel %vm158, %v1519, 0
    %v1621 = vsel %vm158, %v1520, 0
    %v1624 = vsel %vm158, %v1521, 0
    %v1627 = vsel %vm158, %v1522, 0
    %v1630 = vsel %vm158, %v1523, 0
    %v1633 = vsel %vm158, %v1524, 0
    %v1636 = vsel %vm158, %v1525, 0
    %v1639 = vsel %vm158, %v1526, 0
    %v1642 = vsel %vm158, %v1527, 0
    %v1645 = vsel %vm158, %v1528, 0
    %v1648 = vsel %vm158, %v1529, 0
    %v1651 = vsel %vm158, %v1530, 0
    %v1654 = vsel %vm158, %v1531, 0
    %v1657 = vsel %vm158, %v1532, 0
    %v1660 = vsel %vm158, %v1533, 0
    %v1663 = vsel %vm158, %v1534, 0
    %v1666 = vsel %vm158, %v1535, 0
    %v1669 = vsel %vm158, %v1536, 0
    %v1672 = vsel %vm158, %v1537, 0
    %v1675 = vsel %vm158, %v1538, 0
    %v1678 = vsel %vm158, %v1539, 0
    %v1681 = vsel %vm158, %v1540, 0
    %v1684 = vsel %vm158, %v1541, 0
    %v1687 = vsel %vm158, %v1542, 0
    %v1690 = vsel %vm158, %v1543, 0
    %v1693 = vsel %vm158, %v1544, 0
    %v1696 = vsel %vm158, %v1545, 0
    %v1699 = vsel %vm158, %v1546, 0
    %v1702 = vsel %vm158, %v1547, 0
    %v1705 = vsel %vm158, %v1548, 0
    %v1708 = vsel %vm158, %v1549, 0
    %v1711 = vsel %vm158, %v1550, 0
    %v1714 = vsel %vm158, %v1551, 0
    %v1717 = vsel %vm158, %v1552, 0
    %v1720 = vsel %vm158, %v1553, 0
    %v1723 = vsel %vm158, %v1554, 0
    %v1726 = vsel %vm158, %v1555, 0
    %v1729 = vsel %vm158, %v1556, 0
    %v1732 = vsel %vm158, %v1557, 0
    %v1735 = vsel %vm158, %v1558, 0
    %v1738 = vsel %vm158, %v1559, 0
    %v1741 = vsel %vm158, %v1560, 0
    %v1744 = vsel %vm158, %v1561, 0
    %v1747 = vsel %vm158, %v1562, 0
    %v1750 = vsel %vm158, %v1563, 0
    %v1753 = vsel %vm158, %v1564, 0
    %v1756 = vsel %vm158, %v1565, 0
    %v1759 = vsel %vm158, %v1566, 0
    %v1762 = vsel %vm351, %v1568, 0
    %1764 = vmatpush.msra.mxu0 0.0
    %1765 = vmatpush.msra.mxu0 0.0
    %1766 = vmatpush.msra.mxu0 0.0
    %1767 = vmatpush.msra.mxu0 0.0
    %1768 = vmatpush.msra.mxu0 0.0
    %1769 = vmatpush.msra.mxu0 0.0
    %1770 = vmatpush.msra.mxu0 0.0
    %1771 = vmatpush.msra.mxu0 0.0
    %1772 = vmatpush.msra.mxu0 0.0
    %1773 = vmatpush.msra.mxu0 0.0
    %1774 = vmatpush.msra.mxu0 0.0
    %1775 = vmatpush.msra.mxu0 0.0
    %1776 = vmatpush.msra.mxu0 0.0
    %1777 = vmatpush.msra.mxu0 0.0
    %1778 = vmatpush.msra.mxu0 0.0
    %1779 = vmatpush.msra.mxu0 %v1762
    %1780 = vmatmul.f32.gmra.mxu0 %v1570
    %v1781 = vpop.f32.mrf.mxu0
    %v1782 = vadd.f32 0.0, %v1781
    %1783 = vmatmul.f32.gmra.mxu0 %v1573
    %v1784 = vpop.f32.mrf.mxu0
    %v1785 = vadd.f32 0.0, %v1784
    %1786 = vmatmul.f32.gmra.mxu0 %v1576
    %v1787 = vpop.f32.mrf.mxu0
    %v1788 = vadd.f32 0.0, %v1787
    %1789 = vmatmul.f32.gmra.mxu0 %v1579
    %v1790 = vpop.f32.mrf.mxu0
    %v1791 = vadd.f32 0.0, %v1790
    %1792 = vmatmul.f32.gmra.mxu0 %v1582
    %v1793 = vpop.f32.mrf.mxu0
    %v1794 = vadd.f32 0.0, %v1793
    %1795 = vmatmul.f32.gmra.mxu0 %v1585
    %v1796 = vpop.f32.mrf.mxu0
    %v1797 = vadd.f32 0.0, %v1796
    %1798 = vmatmul.f32.gmra.mxu0 %v1588
    %v1799 = vpop.f32.mrf.mxu0
    %v1800 = vadd.f32 0.0, %v1799
    %1801 = vmatmul.f32.gmra.mxu0 %v1591
    %v1802 = vpop.f32.mrf.mxu0
    %v1803 = vadd.f32 0.0, %v1802
    %1804 = vmatmul.f32.gmra.mxu0 %v1594
    %v1805 = vpop.f32.mrf.mxu0
    %v1806 = vadd.f32 0.0, %v1805
    %1807 = vmatmul.f32.gmra.mxu0 %v1597
    %v1808 = vpop.f32.mrf.mxu0
    %v1809 = vadd.f32 0.0, %v1808
    %1810 = vmatmul.f32.gmra.mxu0 %v1600
    %v1811 = vpop.f32.mrf.mxu0
    %v1812 = vadd.f32 0.0, %v1811
    %1813 = vmatmul.f32.gmra.mxu0 %v1603
    %v1814 = vpop.f32.mrf.mxu0
    %v1815 = vadd.f32 0.0, %v1814
    %1816 = vmatmul.f32.gmra.mxu0 %v1606
    %v1817 = vpop.f32.mrf.mxu0
    %v1818 = vadd.f32 0.0, %v1817
    %1819 = vmatmul.f32.gmra.mxu0 %v1609
    %v1820 = vpop.f32.mrf.mxu0
    %v1821 = vadd.f32 0.0, %v1820
    %1822 = vmatmul.f32.gmra.mxu0 %v1612
    %v1823 = vpop.f32.mrf.mxu0
    %v1824 = vadd.f32 0.0, %v1823
    %1825 = vmatmul.f32.gmra.mxu0 %v1615
    %v1826 = vpop.f32.mrf.mxu0
    %v1827 = vadd.f32 0.0, %v1826
    %1828 = vmatmul.f32.gmra.mxu0 %v1618
    %v1829 = vpop.f32.mrf.mxu0
    %v1830 = vadd.f32 0.0, %v1829
    %1831 = vmatmul.f32.gmra.mxu0 %v1621
    %v1832 = vpop.f32.mrf.mxu0
    %v1833 = vadd.f32 0.0, %v1832
    %1834 = vmatmul.f32.gmra.mxu0 %v1624
    %v1835 = vpop.f32.mrf.mxu0
    %v1836 = vadd.f32 0.0, %v1835
    %1837 = vmatmul.f32.gmra.mxu0 %v1627
    %v1838 = vpop.f32.mrf.mxu0
    %v1839 = vadd.f32 0.0, %v1838
    %1840 = vmatmul.f32.gmra.mxu0 %v1630
    %v1841 = vpop.f32.mrf.mxu0
    %v1842 = vadd.f32 0.0, %v1841
    %1843 = vmatmul.f32.gmra.mxu0 %v1633
    %v1844 = vpop.f32.mrf.mxu0
    %v1845 = vadd.f32 0.0, %v1844
    %1846 = vmatmul.f32.gmra.mxu0 %v1636
    %v1847 = vpop.f32.mrf.mxu0
    %v1848 = vadd.f32 0.0, %v1847
    %1849 = vmatmul.f32.gmra.mxu0 %v1639
    %v1850 = vpop.f32.mrf.mxu0
    %v1851 = vadd.f32 0.0, %v1850
    %1852 = vmatmul.f32.gmra.mxu0 %v1642
    %v1853 = vpop.f32.mrf.mxu0
    %v1854 = vadd.f32 0.0, %v1853
    %1855 = vmatmul.f32.gmra.mxu0 %v1645
    %v1856 = vpop.f32.mrf.mxu0
    %v1857 = vadd.f32 0.0, %v1856
    %1858 = vmatmul.f32.gmra.mxu0 %v1648
    %v1859 = vpop.f32.mrf.mxu0
    %v1860 = vadd.f32 0.0, %v1859
    %1861 = vmatmul.f32.gmra.mxu0 %v1651
    %v1862 = vpop.f32.mrf.mxu0
    %v1863 = vadd.f32 0.0, %v1862
    %1864 = vmatmul.f32.gmra.mxu0 %v1654
    %v1865 = vpop.f32.mrf.mxu0
    %v1866 = vadd.f32 0.0, %v1865
    %1867 = vmatmul.f32.gmra.mxu0 %v1657
    %v1868 = vpop.f32.mrf.mxu0
    %v1869 = vadd.f32 0.0, %v1868
    %1870 = vmatmul.f32.gmra.mxu0 %v1660
    %v1871 = vpop.f32.mrf.mxu0
    %v1872 = vadd.f32 0.0, %v1871
    %1873 = vmatmul.f32.gmra.mxu0 %v1663
    %v1874 = vpop.f32.mrf.mxu0
    %v1875 = vadd.f32 0.0, %v1874
    %1876 = vmatmul.f32.gmra.mxu0 %v1666
    %v1877 = vpop.f32.mrf.mxu0
    %v1878 = vadd.f32 0.0, %v1877
    %1879 = vmatmul.f32.gmra.mxu0 %v1669
    %v1880 = vpop.f32.mrf.mxu0
    %v1881 = vadd.f32 0.0, %v1880
    %1882 = vmatmul.f32.gmra.mxu0 %v1672
    %v1883 = vpop.f32.mrf.mxu0
    %v1884 = vadd.f32 0.0, %v1883
    %1885 = vmatmul.f32.gmra.mxu0 %v1675
    %v1886 = vpop.f32.mrf.mxu0
    %v1887 = vadd.f32 0.0, %v1886
    %1888 = vmatmul.f32.gmra.mxu0 %v1678
    %v1889 = vpop.f32.mrf.mxu0
    %v1890 = vadd.f32 0.0, %v1889
    %1891 = vmatmul.f32.gmra.mxu0 %v1681
    %v1892 = vpop.f32.mrf.mxu0
    %v1893 = vadd.f32 0.0, %v1892
    %1894 = vmatmul.f32.gmra.mxu0 %v1684
    %v1895 = vpop.f32.mrf.mxu0
    %v1896 = vadd.f32 0.0, %v1895
    %1897 = vmatmul.f32.gmra.mxu0 %v1687
    %v1898 = vpop.f32.mrf.mxu0
    %v1899 = vadd.f32 0.0, %v1898
    %1900 = vmatmul.f32.gmra.mxu0 %v1690
    %v1901 = vpop.f32.mrf.mxu0
    %v1902 = vadd.f32 0.0, %v1901
    %1903 = vmatmul.f32.gmra.mxu0 %v1693
    %v1904 = vpop.f32.mrf.mxu0
    %v1905 = vadd.f32 0.0, %v1904
    %1906 = vmatmul.f32.gmra.mxu0 %v1696
    %v1907 = vpop.f32.mrf.mxu0
    %v1908 = vadd.f32 0.0, %v1907
    %1909 = vmatmul.f32.gmra.mxu0 %v1699
    %v1910 = vpop.f32.mrf.mxu0
    %v1911 = vadd.f32 0.0, %v1910
    %1912 = vmatmul.f32.gmra.mxu0 %v1702
    %v1913 = vpop.f32.mrf.mxu0
    %v1914 = vadd.f32 0.0, %v1913
    %1915 = vmatmul.f32.gmra.mxu0 %v1705
    %v1916 = vpop.f32.mrf.mxu0
    %v1917 = vadd.f32 0.0, %v1916
    %1918 = vmatmul.f32.gmra.mxu0 %v1708
    %v1919 = vpop.f32.mrf.mxu0
    %v1920 = vadd.f32 0.0, %v1919
    %1921 = vmatmul.f32.gmra.mxu0 %v1711
    %v1922 = vpop.f32.mrf.mxu0
    %v1923 = vadd.f32 0.0, %v1922
    %1924 = vmatmul.f32.gmra.mxu0 %v1714
    %v1925 = vpop.f32.mrf.mxu0
    %v1926 = vadd.f32 0.0, %v1925
    %1927 = vmatmul.f32.gmra.mxu0 %v1717
    %v1928 = vpop.f32.mrf.mxu0
    %v1929 = vadd.f32 0.0, %v1928
    %1930 = vmatmul.f32.gmra.mxu0 %v1720
    %v1931 = vpop.f32.mrf.mxu0
    %v1932 = vadd.f32 0.0, %v1931
    %1933 = vmatmul.f32.gmra.mxu0 %v1723
    %v1934 = vpop.f32.mrf.mxu0
    %v1935 = vadd.f32 0.0, %v1934
    %1936 = vmatmul.f32.gmra.mxu0 %v1726
    %v1937 = vpop.f32.mrf.mxu0
    %v1938 = vadd.f32 0.0, %v1937
    %1939 = vmatmul.f32.gmra.mxu0 %v1729
    %v1940 = vpop.f32.mrf.mxu0
    %v1941 = vadd.f32 0.0, %v1940
    %1942 = vmatmul.f32.gmra.mxu0 %v1732
    %v1943 = vpop.f32.mrf.mxu0
    %v1944 = vadd.f32 0.0, %v1943
    %1945 = vmatmul.f32.gmra.mxu0 %v1735
    %v1946 = vpop.f32.mrf.mxu0
    %v1947 = vadd.f32 0.0, %v1946
    %1948 = vmatmul.f32.gmra.mxu0 %v1738
    %v1949 = vpop.f32.mrf.mxu0
    %v1950 = vadd.f32 0.0, %v1949
    %1951 = vmatmul.f32.gmra.mxu0 %v1741
    %v1952 = vpop.f32.mrf.mxu0
    %v1953 = vadd.f32 0.0, %v1952
    %1954 = vmatmul.f32.gmra.mxu0 %v1744
    %v1955 = vpop.f32.mrf.mxu0
    %v1956 = vadd.f32 0.0, %v1955
    %1957 = vmatmul.f32.gmra.mxu0 %v1747
    %v1958 = vpop.f32.mrf.mxu0
    %v1959 = vadd.f32 0.0, %v1958
    %1960 = vmatmul.f32.gmra.mxu0 %v1750
    %v1961 = vpop.f32.mrf.mxu0
    %v1962 = vadd.f32 0.0, %v1961
    %1963 = vmatmul.f32.gmra.mxu0 %v1753
    %v1964 = vpop.f32.mrf.mxu0
    %v1965 = vadd.f32 0.0, %v1964
    %1966 = vmatmul.f32.gmra.mxu0 %v1756
    %v1967 = vpop.f32.mrf.mxu0
    %v1968 = vadd.f32 0.0, %v1967
    %1969 = vmatmul.f32.gmra.mxu0 %v1759
    %v1970 = vpop.f32.mrf.mxu0
    %v1971 = vadd.f32 0.0, %v1970
    %1972 = vdwg.mxu0
    %v1973 = vadd.f32 %v1438, %v1782
    %v1974 = vadd.f32 %v1439, %v1785
    %v1975 = vadd.f32 %v1440, %v1788
    %v1976 = vadd.f32 %v1441, %v1791
    %v1977 = vadd.f32 %v1442, %v1794
    %v1978 = vadd.f32 %v1443, %v1797
    %v1979 = vadd.f32 %v1444, %v1800
    %v1980 = vadd.f32 %v1445, %v1803
    %v1981 = vadd.f32 %v1446, %v1806
    %v1982 = vadd.f32 %v1447, %v1809
    %v1983 = vadd.f32 %v1448, %v1812
    %v1984 = vadd.f32 %v1449, %v1815
    %v1985 = vadd.f32 %v1450, %v1818
    %v1986 = vadd.f32 %v1451, %v1821
    %v1987 = vadd.f32 %v1452, %v1824
    %v1988 = vadd.f32 %v1453, %v1827
    %v1989 = vadd.f32 %v1454, %v1830
    %v1990 = vadd.f32 %v1455, %v1833
    %v1991 = vadd.f32 %v1456, %v1836
    %v1992 = vadd.f32 %v1457, %v1839
    %v1993 = vadd.f32 %v1458, %v1842
    %v1994 = vadd.f32 %v1459, %v1845
    %v1995 = vadd.f32 %v1460, %v1848
    %v1996 = vadd.f32 %v1461, %v1851
    %v1997 = vadd.f32 %v1462, %v1854
    %v1998 = vadd.f32 %v1463, %v1857
    %v1999 = vadd.f32 %v1464, %v1860
    %v2000 = vadd.f32 %v1465, %v1863
    %v2001 = vadd.f32 %v1466, %v1866
    %v2002 = vadd.f32 %v1467, %v1869
    %v2003 = vadd.f32 %v1468, %v1872
    %v2004 = vadd.f32 %v1469, %v1875
    %v2005 = vadd.f32 %v1470, %v1878
    %v2006 = vadd.f32 %v1471, %v1881
    %v2007 = vadd.f32 %v1472, %v1884
    %v2008 = vadd.f32 %v1473, %v1887
    %v2009 = vadd.f32 %v1474, %v1890
    %v2010 = vadd.f32 %v1475, %v1893
    %v2011 = vadd.f32 %v1476, %v1896
    %v2012 = vadd.f32 %v1477, %v1899
    %v2013 = vadd.f32 %v1478, %v1902
    %v2014 = vadd.f32 %v1479, %v1905
    %v2015 = vadd.f32 %v1480, %v1908
    %v2016 = vadd.f32 %v1481, %v1911
    %v2017 = vadd.f32 %v1482, %v1914
    %v2018 = vadd.f32 %v1483, %v1917
    %v2019 = vadd.f32 %v1484, %v1920
    %v2020 = vadd.f32 %v1485, %v1923
    %v2021 = vadd.f32 %v1486, %v1926
    %v2022 = vadd.f32 %v1487, %v1929
    %v2023 = vadd.f32 %v1488, %v1932
    %v2024 = vadd.f32 %v1489, %v1935
    %v2025 = vadd.f32 %v1490, %v1938
    %v2026 = vadd.f32 %v1491, %v1941
    %v2027 = vadd.f32 %v1492, %v1944
    %v2028 = vadd.f32 %v1493, %v1947
    %v2029 = vadd.f32 %v1494, %v1950
    %v2030 = vadd.f32 %v1495, %v1953
    %v2031 = vadd.f32 %v1496, %v1956
    %v2032 = vadd.f32 %v1497, %v1959
    %v2033 = vadd.f32 %v1498, %v1962
    %v2034 = vadd.f32 %v1499, %v1965
    %v2035 = vadd.f32 %v1500, %v1968
    %v2036 = vadd.f32 %v1501, %v1971
    %v2037 = vld [vmem:[%s1502 + $0x1] sm:$0xff]
    %v2038 = vld [vmem:[%s1502 + $0x9] sm:$0xff]
    %v2039 = vld [vmem:[%s1502 + $0x19] sm:$0xff]
    %v2040 = vld [vmem:[%s1502 + $0x21] sm:$0xff]
    %v2041 = vld [vmem:[%s1502 + $0x31] sm:$0xff]
    %v2042 = vld [vmem:[%s1502 + $0x39] sm:$0xff]
    %v2043 = vld [vmem:[%s1502 + $0x49] sm:$0xff]
    %v2044 = vld [vmem:[%s1502 + $0x51] sm:$0xff]
    %v2045 = vld [vmem:[%s1502 + $0x61] sm:$0xff]
    %v2046 = vld [vmem:[%s1502 + $0x69] sm:$0xff]
    %v2047 = vld [vmem:[%s1502 + $0x79] sm:$0xff]
    %v2048 = vld [vmem:[%s1502 + $0x81] sm:$0xff]
    %v2049 = vld [vmem:[%s1502 + $0x91] sm:$0xff]
    %v2050 = vld [vmem:[%s1502 + $0x99] sm:$0xff]
    %v2051 = vld [vmem:[%s1502 + $0xa9] sm:$0xff]
    %v2052 = vld [vmem:[%s1502 + $0xb1] sm:$0xff]
    %v2053 = vld [vmem:[%s1502 + $0xc1] sm:$0xff]
    %v2054 = vld [vmem:[%s1502 + $0xc9] sm:$0xff]
    %v2055 = vld [vmem:[%s1502 + $0xd9] sm:$0xff]
    %v2056 = vld [vmem:[%s1502 + $0xe1] sm:$0xff]
    %v2057 = vld [vmem:[%s1502 + $0xf1] sm:$0xff]
    %v2058 = vld [vmem:[%s1502 + $0xf9] sm:$0xff]
    %v2059 = vld [vmem:[%s1502 + $0x109] sm:$0xff]
    %v2060 = vld [vmem:[%s1502 + $0x111] sm:$0xff]
    %v2061 = vld [vmem:[%s1502 + $0x121] sm:$0xff]
    %v2062 = vld [vmem:[%s1502 + $0x129] sm:$0xff]
    %v2063 = vld [vmem:[%s1502 + $0x139] sm:$0xff]
    %v2064 = vld [vmem:[%s1502 + $0x141] sm:$0xff]
    %v2065 = vld [vmem:[%s1502 + $0x151] sm:$0xff]
    %v2066 = vld [vmem:[%s1502 + $0x159] sm:$0xff]
    %v2067 = vld [vmem:[%s1502 + $0x169] sm:$0xff]
    %v2068 = vld [vmem:[%s1502 + $0x171] sm:$0xff]
    %v2069 = vld [vmem:[%s1502 + $0x1b1] sm:$0xff]
    %v2070 = vld [vmem:[%s1502 + $0x1b9] sm:$0xff]
    %v2071 = vld [vmem:[%s1502 + $0x1c9] sm:$0xff]
    %v2072 = vld [vmem:[%s1502 + $0x1d1] sm:$0xff]
    %v2073 = vld [vmem:[%s1502 + $0x1e1] sm:$0xff]
    %v2074 = vld [vmem:[%s1502 + $0x1e9] sm:$0xff]
    %v2075 = vld [vmem:[%s1502 + $0x1f9] sm:$0xff]
    %v2076 = vld [vmem:[%s1502 + $0x201] sm:$0xff]
    %v2077 = vld [vmem:[%s1502 + $0x211] sm:$0xff]
    %v2078 = vld [vmem:[%s1502 + $0x219] sm:$0xff]
    %v2079 = vld [vmem:[%s1502 + $0x229] sm:$0xff]
    %v2080 = vld [vmem:[%s1502 + $0x231] sm:$0xff]
    %v2081 = vld [vmem:[%s1502 + $0x241] sm:$0xff]
    %v2082 = vld [vmem:[%s1502 + $0x249] sm:$0xff]
    %v2083 = vld [vmem:[%s1502 + $0x259] sm:$0xff]
    %v2084 = vld [vmem:[%s1502 + $0x261] sm:$0xff]
    %v2085 = vld [vmem:[%s1502 + $0x271] sm:$0xff]
    %v2086 = vld [vmem:[%s1502 + $0x279] sm:$0xff]
    %v2087 = vld [vmem:[%s1502 + $0x289] sm:$0xff]
    %v2088 = vld [vmem:[%s1502 + $0x291] sm:$0xff]
    %v2089 = vld [vmem:[%s1502 + $0x2a1] sm:$0xff]
    %v2090 = vld [vmem:[%s1502 + $0x2a9] sm:$0xff]
    %v2091 = vld [vmem:[%s1502 + $0x2b9] sm:$0xff]
    %v2092 = vld [vmem:[%s1502 + $0x2c1] sm:$0xff]
    %v2093 = vld [vmem:[%s1502 + $0x2d1] sm:$0xff]
    %v2094 = vld [vmem:[%s1502 + $0x2d9] sm:$0xff]
    %v2095 = vld [vmem:[%s1502 + $0x2e9] sm:$0xff]
    %v2096 = vld [vmem:[%s1502 + $0x2f1] sm:$0xff]
    %v2097 = vld [vmem:[%s1502 + $0x301] sm:$0xff]
    %v2098 = vld [vmem:[%s1502 + $0x309] sm:$0xff]
    %v2099 = vld [vmem:[%s1502 + $0x319] sm:$0xff]
    %v2100 = vld [vmem:[%s1502 + $0x321] sm:$0xff]
    %s2101 = scalar_lea.vmem %s1, 16
    %v2102 = vld [vmem:[%s2101] sm:$0xf]
    %v2104 = vsel %vm158, %v2037, 0
    %v2107 = vsel %vm158, %v2038, 0
    %v2110 = vsel %vm158, %v2039, 0
    %v2113 = vsel %vm158, %v2040, 0
    %v2116 = vsel %vm158, %v2041, 0
    %v2119 = vsel %vm158, %v2042, 0
    %v2122 = vsel %vm158, %v2043, 0
    %v2125 = vsel %vm158, %v2044, 0
    %v2128 = vsel %vm158, %v2045, 0
    %v2131 = vsel %vm158, %v2046, 0
    %v2134 = vsel %vm158, %v2047, 0
    %v2137 = vsel %vm158, %v2048, 0
    %v2140 = vsel %vm158, %v2049, 0
    %v2143 = vsel %vm158, %v2050, 0
    %v2146 = vsel %vm158, %v2051, 0
    %v2149 = vsel %vm158, %v2052, 0
    %v2152 = vsel %vm158, %v2053, 0
    %v2155 = vsel %vm158, %v2054, 0
    %v2158 = vsel %vm158, %v2055, 0
    %v2161 = vsel %vm158, %v2056, 0
    %v2164 = vsel %vm158, %v2057, 0
    %v2167 = vsel %vm158, %v2058, 0
    %v2170 = vsel %vm158, %v2059, 0
    %v2173 = vsel %vm158, %v2060, 0
    %v2176 = vsel %vm158, %v2061, 0
    %v2179 = vsel %vm158, %v2062, 0
    %v2182 = vsel %vm158, %v2063, 0
    %v2185 = vsel %vm158, %v2064, 0
    %v2188 = vsel %vm158, %v2065, 0
    %v2191 = vsel %vm158, %v2066, 0
    %v2194 = vsel %vm158, %v2067, 0
    %v2197 = vsel %vm158, %v2068, 0
    %v2200 = vsel %vm158, %v2069, 0
    %v2203 = vsel %vm158, %v2070, 0
    %v2206 = vsel %vm158, %v2071, 0
    %v2209 = vsel %vm158, %v2072, 0
    %v2212 = vsel %vm158, %v2073, 0
    %v2215 = vsel %vm158, %v2074, 0
    %v2218 = vsel %vm158, %v2075, 0
    %v2221 = vsel %vm158, %v2076, 0
    %v2224 = vsel %vm158, %v2077, 0
    %v2227 = vsel %vm158, %v2078, 0
    %v2230 = vsel %vm158, %v2079, 0
    %v2233 = vsel %vm158, %v2080, 0
    %v2236 = vsel %vm158, %v2081, 0
    %v2239 = vsel %vm158, %v2082, 0
    %v2242 = vsel %vm158, %v2083, 0
    %v2245 = vsel %vm158, %v2084, 0
    %v2248 = vsel %vm158, %v2085, 0
    %v2251 = vsel %vm158, %v2086, 0
    %v2254 = vsel %vm158, %v2087, 0
    %v2257 = vsel %vm158, %v2088, 0
    %v2260 = vsel %vm158, %v2089, 0
    %v2263 = vsel %vm158, %v2090, 0
    %v2266 = vsel %vm158, %v2091, 0
    %v2269 = vsel %vm158, %v2092, 0
    %v2272 = vsel %vm158, %v2093, 0
    %v2275 = vsel %vm158, %v2094, 0
    %v2278 = vsel %vm158, %v2095, 0
    %v2281 = vsel %vm158, %v2096, 0
    %v2284 = vsel %vm158, %v2097, 0
    %v2287 = vsel %vm158, %v2098, 0
    %v2290 = vsel %vm158, %v2099, 0
    %v2293 = vsel %vm158, %v2100, 0
    %v2296 = vsel %vm351, %v2102, 0
    %2298 = vmatpush.msra.mxu0 0.0
    %2299 = vmatpush.msra.mxu0 0.0
    %2300 = vmatpush.msra.mxu0 0.0
    %2301 = vmatpush.msra.mxu0 0.0
    %2302 = vmatpush.msra.mxu0 0.0
    %2303 = vmatpush.msra.mxu0 0.0
    %2304 = vmatpush.msra.mxu0 0.0
    %2305 = vmatpush.msra.mxu0 0.0
    %2306 = vmatpush.msra.mxu0 0.0
    %2307 = vmatpush.msra.mxu0 0.0
    %2308 = vmatpush.msra.mxu0 0.0
    %2309 = vmatpush.msra.mxu0 0.0
    %2310 = vmatpush.msra.mxu0 0.0
    %2311 = vmatpush.msra.mxu0 0.0
    %2312 = vmatpush.msra.mxu0 0.0
    %2313 = vmatpush.msra.mxu0 %v2296
    %2314 = vmatmul.f32.gmra.mxu0 %v2104
    %v2315 = vpop.f32.mrf.mxu0
    %v2316 = vadd.f32 0.0, %v2315
    %2317 = vmatmul.f32.gmra.mxu0 %v2107
    %v2318 = vpop.f32.mrf.mxu0
    %v2319 = vadd.f32 0.0, %v2318
    %2320 = vmatmul.f32.gmra.mxu0 %v2110
    %v2321 = vpop.f32.mrf.mxu0
    %v2322 = vadd.f32 0.0, %v2321
    %2323 = vmatmul.f32.gmra.mxu0 %v2113
    %v2324 = vpop.f32.mrf.mxu0
    %v2325 = vadd.f32 0.0, %v2324
    %2326 = vmatmul.f32.gmra.mxu0 %v2116
    %v2327 = vpop.f32.mrf.mxu0
    %v2328 = vadd.f32 0.0, %v2327
    %2329 = vmatmul.f32.gmra.mxu0 %v2119
    %v2330 = vpop.f32.mrf.mxu0
    %v2331 = vadd.f32 0.0, %v2330
    %2332 = vmatmul.f32.gmra.mxu0 %v2122
    %v2333 = vpop.f32.mrf.mxu0
    %v2334 = vadd.f32 0.0, %v2333
    %2335 = vmatmul.f32.gmra.mxu0 %v2125
    %v2336 = vpop.f32.mrf.mxu0
    %v2337 = vadd.f32 0.0, %v2336
    %2338 = vmatmul.f32.gmra.mxu0 %v2128
    %v2339 = vpop.f32.mrf.mxu0
    %v2340 = vadd.f32 0.0, %v2339
    %2341 = vmatmul.f32.gmra.mxu0 %v2131
    %v2342 = vpop.f32.mrf.mxu0
    %v2343 = vadd.f32 0.0, %v2342
    %2344 = vmatmul.f32.gmra.mxu0 %v2134
    %v2345 = vpop.f32.mrf.mxu0
    %v2346 = vadd.f32 0.0, %v2345
    %2347 = vmatmul.f32.gmra.mxu0 %v2137
    %v2348 = vpop.f32.mrf.mxu0
    %v2349 = vadd.f32 0.0, %v2348
    %2350 = vmatmul.f32.gmra.mxu0 %v2140
    %v2351 = vpop.f32.mrf.mxu0
    %v2352 = vadd.f32 0.0, %v2351
    %2353 = vmatmul.f32.gmra.mxu0 %v2143
    %v2354 = vpop.f32.mrf.mxu0
    %v2355 = vadd.f32 0.0, %v2354
    %2356 = vmatmul.f32.gmra.mxu0 %v2146
    %v2357 = vpop.f32.mrf.mxu0
    %v2358 = vadd.f32 0.0, %v2357
    %2359 = vmatmul.f32.gmra.mxu0 %v2149
    %v2360 = vpop.f32.mrf.mxu0
    %v2361 = vadd.f32 0.0, %v2360
    %2362 = vmatmul.f32.gmra.mxu0 %v2152
    %v2363 = vpop.f32.mrf.mxu0
    %v2364 = vadd.f32 0.0, %v2363
    %2365 = vmatmul.f32.gmra.mxu0 %v2155
    %v2366 = vpop.f32.mrf.mxu0
    %v2367 = vadd.f32 0.0, %v2366
    %2368 = vmatmul.f32.gmra.mxu0 %v2158
    %v2369 = vpop.f32.mrf.mxu0
    %v2370 = vadd.f32 0.0, %v2369
    %2371 = vmatmul.f32.gmra.mxu0 %v2161
    %v2372 = vpop.f32.mrf.mxu0
    %v2373 = vadd.f32 0.0, %v2372
    %2374 = vmatmul.f32.gmra.mxu0 %v2164
    %v2375 = vpop.f32.mrf.mxu0
    %v2376 = vadd.f32 0.0, %v2375
    %2377 = vmatmul.f32.gmra.mxu0 %v2167
    %v2378 = vpop.f32.mrf.mxu0
    %v2379 = vadd.f32 0.0, %v2378
    %2380 = vmatmul.f32.gmra.mxu0 %v2170
    %v2381 = vpop.f32.mrf.mxu0
    %v2382 = vadd.f32 0.0, %v2381
    %2383 = vmatmul.f32.gmra.mxu0 %v2173
    %v2384 = vpop.f32.mrf.mxu0
    %v2385 = vadd.f32 0.0, %v2384
    %2386 = vmatmul.f32.gmra.mxu0 %v2176
    %v2387 = vpop.f32.mrf.mxu0
    %v2388 = vadd.f32 0.0, %v2387
    %2389 = vmatmul.f32.gmra.mxu0 %v2179
    %v2390 = vpop.f32.mrf.mxu0
    %v2391 = vadd.f32 0.0, %v2390
    %2392 = vmatmul.f32.gmra.mxu0 %v2182
    %v2393 = vpop.f32.mrf.mxu0
    %v2394 = vadd.f32 0.0, %v2393
    %2395 = vmatmul.f32.gmra.mxu0 %v2185
    %v2396 = vpop.f32.mrf.mxu0
    %v2397 = vadd.f32 0.0, %v2396
    %2398 = vmatmul.f32.gmra.mxu0 %v2188
    %v2399 = vpop.f32.mrf.mxu0
    %v2400 = vadd.f32 0.0, %v2399
    %2401 = vmatmul.f32.gmra.mxu0 %v2191
    %v2402 = vpop.f32.mrf.mxu0
    %v2403 = vadd.f32 0.0, %v2402
    %2404 = vmatmul.f32.gmra.mxu0 %v2194
    %v2405 = vpop.f32.mrf.mxu0
    %v2406 = vadd.f32 0.0, %v2405
    %2407 = vmatmul.f32.gmra.mxu0 %v2197
    %v2408 = vpop.f32.mrf.mxu0
    %v2409 = vadd.f32 0.0, %v2408
    %2410 = vmatmul.f32.gmra.mxu0 %v2200
    %v2411 = vpop.f32.mrf.mxu0
    %v2412 = vadd.f32 0.0, %v2411
    %2413 = vmatmul.f32.gmra.mxu0 %v2203
    %v2414 = vpop.f32.mrf.mxu0
    %v2415 = vadd.f32 0.0, %v2414
    %2416 = vmatmul.f32.gmra.mxu0 %v2206
    %v2417 = vpop.f32.mrf.mxu0
    %v2418 = vadd.f32 0.0, %v2417
    %2419 = vmatmul.f32.gmra.mxu0 %v2209
    %v2420 = vpop.f32.mrf.mxu0
    %v2421 = vadd.f32 0.0, %v2420
    %2422 = vmatmul.f32.gmra.mxu0 %v2212
    %v2423 = vpop.f32.mrf.mxu0
    %v2424 = vadd.f32 0.0, %v2423
    %2425 = vmatmul.f32.gmra.mxu0 %v2215
    %v2426 = vpop.f32.mrf.mxu0
    %v2427 = vadd.f32 0.0, %v2426
    %2428 = vmatmul.f32.gmra.mxu0 %v2218
    %v2429 = vpop.f32.mrf.mxu0
    %v2430 = vadd.f32 0.0, %v2429
    %2431 = vmatmul.f32.gmra.mxu0 %v2221
    %v2432 = vpop.f32.mrf.mxu0
    %v2433 = vadd.f32 0.0, %v2432
    %2434 = vmatmul.f32.gmra.mxu0 %v2224
    %v2435 = vpop.f32.mrf.mxu0
    %v2436 = vadd.f32 0.0, %v2435
    %2437 = vmatmul.f32.gmra.mxu0 %v2227
    %v2438 = vpop.f32.mrf.mxu0
    %v2439 = vadd.f32 0.0, %v2438
    %2440 = vmatmul.f32.gmra.mxu0 %v2230
    %v2441 = vpop.f32.mrf.mxu0
    %v2442 = vadd.f32 0.0, %v2441
    %2443 = vmatmul.f32.gmra.mxu0 %v2233
    %v2444 = vpop.f32.mrf.mxu0
    %v2445 = vadd.f32 0.0, %v2444
    %2446 = vmatmul.f32.gmra.mxu0 %v2236
    %v2447 = vpop.f32.mrf.mxu0
    %v2448 = vadd.f32 0.0, %v2447
    %2449 = vmatmul.f32.gmra.mxu0 %v2239
    %v2450 = vpop.f32.mrf.mxu0
    %v2451 = vadd.f32 0.0, %v2450
    %2452 = vmatmul.f32.gmra.mxu0 %v2242
    %v2453 = vpop.f32.mrf.mxu0
    %v2454 = vadd.f32 0.0, %v2453
    %2455 = vmatmul.f32.gmra.mxu0 %v2245
    %v2456 = vpop.f32.mrf.mxu0
    %v2457 = vadd.f32 0.0, %v2456
    %2458 = vmatmul.f32.gmra.mxu0 %v2248
    %v2459 = vpop.f32.mrf.mxu0
    %v2460 = vadd.f32 0.0, %v2459
    %2461 = vmatmul.f32.gmra.mxu0 %v2251
    %v2462 = vpop.f32.mrf.mxu0
    %v2463 = vadd.f32 0.0, %v2462
    %2464 = vmatmul.f32.gmra.mxu0 %v2254
    %v2465 = vpop.f32.mrf.mxu0
    %v2466 = vadd.f32 0.0, %v2465
    %2467 = vmatmul.f32.gmra.mxu0 %v2257
    %v2468 = vpop.f32.mrf.mxu0
    %v2469 = vadd.f32 0.0, %v2468
    %2470 = vmatmul.f32.gmra.mxu0 %v2260
    %v2471 = vpop.f32.mrf.mxu0
    %v2472 = vadd.f32 0.0, %v2471
    %2473 = vmatmul.f32.gmra.mxu0 %v2263
    %v2474 = vpop.f32.mrf.mxu0
    %v2475 = vadd.f32 0.0, %v2474
    %2476 = vmatmul.f32.gmra.mxu0 %v2266
    %v2477 = vpop.f32.mrf.mxu0
    %v2478 = vadd.f32 0.0, %v2477
    %2479 = vmatmul.f32.gmra.mxu0 %v2269
    %v2480 = vpop.f32.mrf.mxu0
    %v2481 = vadd.f32 0.0, %v2480
    %2482 = vmatmul.f32.gmra.mxu0 %v2272
    %v2483 = vpop.f32.mrf.mxu0
    %v2484 = vadd.f32 0.0, %v2483
    %2485 = vmatmul.f32.gmra.mxu0 %v2275
    %v2486 = vpop.f32.mrf.mxu0
    %v2487 = vadd.f32 0.0, %v2486
    %2488 = vmatmul.f32.gmra.mxu0 %v2278
    %v2489 = vpop.f32.mrf.mxu0
    %v2490 = vadd.f32 0.0, %v2489
    %2491 = vmatmul.f32.gmra.mxu0 %v2281
    %v2492 = vpop.f32.mrf.mxu0
    %v2493 = vadd.f32 0.0, %v2492
    %2494 = vmatmul.f32.gmra.mxu0 %v2284
    %v2495 = vpop.f32.mrf.mxu0
    %v2496 = vadd.f32 0.0, %v2495
    %2497 = vmatmul.f32.gmra.mxu0 %v2287
    %v2498 = vpop.f32.mrf.mxu0
    %v2499 = vadd.f32 0.0, %v2498
    %2500 = vmatmul.f32.gmra.mxu0 %v2290
    %v2501 = vpop.f32.mrf.mxu0
    %v2502 = vadd.f32 0.0, %v2501
    %2503 = vmatmul.f32.gmra.mxu0 %v2293
    %v2504 = vpop.f32.mrf.mxu0
    %v2505 = vadd.f32 0.0, %v2504
    %2506 = vdwg.mxu0
    %v2507 = vadd.f32 %v1973, %v2316
    %v2508 = vadd.f32 %v1974, %v2319
    %v2509 = vadd.f32 %v1975, %v2322
    %v2510 = vadd.f32 %v1976, %v2325
    %v2511 = vadd.f32 %v1977, %v2328
    %v2512 = vadd.f32 %v1978, %v2331
    %v2513 = vadd.f32 %v1979, %v2334
    %v2514 = vadd.f32 %v1980, %v2337
    %v2515 = vadd.f32 %v1981, %v2340
    %v2516 = vadd.f32 %v1982, %v2343
    %v2517 = vadd.f32 %v1983, %v2346
    %v2518 = vadd.f32 %v1984, %v2349
    %v2519 = vadd.f32 %v1985, %v2352
    %v2520 = vadd.f32 %v1986, %v2355
    %v2521 = vadd.f32 %v1987, %v2358
    %v2522 = vadd.f32 %v1988, %v2361
    %v2523 = vadd.f32 %v1989, %v2364
    %v2524 = vadd.f32 %v1990, %v2367
    %v2525 = vadd.f32 %v1991, %v2370
    %v2526 = vadd.f32 %v1992, %v2373
    %v2527 = vadd.f32 %v1993, %v2376
    %v2528 = vadd.f32 %v1994, %v2379
    %v2529 = vadd.f32 %v1995, %v2382
    %v2530 = vadd.f32 %v1996, %v2385
    %v2531 = vadd.f32 %v1997, %v2388
    %v2532 = vadd.f32 %v1998, %v2391
    %v2533 = vadd.f32 %v1999, %v2394
    %v2534 = vadd.f32 %v2000, %v2397
    %v2535 = vadd.f32 %v2001, %v2400
    %v2536 = vadd.f32 %v2002, %v2403
    %v2537 = vadd.f32 %v2003, %v2406
    %v2538 = vadd.f32 %v2004, %v2409
    %v2539 = vadd.f32 %v2005, %v2412
    %v2540 = vadd.f32 %v2006, %v2415
    %v2541 = vadd.f32 %v2007, %v2418
    %v2542 = vadd.f32 %v2008, %v2421
    %v2543 = vadd.f32 %v2009, %v2424
    %v2544 = vadd.f32 %v2010, %v2427
    %v2545 = vadd.f32 %v2011, %v2430
    %v2546 = vadd.f32 %v2012, %v2433
    %v2547 = vadd.f32 %v2013, %v2436
    %v2548 = vadd.f32 %v2014, %v2439
    %v2549 = vadd.f32 %v2015, %v2442
    %v2550 = vadd.f32 %v2016, %v2445
    %v2551 = vadd.f32 %v2017, %v2448
    %v2552 = vadd.f32 %v2018, %v2451
    %v2553 = vadd.f32 %v2019, %v2454
    %v2554 = vadd.f32 %v2020, %v2457
    %v2555 = vadd.f32 %v2021, %v2460
    %v2556 = vadd.f32 %v2022, %v2463
    %v2557 = vadd.f32 %v2023, %v2466
    %v2558 = vadd.f32 %v2024, %v2469
    %v2559 = vadd.f32 %v2025, %v2472
    %v2560 = vadd.f32 %v2026, %v2475
    %v2561 = vadd.f32 %v2027, %v2478
    %v2562 = vadd.f32 %v2028, %v2481
    %v2563 = vadd.f32 %v2029, %v2484
    %v2564 = vadd.f32 %v2030, %v2487
    %v2565 = vadd.f32 %v2031, %v2490
    %v2566 = vadd.f32 %v2032, %v2493
    %v2567 = vadd.f32 %v2033, %v2496
    %v2568 = vadd.f32 %v2034, %v2499
    %v2569 = vadd.f32 %v2035, %v2502
    %v2570 = vadd.f32 %v2036, %v2505
    %v2571 = vld [vmem:[%s1502 + $0x2] sm:$0xff]
    %v2572 = vld [vmem:[%s1502 + $0xa] sm:$0xff]
    %v2573 = vld [vmem:[%s1502 + $0x1a] sm:$0xff]
    %v2574 = vld [vmem:[%s1502 + $0x22] sm:$0xff]
    %v2575 = vld [vmem:[%s1502 + $0x32] sm:$0xff]
    %v2576 = vld [vmem:[%s1502 + $0x3a] sm:$0xff]
    %v2577 = vld [vmem:[%s1502 + $0x4a] sm:$0xff]
    %v2578 = vld [vmem:[%s1502 + $0x52] sm:$0xff]
    %v2579 = vld [vmem:[%s1502 + $0x62] sm:$0xff]
    %v2580 = vld [vmem:[%s1502 + $0x6a] sm:$0xff]
    %v2581 = vld [vmem:[%s1502 + $0x7a] sm:$0xff]
    %v2582 = vld [vmem:[%s1502 + $0x82] sm:$0xff]
    %v2583 = vld [vmem:[%s1502 + $0x92] sm:$0xff]
    %v2584 = vld [vmem:[%s1502 + $0x9a] sm:$0xff]
    %v2585 = vld [vmem:[%s1502 + $0xaa] sm:$0xff]
    %v2586 = vld [vmem:[%s1502 + $0xb2] sm:$0xff]
    %v2587 = vld [vmem:[%s1502 + $0xc2] sm:$0xff]
    %v2588 = vld [vmem:[%s1502 + $0xca] sm:$0xff]
    %v2589 = vld [vmem:[%s1502 + $0xda] sm:$0xff]
    %v2590 = vld [vmem:[%s1502 + $0xe2] sm:$0xff]
    %v2591 = vld [vmem:[%s1502 + $0xf2] sm:$0xff]
    %v2592 = vld [vmem:[%s1502 + $0xfa] sm:$0xff]
    %v2593 = vld [vmem:[%s1502 + $0x10a] sm:$0xff]
    %v2594 = vld [vmem:[%s1502 + $0x112] sm:$0xff]
    %v2595 = vld [vmem:[%s1502 + $0x122] sm:$0xff]
    %v2596 = vld [vmem:[%s1502 + $0x12a] sm:$0xff]
    %v2597 = vld [vmem:[%s1502 + $0x13a] sm:$0xff]
    %v2598 = vld [vmem:[%s1502 + $0x142] sm:$0xff]
    %v2599 = vld [vmem:[%s1502 + $0x152] sm:$0xff]
    %v2600 = vld [vmem:[%s1502 + $0x15a] sm:$0xff]
    %v2601 = vld [vmem:[%s1502 + $0x16a] sm:$0xff]
    %v2602 = vld [vmem:[%s1502 + $0x172] sm:$0xff]
    %v2603 = vld [vmem:[%s1502 + $0x1b2] sm:$0xff]
    %v2604 = vld [vmem:[%s1502 + $0x1ba] sm:$0xff]
    %v2605 = vld [vmem:[%s1502 + $0x1ca] sm:$0xff]
    %v2606 = vld [vmem:[%s1502 + $0x1d2] sm:$0xff]
    %v2607 = vld [vmem:[%s1502 + $0x1e2] sm:$0xff]
    %v2608 = vld [vmem:[%s1502 + $0x1ea] sm:$0xff]
    %v2609 = vld [vmem:[%s1502 + $0x1fa] sm:$0xff]
    %v2610 = vld [vmem:[%s1502 + $0x202] sm:$0xff]
    %v2611 = vld [vmem:[%s1502 + $0x212] sm:$0xff]
    %v2612 = vld [vmem:[%s1502 + $0x21a] sm:$0xff]
    %v2613 = vld [vmem:[%s1502 + $0x22a] sm:$0xff]
    %v2614 = vld [vmem:[%s1502 + $0x232] sm:$0xff]
    %v2615 = vld [vmem:[%s1502 + $0x242] sm:$0xff]
    %v2616 = vld [vmem:[%s1502 + $0x24a] sm:$0xff]
    %v2617 = vld [vmem:[%s1502 + $0x25a] sm:$0xff]
    %v2618 = vld [vmem:[%s1502 + $0x262] sm:$0xff]
    %v2619 = vld [vmem:[%s1502 + $0x272] sm:$0xff]
    %v2620 = vld [vmem:[%s1502 + $0x27a] sm:$0xff]
    %v2621 = vld [vmem:[%s1502 + $0x28a] sm:$0xff]
    %v2622 = vld [vmem:[%s1502 + $0x292] sm:$0xff]
    %v2623 = vld [vmem:[%s1502 + $0x2a2] sm:$0xff]
    %v2624 = vld [vmem:[%s1502 + $0x2aa] sm:$0xff]
    %v2625 = vld [vmem:[%s1502 + $0x2ba] sm:$0xff]
    %v2626 = vld [vmem:[%s1502 + $0x2c2] sm:$0xff]
    %v2627 = vld [vmem:[%s1502 + $0x2d2] sm:$0xff]
    %v2628 = vld [vmem:[%s1502 + $0x2da] sm:$0xff]
    %v2629 = vld [vmem:[%s1502 + $0x2ea] sm:$0xff]
    %v2630 = vld [vmem:[%s1502 + $0x2f2] sm:$0xff]
    %v2631 = vld [vmem:[%s1502 + $0x302] sm:$0xff]
    %v2632 = vld [vmem:[%s1502 + $0x30a] sm:$0xff]
    %v2633 = vld [vmem:[%s1502 + $0x31a] sm:$0xff]
    %v2634 = vld [vmem:[%s1502 + $0x322] sm:$0xff]
    %s2635 = scalar_lea.vmem %s1, 20
    %v2636 = vld [vmem:[%s2635] sm:$0xf]
    %v2638 = vsel %vm158, %v2571, 0
    %v2641 = vsel %vm158, %v2572, 0
    %v2644 = vsel %vm158, %v2573, 0
    %v2647 = vsel %vm158, %v2574, 0
    %v2650 = vsel %vm158, %v2575, 0
    %v2653 = vsel %vm158, %v2576, 0
    %v2656 = vsel %vm158, %v2577, 0
    %v2659 = vsel %vm158, %v2578, 0
    %v2662 = vsel %vm158, %v2579, 0
    %v2665 = vsel %vm158, %v2580, 0
    %v2668 = vsel %vm158, %v2581, 0
    %v2671 = vsel %vm158, %v2582, 0
    %v2674 = vsel %vm158, %v2583, 0
    %v2677 = vsel %vm158, %v2584, 0
    %v2680 = vsel %vm158, %v2585, 0
    %v2683 = vsel %vm158, %v2586, 0
    %v2686 = vsel %vm158, %v2587, 0
    %v2689 = vsel %vm158, %v2588, 0
    %v2692 = vsel %vm158, %v2589, 0
    %v2695 = vsel %vm158, %v2590, 0
    %v2698 = vsel %vm158, %v2591, 0
    %v2701 = vsel %vm158, %v2592, 0
    %v2704 = vsel %vm158, %v2593, 0
    %v2707 = vsel %vm158, %v2594, 0
    %v2710 = vsel %vm158, %v2595, 0
    %v2713 = vsel %vm158, %v2596, 0
    %v2716 = vsel %vm158, %v2597, 0
    %v2719 = vsel %vm158, %v2598, 0
    %v2722 = vsel %vm158, %v2599, 0
    %v2725 = vsel %vm158, %v2600, 0
    %v2728 = vsel %vm158, %v2601, 0
    %v2731 = vsel %vm158, %v2602, 0
    %v2734 = vsel %vm158, %v2603, 0
    %v2737 = vsel %vm158, %v2604, 0
    %v2740 = vsel %vm158, %v2605, 0
    %v2743 = vsel %vm158, %v2606, 0
    %v2746 = vsel %vm158, %v2607, 0
    %v2749 = vsel %vm158, %v2608, 0
    %v2752 = vsel %vm158, %v2609, 0
    %v2755 = vsel %vm158, %v2610, 0
    %v2758 = vsel %vm158, %v2611, 0
    %v2761 = vsel %vm158, %v2612, 0
    %v2764 = vsel %vm158, %v2613, 0
    %v2767 = vsel %vm158, %v2614, 0
    %v2770 = vsel %vm158, %v2615, 0
    %v2773 = vsel %vm158, %v2616, 0
    %v2776 = vsel %vm158, %v2617, 0
    %v2779 = vsel %vm158, %v2618, 0
    %v2782 = vsel %vm158, %v2619, 0
    %v2785 = vsel %vm158, %v2620, 0
    %v2788 = vsel %vm158, %v2621, 0
    %v2791 = vsel %vm158, %v2622, 0
    %v2794 = vsel %vm158, %v2623, 0
    %v2797 = vsel %vm158, %v2624, 0
    %v2800 = vsel %vm158, %v2625, 0
    %v2803 = vsel %vm158, %v2626, 0
    %v2806 = vsel %vm158, %v2627, 0
    %v2809 = vsel %vm158, %v2628, 0
    %v2812 = vsel %vm158, %v2629, 0
    %v2815 = vsel %vm158, %v2630, 0
    %v2818 = vsel %vm158, %v2631, 0
    %v2821 = vsel %vm158, %v2632, 0
    %v2824 = vsel %vm158, %v2633, 0
    %v2827 = vsel %vm158, %v2634, 0
    %v2830 = vsel %vm351, %v2636, 0
    %2832 = vmatpush.msra.mxu0 0.0
    %2833 = vmatpush.msra.mxu0 0.0
    %2834 = vmatpush.msra.mxu0 0.0
    %2835 = vmatpush.msra.mxu0 0.0
    %2836 = vmatpush.msra.mxu0 0.0
    %2837 = vmatpush.msra.mxu0 0.0
    %2838 = vmatpush.msra.mxu0 0.0
    %2839 = vmatpush.msra.mxu0 0.0
    %2840 = vmatpush.msra.mxu0 0.0
    %2841 = vmatpush.msra.mxu0 0.0
    %2842 = vmatpush.msra.mxu0 0.0
    %2843 = vmatpush.msra.mxu0 0.0
    %2844 = vmatpush.msra.mxu0 0.0
    %2845 = vmatpush.msra.mxu0 0.0
    %2846 = vmatpush.msra.mxu0 0.0
    %2847 = vmatpush.msra.mxu0 %v2830
    %2848 = vmatmul.f32.gmra.mxu0 %v2638
    %v2849 = vpop.f32.mrf.mxu0
    %v2850 = vadd.f32 0.0, %v2849
    %2851 = vmatmul.f32.gmra.mxu0 %v2641
    %v2852 = vpop.f32.mrf.mxu0
    %v2853 = vadd.f32 0.0, %v2852
    %2854 = vmatmul.f32.gmra.mxu0 %v2644
    %v2855 = vpop.f32.mrf.mxu0
    %v2856 = vadd.f32 0.0, %v2855
    %2857 = vmatmul.f32.gmra.mxu0 %v2647
    %v2858 = vpop.f32.mrf.mxu0
    %v2859 = vadd.f32 0.0, %v2858
    %2860 = vmatmul.f32.gmra.mxu0 %v2650
    %v2861 = vpop.f32.mrf.mxu0
    %v2862 = vadd.f32 0.0, %v2861
    %2863 = vmatmul.f32.gmra.mxu0 %v2653
    %v2864 = vpop.f32.mrf.mxu0
    %v2865 = vadd.f32 0.0, %v2864
    %2866 = vmatmul.f32.gmra.mxu0 %v2656
    %v2867 = vpop.f32.mrf.mxu0
    %v2868 = vadd.f32 0.0, %v2867
    %2869 = vmatmul.f32.gmra.mxu0 %v2659
    %v2870 = vpop.f32.mrf.mxu0
    %v2871 = vadd.f32 0.0, %v2870
    %2872 = vmatmul.f32.gmra.mxu0 %v2662
    %v2873 = vpop.f32.mrf.mxu0
    %v2874 = vadd.f32 0.0, %v2873
    %2875 = vmatmul.f32.gmra.mxu0 %v2665
    %v2876 = vpop.f32.mrf.mxu0
    %v2877 = vadd.f32 0.0, %v2876
    %2878 = vmatmul.f32.gmra.mxu0 %v2668
    %v2879 = vpop.f32.mrf.mxu0
    %v2880 = vadd.f32 0.0, %v2879
    %2881 = vmatmul.f32.gmra.mxu0 %v2671
    %v2882 = vpop.f32.mrf.mxu0
    %v2883 = vadd.f32 0.0, %v2882
    %2884 = vmatmul.f32.gmra.mxu0 %v2674
    %v2885 = vpop.f32.mrf.mxu0
    %v2886 = vadd.f32 0.0, %v2885
    %2887 = vmatmul.f32.gmra.mxu0 %v2677
    %v2888 = vpop.f32.mrf.mxu0
    %v2889 = vadd.f32 0.0, %v2888
    %2890 = vmatmul.f32.gmra.mxu0 %v2680
    %v2891 = vpop.f32.mrf.mxu0
    %v2892 = vadd.f32 0.0, %v2891
    %2893 = vmatmul.f32.gmra.mxu0 %v2683
    %v2894 = vpop.f32.mrf.mxu0
    %v2895 = vadd.f32 0.0, %v2894
    %2896 = vmatmul.f32.gmra.mxu0 %v2686
    %v2897 = vpop.f32.mrf.mxu0
    %v2898 = vadd.f32 0.0, %v2897
    %2899 = vmatmul.f32.gmra.mxu0 %v2689
    %v2900 = vpop.f32.mrf.mxu0
    %v2901 = vadd.f32 0.0, %v2900
    %2902 = vmatmul.f32.gmra.mxu0 %v2692
    %v2903 = vpop.f32.mrf.mxu0
    %v2904 = vadd.f32 0.0, %v2903
    %2905 = vmatmul.f32.gmra.mxu0 %v2695
    %v2906 = vpop.f32.mrf.mxu0
    %v2907 = vadd.f32 0.0, %v2906
    %2908 = vmatmul.f32.gmra.mxu0 %v2698
    %v2909 = vpop.f32.mrf.mxu0
    %v2910 = vadd.f32 0.0, %v2909
    %2911 = vmatmul.f32.gmra.mxu0 %v2701
    %v2912 = vpop.f32.mrf.mxu0
    %v2913 = vadd.f32 0.0, %v2912
    %2914 = vmatmul.f32.gmra.mxu0 %v2704
    %v2915 = vpop.f32.mrf.mxu0
    %v2916 = vadd.f32 0.0, %v2915
    %2917 = vmatmul.f32.gmra.mxu0 %v2707
    %v2918 = vpop.f32.mrf.mxu0
    %v2919 = vadd.f32 0.0, %v2918
    %2920 = vmatmul.f32.gmra.mxu0 %v2710
    %v2921 = vpop.f32.mrf.mxu0
    %v2922 = vadd.f32 0.0, %v2921
    %2923 = vmatmul.f32.gmra.mxu0 %v2713
    %v2924 = vpop.f32.mrf.mxu0
    %v2925 = vadd.f32 0.0, %v2924
    %2926 = vmatmul.f32.gmra.mxu0 %v2716
    %v2927 = vpop.f32.mrf.mxu0
    %v2928 = vadd.f32 0.0, %v2927
    %2929 = vmatmul.f32.gmra.mxu0 %v2719
    %v2930 = vpop.f32.mrf.mxu0
    %v2931 = vadd.f32 0.0, %v2930
    %2932 = vmatmul.f32.gmra.mxu0 %v2722
    %v2933 = vpop.f32.mrf.mxu0
    %v2934 = vadd.f32 0.0, %v2933
    %2935 = vmatmul.f32.gmra.mxu0 %v2725
    %v2936 = vpop.f32.mrf.mxu0
    %v2937 = vadd.f32 0.0, %v2936
    %2938 = vmatmul.f32.gmra.mxu0 %v2728
    %v2939 = vpop.f32.mrf.mxu0
    %v2940 = vadd.f32 0.0, %v2939
    %2941 = vmatmul.f32.gmra.mxu0 %v2731
    %v2942 = vpop.f32.mrf.mxu0
    %v2943 = vadd.f32 0.0, %v2942
    %2944 = vmatmul.f32.gmra.mxu0 %v2734
    %v2945 = vpop.f32.mrf.mxu0
    %v2946 = vadd.f32 0.0, %v2945
    %2947 = vmatmul.f32.gmra.mxu0 %v2737
    %v2948 = vpop.f32.mrf.mxu0
    %v2949 = vadd.f32 0.0, %v2948
    %2950 = vmatmul.f32.gmra.mxu0 %v2740
    %v2951 = vpop.f32.mrf.mxu0
    %v2952 = vadd.f32 0.0, %v2951
    %2953 = vmatmul.f32.gmra.mxu0 %v2743
    %v2954 = vpop.f32.mrf.mxu0
    %v2955 = vadd.f32 0.0, %v2954
    %2956 = vmatmul.f32.gmra.mxu0 %v2746
    %v2957 = vpop.f32.mrf.mxu0
    %v2958 = vadd.f32 0.0, %v2957
    %2959 = vmatmul.f32.gmra.mxu0 %v2749
    %v2960 = vpop.f32.mrf.mxu0
    %v2961 = vadd.f32 0.0, %v2960
    %2962 = vmatmul.f32.gmra.mxu0 %v2752
    %v2963 = vpop.f32.mrf.mxu0
    %v2964 = vadd.f32 0.0, %v2963
    %2965 = vmatmul.f32.gmra.mxu0 %v2755
    %v2966 = vpop.f32.mrf.mxu0
    %v2967 = vadd.f32 0.0, %v2966
    %2968 = vmatmul.f32.gmra.mxu0 %v2758
    %v2969 = vpop.f32.mrf.mxu0
    %v2970 = vadd.f32 0.0, %v2969
    %2971 = vmatmul.f32.gmra.mxu0 %v2761
    %v2972 = vpop.f32.mrf.mxu0
    %v2973 = vadd.f32 0.0, %v2972
    %2974 = vmatmul.f32.gmra.mxu0 %v2764
    %v2975 = vpop.f32.mrf.mxu0
    %v2976 = vadd.f32 0.0, %v2975
    %2977 = vmatmul.f32.gmra.mxu0 %v2767
    %v2978 = vpop.f32.mrf.mxu0
    %v2979 = vadd.f32 0.0, %v2978
    %2980 = vmatmul.f32.gmra.mxu0 %v2770
    %v2981 = vpop.f32.mrf.mxu0
    %v2982 = vadd.f32 0.0, %v2981
    %2983 = vmatmul.f32.gmra.mxu0 %v2773
    %v2984 = vpop.f32.mrf.mxu0
    %v2985 = vadd.f32 0.0, %v2984
    %2986 = vmatmul.f32.gmra.mxu0 %v2776
    %v2987 = vpop.f32.mrf.mxu0
    %v2988 = vadd.f32 0.0, %v2987
    %2989 = vmatmul.f32.gmra.mxu0 %v2779
    %v2990 = vpop.f32.mrf.mxu0
    %v2991 = vadd.f32 0.0, %v2990
    %2992 = vmatmul.f32.gmra.mxu0 %v2782
    %v2993 = vpop.f32.mrf.mxu0
    %v2994 = vadd.f32 0.0, %v2993
    %2995 = vmatmul.f32.gmra.mxu0 %v2785
    %v2996 = vpop.f32.mrf.mxu0
    %v2997 = vadd.f32 0.0, %v2996
    %2998 = vmatmul.f32.gmra.mxu0 %v2788
    %v2999 = vpop.f32.mrf.mxu0
    %v3000 = vadd.f32 0.0, %v2999
    %3001 = vmatmul.f32.gmra.mxu0 %v2791
    %v3002 = vpop.f32.mrf.mxu0
    %v3003 = vadd.f32 0.0, %v3002
    %3004 = vmatmul.f32.gmra.mxu0 %v2794
    %v3005 = vpop.f32.mrf.mxu0
    %v3006 = vadd.f32 0.0, %v3005
    %3007 = vmatmul.f32.gmra.mxu0 %v2797
    %v3008 = vpop.f32.mrf.mxu0
    %v3009 = vadd.f32 0.0, %v3008
    %3010 = vmatmul.f32.gmra.mxu0 %v2800
    %v3011 = vpop.f32.mrf.mxu0
    %v3012 = vadd.f32 0.0, %v3011
    %3013 = vmatmul.f32.gmra.mxu0 %v2803
    %v3014 = vpop.f32.mrf.mxu0
    %v3015 = vadd.f32 0.0, %v3014
    %3016 = vmatmul.f32.gmra.mxu0 %v2806
    %v3017 = vpop.f32.mrf.mxu0
    %v3018 = vadd.f32 0.0, %v3017
    %3019 = vmatmul.f32.gmra.mxu0 %v2809
    %v3020 = vpop.f32.mrf.mxu0
    %v3021 = vadd.f32 0.0, %v3020
    %3022 = vmatmul.f32.gmra.mxu0 %v2812
    %v3023 = vpop.f32.mrf.mxu0
    %v3024 = vadd.f32 0.0, %v3023
    %3025 = vmatmul.f32.gmra.mxu0 %v2815
    %v3026 = vpop.f32.mrf.mxu0
    %v3027 = vadd.f32 0.0, %v3026
    %3028 = vmatmul.f32.gmra.mxu0 %v2818
    %v3029 = vpop.f32.mrf.mxu0
    %v3030 = vadd.f32 0.0, %v3029
    %3031 = vmatmul.f32.gmra.mxu0 %v2821
    %v3032 = vpop.f32.mrf.mxu0
    %v3033 = vadd.f32 0.0, %v3032
    %3034 = vmatmul.f32.gmra.mxu0 %v2824
    %v3035 = vpop.f32.mrf.mxu0
    %v3036 = vadd.f32 0.0, %v3035
    %3037 = vmatmul.f32.gmra.mxu0 %v2827
    %v3038 = vpop.f32.mrf.mxu0
    %v3039 = vadd.f32 0.0, %v3038
    %3040 = vdwg.mxu0
    %v3041 = vadd.f32 %v2507, %v2850
    %v3042 = vadd.f32 %v2508, %v2853
    %v3043 = vadd.f32 %v2509, %v2856
    %v3044 = vadd.f32 %v2510, %v2859
    %v3045 = vadd.f32 %v2511, %v2862
    %v3046 = vadd.f32 %v2512, %v2865
    %v3047 = vadd.f32 %v2513, %v2868
    %v3048 = vadd.f32 %v2514, %v2871
    %v3049 = vadd.f32 %v2515, %v2874
    %v3050 = vadd.f32 %v2516, %v2877
    %v3051 = vadd.f32 %v2517, %v2880
    %v3052 = vadd.f32 %v2518, %v2883
    %v3053 = vadd.f32 %v2519, %v2886
    %v3054 = vadd.f32 %v2520, %v2889
    %v3055 = vadd.f32 %v2521, %v2892
    %v3056 = vadd.f32 %v2522, %v2895
    %v3057 = vadd.f32 %v2523, %v2898
    %v3058 = vadd.f32 %v2524, %v2901
    %v3059 = vadd.f32 %v2525, %v2904
    %v3060 = vadd.f32 %v2526, %v2907
    %v3061 = vadd.f32 %v2527, %v2910
    %v3062 = vadd.f32 %v2528, %v2913
    %v3063 = vadd.f32 %v2529, %v2916
    %v3064 = vadd.f32 %v2530, %v2919
    %v3065 = vadd.f32 %v2531, %v2922
    %v3066 = vadd.f32 %v2532, %v2925
    %v3067 = vadd.f32 %v2533, %v2928
    %v3068 = vadd.f32 %v2534, %v2931
    %v3069 = vadd.f32 %v2535, %v2934
    %v3070 = vadd.f32 %v2536, %v2937
    %v3071 = vadd.f32 %v2537, %v2940
    %v3072 = vadd.f32 %v2538, %v2943
    %v3073 = vadd.f32 %v2539, %v2946
    %v3074 = vadd.f32 %v2540, %v2949
    %v3075 = vadd.f32 %v2541, %v2952
    %v3076 = vadd.f32 %v2542, %v2955
    %v3077 = vadd.f32 %v2543, %v2958
    %v3078 = vadd.f32 %v2544, %v2961
    %v3079 = vadd.f32 %v2545, %v2964
    %v3080 = vadd.f32 %v2546, %v2967
    %v3081 = vadd.f32 %v2547, %v2970
    %v3082 = vadd.f32 %v2548, %v2973
    %v3083 = vadd.f32 %v2549, %v2976
    %v3084 = vadd.f32 %v2550, %v2979
    %v3085 = vadd.f32 %v2551, %v2982
    %v3086 = vadd.f32 %v2552, %v2985
    %v3087 = vadd.f32 %v2553, %v2988
    %v3088 = vadd.f32 %v2554, %v2991
    %v3089 = vadd.f32 %v2555, %v2994
    %v3090 = vadd.f32 %v2556, %v2997
    %v3091 = vadd.f32 %v2557, %v3000
    %v3092 = vadd.f32 %v2558, %v3003
    %v3093 = vadd.f32 %v2559, %v3006
    %v3094 = vadd.f32 %v2560, %v3009
    %v3095 = vadd.f32 %v2561, %v3012
    %v3096 = vadd.f32 %v2562, %v3015
    %v3097 = vadd.f32 %v2563, %v3018
    %v3098 = vadd.f32 %v2564, %v3021
    %v3099 = vadd.f32 %v2565, %v3024
    %v3100 = vadd.f32 %v2566, %v3027
    %v3101 = vadd.f32 %v2567, %v3030
    %v3102 = vadd.f32 %v2568, %v3033
    %v3103 = vadd.f32 %v2569, %v3036
    %v3104 = vadd.f32 %v2570, %v3039
    %s3105 = scalar_lea.vmem %s0, 48
    %v3106 = vld [vmem:[%s3105] sm:$0xff]
    %v3107 = vld [vmem:[%s3105 + $0x8] sm:$0xff]
    %v3108 = vld [vmem:[%s3105 + $0x18] sm:$0xff]
    %v3109 = vld [vmem:[%s3105 + $0x20] sm:$0xff]
    %v3110 = vld [vmem:[%s3105 + $0x30] sm:$0xff]
    %v3111 = vld [vmem:[%s3105 + $0x38] sm:$0xff]
    %v3112 = vld [vmem:[%s3105 + $0x48] sm:$0xff]
    %v3113 = vld [vmem:[%s3105 + $0x50] sm:$0xff]
    %v3114 = vld [vmem:[%s3105 + $0x60] sm:$0xff]
    %v3115 = vld [vmem:[%s3105 + $0x68] sm:$0xff]
    %v3116 = vld [vmem:[%s3105 + $0x78] sm:$0xff]
    %v3117 = vld [vmem:[%s3105 + $0x80] sm:$0xff]
    %v3118 = vld [vmem:[%s3105 + $0x90] sm:$0xff]
    %v3119 = vld [vmem:[%s3105 + $0x98] sm:$0xff]
    %v3120 = vld [vmem:[%s3105 + $0xa8] sm:$0xff]
    %v3121 = vld [vmem:[%s3105 + $0xb0] sm:$0xff]
    %v3122 = vld [vmem:[%s3105 + $0xc0] sm:$0xff]
    %v3123 = vld [vmem:[%s3105 + $0xc8] sm:$0xff]
    %v3124 = vld [vmem:[%s3105 + $0xd8] sm:$0xff]
    %v3125 = vld [vmem:[%s3105 + $0xe0] sm:$0xff]
    %v3126 = vld [vmem:[%s3105 + $0xf0] sm:$0xff]
    %v3127 = vld [vmem:[%s3105 + $0xf8] sm:$0xff]
    %v3128 = vld [vmem:[%s3105 + $0x108] sm:$0xff]
    %v3129 = vld [vmem:[%s3105 + $0x110] sm:$0xff]
    %v3130 = vld [vmem:[%s3105 + $0x120] sm:$0xff]
    %v3131 = vld [vmem:[%s3105 + $0x128] sm:$0xff]
    %v3132 = vld [vmem:[%s3105 + $0x138] sm:$0xff]
    %v3133 = vld [vmem:[%s3105 + $0x140] sm:$0xff]
    %v3134 = vld [vmem:[%s3105 + $0x150] sm:$0xff]
    %v3135 = vld [vmem:[%s3105 + $0x158] sm:$0xff]
    %v3136 = vld [vmem:[%s3105 + $0x168] sm:$0xff]
    %v3137 = vld [vmem:[%s3105 + $0x170] sm:$0xff]
    %v3138 = vld [vmem:[%s3105 + $0x1b0] sm:$0xff]
    %v3139 = vld [vmem:[%s3105 + $0x1b8] sm:$0xff]
    %v3140 = vld [vmem:[%s3105 + $0x1c8] sm:$0xff]
    %v3141 = vld [vmem:[%s3105 + $0x1d0] sm:$0xff]
    %v3142 = vld [vmem:[%s3105 + $0x1e0] sm:$0xff]
    %v3143 = vld [vmem:[%s3105 + $0x1e8] sm:$0xff]
    %v3144 = vld [vmem:[%s3105 + $0x1f8] sm:$0xff]
    %v3145 = vld [vmem:[%s3105 + $0x200] sm:$0xff]
    %v3146 = vld [vmem:[%s3105 + $0x210] sm:$0xff]
    %v3147 = vld [vmem:[%s3105 + $0x218] sm:$0xff]
    %v3148 = vld [vmem:[%s3105 + $0x228] sm:$0xff]
    %v3149 = vld [vmem:[%s3105 + $0x230] sm:$0xff]
    %v3150 = vld [vmem:[%s3105 + $0x240] sm:$0xff]
    %v3151 = vld [vmem:[%s3105 + $0x248] sm:$0xff]
    %v3152 = vld [vmem:[%s3105 + $0x258] sm:$0xff]
    %v3153 = vld [vmem:[%s3105 + $0x260] sm:$0xff]
    %v3154 = vld [vmem:[%s3105 + $0x270] sm:$0xff]
    %v3155 = vld [vmem:[%s3105 + $0x278] sm:$0xff]
    %v3156 = vld [vmem:[%s3105 + $0x288] sm:$0xff]
    %v3157 = vld [vmem:[%s3105 + $0x290] sm:$0xff]
    %v3158 = vld [vmem:[%s3105 + $0x2a0] sm:$0xff]
    %v3159 = vld [vmem:[%s3105 + $0x2a8] sm:$0xff]
    %v3160 = vld [vmem:[%s3105 + $0x2b8] sm:$0xff]
    %v3161 = vld [vmem:[%s3105 + $0x2c0] sm:$0xff]
    %v3162 = vld [vmem:[%s3105 + $0x2d0] sm:$0xff]
    %v3163 = vld [vmem:[%s3105 + $0x2d8] sm:$0xff]
    %v3164 = vld [vmem:[%s3105 + $0x2e8] sm:$0xff]
    %v3165 = vld [vmem:[%s3105 + $0x2f0] sm:$0xff]
    %v3166 = vld [vmem:[%s3105 + $0x300] sm:$0xff]
    %v3167 = vld [vmem:[%s3105 + $0x308] sm:$0xff]
    %v3168 = vld [vmem:[%s3105 + $0x318] sm:$0xff]
    %v3169 = vld [vmem:[%s3105 + $0x320] sm:$0xff]
    %s3170 = scalar_lea.vmem %s1, 24
    %v3171 = vld [vmem:[%s3170] sm:$0xf]
    %v3173 = vsel %vm158, %v3106, 0
    %v3176 = vsel %vm158, %v3107, 0
    %v3179 = vsel %vm158, %v3108, 0
    %v3182 = vsel %vm158, %v3109, 0
    %v3185 = vsel %vm158, %v3110, 0
    %v3188 = vsel %vm158, %v3111, 0
    %v3191 = vsel %vm158, %v3112, 0
    %v3194 = vsel %vm158, %v3113, 0
    %v3197 = vsel %vm158, %v3114, 0
    %v3200 = vsel %vm158, %v3115, 0
    %v3203 = vsel %vm158, %v3116, 0
    %v3206 = vsel %vm158, %v3117, 0
    %v3209 = vsel %vm158, %v3118, 0
    %v3212 = vsel %vm158, %v3119, 0
    %v3215 = vsel %vm158, %v3120, 0
    %v3218 = vsel %vm158, %v3121, 0
    %v3221 = vsel %vm158, %v3122, 0
    %v3224 = vsel %vm158, %v3123, 0
    %v3227 = vsel %vm158, %v3124, 0
    %v3230 = vsel %vm158, %v3125, 0
    %v3233 = vsel %vm158, %v3126, 0
    %v3236 = vsel %vm158, %v3127, 0
    %v3239 = vsel %vm158, %v3128, 0
    %v3242 = vsel %vm158, %v3129, 0
    %v3245 = vsel %vm158, %v3130, 0
    %v3248 = vsel %vm158, %v3131, 0
    %v3251 = vsel %vm158, %v3132, 0
    %v3254 = vsel %vm158, %v3133, 0
    %v3257 = vsel %vm158, %v3134, 0
    %v3260 = vsel %vm158, %v3135, 0
    %v3263 = vsel %vm158, %v3136, 0
    %v3266 = vsel %vm158, %v3137, 0
    %v3269 = vsel %vm158, %v3138, 0
    %v3272 = vsel %vm158, %v3139, 0
    %v3275 = vsel %vm158, %v3140, 0
    %v3278 = vsel %vm158, %v3141, 0
    %v3281 = vsel %vm158, %v3142, 0
    %v3284 = vsel %vm158, %v3143, 0
    %v3287 = vsel %vm158, %v3144, 0
    %v3290 = vsel %vm158, %v3145, 0
    %v3293 = vsel %vm158, %v3146, 0
    %v3296 = vsel %vm158, %v3147, 0
    %v3299 = vsel %vm158, %v3148, 0
    %v3302 = vsel %vm158, %v3149, 0
    %v3305 = vsel %vm158, %v3150, 0
    %v3308 = vsel %vm158, %v3151, 0
    %v3311 = vsel %vm158, %v3152, 0
    %v3314 = vsel %vm158, %v3153, 0
    %v3317 = vsel %vm158, %v3154, 0
    %v3320 = vsel %vm158, %v3155, 0
    %v3323 = vsel %vm158, %v3156, 0
    %v3326 = vsel %vm158, %v3157, 0
    %v3329 = vsel %vm158, %v3158, 0
    %v3332 = vsel %vm158, %v3159, 0
    %v3335 = vsel %vm158, %v3160, 0
    %v3338 = vsel %vm158, %v3161, 0
    %v3341 = vsel %vm158, %v3162, 0
    %v3344 = vsel %vm158, %v3163, 0
    %v3347 = vsel %vm158, %v3164, 0
    %v3350 = vsel %vm158, %v3165, 0
    %v3353 = vsel %vm158, %v3166, 0
    %v3356 = vsel %vm158, %v3167, 0
    %v3359 = vsel %vm158, %v3168, 0
    %v3362 = vsel %vm158, %v3169, 0
    %v3365 = vsel %vm351, %v3171, 0
    %3367 = vmatpush.msra.mxu0 0.0
    %3368 = vmatpush.msra.mxu0 0.0
    %3369 = vmatpush.msra.mxu0 0.0
    %3370 = vmatpush.msra.mxu0 0.0
    %3371 = vmatpush.msra.mxu0 0.0
    %3372 = vmatpush.msra.mxu0 0.0
    %3373 = vmatpush.msra.mxu0 0.0
    %3374 = vmatpush.msra.mxu0 0.0
    %3375 = vmatpush.msra.mxu0 0.0
    %3376 = vmatpush.msra.mxu0 0.0
    %3377 = vmatpush.msra.mxu0 0.0
    %3378 = vmatpush.msra.mxu0 0.0
    %3379 = vmatpush.msra.mxu0 0.0
    %3380 = vmatpush.msra.mxu0 0.0
    %3381 = vmatpush.msra.mxu0 0.0
    %3382 = vmatpush.msra.mxu0 %v3365
    %3383 = vmatmul.f32.gmra.mxu0 %v3173
    %v3384 = vpop.f32.mrf.mxu0
    %v3385 = vadd.f32 0.0, %v3384
    %3386 = vmatmul.f32.gmra.mxu0 %v3176
    %v3387 = vpop.f32.mrf.mxu0
    %v3388 = vadd.f32 0.0, %v3387
    %3389 = vmatmul.f32.gmra.mxu0 %v3179
    %v3390 = vpop.f32.mrf.mxu0
    %v3391 = vadd.f32 0.0, %v3390
    %3392 = vmatmul.f32.gmra.mxu0 %v3182
    %v3393 = vpop.f32.mrf.mxu0
    %v3394 = vadd.f32 0.0, %v3393
    %3395 = vmatmul.f32.gmra.mxu0 %v3185
    %v3396 = vpop.f32.mrf.mxu0
    %v3397 = vadd.f32 0.0, %v3396
    %3398 = vmatmul.f32.gmra.mxu0 %v3188
    %v3399 = vpop.f32.mrf.mxu0
    %v3400 = vadd.f32 0.0, %v3399
    %3401 = vmatmul.f32.gmra.mxu0 %v3191
    %v3402 = vpop.f32.mrf.mxu0
    %v3403 = vadd.f32 0.0, %v3402
    %3404 = vmatmul.f32.gmra.mxu0 %v3194
    %v3405 = vpop.f32.mrf.mxu0
    %v3406 = vadd.f32 0.0, %v3405
    %3407 = vmatmul.f32.gmra.mxu0 %v3197
    %v3408 = vpop.f32.mrf.mxu0
    %v3409 = vadd.f32 0.0, %v3408
    %3410 = vmatmul.f32.gmra.mxu0 %v3200
    %v3411 = vpop.f32.mrf.mxu0
    %v3412 = vadd.f32 0.0, %v3411
    %3413 = vmatmul.f32.gmra.mxu0 %v3203
    %v3414 = vpop.f32.mrf.mxu0
    %v3415 = vadd.f32 0.0, %v3414
    %3416 = vmatmul.f32.gmra.mxu0 %v3206
    %v3417 = vpop.f32.mrf.mxu0
    %v3418 = vadd.f32 0.0, %v3417
    %3419 = vmatmul.f32.gmra.mxu0 %v3209
    %v3420 = vpop.f32.mrf.mxu0
    %v3421 = vadd.f32 0.0, %v3420
    %3422 = vmatmul.f32.gmra.mxu0 %v3212
    %v3423 = vpop.f32.mrf.mxu0
    %v3424 = vadd.f32 0.0, %v3423
    %3425 = vmatmul.f32.gmra.mxu0 %v3215
    %v3426 = vpop.f32.mrf.mxu0
    %v3427 = vadd.f32 0.0, %v3426
    %3428 = vmatmul.f32.gmra.mxu0 %v3218
    %v3429 = vpop.f32.mrf.mxu0
    %v3430 = vadd.f32 0.0, %v3429
    %3431 = vmatmul.f32.gmra.mxu0 %v3221
    %v3432 = vpop.f32.mrf.mxu0
    %v3433 = vadd.f32 0.0, %v3432
    %3434 = vmatmul.f32.gmra.mxu0 %v3224
    %v3435 = vpop.f32.mrf.mxu0
    %v3436 = vadd.f32 0.0, %v3435
    %3437 = vmatmul.f32.gmra.mxu0 %v3227
    %v3438 = vpop.f32.mrf.mxu0
    %v3439 = vadd.f32 0.0, %v3438
    %3440 = vmatmul.f32.gmra.mxu0 %v3230
    %v3441 = vpop.f32.mrf.mxu0
    %v3442 = vadd.f32 0.0, %v3441
    %3443 = vmatmul.f32.gmra.mxu0 %v3233
    %v3444 = vpop.f32.mrf.mxu0
    %v3445 = vadd.f32 0.0, %v3444
    %3446 = vmatmul.f32.gmra.mxu0 %v3236
    %v3447 = vpop.f32.mrf.mxu0
    %v3448 = vadd.f32 0.0, %v3447
    %3449 = vmatmul.f32.gmra.mxu0 %v3239
    %v3450 = vpop.f32.mrf.mxu0
    %v3451 = vadd.f32 0.0, %v3450
    %3452 = vmatmul.f32.gmra.mxu0 %v3242
    %v3453 = vpop.f32.mrf.mxu0
    %v3454 = vadd.f32 0.0, %v3453
    %3455 = vmatmul.f32.gmra.mxu0 %v3245
    %v3456 = vpop.f32.mrf.mxu0
    %v3457 = vadd.f32 0.0, %v3456
    %3458 = vmatmul.f32.gmra.mxu0 %v3248
    %v3459 = vpop.f32.mrf.mxu0
    %v3460 = vadd.f32 0.0, %v3459
    %3461 = vmatmul.f32.gmra.mxu0 %v3251
    %v3462 = vpop.f32.mrf.mxu0
    %v3463 = vadd.f32 0.0, %v3462
    %3464 = vmatmul.f32.gmra.mxu0 %v3254
    %v3465 = vpop.f32.mrf.mxu0
    %v3466 = vadd.f32 0.0, %v3465
    %3467 = vmatmul.f32.gmra.mxu0 %v3257
    %v3468 = vpop.f32.mrf.mxu0
    %v3469 = vadd.f32 0.0, %v3468
    %3470 = vmatmul.f32.gmra.mxu0 %v3260
    %v3471 = vpop.f32.mrf.mxu0
    %v3472 = vadd.f32 0.0, %v3471
    %3473 = vmatmul.f32.gmra.mxu0 %v3263
    %v3474 = vpop.f32.mrf.mxu0
    %v3475 = vadd.f32 0.0, %v3474
    %3476 = vmatmul.f32.gmra.mxu0 %v3266
    %v3477 = vpop.f32.mrf.mxu0
    %v3478 = vadd.f32 0.0, %v3477
    %3479 = vmatmul.f32.gmra.mxu0 %v3269
    %v3480 = vpop.f32.mrf.mxu0
    %v3481 = vadd.f32 0.0, %v3480
    %3482 = vmatmul.f32.gmra.mxu0 %v3272
    %v3483 = vpop.f32.mrf.mxu0
    %v3484 = vadd.f32 0.0, %v3483
    %3485 = vmatmul.f32.gmra.mxu0 %v3275
    %v3486 = vpop.f32.mrf.mxu0
    %v3487 = vadd.f32 0.0, %v3486
    %3488 = vmatmul.f32.gmra.mxu0 %v3278
    %v3489 = vpop.f32.mrf.mxu0
    %v3490 = vadd.f32 0.0, %v3489
    %3491 = vmatmul.f32.gmra.mxu0 %v3281
    %v3492 = vpop.f32.mrf.mxu0
    %v3493 = vadd.f32 0.0, %v3492
    %3494 = vmatmul.f32.gmra.mxu0 %v3284
    %v3495 = vpop.f32.mrf.mxu0
    %v3496 = vadd.f32 0.0, %v3495
    %3497 = vmatmul.f32.gmra.mxu0 %v3287
    %v3498 = vpop.f32.mrf.mxu0
    %v3499 = vadd.f32 0.0, %v3498
    %3500 = vmatmul.f32.gmra.mxu0 %v3290
    %v3501 = vpop.f32.mrf.mxu0
    %v3502 = vadd.f32 0.0, %v3501
    %3503 = vmatmul.f32.gmra.mxu0 %v3293
    %v3504 = vpop.f32.mrf.mxu0
    %v3505 = vadd.f32 0.0, %v3504
    %3506 = vmatmul.f32.gmra.mxu0 %v3296
    %v3507 = vpop.f32.mrf.mxu0
    %v3508 = vadd.f32 0.0, %v3507
    %3509 = vmatmul.f32.gmra.mxu0 %v3299
    %v3510 = vpop.f32.mrf.mxu0
    %v3511 = vadd.f32 0.0, %v3510
    %3512 = vmatmul.f32.gmra.mxu0 %v3302
    %v3513 = vpop.f32.mrf.mxu0
    %v3514 = vadd.f32 0.0, %v3513
    %3515 = vmatmul.f32.gmra.mxu0 %v3305
    %v3516 = vpop.f32.mrf.mxu0
    %v3517 = vadd.f32 0.0, %v3516
    %3518 = vmatmul.f32.gmra.mxu0 %v3308
    %v3519 = vpop.f32.mrf.mxu0
    %v3520 = vadd.f32 0.0, %v3519
    %3521 = vmatmul.f32.gmra.mxu0 %v3311
    %v3522 = vpop.f32.mrf.mxu0
    %v3523 = vadd.f32 0.0, %v3522
    %3524 = vmatmul.f32.gmra.mxu0 %v3314
    %v3525 = vpop.f32.mrf.mxu0
    %v3526 = vadd.f32 0.0, %v3525
    %3527 = vmatmul.f32.gmra.mxu0 %v3317
    %v3528 = vpop.f32.mrf.mxu0
    %v3529 = vadd.f32 0.0, %v3528
    %3530 = vmatmul.f32.gmra.mxu0 %v3320
    %v3531 = vpop.f32.mrf.mxu0
    %v3532 = vadd.f32 0.0, %v3531
    %3533 = vmatmul.f32.gmra.mxu0 %v3323
    %v3534 = vpop.f32.mrf.mxu0
    %v3535 = vadd.f32 0.0, %v3534
    %3536 = vmatmul.f32.gmra.mxu0 %v3326
    %v3537 = vpop.f32.mrf.mxu0
    %v3538 = vadd.f32 0.0, %v3537
    %3539 = vmatmul.f32.gmra.mxu0 %v3329
    %v3540 = vpop.f32.mrf.mxu0
    %v3541 = vadd.f32 0.0, %v3540
    %3542 = vmatmul.f32.gmra.mxu0 %v3332
    %v3543 = vpop.f32.mrf.mxu0
    %v3544 = vadd.f32 0.0, %v3543
    %3545 = vmatmul.f32.gmra.mxu0 %v3335
    %v3546 = vpop.f32.mrf.mxu0
    %v3547 = vadd.f32 0.0, %v3546
    %3548 = vmatmul.f32.gmra.mxu0 %v3338
    %v3549 = vpop.f32.mrf.mxu0
    %v3550 = vadd.f32 0.0, %v3549
    %3551 = vmatmul.f32.gmra.mxu0 %v3341
    %v3552 = vpop.f32.mrf.mxu0
    %v3553 = vadd.f32 0.0, %v3552
    %3554 = vmatmul.f32.gmra.mxu0 %v3344
    %v3555 = vpop.f32.mrf.mxu0
    %v3556 = vadd.f32 0.0, %v3555
    %3557 = vmatmul.f32.gmra.mxu0 %v3347
    %v3558 = vpop.f32.mrf.mxu0
    %v3559 = vadd.f32 0.0, %v3558
    %3560 = vmatmul.f32.gmra.mxu0 %v3350
    %v3561 = vpop.f32.mrf.mxu0
    %v3562 = vadd.f32 0.0, %v3561
    %3563 = vmatmul.f32.gmra.mxu0 %v3353
    %v3564 = vpop.f32.mrf.mxu0
    %v3565 = vadd.f32 0.0, %v3564
    %3566 = vmatmul.f32.gmra.mxu0 %v3356
    %v3567 = vpop.f32.mrf.mxu0
    %v3568 = vadd.f32 0.0, %v3567
    %3569 = vmatmul.f32.gmra.mxu0 %v3359
    %v3570 = vpop.f32.mrf.mxu0
    %v3571 = vadd.f32 0.0, %v3570
    %3572 = vmatmul.f32.gmra.mxu0 %v3362
    %v3573 = vpop.f32.mrf.mxu0
    %v3574 = vadd.f32 0.0, %v3573
    %3575 = vdwg.mxu0
    %v3576 = vadd.f32 %v3041, %v3385
    %v3577 = vadd.f32 %v3042, %v3388
    %v3578 = vadd.f32 %v3043, %v3391
    %v3579 = vadd.f32 %v3044, %v3394
    %v3580 = vadd.f32 %v3045, %v3397
    %v3581 = vadd.f32 %v3046, %v3400
    %v3582 = vadd.f32 %v3047, %v3403
    %v3583 = vadd.f32 %v3048, %v3406
    %v3584 = vadd.f32 %v3049, %v3409
    %v3585 = vadd.f32 %v3050, %v3412
    %v3586 = vadd.f32 %v3051, %v3415
    %v3587 = vadd.f32 %v3052, %v3418
    %v3588 = vadd.f32 %v3053, %v3421
    %v3589 = vadd.f32 %v3054, %v3424
    %v3590 = vadd.f32 %v3055, %v3427
    %v3591 = vadd.f32 %v3056, %v3430
    %v3592 = vadd.f32 %v3057, %v3433
    %v3593 = vadd.f32 %v3058, %v3436
    %v3594 = vadd.f32 %v3059, %v3439
    %v3595 = vadd.f32 %v3060, %v3442
    %v3596 = vadd.f32 %v3061, %v3445
    %v3597 = vadd.f32 %v3062, %v3448
    %v3598 = vadd.f32 %v3063, %v3451
    %v3599 = vadd.f32 %v3064, %v3454
    %v3600 = vadd.f32 %v3065, %v3457
    %v3601 = vadd.f32 %v3066, %v3460
    %v3602 = vadd.f32 %v3067, %v3463
    %v3603 = vadd.f32 %v3068, %v3466
    %v3604 = vadd.f32 %v3069, %v3469
    %v3605 = vadd.f32 %v3070, %v3472
    %v3606 = vadd.f32 %v3071, %v3475
    %v3607 = vadd.f32 %v3072, %v3478
    %v3608 = vadd.f32 %v3073, %v3481
    %v3609 = vadd.f32 %v3074, %v3484
    %v3610 = vadd.f32 %v3075, %v3487
    %v3611 = vadd.f32 %v3076, %v3490
    %v3612 = vadd.f32 %v3077, %v3493
    %v3613 = vadd.f32 %v3078, %v3496
    %v3614 = vadd.f32 %v3079, %v3499
    %v3615 = vadd.f32 %v3080, %v3502
    %v3616 = vadd.f32 %v3081, %v3505
    %v3617 = vadd.f32 %v3082, %v3508
    %v3618 = vadd.f32 %v3083, %v3511
    %v3619 = vadd.f32 %v3084, %v3514
    %v3620 = vadd.f32 %v3085, %v3517
    %v3621 = vadd.f32 %v3086, %v3520
    %v3622 = vadd.f32 %v3087, %v3523
    %v3623 = vadd.f32 %v3088, %v3526
    %v3624 = vadd.f32 %v3089, %v3529
    %v3625 = vadd.f32 %v3090, %v3532
    %v3626 = vadd.f32 %v3091, %v3535
    %v3627 = vadd.f32 %v3092, %v3538
    %v3628 = vadd.f32 %v3093, %v3541
    %v3629 = vadd.f32 %v3094, %v3544
    %v3630 = vadd.f32 %v3095, %v3547
    %v3631 = vadd.f32 %v3096, %v3550
    %v3632 = vadd.f32 %v3097, %v3553
    %v3633 = vadd.f32 %v3098, %v3556
    %v3634 = vadd.f32 %v3099, %v3559
    %v3635 = vadd.f32 %v3100, %v3562
    %v3636 = vadd.f32 %v3101, %v3565
    %v3637 = vadd.f32 %v3102, %v3568
    %v3638 = vadd.f32 %v3103, %v3571
    %v3639 = vadd.f32 %v3104, %v3574
    %v3640 = vld [vmem:[%s3105 + $0x1] sm:$0xff]
    %v3641 = vld [vmem:[%s3105 + $0x9] sm:$0xff]
    %v3642 = vld [vmem:[%s3105 + $0x19] sm:$0xff]
    %v3643 = vld [vmem:[%s3105 + $0x21] sm:$0xff]
    %v3644 = vld [vmem:[%s3105 + $0x31] sm:$0xff]
    %v3645 = vld [vmem:[%s3105 + $0x39] sm:$0xff]
    %v3646 = vld [vmem:[%s3105 + $0x49] sm:$0xff]
    %v3647 = vld [vmem:[%s3105 + $0x51] sm:$0xff]
    %v3648 = vld [vmem:[%s3105 + $0x61] sm:$0xff]
    %v3649 = vld [vmem:[%s3105 + $0x69] sm:$0xff]
    %v3650 = vld [vmem:[%s3105 + $0x79] sm:$0xff]
    %v3651 = vld [vmem:[%s3105 + $0x81] sm:$0xff]
    %v3652 = vld [vmem:[%s3105 + $0x91] sm:$0xff]
    %v3653 = vld [vmem:[%s3105 + $0x99] sm:$0xff]
    %v3654 = vld [vmem:[%s3105 + $0xa9] sm:$0xff]
    %v3655 = vld [vmem:[%s3105 + $0xb1] sm:$0xff]
    %v3656 = vld [vmem:[%s3105 + $0xc1] sm:$0xff]
    %v3657 = vld [vmem:[%s3105 + $0xc9] sm:$0xff]
    %v3658 = vld [vmem:[%s3105 + $0xd9] sm:$0xff]
    %v3659 = vld [vmem:[%s3105 + $0xe1] sm:$0xff]
    %v3660 = vld [vmem:[%s3105 + $0xf1] sm:$0xff]
    %v3661 = vld [vmem:[%s3105 + $0xf9] sm:$0xff]
    %v3662 = vld [vmem:[%s3105 + $0x109] sm:$0xff]
    %v3663 = vld [vmem:[%s3105 + $0x111] sm:$0xff]
    %v3664 = vld [vmem:[%s3105 + $0x121] sm:$0xff]
    %v3665 = vld [vmem:[%s3105 + $0x129] sm:$0xff]
    %v3666 = vld [vmem:[%s3105 + $0x139] sm:$0xff]
    %v3667 = vld [vmem:[%s3105 + $0x141] sm:$0xff]
    %v3668 = vld [vmem:[%s3105 + $0x151] sm:$0xff]
    %v3669 = vld [vmem:[%s3105 + $0x159] sm:$0xff]
    %v3670 = vld [vmem:[%s3105 + $0x169] sm:$0xff]
    %v3671 = vld [vmem:[%s3105 + $0x171] sm:$0xff]
    %v3672 = vld [vmem:[%s3105 + $0x1b1] sm:$0xff]
    %v3673 = vld [vmem:[%s3105 + $0x1b9] sm:$0xff]
    %v3674 = vld [vmem:[%s3105 + $0x1c9] sm:$0xff]
    %v3675 = vld [vmem:[%s3105 + $0x1d1] sm:$0xff]
    %v3676 = vld [vmem:[%s3105 + $0x1e1] sm:$0xff]
    %v3677 = vld [vmem:[%s3105 + $0x1e9] sm:$0xff]
    %v3678 = vld [vmem:[%s3105 + $0x1f9] sm:$0xff]
    %v3679 = vld [vmem:[%s3105 + $0x201] sm:$0xff]
    %v3680 = vld [vmem:[%s3105 + $0x211] sm:$0xff]
    %v3681 = vld [vmem:[%s3105 + $0x219] sm:$0xff]
    %v3682 = vld [vmem:[%s3105 + $0x229] sm:$0xff]
    %v3683 = vld [vmem:[%s3105 + $0x231] sm:$0xff]
    %v3684 = vld [vmem:[%s3105 + $0x241] sm:$0xff]
    %v3685 = vld [vmem:[%s3105 + $0x249] sm:$0xff]
    %v3686 = vld [vmem:[%s3105 + $0x259] sm:$0xff]
    %v3687 = vld [vmem:[%s3105 + $0x261] sm:$0xff]
    %v3688 = vld [vmem:[%s3105 + $0x271] sm:$0xff]
    %v3689 = vld [vmem:[%s3105 + $0x279] sm:$0xff]
    %v3690 = vld [vmem:[%s3105 + $0x289] sm:$0xff]
    %v3691 = vld [vmem:[%s3105 + $0x291] sm:$0xff]
    %v3692 = vld [vmem:[%s3105 + $0x2a1] sm:$0xff]
    %v3693 = vld [vmem:[%s3105 + $0x2a9] sm:$0xff]
    %v3694 = vld [vmem:[%s3105 + $0x2b9] sm:$0xff]
    %v3695 = vld [vmem:[%s3105 + $0x2c1] sm:$0xff]
    %v3696 = vld [vmem:[%s3105 + $0x2d1] sm:$0xff]
    %v3697 = vld [vmem:[%s3105 + $0x2d9] sm:$0xff]
    %v3698 = vld [vmem:[%s3105 + $0x2e9] sm:$0xff]
    %v3699 = vld [vmem:[%s3105 + $0x2f1] sm:$0xff]
    %v3700 = vld [vmem:[%s3105 + $0x301] sm:$0xff]
    %v3701 = vld [vmem:[%s3105 + $0x309] sm:$0xff]
    %v3702 = vld [vmem:[%s3105 + $0x319] sm:$0xff]
    %v3703 = vld [vmem:[%s3105 + $0x321] sm:$0xff]
    %s3704 = scalar_lea.vmem %s1, 28
    %v3705 = vld [vmem:[%s3704] sm:$0xf]
    %v3707 = vsel %vm158, %v3640, 0
    %v3710 = vsel %vm158, %v3641, 0
    %v3713 = vsel %vm158, %v3642, 0
    %v3716 = vsel %vm158, %v3643, 0
    %v3719 = vsel %vm158, %v3644, 0
    %v3722 = vsel %vm158, %v3645, 0
    %v3725 = vsel %vm158, %v3646, 0
    %v3728 = vsel %vm158, %v3647, 0
    %v3731 = vsel %vm158, %v3648, 0
    %v3734 = vsel %vm158, %v3649, 0
    %v3737 = vsel %vm158, %v3650, 0
    %v3740 = vsel %vm158, %v3651, 0
    %v3743 = vsel %vm158, %v3652, 0
    %v3746 = vsel %vm158, %v3653, 0
    %v3749 = vsel %vm158, %v3654, 0
    %v3752 = vsel %vm158, %v3655, 0
    %v3755 = vsel %vm158, %v3656, 0
    %v3758 = vsel %vm158, %v3657, 0
    %v3761 = vsel %vm158, %v3658, 0
    %v3764 = vsel %vm158, %v3659, 0
    %v3767 = vsel %vm158, %v3660, 0
    %v3770 = vsel %vm158, %v3661, 0
    %v3773 = vsel %vm158, %v3662, 0
    %v3776 = vsel %vm158, %v3663, 0
    %v3779 = vsel %vm158, %v3664, 0
    %v3782 = vsel %vm158, %v3665, 0
    %v3785 = vsel %vm158, %v3666, 0
    %v3788 = vsel %vm158, %v3667, 0
    %v3791 = vsel %vm158, %v3668, 0
    %v3794 = vsel %vm158, %v3669, 0
    %v3797 = vsel %vm158, %v3670, 0
    %v3800 = vsel %vm158, %v3671, 0
    %v3803 = vsel %vm158, %v3672, 0
    %v3806 = vsel %vm158, %v3673, 0
    %v3809 = vsel %vm158, %v3674, 0
    %v3812 = vsel %vm158, %v3675, 0
    %v3815 = vsel %vm158, %v3676, 0
    %v3818 = vsel %vm158, %v3677, 0
    %v3821 = vsel %vm158, %v3678, 0
    %v3824 = vsel %vm158, %v3679, 0
    %v3827 = vsel %vm158, %v3680, 0
    %v3830 = vsel %vm158, %v3681, 0
    %v3833 = vsel %vm158, %v3682, 0
    %v3836 = vsel %vm158, %v3683, 0
    %v3839 = vsel %vm158, %v3684, 0
    %v3842 = vsel %vm158, %v3685, 0
    %v3845 = vsel %vm158, %v3686, 0
    %v3848 = vsel %vm158, %v3687, 0
    %v3851 = vsel %vm158, %v3688, 0
    %v3854 = vsel %vm158, %v3689, 0
    %v3857 = vsel %vm158, %v3690, 0
    %v3860 = vsel %vm158, %v3691, 0
    %v3863 = vsel %vm158, %v3692, 0
    %v3866 = vsel %vm158, %v3693, 0
    %v3869 = vsel %vm158, %v3694, 0
    %v3872 = vsel %vm158, %v3695, 0
    %v3875 = vsel %vm158, %v3696, 0
    %v3878 = vsel %vm158, %v3697, 0
    %v3881 = vsel %vm158, %v3698, 0
    %v3884 = vsel %vm158, %v3699, 0
    %v3887 = vsel %vm158, %v3700, 0
    %v3890 = vsel %vm158, %v3701, 0
    %v3893 = vsel %vm158, %v3702, 0
    %v3896 = vsel %vm158, %v3703, 0
    %v3899 = vsel %vm351, %v3705, 0
    %3901 = vmatpush.msra.mxu0 0.0
    %3902 = vmatpush.msra.mxu0 0.0
    %3903 = vmatpush.msra.mxu0 0.0
    %3904 = vmatpush.msra.mxu0 0.0
    %3905 = vmatpush.msra.mxu0 0.0
    %3906 = vmatpush.msra.mxu0 0.0
    %3907 = vmatpush.msra.mxu0 0.0
    %3908 = vmatpush.msra.mxu0 0.0
    %3909 = vmatpush.msra.mxu0 0.0
    %3910 = vmatpush.msra.mxu0 0.0
    %3911 = vmatpush.msra.mxu0 0.0
    %3912 = vmatpush.msra.mxu0 0.0
    %3913 = vmatpush.msra.mxu0 0.0
    %3914 = vmatpush.msra.mxu0 0.0
    %3915 = vmatpush.msra.mxu0 0.0
    %3916 = vmatpush.msra.mxu0 %v3899
    %3917 = vmatmul.f32.gmra.mxu0 %v3707
    %v3918 = vpop.f32.mrf.mxu0
    %v3919 = vadd.f32 0.0, %v3918
    %3920 = vmatmul.f32.gmra.mxu0 %v3710
    %v3921 = vpop.f32.mrf.mxu0
    %v3922 = vadd.f32 0.0, %v3921
    %3923 = vmatmul.f32.gmra.mxu0 %v3713
    %v3924 = vpop.f32.mrf.mxu0
    %v3925 = vadd.f32 0.0, %v3924
    %3926 = vmatmul.f32.gmra.mxu0 %v3716
    %v3927 = vpop.f32.mrf.mxu0
    %v3928 = vadd.f32 0.0, %v3927
    %3929 = vmatmul.f32.gmra.mxu0 %v3719
    %v3930 = vpop.f32.mrf.mxu0
    %v3931 = vadd.f32 0.0, %v3930
    %3932 = vmatmul.f32.gmra.mxu0 %v3722
    %v3933 = vpop.f32.mrf.mxu0
    %v3934 = vadd.f32 0.0, %v3933
    %3935 = vmatmul.f32.gmra.mxu0 %v3725
    %v3936 = vpop.f32.mrf.mxu0
    %v3937 = vadd.f32 0.0, %v3936
    %3938 = vmatmul.f32.gmra.mxu0 %v3728
    %v3939 = vpop.f32.mrf.mxu0
    %v3940 = vadd.f32 0.0, %v3939
    %3941 = vmatmul.f32.gmra.mxu0 %v3731
    %v3942 = vpop.f32.mrf.mxu0
    %v3943 = vadd.f32 0.0, %v3942
    %3944 = vmatmul.f32.gmra.mxu0 %v3734
    %v3945 = vpop.f32.mrf.mxu0
    %v3946 = vadd.f32 0.0, %v3945
    %3947 = vmatmul.f32.gmra.mxu0 %v3737
    %v3948 = vpop.f32.mrf.mxu0
    %v3949 = vadd.f32 0.0, %v3948
    %3950 = vmatmul.f32.gmra.mxu0 %v3740
    %v3951 = vpop.f32.mrf.mxu0
    %v3952 = vadd.f32 0.0, %v3951
    %3953 = vmatmul.f32.gmra.mxu0 %v3743
    %v3954 = vpop.f32.mrf.mxu0
    %v3955 = vadd.f32 0.0, %v3954
    %3956 = vmatmul.f32.gmra.mxu0 %v3746
    %v3957 = vpop.f32.mrf.mxu0
    %v3958 = vadd.f32 0.0, %v3957
    %3959 = vmatmul.f32.gmra.mxu0 %v3749
    %v3960 = vpop.f32.mrf.mxu0
    %v3961 = vadd.f32 0.0, %v3960
    %3962 = vmatmul.f32.gmra.mxu0 %v3752
    %v3963 = vpop.f32.mrf.mxu0
    %v3964 = vadd.f32 0.0, %v3963
    %3965 = vmatmul.f32.gmra.mxu0 %v3755
    %v3966 = vpop.f32.mrf.mxu0
    %v3967 = vadd.f32 0.0, %v3966
    %3968 = vmatmul.f32.gmra.mxu0 %v3758
    %v3969 = vpop.f32.mrf.mxu0
    %v3970 = vadd.f32 0.0, %v3969
    %3971 = vmatmul.f32.gmra.mxu0 %v3761
    %v3972 = vpop.f32.mrf.mxu0
    %v3973 = vadd.f32 0.0, %v3972
    %3974 = vmatmul.f32.gmra.mxu0 %v3764
    %v3975 = vpop.f32.mrf.mxu0
    %v3976 = vadd.f32 0.0, %v3975
    %3977 = vmatmul.f32.gmra.mxu0 %v3767
    %v3978 = vpop.f32.mrf.mxu0
    %v3979 = vadd.f32 0.0, %v3978
    %3980 = vmatmul.f32.gmra.mxu0 %v3770
    %v3981 = vpop.f32.mrf.mxu0
    %v3982 = vadd.f32 0.0, %v3981
    %3983 = vmatmul.f32.gmra.mxu0 %v3773
    %v3984 = vpop.f32.mrf.mxu0
    %v3985 = vadd.f32 0.0, %v3984
    %3986 = vmatmul.f32.gmra.mxu0 %v3776
    %v3987 = vpop.f32.mrf.mxu0
    %v3988 = vadd.f32 0.0, %v3987
    %3989 = vmatmul.f32.gmra.mxu0 %v3779
    %v3990 = vpop.f32.mrf.mxu0
    %v3991 = vadd.f32 0.0, %v3990
    %3992 = vmatmul.f32.gmra.mxu0 %v3782
    %v3993 = vpop.f32.mrf.mxu0
    %v3994 = vadd.f32 0.0, %v3993
    %3995 = vmatmul.f32.gmra.mxu0 %v3785
    %v3996 = vpop.f32.mrf.mxu0
    %v3997 = vadd.f32 0.0, %v3996
    %3998 = vmatmul.f32.gmra.mxu0 %v3788
    %v3999 = vpop.f32.mrf.mxu0
    %v4000 = vadd.f32 0.0, %v3999
    %4001 = vmatmul.f32.gmra.mxu0 %v3791
    %v4002 = vpop.f32.mrf.mxu0
    %v4003 = vadd.f32 0.0, %v4002
    %4004 = vmatmul.f32.gmra.mxu0 %v3794
    %v4005 = vpop.f32.mrf.mxu0
    %v4006 = vadd.f32 0.0, %v4005
    %4007 = vmatmul.f32.gmra.mxu0 %v3797
    %v4008 = vpop.f32.mrf.mxu0
    %v4009 = vadd.f32 0.0, %v4008
    %4010 = vmatmul.f32.gmra.mxu0 %v3800
    %v4011 = vpop.f32.mrf.mxu0
    %v4012 = vadd.f32 0.0, %v4011
    %4013 = vmatmul.f32.gmra.mxu0 %v3803
    %v4014 = vpop.f32.mrf.mxu0
    %v4015 = vadd.f32 0.0, %v4014
    %4016 = vmatmul.f32.gmra.mxu0 %v3806
    %v4017 = vpop.f32.mrf.mxu0
    %v4018 = vadd.f32 0.0, %v4017
    %4019 = vmatmul.f32.gmra.mxu0 %v3809
    %v4020 = vpop.f32.mrf.mxu0
    %v4021 = vadd.f32 0.0, %v4020
    %4022 = vmatmul.f32.gmra.mxu0 %v3812
    %v4023 = vpop.f32.mrf.mxu0
    %v4024 = vadd.f32 0.0, %v4023
    %4025 = vmatmul.f32.gmra.mxu0 %v3815
    %v4026 = vpop.f32.mrf.mxu0
    %v4027 = vadd.f32 0.0, %v4026
    %4028 = vmatmul.f32.gmra.mxu0 %v3818
    %v4029 = vpop.f32.mrf.mxu0
    %v4030 = vadd.f32 0.0, %v4029
    %4031 = vmatmul.f32.gmra.mxu0 %v3821
    %v4032 = vpop.f32.mrf.mxu0
    %v4033 = vadd.f32 0.0, %v4032
    %4034 = vmatmul.f32.gmra.mxu0 %v3824
    %v4035 = vpop.f32.mrf.mxu0
    %v4036 = vadd.f32 0.0, %v4035
    %4037 = vmatmul.f32.gmra.mxu0 %v3827
    %v4038 = vpop.f32.mrf.mxu0
    %v4039 = vadd.f32 0.0, %v4038
    %4040 = vmatmul.f32.gmra.mxu0 %v3830
    %v4041 = vpop.f32.mrf.mxu0
    %v4042 = vadd.f32 0.0, %v4041
    %4043 = vmatmul.f32.gmra.mxu0 %v3833
    %v4044 = vpop.f32.mrf.mxu0
    %v4045 = vadd.f32 0.0, %v4044
    %4046 = vmatmul.f32.gmra.mxu0 %v3836
    %v4047 = vpop.f32.mrf.mxu0
    %v4048 = vadd.f32 0.0, %v4047
    %4049 = vmatmul.f32.gmra.mxu0 %v3839
    %v4050 = vpop.f32.mrf.mxu0
    %v4051 = vadd.f32 0.0, %v4050
    %4052 = vmatmul.f32.gmra.mxu0 %v3842
    %v4053 = vpop.f32.mrf.mxu0
    %v4054 = vadd.f32 0.0, %v4053
    %4055 = vmatmul.f32.gmra.mxu0 %v3845
    %v4056 = vpop.f32.mrf.mxu0
    %v4057 = vadd.f32 0.0, %v4056
    %4058 = vmatmul.f32.gmra.mxu0 %v3848
    %v4059 = vpop.f32.mrf.mxu0
    %v4060 = vadd.f32 0.0, %v4059
    %4061 = vmatmul.f32.gmra.mxu0 %v3851
    %v4062 = vpop.f32.mrf.mxu0
    %v4063 = vadd.f32 0.0, %v4062
    %4064 = vmatmul.f32.gmra.mxu0 %v3854
    %v4065 = vpop.f32.mrf.mxu0
    %v4066 = vadd.f32 0.0, %v4065
    %4067 = vmatmul.f32.gmra.mxu0 %v3857
    %v4068 = vpop.f32.mrf.mxu0
    %v4069 = vadd.f32 0.0, %v4068
    %4070 = vmatmul.f32.gmra.mxu0 %v3860
    %v4071 = vpop.f32.mrf.mxu0
    %v4072 = vadd.f32 0.0, %v4071
    %4073 = vmatmul.f32.gmra.mxu0 %v3863
    %v4074 = vpop.f32.mrf.mxu0
    %v4075 = vadd.f32 0.0, %v4074
    %4076 = vmatmul.f32.gmra.mxu0 %v3866
    %v4077 = vpop.f32.mrf.mxu0
    %v4078 = vadd.f32 0.0, %v4077
    %4079 = vmatmul.f32.gmra.mxu0 %v3869
    %v4080 = vpop.f32.mrf.mxu0
    %v4081 = vadd.f32 0.0, %v4080
    %4082 = vmatmul.f32.gmra.mxu0 %v3872
    %v4083 = vpop.f32.mrf.mxu0
    %v4084 = vadd.f32 0.0, %v4083
    %4085 = vmatmul.f32.gmra.mxu0 %v3875
    %v4086 = vpop.f32.mrf.mxu0
    %v4087 = vadd.f32 0.0, %v4086
    %4088 = vmatmul.f32.gmra.mxu0 %v3878
    %v4089 = vpop.f32.mrf.mxu0
    %v4090 = vadd.f32 0.0, %v4089
    %4091 = vmatmul.f32.gmra.mxu0 %v3881
    %v4092 = vpop.f32.mrf.mxu0
    %v4093 = vadd.f32 0.0, %v4092
    %4094 = vmatmul.f32.gmra.mxu0 %v3884
    %v4095 = vpop.f32.mrf.mxu0
    %v4096 = vadd.f32 0.0, %v4095
    %4097 = vmatmul.f32.gmra.mxu0 %v3887
    %v4098 = vpop.f32.mrf.mxu0
    %v4099 = vadd.f32 0.0, %v4098
    %4100 = vmatmul.f32.gmra.mxu0 %v3890
    %v4101 = vpop.f32.mrf.mxu0
    %v4102 = vadd.f32 0.0, %v4101
    %4103 = vmatmul.f32.gmra.mxu0 %v3893
    %v4104 = vpop.f32.mrf.mxu0
    %v4105 = vadd.f32 0.0, %v4104
    %4106 = vmatmul.f32.gmra.mxu0 %v3896
    %v4107 = vpop.f32.mrf.mxu0
    %v4108 = vadd.f32 0.0, %v4107
    %4109 = vdwg.mxu0
    %v4110 = vadd.f32 %v3576, %v3919
    %v4111 = vadd.f32 %v3577, %v3922
    %v4112 = vadd.f32 %v3578, %v3925
    %v4113 = vadd.f32 %v3579, %v3928
    %v4114 = vadd.f32 %v3580, %v3931
    %v4115 = vadd.f32 %v3581, %v3934
    %v4116 = vadd.f32 %v3582, %v3937
    %v4117 = vadd.f32 %v3583, %v3940
    %v4118 = vadd.f32 %v3584, %v3943
    %v4119 = vadd.f32 %v3585, %v3946
    %v4120 = vadd.f32 %v3586, %v3949
    %v4121 = vadd.f32 %v3587, %v3952
    %v4122 = vadd.f32 %v3588, %v3955
    %v4123 = vadd.f32 %v3589, %v3958
    %v4124 = vadd.f32 %v3590, %v3961
    %v4125 = vadd.f32 %v3591, %v3964
    %v4126 = vadd.f32 %v3592, %v3967
    %v4127 = vadd.f32 %v3593, %v3970
    %v4128 = vadd.f32 %v3594, %v3973
    %v4129 = vadd.f32 %v3595, %v3976
    %v4130 = vadd.f32 %v3596, %v3979
    %v4131 = vadd.f32 %v3597, %v3982
    %v4132 = vadd.f32 %v3598, %v3985
    %v4133 = vadd.f32 %v3599, %v3988
    %v4134 = vadd.f32 %v3600, %v3991
    %v4135 = vadd.f32 %v3601, %v3994
    %v4136 = vadd.f32 %v3602, %v3997
    %v4137 = vadd.f32 %v3603, %v4000
    %v4138 = vadd.f32 %v3604, %v4003
    %v4139 = vadd.f32 %v3605, %v4006
    %v4140 = vadd.f32 %v3606, %v4009
    %v4141 = vadd.f32 %v3607, %v4012
    %v4142 = vadd.f32 %v3608, %v4015
    %v4143 = vadd.f32 %v3609, %v4018
    %v4144 = vadd.f32 %v3610, %v4021
    %v4145 = vadd.f32 %v3611, %v4024
    %v4146 = vadd.f32 %v3612, %v4027
    %v4147 = vadd.f32 %v3613, %v4030
    %v4148 = vadd.f32 %v3614, %v4033
    %v4149 = vadd.f32 %v3615, %v4036
    %v4150 = vadd.f32 %v3616, %v4039
    %v4151 = vadd.f32 %v3617, %v4042
    %v4152 = vadd.f32 %v3618, %v4045
    %v4153 = vadd.f32 %v3619, %v4048
    %v4154 = vadd.f32 %v3620, %v4051
    %v4155 = vadd.f32 %v3621, %v4054
    %v4156 = vadd.f32 %v3622, %v4057
    %v4157 = vadd.f32 %v3623, %v4060
    %v4158 = vadd.f32 %v3624, %v4063
    %v4159 = vadd.f32 %v3625, %v4066
    %v4160 = vadd.f32 %v3626, %v4069
    %v4161 = vadd.f32 %v3627, %v4072
    %v4162 = vadd.f32 %v3628, %v4075
    %v4163 = vadd.f32 %v3629, %v4078
    %v4164 = vadd.f32 %v3630, %v4081
    %v4165 = vadd.f32 %v3631, %v4084
    %v4166 = vadd.f32 %v3632, %v4087
    %v4167 = vadd.f32 %v3633, %v4090
    %v4168 = vadd.f32 %v3634, %v4093
    %v4169 = vadd.f32 %v3635, %v4096
    %v4170 = vadd.f32 %v3636, %v4099
    %v4171 = vadd.f32 %v3637, %v4102
    %v4172 = vadd.f32 %v3638, %v4105
    %v4173 = vadd.f32 %v3639, %v4108
    %v4174 = vld [vmem:[%s3105 + $0x2] sm:$0xff]
    %v4175 = vld [vmem:[%s3105 + $0xa] sm:$0xff]
    %v4176 = vld [vmem:[%s3105 + $0x1a] sm:$0xff]
    %v4177 = vld [vmem:[%s3105 + $0x22] sm:$0xff]
    %v4178 = vld [vmem:[%s3105 + $0x32] sm:$0xff]
    %v4179 = vld [vmem:[%s3105 + $0x3a] sm:$0xff]
    %v4180 = vld [vmem:[%s3105 + $0x4a] sm:$0xff]
    %v4181 = vld [vmem:[%s3105 + $0x52] sm:$0xff]
    %v4182 = vld [vmem:[%s3105 + $0x62] sm:$0xff]
    %v4183 = vld [vmem:[%s3105 + $0x6a] sm:$0xff]
    %v4184 = vld [vmem:[%s3105 + $0x7a] sm:$0xff]
    %v4185 = vld [vmem:[%s3105 + $0x82] sm:$0xff]
    %v4186 = vld [vmem:[%s3105 + $0x92] sm:$0xff]
    %v4187 = vld [vmem:[%s3105 + $0x9a] sm:$0xff]
    %v4188 = vld [vmem:[%s3105 + $0xaa] sm:$0xff]
    %v4189 = vld [vmem:[%s3105 + $0xb2] sm:$0xff]
    %v4190 = vld [vmem:[%s3105 + $0xc2] sm:$0xff]
    %v4191 = vld [vmem:[%s3105 + $0xca] sm:$0xff]
    %v4192 = vld [vmem:[%s3105 + $0xda] sm:$0xff]
    %v4193 = vld [vmem:[%s3105 + $0xe2] sm:$0xff]
    %v4194 = vld [vmem:[%s3105 + $0xf2] sm:$0xff]
    %v4195 = vld [vmem:[%s3105 + $0xfa] sm:$0xff]
    %v4196 = vld [vmem:[%s3105 + $0x10a] sm:$0xff]
    %v4197 = vld [vmem:[%s3105 + $0x112] sm:$0xff]
    %v4198 = vld [vmem:[%s3105 + $0x122] sm:$0xff]
    %v4199 = vld [vmem:[%s3105 + $0x12a] sm:$0xff]
    %v4200 = vld [vmem:[%s3105 + $0x13a] sm:$0xff]
    %v4201 = vld [vmem:[%s3105 + $0x142] sm:$0xff]
    %v4202 = vld [vmem:[%s3105 + $0x152] sm:$0xff]
    %v4203 = vld [vmem:[%s3105 + $0x15a] sm:$0xff]
    %v4204 = vld [vmem:[%s3105 + $0x16a] sm:$0xff]
    %v4205 = vld [vmem:[%s3105 + $0x172] sm:$0xff]
    %v4206 = vld [vmem:[%s3105 + $0x1b2] sm:$0xff]
    %v4207 = vld [vmem:[%s3105 + $0x1ba] sm:$0xff]
    %v4208 = vld [vmem:[%s3105 + $0x1ca] sm:$0xff]
    %v4209 = vld [vmem:[%s3105 + $0x1d2] sm:$0xff]
    %v4210 = vld [vmem:[%s3105 + $0x1e2] sm:$0xff]
    %v4211 = vld [vmem:[%s3105 + $0x1ea] sm:$0xff]
    %v4212 = vld [vmem:[%s3105 + $0x1fa] sm:$0xff]
    %v4213 = vld [vmem:[%s3105 + $0x202] sm:$0xff]
    %v4214 = vld [vmem:[%s3105 + $0x212] sm:$0xff]
    %v4215 = vld [vmem:[%s3105 + $0x21a] sm:$0xff]
    %v4216 = vld [vmem:[%s3105 + $0x22a] sm:$0xff]
    %v4217 = vld [vmem:[%s3105 + $0x232] sm:$0xff]
    %v4218 = vld [vmem:[%s3105 + $0x242] sm:$0xff]
    %v4219 = vld [vmem:[%s3105 + $0x24a] sm:$0xff]
    %v4220 = vld [vmem:[%s3105 + $0x25a] sm:$0xff]
    %v4221 = vld [vmem:[%s3105 + $0x262] sm:$0xff]
    %v4222 = vld [vmem:[%s3105 + $0x272] sm:$0xff]
    %v4223 = vld [vmem:[%s3105 + $0x27a] sm:$0xff]
    %v4224 = vld [vmem:[%s3105 + $0x28a] sm:$0xff]
    %v4225 = vld [vmem:[%s3105 + $0x292] sm:$0xff]
    %v4226 = vld [vmem:[%s3105 + $0x2a2] sm:$0xff]
    %v4227 = vld [vmem:[%s3105 + $0x2aa] sm:$0xff]
    %v4228 = vld [vmem:[%s3105 + $0x2ba] sm:$0xff]
    %v4229 = vld [vmem:[%s3105 + $0x2c2] sm:$0xff]
    %v4230 = vld [vmem:[%s3105 + $0x2d2] sm:$0xff]
    %v4231 = vld [vmem:[%s3105 + $0x2da] sm:$0xff]
    %v4232 = vld [vmem:[%s3105 + $0x2ea] sm:$0xff]
    %v4233 = vld [vmem:[%s3105 + $0x2f2] sm:$0xff]
    %v4234 = vld [vmem:[%s3105 + $0x302] sm:$0xff]
    %v4235 = vld [vmem:[%s3105 + $0x30a] sm:$0xff]
    %v4236 = vld [vmem:[%s3105 + $0x31a] sm:$0xff]
    %v4237 = vld [vmem:[%s3105 + $0x322] sm:$0xff]
    %s4238 = scalar_lea.vmem %s1, 32
    %v4239 = vld [vmem:[%s4238] sm:$0xf]
    %v4241 = vsel %vm158, %v4174, 0
    %v4244 = vsel %vm158, %v4175, 0
    %v4247 = vsel %vm158, %v4176, 0
    %v4250 = vsel %vm158, %v4177, 0
    %v4253 = vsel %vm158, %v4178, 0
    %v4256 = vsel %vm158, %v4179, 0
    %v4259 = vsel %vm158, %v4180, 0
    %v4262 = vsel %vm158, %v4181, 0
    %v4265 = vsel %vm158, %v4182, 0
    %v4268 = vsel %vm158, %v4183, 0
    %v4271 = vsel %vm158, %v4184, 0
    %v4274 = vsel %vm158, %v4185, 0
    %v4277 = vsel %vm158, %v4186, 0
    %v4280 = vsel %vm158, %v4187, 0
    %v4283 = vsel %vm158, %v4188, 0
    %v4286 = vsel %vm158, %v4189, 0
    %v4289 = vsel %vm158, %v4190, 0
    %v4292 = vsel %vm158, %v4191, 0
    %v4295 = vsel %vm158, %v4192, 0
    %v4298 = vsel %vm158, %v4193, 0
    %v4301 = vsel %vm158, %v4194, 0
    %v4304 = vsel %vm158, %v4195, 0
    %v4307 = vsel %vm158, %v4196, 0
    %v4310 = vsel %vm158, %v4197, 0
    %v4313 = vsel %vm158, %v4198, 0
    %v4316 = vsel %vm158, %v4199, 0
    %v4319 = vsel %vm158, %v4200, 0
    %v4322 = vsel %vm158, %v4201, 0
    %v4325 = vsel %vm158, %v4202, 0
    %v4328 = vsel %vm158, %v4203, 0
    %v4331 = vsel %vm158, %v4204, 0
    %v4334 = vsel %vm158, %v4205, 0
    %v4337 = vsel %vm158, %v4206, 0
    %v4340 = vsel %vm158, %v4207, 0
    %v4343 = vsel %vm158, %v4208, 0
    %v4346 = vsel %vm158, %v4209, 0
    %v4349 = vsel %vm158, %v4210, 0
    %v4352 = vsel %vm158, %v4211, 0
    %v4355 = vsel %vm158, %v4212, 0
    %v4358 = vsel %vm158, %v4213, 0
    %v4361 = vsel %vm158, %v4214, 0
    %v4364 = vsel %vm158, %v4215, 0
    %v4367 = vsel %vm158, %v4216, 0
    %v4370 = vsel %vm158, %v4217, 0
    %v4373 = vsel %vm158, %v4218, 0
    %v4376 = vsel %vm158, %v4219, 0
    %v4379 = vsel %vm158, %v4220, 0
    %v4382 = vsel %vm158, %v4221, 0
    %v4385 = vsel %vm158, %v4222, 0
    %v4388 = vsel %vm158, %v4223, 0
    %v4391 = vsel %vm158, %v4224, 0
    %v4394 = vsel %vm158, %v4225, 0
    %v4397 = vsel %vm158, %v4226, 0
    %v4400 = vsel %vm158, %v4227, 0
    %v4403 = vsel %vm158, %v4228, 0
    %v4406 = vsel %vm158, %v4229, 0
    %v4409 = vsel %vm158, %v4230, 0
    %v4412 = vsel %vm158, %v4231, 0
    %v4415 = vsel %vm158, %v4232, 0
    %v4418 = vsel %vm158, %v4233, 0
    %v4421 = vsel %vm158, %v4234, 0
    %v4424 = vsel %vm158, %v4235, 0
    %v4427 = vsel %vm158, %v4236, 0
    %v4430 = vsel %vm158, %v4237, 0
    %v4433 = vsel %vm351, %v4239, 0
    %4435 = vmatpush.msra.mxu0 0.0
    %4436 = vmatpush.msra.mxu0 0.0
    %4437 = vmatpush.msra.mxu0 0.0
    %4438 = vmatpush.msra.mxu0 0.0
    %4439 = vmatpush.msra.mxu0 0.0
    %4440 = vmatpush.msra.mxu0 0.0
    %4441 = vmatpush.msra.mxu0 0.0
    %4442 = vmatpush.msra.mxu0 0.0
    %4443 = vmatpush.msra.mxu0 0.0
    %4444 = vmatpush.msra.mxu0 0.0
    %4445 = vmatpush.msra.mxu0 0.0
    %4446 = vmatpush.msra.mxu0 0.0
    %4447 = vmatpush.msra.mxu0 0.0
    %4448 = vmatpush.msra.mxu0 0.0
    %4449 = vmatpush.msra.mxu0 0.0
    %4450 = vmatpush.msra.mxu0 %v4433
    %4451 = vmatmul.f32.gmra.mxu0 %v4241
    %v4452 = vpop.f32.mrf.mxu0
    %v4453 = vadd.f32 0.0, %v4452
    %4454 = vmatmul.f32.gmra.mxu0 %v4244
    %v4455 = vpop.f32.mrf.mxu0
    %v4456 = vadd.f32 0.0, %v4455
    %4457 = vmatmul.f32.gmra.mxu0 %v4247
    %v4458 = vpop.f32.mrf.mxu0
    %v4459 = vadd.f32 0.0, %v4458
    %4460 = vmatmul.f32.gmra.mxu0 %v4250
    %v4461 = vpop.f32.mrf.mxu0
    %v4462 = vadd.f32 0.0, %v4461
    %4463 = vmatmul.f32.gmra.mxu0 %v4253
    %v4464 = vpop.f32.mrf.mxu0
    %v4465 = vadd.f32 0.0, %v4464
    %4466 = vmatmul.f32.gmra.mxu0 %v4256
    %v4467 = vpop.f32.mrf.mxu0
    %v4468 = vadd.f32 0.0, %v4467
    %4469 = vmatmul.f32.gmra.mxu0 %v4259
    %v4470 = vpop.f32.mrf.mxu0
    %v4471 = vadd.f32 0.0, %v4470
    %4472 = vmatmul.f32.gmra.mxu0 %v4262
    %v4473 = vpop.f32.mrf.mxu0
    %v4474 = vadd.f32 0.0, %v4473
    %4475 = vmatmul.f32.gmra.mxu0 %v4265
    %v4476 = vpop.f32.mrf.mxu0
    %v4477 = vadd.f32 0.0, %v4476
    %4478 = vmatmul.f32.gmra.mxu0 %v4268
    %v4479 = vpop.f32.mrf.mxu0
    %v4480 = vadd.f32 0.0, %v4479
    %4481 = vmatmul.f32.gmra.mxu0 %v4271
    %v4482 = vpop.f32.mrf.mxu0
    %v4483 = vadd.f32 0.0, %v4482
    %4484 = vmatmul.f32.gmra.mxu0 %v4274
    %v4485 = vpop.f32.mrf.mxu0
    %v4486 = vadd.f32 0.0, %v4485
    %4487 = vmatmul.f32.gmra.mxu0 %v4277
    %v4488 = vpop.f32.mrf.mxu0
    %v4489 = vadd.f32 0.0, %v4488
    %4490 = vmatmul.f32.gmra.mxu0 %v4280
    %v4491 = vpop.f32.mrf.mxu0
    %v4492 = vadd.f32 0.0, %v4491
    %4493 = vmatmul.f32.gmra.mxu0 %v4283
    %v4494 = vpop.f32.mrf.mxu0
    %v4495 = vadd.f32 0.0, %v4494
    %4496 = vmatmul.f32.gmra.mxu0 %v4286
    %v4497 = vpop.f32.mrf.mxu0
    %v4498 = vadd.f32 0.0, %v4497
    %4499 = vmatmul.f32.gmra.mxu0 %v4289
    %v4500 = vpop.f32.mrf.mxu0
    %v4501 = vadd.f32 0.0, %v4500
    %4502 = vmatmul.f32.gmra.mxu0 %v4292
    %v4503 = vpop.f32.mrf.mxu0
    %v4504 = vadd.f32 0.0, %v4503
    %4505 = vmatmul.f32.gmra.mxu0 %v4295
    %v4506 = vpop.f32.mrf.mxu0
    %v4507 = vadd.f32 0.0, %v4506
    %4508 = vmatmul.f32.gmra.mxu0 %v4298
    %v4509 = vpop.f32.mrf.mxu0
    %v4510 = vadd.f32 0.0, %v4509
    %4511 = vmatmul.f32.gmra.mxu0 %v4301
    %v4512 = vpop.f32.mrf.mxu0
    %v4513 = vadd.f32 0.0, %v4512
    %4514 = vmatmul.f32.gmra.mxu0 %v4304
    %v4515 = vpop.f32.mrf.mxu0
    %v4516 = vadd.f32 0.0, %v4515
    %4517 = vmatmul.f32.gmra.mxu0 %v4307
    %v4518 = vpop.f32.mrf.mxu0
    %v4519 = vadd.f32 0.0, %v4518
    %4520 = vmatmul.f32.gmra.mxu0 %v4310
    %v4521 = vpop.f32.mrf.mxu0
    %v4522 = vadd.f32 0.0, %v4521
    %4523 = vmatmul.f32.gmra.mxu0 %v4313
    %v4524 = vpop.f32.mrf.mxu0
    %v4525 = vadd.f32 0.0, %v4524
    %4526 = vmatmul.f32.gmra.mxu0 %v4316
    %v4527 = vpop.f32.mrf.mxu0
    %v4528 = vadd.f32 0.0, %v4527
    %4529 = vmatmul.f32.gmra.mxu0 %v4319
    %v4530 = vpop.f32.mrf.mxu0
    %v4531 = vadd.f32 0.0, %v4530
    %4532 = vmatmul.f32.gmra.mxu0 %v4322
    %v4533 = vpop.f32.mrf.mxu0
    %v4534 = vadd.f32 0.0, %v4533
    %4535 = vmatmul.f32.gmra.mxu0 %v4325
    %v4536 = vpop.f32.mrf.mxu0
    %v4537 = vadd.f32 0.0, %v4536
    %4538 = vmatmul.f32.gmra.mxu0 %v4328
    %v4539 = vpop.f32.mrf.mxu0
    %v4540 = vadd.f32 0.0, %v4539
    %4541 = vmatmul.f32.gmra.mxu0 %v4331
    %v4542 = vpop.f32.mrf.mxu0
    %v4543 = vadd.f32 0.0, %v4542
    %4544 = vmatmul.f32.gmra.mxu0 %v4334
    %v4545 = vpop.f32.mrf.mxu0
    %v4546 = vadd.f32 0.0, %v4545
    %4547 = vmatmul.f32.gmra.mxu0 %v4337
    %v4548 = vpop.f32.mrf.mxu0
    %v4549 = vadd.f32 0.0, %v4548
    %4550 = vmatmul.f32.gmra.mxu0 %v4340
    %v4551 = vpop.f32.mrf.mxu0
    %v4552 = vadd.f32 0.0, %v4551
    %4553 = vmatmul.f32.gmra.mxu0 %v4343
    %v4554 = vpop.f32.mrf.mxu0
    %v4555 = vadd.f32 0.0, %v4554
    %4556 = vmatmul.f32.gmra.mxu0 %v4346
    %v4557 = vpop.f32.mrf.mxu0
    %v4558 = vadd.f32 0.0, %v4557
    %4559 = vmatmul.f32.gmra.mxu0 %v4349
    %v4560 = vpop.f32.mrf.mxu0
    %v4561 = vadd.f32 0.0, %v4560
    %4562 = vmatmul.f32.gmra.mxu0 %v4352
    %v4563 = vpop.f32.mrf.mxu0
    %v4564 = vadd.f32 0.0, %v4563
    %4565 = vmatmul.f32.gmra.mxu0 %v4355
    %v4566 = vpop.f32.mrf.mxu0
    %v4567 = vadd.f32 0.0, %v4566
    %4568 = vmatmul.f32.gmra.mxu0 %v4358
    %v4569 = vpop.f32.mrf.mxu0
    %v4570 = vadd.f32 0.0, %v4569
    %4571 = vmatmul.f32.gmra.mxu0 %v4361
    %v4572 = vpop.f32.mrf.mxu0
    %v4573 = vadd.f32 0.0, %v4572
    %4574 = vmatmul.f32.gmra.mxu0 %v4364
    %v4575 = vpop.f32.mrf.mxu0
    %v4576 = vadd.f32 0.0, %v4575
    %4577 = vmatmul.f32.gmra.mxu0 %v4367
    %v4578 = vpop.f32.mrf.mxu0
    %v4579 = vadd.f32 0.0, %v4578
    %4580 = vmatmul.f32.gmra.mxu0 %v4370
    %v4581 = vpop.f32.mrf.mxu0
    %v4582 = vadd.f32 0.0, %v4581
    %4583 = vmatmul.f32.gmra.mxu0 %v4373
    %v4584 = vpop.f32.mrf.mxu0
    %v4585 = vadd.f32 0.0, %v4584
    %4586 = vmatmul.f32.gmra.mxu0 %v4376
    %v4587 = vpop.f32.mrf.mxu0
    %v4588 = vadd.f32 0.0, %v4587
    %4589 = vmatmul.f32.gmra.mxu0 %v4379
    %v4590 = vpop.f32.mrf.mxu0
    %v4591 = vadd.f32 0.0, %v4590
    %4592 = vmatmul.f32.gmra.mxu0 %v4382
    %v4593 = vpop.f32.mrf.mxu0
    %v4594 = vadd.f32 0.0, %v4593
    %4595 = vmatmul.f32.gmra.mxu0 %v4385
    %v4596 = vpop.f32.mrf.mxu0
    %v4597 = vadd.f32 0.0, %v4596
    %4598 = vmatmul.f32.gmra.mxu0 %v4388
    %v4599 = vpop.f32.mrf.mxu0
    %v4600 = vadd.f32 0.0, %v4599
    %4601 = vmatmul.f32.gmra.mxu0 %v4391
    %v4602 = vpop.f32.mrf.mxu0
    %v4603 = vadd.f32 0.0, %v4602
    %4604 = vmatmul.f32.gmra.mxu0 %v4394
    %v4605 = vpop.f32.mrf.mxu0
    %v4606 = vadd.f32 0.0, %v4605
    %4607 = vmatmul.f32.gmra.mxu0 %v4397
    %v4608 = vpop.f32.mrf.mxu0
    %v4609 = vadd.f32 0.0, %v4608
    %4610 = vmatmul.f32.gmra.mxu0 %v4400
    %v4611 = vpop.f32.mrf.mxu0
    %v4612 = vadd.f32 0.0, %v4611
    %4613 = vmatmul.f32.gmra.mxu0 %v4403
    %v4614 = vpop.f32.mrf.mxu0
    %v4615 = vadd.f32 0.0, %v4614
    %4616 = vmatmul.f32.gmra.mxu0 %v4406
    %v4617 = vpop.f32.mrf.mxu0
    %v4618 = vadd.f32 0.0, %v4617
    %4619 = vmatmul.f32.gmra.mxu0 %v4409
    %v4620 = vpop.f32.mrf.mxu0
    %v4621 = vadd.f32 0.0, %v4620
    %4622 = vmatmul.f32.gmra.mxu0 %v4412
    %v4623 = vpop.f32.mrf.mxu0
    %v4624 = vadd.f32 0.0, %v4623
    %4625 = vmatmul.f32.gmra.mxu0 %v4415
    %v4626 = vpop.f32.mrf.mxu0
    %v4627 = vadd.f32 0.0, %v4626
    %4628 = vmatmul.f32.gmra.mxu0 %v4418
    %v4629 = vpop.f32.mrf.mxu0
    %v4630 = vadd.f32 0.0, %v4629
    %4631 = vmatmul.f32.gmra.mxu0 %v4421
    %v4632 = vpop.f32.mrf.mxu0
    %v4633 = vadd.f32 0.0, %v4632
    %4634 = vmatmul.f32.gmra.mxu0 %v4424
    %v4635 = vpop.f32.mrf.mxu0
    %v4636 = vadd.f32 0.0, %v4635
    %4637 = vmatmul.f32.gmra.mxu0 %v4427
    %v4638 = vpop.f32.mrf.mxu0
    %v4639 = vadd.f32 0.0, %v4638
    %4640 = vmatmul.f32.gmra.mxu0 %v4430
    %v4641 = vpop.f32.mrf.mxu0
    %v4642 = vadd.f32 0.0, %v4641
    %4643 = vdwg.mxu0
    %v4644 = vadd.f32 %v4110, %v4453
    %v4645 = vadd.f32 %v4111, %v4456
    %v4646 = vadd.f32 %v4112, %v4459
    %v4647 = vadd.f32 %v4113, %v4462
    %v4648 = vadd.f32 %v4114, %v4465
    %v4649 = vadd.f32 %v4115, %v4468
    %v4650 = vadd.f32 %v4116, %v4471
    %v4651 = vadd.f32 %v4117, %v4474
    %v4652 = vadd.f32 %v4118, %v4477
    %v4653 = vadd.f32 %v4119, %v4480
    %v4654 = vadd.f32 %v4120, %v4483
    %v4655 = vadd.f32 %v4121, %v4486
    %v4656 = vadd.f32 %v4122, %v4489
    %v4657 = vadd.f32 %v4123, %v4492
    %v4658 = vadd.f32 %v4124, %v4495
    %v4659 = vadd.f32 %v4125, %v4498
    %v4660 = vadd.f32 %v4126, %v4501
    %v4661 = vadd.f32 %v4127, %v4504
    %v4662 = vadd.f32 %v4128, %v4507
    %v4663 = vadd.f32 %v4129, %v4510
    %v4664 = vadd.f32 %v4130, %v4513
    %v4665 = vadd.f32 %v4131, %v4516
    %v4666 = vadd.f32 %v4132, %v4519
    %v4667 = vadd.f32 %v4133, %v4522
    %v4668 = vadd.f32 %v4134, %v4525
    %v4669 = vadd.f32 %v4135, %v4528
    %v4670 = vadd.f32 %v4136, %v4531
    %v4671 = vadd.f32 %v4137, %v4534
    %v4672 = vadd.f32 %v4138, %v4537
    %v4673 = vadd.f32 %v4139, %v4540
    %v4674 = vadd.f32 %v4140, %v4543
    %v4675 = vadd.f32 %v4141, %v4546
    %v4676 = vadd.f32 %v4142, %v4549
    %v4677 = vadd.f32 %v4143, %v4552
    %v4678 = vadd.f32 %v4144, %v4555
    %v4679 = vadd.f32 %v4145, %v4558
    %v4680 = vadd.f32 %v4146, %v4561
    %v4681 = vadd.f32 %v4147, %v4564
    %v4682 = vadd.f32 %v4148, %v4567
    %v4683 = vadd.f32 %v4149, %v4570
    %v4684 = vadd.f32 %v4150, %v4573
    %v4685 = vadd.f32 %v4151, %v4576
    %v4686 = vadd.f32 %v4152, %v4579
    %v4687 = vadd.f32 %v4153, %v4582
    %v4688 = vadd.f32 %v4154, %v4585
    %v4689 = vadd.f32 %v4155, %v4588
    %v4690 = vadd.f32 %v4156, %v4591
    %v4691 = vadd.f32 %v4157, %v4594
    %v4692 = vadd.f32 %v4158, %v4597
    %v4693 = vadd.f32 %v4159, %v4600
    %v4694 = vadd.f32 %v4160, %v4603
    %v4695 = vadd.f32 %v4161, %v4606
    %v4696 = vadd.f32 %v4162, %v4609
    %v4697 = vadd.f32 %v4163, %v4612
    %v4698 = vadd.f32 %v4164, %v4615
    %v4699 = vadd.f32 %v4165, %v4618
    %v4700 = vadd.f32 %v4166, %v4621
    %v4701 = vadd.f32 %v4167, %v4624
    %v4702 = vadd.f32 %v4168, %v4627
    %v4703 = vadd.f32 %v4169, %v4630
    %v4704 = vadd.f32 %v4170, %v4633
    %v4705 = vadd.f32 %v4171, %v4636
    %v4706 = vadd.f32 %v4172, %v4639
    %v4707 = vadd.f32 %v4173, %v4642
    %v4708 = vld [vmem:[%s2] sm:$0x1]
    %v4710 = vperm.slane %v4708, 0
    %v4712 = vadd.f32 %v4644, %v4710
    %v4713 = vadd.f32 %v4645, %v4710
    %v4714 = vadd.f32 %v4646, %v4710
    %v4715 = vadd.f32 %v4647, %v4710
    %v4716 = vadd.f32 %v4648, %v4710
    %v4717 = vadd.f32 %v4649, %v4710
    %v4718 = vadd.f32 %v4650, %v4710
    %v4719 = vadd.f32 %v4651, %v4710
    %v4720 = vadd.f32 %v4652, %v4710
    %v4721 = vadd.f32 %v4653, %v4710
    %v4722 = vadd.f32 %v4654, %v4710
    %v4723 = vadd.f32 %v4655, %v4710
    %v4724 = vadd.f32 %v4656, %v4710
    %v4725 = vadd.f32 %v4657, %v4710
    %v4726 = vadd.f32 %v4658, %v4710
    %v4727 = vadd.f32 %v4659, %v4710
    %v4728 = vadd.f32 %v4660, %v4710
    %v4729 = vadd.f32 %v4661, %v4710
    %v4730 = vadd.f32 %v4662, %v4710
    %v4731 = vadd.f32 %v4663, %v4710
    %v4732 = vadd.f32 %v4664, %v4710
    %v4733 = vadd.f32 %v4665, %v4710
    %v4734 = vadd.f32 %v4666, %v4710
    %v4735 = vadd.f32 %v4667, %v4710
    %v4736 = vadd.f32 %v4668, %v4710
    %v4737 = vadd.f32 %v4669, %v4710
    %v4738 = vadd.f32 %v4670, %v4710
    %v4739 = vadd.f32 %v4671, %v4710
    %v4740 = vadd.f32 %v4672, %v4710
    %v4741 = vadd.f32 %v4673, %v4710
    %v4742 = vadd.f32 %v4674, %v4710
    %v4743 = vadd.f32 %v4675, %v4710
    %v4744 = vadd.f32 %v4676, %v4710
    %v4745 = vadd.f32 %v4677, %v4710
    %v4746 = vadd.f32 %v4678, %v4710
    %v4747 = vadd.f32 %v4679, %v4710
    %v4748 = vadd.f32 %v4680, %v4710
    %v4749 = vadd.f32 %v4681, %v4710
    %v4750 = vadd.f32 %v4682, %v4710
    %v4751 = vadd.f32 %v4683, %v4710
    %v4752 = vadd.f32 %v4684, %v4710
    %v4753 = vadd.f32 %v4685, %v4710
    %v4754 = vadd.f32 %v4686, %v4710
    %v4755 = vadd.f32 %v4687, %v4710
    %v4756 = vadd.f32 %v4688, %v4710
    %v4757 = vadd.f32 %v4689, %v4710
    %v4758 = vadd.f32 %v4690, %v4710
    %v4759 = vadd.f32 %v4691, %v4710
    %v4760 = vadd.f32 %v4692, %v4710
    %v4761 = vadd.f32 %v4693, %v4710
    %v4762 = vadd.f32 %v4694, %v4710
    %v4763 = vadd.f32 %v4695, %v4710
    %v4764 = vadd.f32 %v4696, %v4710
    %v4765 = vadd.f32 %v4697, %v4710
    %v4766 = vadd.f32 %v4698, %v4710
    %v4767 = vadd.f32 %v4699, %v4710
    %v4768 = vadd.f32 %v4700, %v4710
    %v4769 = vadd.f32 %v4701, %v4710
    %v4770 = vadd.f32 %v4702, %v4710
    %v4771 = vadd.f32 %v4703, %v4710
    %v4772 = vadd.f32 %v4704, %v4710
    %v4773 = vadd.f32 %v4705, %v4710
    %v4774 = vadd.f32 %v4706, %v4710
    %v4775 = vadd.f32 %v4707, %v4710
    %vm4776 = vcmp.gt.f32.partialorder %v4712, 0.0
    %vm4777 = vcmp.gt.f32.partialorder %v4713, 0.0
    %vm4778 = vcmp.gt.f32.partialorder %v4714, 0.0
    %vm4779 = vcmp.gt.f32.partialorder %v4715, 0.0
    %vm4780 = vcmp.gt.f32.partialorder %v4716, 0.0
    %vm4781 = vcmp.gt.f32.partialorder %v4717, 0.0
    %vm4782 = vcmp.gt.f32.partialorder %v4718, 0.0
    %vm4783 = vcmp.gt.f32.partialorder %v4719, 0.0
    %vm4784 = vcmp.gt.f32.partialorder %v4720, 0.0
    %vm4785 = vcmp.gt.f32.partialorder %v4721, 0.0
    %vm4786 = vcmp.gt.f32.partialorder %v4722, 0.0
    %vm4787 = vcmp.gt.f32.partialorder %v4723, 0.0
    %vm4788 = vcmp.gt.f32.partialorder %v4724, 0.0
    %vm4789 = vcmp.gt.f32.partialorder %v4725, 0.0
    %vm4790 = vcmp.gt.f32.partialorder %v4726, 0.0
    %vm4791 = vcmp.gt.f32.partialorder %v4727, 0.0
    %vm4792 = vcmp.gt.f32.partialorder %v4728, 0.0
    %vm4793 = vcmp.gt.f32.partialorder %v4729, 0.0
    %vm4794 = vcmp.gt.f32.partialorder %v4730, 0.0
    %vm4795 = vcmp.gt.f32.partialorder %v4731, 0.0
    %vm4796 = vcmp.gt.f32.partialorder %v4732, 0.0
    %vm4797 = vcmp.gt.f32.partialorder %v4733, 0.0
    %vm4798 = vcmp.gt.f32.partialorder %v4734, 0.0
    %vm4799 = vcmp.gt.f32.partialorder %v4735, 0.0
    %vm4800 = vcmp.gt.f32.partialorder %v4736, 0.0
    %vm4801 = vcmp.gt.f32.partialorder %v4737, 0.0
    %vm4802 = vcmp.gt.f32.partialorder %v4738, 0.0
    %vm4803 = vcmp.gt.f32.partialorder %v4739, 0.0
    %vm4804 = vcmp.gt.f32.partialorder %v4740, 0.0
    %vm4805 = vcmp.gt.f32.partialorder %v4741, 0.0
    %vm4806 = vcmp.gt.f32.partialorder %v4742, 0.0
    %vm4807 = vcmp.gt.f32.partialorder %v4743, 0.0
    %vm4808 = vcmp.gt.f32.partialorder %v4744, 0.0
    %vm4809 = vcmp.gt.f32.partialorder %v4745, 0.0
    %vm4810 = vcmp.gt.f32.partialorder %v4746, 0.0
    %vm4811 = vcmp.gt.f32.partialorder %v4747, 0.0
    %vm4812 = vcmp.gt.f32.partialorder %v4748, 0.0
    %vm4813 = vcmp.gt.f32.partialorder %v4749, 0.0
    %vm4814 = vcmp.gt.f32.partialorder %v4750, 0.0
    %vm4815 = vcmp.gt.f32.partialorder %v4751, 0.0
    %vm4816 = vcmp.gt.f32.partialorder %v4752, 0.0
    %vm4817 = vcmp.gt.f32.partialorder %v4753, 0.0
    %vm4818 = vcmp.gt.f32.partialorder %v4754, 0.0
    %vm4819 = vcmp.gt.f32.partialorder %v4755, 0.0
    %vm4820 = vcmp.gt.f32.partialorder %v4756, 0.0
    %vm4821 = vcmp.gt.f32.partialorder %v4757, 0.0
    %vm4822 = vcmp.gt.f32.partialorder %v4758, 0.0
    %vm4823 = vcmp.gt.f32.partialorder %v4759, 0.0
    %vm4824 = vcmp.gt.f32.partialorder %v4760, 0.0
    %vm4825 = vcmp.gt.f32.partialorder %v4761, 0.0
    %vm4826 = vcmp.gt.f32.partialorder %v4762, 0.0
    %vm4827 = vcmp.gt.f32.partialorder %v4763, 0.0
    %vm4828 = vcmp.gt.f32.partialorder %v4764, 0.0
    %vm4829 = vcmp.gt.f32.partialorder %v4765, 0.0
    %vm4830 = vcmp.gt.f32.partialorder %v4766, 0.0
    %vm4831 = vcmp.gt.f32.partialorder %v4767, 0.0
    %vm4832 = vcmp.gt.f32.partialorder %v4768, 0.0
    %vm4833 = vcmp.gt.f32.partialorder %v4769, 0.0
    %vm4834 = vcmp.gt.f32.partialorder %v4770, 0.0
    %vm4835 = vcmp.gt.f32.partialorder %v4771, 0.0
    %vm4836 = vcmp.gt.f32.partialorder %v4772, 0.0
    %vm4837 = vcmp.gt.f32.partialorder %v4773, 0.0
    %vm4838 = vcmp.gt.f32.partialorder %v4774, 0.0
    %vm4839 = vcmp.gt.f32.partialorder %v4775, 0.0
    %v4840 = vmul.f32 %v4712, 0.01
    %v4841 = vmul.f32 %v4713, 0.01
    %v4842 = vmul.f32 %v4714, 0.01
    %v4843 = vmul.f32 %v4715, 0.01
    %v4844 = vmul.f32 %v4716, 0.01
    %v4845 = vmul.f32 %v4717, 0.01
    %v4846 = vmul.f32 %v4718, 0.01
    %v4847 = vmul.f32 %v4719, 0.01
    %v4848 = vmul.f32 %v4720, 0.01
    %v4849 = vmul.f32 %v4721, 0.01
    %v4850 = vmul.f32 %v4722, 0.01
    %v4851 = vmul.f32 %v4723, 0.01
    %v4852 = vmul.f32 %v4724, 0.01
    %v4853 = vmul.f32 %v4725, 0.01
    %v4854 = vmul.f32 %v4726, 0.01
    %v4855 = vmul.f32 %v4727, 0.01
    %v4856 = vmul.f32 %v4728, 0.01
    %v4857 = vmul.f32 %v4729, 0.01
    %v4858 = vmul.f32 %v4730, 0.01
    %v4859 = vmul.f32 %v4731, 0.01
    %v4860 = vmul.f32 %v4732, 0.01
    %v4861 = vmul.f32 %v4733, 0.01
    %v4862 = vmul.f32 %v4734, 0.01
    %v4863 = vmul.f32 %v4735, 0.01
    %v4864 = vmul.f32 %v4736, 0.01
    %v4865 = vmul.f32 %v4737, 0.01
    %v4866 = vmul.f32 %v4738, 0.01
    %v4867 = vmul.f32 %v4739, 0.01
    %v4868 = vmul.f32 %v4740, 0.01
    %v4869 = vmul.f32 %v4741, 0.01
    %v4870 = vmul.f32 %v4742, 0.01
    %v4871 = vmul.f32 %v4743, 0.01
    %v4872 = vmul.f32 %v4744, 0.01
    %v4873 = vmul.f32 %v4745, 0.01
    %v4874 = vmul.f32 %v4746, 0.01
    %v4875 = vmul.f32 %v4747, 0.01
    %v4876 = vmul.f32 %v4748, 0.01
    %v4877 = vmul.f32 %v4749, 0.01
    %v4878 = vmul.f32 %v4750, 0.01
    %v4879 = vmul.f32 %v4751, 0.01
    %v4880 = vmul.f32 %v4752, 0.01
    %v4881 = vmul.f32 %v4753, 0.01
    %v4882 = vmul.f32 %v4754, 0.01
    %v4883 = vmul.f32 %v4755, 0.01
    %v4884 = vmul.f32 %v4756, 0.01
    %v4885 = vmul.f32 %v4757, 0.01
    %v4886 = vmul.f32 %v4758, 0.01
    %v4887 = vmul.f32 %v4759, 0.01
    %v4888 = vmul.f32 %v4760, 0.01
    %v4889 = vmul.f32 %v4761, 0.01
    %v4890 = vmul.f32 %v4762, 0.01
    %v4891 = vmul.f32 %v4763, 0.01
    %v4892 = vmul.f32 %v4764, 0.01
    %v4893 = vmul.f32 %v4765, 0.01
    %v4894 = vmul.f32 %v4766, 0.01
    %v4895 = vmul.f32 %v4767, 0.01
    %v4896 = vmul.f32 %v4768, 0.01
    %v4897 = vmul.f32 %v4769, 0.01
    %v4898 = vmul.f32 %v4770, 0.01
    %v4899 = vmul.f32 %v4771, 0.01
    %v4900 = vmul.f32 %v4772, 0.01
    %v4901 = vmul.f32 %v4773, 0.01
    %v4902 = vmul.f32 %v4774, 0.01
    %v4903 = vmul.f32 %v4775, 0.01
    %v4904 = vsel %vm4776, %v4712, %v4840
    %v4905 = vsel %vm4777, %v4713, %v4841
    %v4906 = vsel %vm4778, %v4714, %v4842
    %v4907 = vsel %vm4779, %v4715, %v4843
    %v4908 = vsel %vm4780, %v4716, %v4844
    %v4909 = vsel %vm4781, %v4717, %v4845
    %v4910 = vsel %vm4782, %v4718, %v4846
    %v4911 = vsel %vm4783, %v4719, %v4847
    %v4912 = vsel %vm4784, %v4720, %v4848
    %v4913 = vsel %vm4785, %v4721, %v4849
    %v4914 = vsel %vm4786, %v4722, %v4850
    %v4915 = vsel %vm4787, %v4723, %v4851
    %v4916 = vsel %vm4788, %v4724, %v4852
    %v4917 = vsel %vm4789, %v4725, %v4853
    %v4918 = vsel %vm4790, %v4726, %v4854
    %v4919 = vsel %vm4791, %v4727, %v4855
    %v4920 = vsel %vm4792, %v4728, %v4856
    %v4921 = vsel %vm4793, %v4729, %v4857
    %v4922 = vsel %vm4794, %v4730, %v4858
    %v4923 = vsel %vm4795, %v4731, %v4859
    %v4924 = vsel %vm4796, %v4732, %v4860
    %v4925 = vsel %vm4797, %v4733, %v4861
    %v4926 = vsel %vm4798, %v4734, %v4862
    %v4927 = vsel %vm4799, %v4735, %v4863
    %v4928 = vsel %vm4800, %v4736, %v4864
    %v4929 = vsel %vm4801, %v4737, %v4865
    %v4930 = vsel %vm4802, %v4738, %v4866
    %v4931 = vsel %vm4803, %v4739, %v4867
    %v4932 = vsel %vm4804, %v4740, %v4868
    %v4933 = vsel %vm4805, %v4741, %v4869
    %v4934 = vsel %vm4806, %v4742, %v4870
    %v4935 = vsel %vm4807, %v4743, %v4871
    %v4936 = vsel %vm4808, %v4744, %v4872
    %v4937 = vsel %vm4809, %v4745, %v4873
    %v4938 = vsel %vm4810, %v4746, %v4874
    %v4939 = vsel %vm4811, %v4747, %v4875
    %v4940 = vsel %vm4812, %v4748, %v4876
    %v4941 = vsel %vm4813, %v4749, %v4877
    %v4942 = vsel %vm4814, %v4750, %v4878
    %v4943 = vsel %vm4815, %v4751, %v4879
    %v4944 = vsel %vm4816, %v4752, %v4880
    %v4945 = vsel %vm4817, %v4753, %v4881
    %v4946 = vsel %vm4818, %v4754, %v4882
    %v4947 = vsel %vm4819, %v4755, %v4883
    %v4948 = vsel %vm4820, %v4756, %v4884
    %v4949 = vsel %vm4821, %v4757, %v4885
    %v4950 = vsel %vm4822, %v4758, %v4886
    %v4951 = vsel %vm4823, %v4759, %v4887
    %v4952 = vsel %vm4824, %v4760, %v4888
    %v4953 = vsel %vm4825, %v4761, %v4889
    %v4954 = vsel %vm4826, %v4762, %v4890
    %v4955 = vsel %vm4827, %v4763, %v4891
    %v4956 = vsel %vm4828, %v4764, %v4892
    %v4957 = vsel %vm4829, %v4765, %v4893
    %v4958 = vsel %vm4830, %v4766, %v4894
    %v4959 = vsel %vm4831, %v4767, %v4895
    %v4960 = vsel %vm4832, %v4768, %v4896
    %v4961 = vsel %vm4833, %v4769, %v4897
    %v4962 = vsel %vm4834, %v4770, %v4898
    %v4963 = vsel %vm4835, %v4771, %v4899
    %v4964 = vsel %vm4836, %v4772, %v4900
    %v4965 = vsel %vm4837, %v4773, %v4901
    %v4966 = vsel %vm4838, %v4774, %v4902
    %v4967 = vsel %vm4839, %v4775, %v4903
    %vm4968 = vcmask 64512
    %4969 = vst.msk [vmem:[#allocation2] sm:$0xff] %vm4968, 0.0
    %4970 = vst.msk [vmem:[#allocation2 + $0x8] sm:$0xff] %vm4968, 0.0
    %4971 = vst.msk [vmem:[#allocation2 + $0x10] sm:$0xff] %vm4968, 0.0
    %4972 = vst.msk [vmem:[#allocation2 + $0x18] sm:$0xff] %vm4968, 0.0
    %4973 = vst.msk [vmem:[#allocation2 + $0x20] sm:$0xff] %vm4968, 0.0
    %4974 = vst.msk [vmem:[#allocation2 + $0x28] sm:$0xff] %vm4968, 0.0
    %4975 = vst.msk [vmem:[#allocation2 + $0x30] sm:$0xff] %vm4968, 0.0
    %4976 = vst.msk [vmem:[#allocation2 + $0x38] sm:$0xff] %vm4968, 0.0
    %4977 = vst.msk [vmem:[#allocation2 + $0x40] sm:$0xff] %vm4968, 0.0
    %4978 = vst.msk [vmem:[#allocation2 + $0x48] sm:$0xff] %vm4968, 0.0
    %4979 = vst.msk [vmem:[#allocation2 + $0x50] sm:$0xff] %vm4968, 0.0
    %4980 = vst.msk [vmem:[#allocation2 + $0x58] sm:$0xff] %vm4968, 0.0
    %4981 = vst.msk [vmem:[#allocation2 + $0x60] sm:$0xff] %vm4968, 0.0
    %4982 = vst.msk [vmem:[#allocation2 + $0x68] sm:$0xff] %vm4968, 0.0
    %4983 = vst.msk [vmem:[#allocation2 + $0x70] sm:$0xff] %vm4968, 0.0
    %4984 = vst.msk [vmem:[#allocation2 + $0x78] sm:$0xff] %vm4968, 0.0
    %4985 = vst.msk [vmem:[#allocation2 + $0x80] sm:$0xff] %vm4968, 0.0
    %4986 = vst.msk [vmem:[#allocation2 + $0x88] sm:$0xff] %vm4968, 0.0
    %4987 = vst.msk [vmem:[#allocation2 + $0x90] sm:$0xff] %vm4968, 0.0
    %4988 = vst.msk [vmem:[#allocation2 + $0x98] sm:$0xff] %vm4968, 0.0
    %4989 = vst.msk [vmem:[#allocation2 + $0xa0] sm:$0xff] %vm4968, 0.0
    %4990 = vst.msk [vmem:[#allocation2 + $0xa8] sm:$0xff] %vm4968, 0.0
    %4991 = vst.msk [vmem:[#allocation2 + $0xb0] sm:$0xff] %vm4968, 0.0
    %4992 = vst.msk [vmem:[#allocation2 + $0xb8] sm:$0xff] %vm4968, 0.0
    %4993 = vst.msk [vmem:[#allocation2 + $0xc0] sm:$0xff] %vm4968, 0.0
    %4994 = vst.msk [vmem:[#allocation2 + $0xc8] sm:$0xff] %vm4968, 0.0
    %4995 = vst.msk [vmem:[#allocation2 + $0xd0] sm:$0xff] %vm4968, 0.0
    %4996 = vst.msk [vmem:[#allocation2 + $0xd8] sm:$0xff] %vm4968, 0.0
    %4997 = vst.msk [vmem:[#allocation2 + $0xe0] sm:$0xff] %vm4968, 0.0
    %4998 = vst.msk [vmem:[#allocation2 + $0xe8] sm:$0xff] %vm4968, 0.0
    %4999 = vst.msk [vmem:[#allocation2 + $0xf0] sm:$0xff] %vm4968, 0.0
    %5000 = vst.msk [vmem:[#allocation2 + $0xf8] sm:$0xff] %vm4968, 0.0
    %5001 = vst.msk [vmem:[#allocation2 + $0x100] sm:$0xff] %vm4968, 0.0
    %5002 = vst.msk [vmem:[#allocation2 + $0x108] sm:$0xff] %vm4968, 0.0
    %5003 = vst.msk [vmem:[#allocation2 + $0x110] sm:$0xff] %vm4968, 0.0
    %5004 = vst.msk [vmem:[#allocation2 + $0x118] sm:$0xff] %vm4968, 0.0
    %5005 = vst.msk [vmem:[#allocation2 + $0x120] sm:$0xff] %vm4968, 0.0
    %5006 = vst.msk [vmem:[#allocation2 + $0x128] sm:$0xff] %vm4968, 0.0
    %5007 = vst.msk [vmem:[#allocation2 + $0x130] sm:$0xff] %vm4968, 0.0
    %5008 = vst.msk [vmem:[#allocation2 + $0x138] sm:$0xff] %vm4968, 0.0
    %5009 = vst.msk [vmem:[#allocation2 + $0x140] sm:$0xff] %vm4968, 0.0
    %5010 = vst.msk [vmem:[#allocation2 + $0x148] sm:$0xff] %vm4968, 0.0
    %5011 = vst.msk [vmem:[#allocation2 + $0x150] sm:$0xff] %vm4968, 0.0
    %5012 = vst.msk [vmem:[#allocation2 + $0x158] sm:$0xff] %vm4968, 0.0
    %5013 = vst.msk [vmem:[#allocation2 + $0x160] sm:$0xff] %vm4968, 0.0
    %5014 = vst.msk [vmem:[#allocation2 + $0x168] sm:$0xff] %vm4968, 0.0
    %5015 = vst.msk [vmem:[#allocation2 + $0x170] sm:$0xff] %vm4968, 0.0
    %5016 = vst.msk [vmem:[#allocation2 + $0x178] sm:$0xff] %vm4968, 0.0
    %5017 = vst.msk [vmem:[#allocation2 + $0x180] sm:$0xff] %vm4968, 0.0
    %5018 = vst.msk [vmem:[#allocation2 + $0x188] sm:$0xff] %vm4968, 0.0
    %5019 = vst.msk [vmem:[#allocation2 + $0x190] sm:$0xff] %vm4968, 0.0
    %5020 = vst.msk [vmem:[#allocation2 + $0x198] sm:$0xff] %vm4968, 0.0
    %5021 = vst.msk [vmem:[#allocation2 + $0x1a0] sm:$0xff] %vm4968, 0.0
    %5022 = vst.msk [vmem:[#allocation2 + $0x1a8] sm:$0xff] %vm4968, 0.0
    %5023 = vst.msk [vmem:[#allocation2 + $0x1b0] sm:$0xff] %vm4968, 0.0
    %5024 = vst.msk [vmem:[#allocation2 + $0x1b8] sm:$0xff] %vm4968, 0.0
    %5025 = vst.msk [vmem:[#allocation2 + $0x1c0] sm:$0xff] %vm4968, 0.0
    %5026 = vst.msk [vmem:[#allocation2 + $0x1c8] sm:$0xff] %vm4968, 0.0
    %5027 = vst.msk [vmem:[#allocation2 + $0x1d0] sm:$0xff] %vm4968, 0.0
    %5028 = vst.msk [vmem:[#allocation2 + $0x1d8] sm:$0xff] %vm4968, 0.0
    %5029 = vst.msk [vmem:[#allocation2 + $0x1e0] sm:$0xff] %vm4968, 0.0
    %5030 = vst.msk [vmem:[#allocation2 + $0x1e8] sm:$0xff] %vm4968, 0.0
    %5031 = vst.msk [vmem:[#allocation2 + $0x1f0] sm:$0xff] %vm4968, 0.0
    %5032 = vst.msk [vmem:[#allocation2 + $0x1f8] sm:$0xff] %vm4968, 0.0
    %5033 = vst.msk [vmem:[#allocation2 + $0x200] sm:$0xff] %vm4968, 0.0
    %5034 = vst.msk [vmem:[#allocation2 + $0x208] sm:$0xff] %vm4968, 0.0
    %5035 = vst.msk [vmem:[#allocation2 + $0x210] sm:$0xff] %vm4968, 0.0
    %5036 = vst.msk [vmem:[#allocation2 + $0x218] sm:$0xff] %vm4968, 0.0
    %5037 = vst.msk [vmem:[#allocation2 + $0x220] sm:$0xff] %vm4968, 0.0
    %5038 = vst.msk [vmem:[#allocation2 + $0x228] sm:$0xff] %vm4968, 0.0
    %5039 = vst.msk [vmem:[#allocation2 + $0x230] sm:$0xff] %vm4968, 0.0
    %5040 = vst.msk [vmem:[#allocation2 + $0x238] sm:$0xff] %vm4968, 0.0
    %5041 = vst.msk [vmem:[#allocation2 + $0x240] sm:$0xff] %vm4968, 0.0
    %5042 = vst.msk [vmem:[#allocation2 + $0x248] sm:$0xff] %vm4968, 0.0
    %5043 = vst.msk [vmem:[#allocation2 + $0x250] sm:$0xff] %vm4968, 0.0
    %5044 = vst.msk [vmem:[#allocation2 + $0x258] sm:$0xff] %vm4968, 0.0
    %5045 = vst.msk [vmem:[#allocation2 + $0x260] sm:$0xff] %vm4968, 0.0
    %5046 = vst.msk [vmem:[#allocation2 + $0x268] sm:$0xff] %vm4968, 0.0
    %5047 = vst.msk [vmem:[#allocation2 + $0x270] sm:$0xff] %vm4968, 0.0
    %5048 = vst.msk [vmem:[#allocation2 + $0x278] sm:$0xff] %vm4968, 0.0
    %5049 = vst.msk [vmem:[#allocation2 + $0x280] sm:$0xff] %vm4968, 0.0
    %5050 = vst.msk [vmem:[#allocation2 + $0x288] sm:$0xff] %vm4968, 0.0
    %5051 = vst.msk [vmem:[#allocation2 + $0x290] sm:$0xff] %vm4968, 0.0
    %5052 = vst.msk [vmem:[#allocation2 + $0x298] sm:$0xff] %vm4968, 0.0
    %5053 = vst.msk [vmem:[#allocation2 + $0x2a0] sm:$0xff] %vm4968, 0.0
    %5054 = vst.msk [vmem:[#allocation2 + $0x2a8] sm:$0xff] %vm4968, 0.0
    %5055 = vst.msk [vmem:[#allocation2 + $0x2b0] sm:$0xff] %vm4968, 0.0
    %5056 = vst.msk [vmem:[#allocation2 + $0x2b8] sm:$0xff] %vm4968, 0.0
    %5057 = vst.msk [vmem:[#allocation2 + $0x2c0] sm:$0xff] %vm4968, 0.0
    %5058 = vst.msk [vmem:[#allocation2 + $0x2c8] sm:$0xff] %vm4968, 0.0
    %5059 = vst.msk [vmem:[#allocation2 + $0x2d0] sm:$0xff] %vm4968, 0.0
    %5060 = vst.msk [vmem:[#allocation2 + $0x2d8] sm:$0xff] %vm4968, 0.0
    %5061 = vst.msk [vmem:[#allocation2 + $0x2e0] sm:$0xff] %vm4968, 0.0
    %5062 = vst.msk [vmem:[#allocation2 + $0x2e8] sm:$0xff] %vm4968, 0.0
    %5063 = vst.msk [vmem:[#allocation2 + $0x2f0] sm:$0xff] %vm4968, 0.0
    %5064 = vst.msk [vmem:[#allocation2 + $0x2f8] sm:$0xff] %vm4968, 0.0
    %5065 = vst.msk [vmem:[#allocation2 + $0x300] sm:$0xff] %vm4968, 0.0
    %5066 = vst.msk [vmem:[#allocation2 + $0x308] sm:$0xff] %vm4968, 0.0
    %5067 = vst.msk [vmem:[#allocation2 + $0x310] sm:$0xff] %vm4968, 0.0
    %5068 = vst.msk [vmem:[#allocation2 + $0x318] sm:$0xff] %vm4968, 0.0
    %5069 = vst.msk [vmem:[#allocation2 + $0x320] sm:$0xff] %vm4968, 0.0
    %5070 = vst.msk [vmem:[#allocation2 + $0x328] sm:$0xff] %vm4968, 0.0
    %5071 = vst.msk [vmem:[#allocation2 + $0x330] sm:$0xff] %vm4968, 0.0
    %5072 = vst.msk [vmem:[#allocation2 + $0x338] sm:$0xff] %vm4968, 0.0
    %5073 = vst.msk [vmem:[#allocation2 + $0x340] sm:$0xff] %vm4968, 0.0
    %5074 = vst.msk [vmem:[#allocation2 + $0x348] sm:$0xff] %vm4968, 0.0
    %5075 = vst.msk [vmem:[#allocation2 + $0x350] sm:$0xff] %vm4968, 0.0
    %5076 = vst.msk [vmem:[#allocation2 + $0x358] sm:$0xff] %vm4968, 0.0
    %s5077 = scalar_lea.vmem [#allocation2], 24
    %5078 = vst.msk [vmem:[%s5077 + $0x8] sm:$0xff] %vm4968, %v4904
    %5079 = vst.msk [vmem:[%s5077 + $0x10] sm:$0xff] %vm4968, %v4905
    %5080 = vst.msk [vmem:[%s5077 + $0x20] sm:$0xff] %vm4968, %v4906
    %5081 = vst.msk [vmem:[%s5077 + $0x28] sm:$0xff] %vm4968, %v4907
    %5082 = vst.msk [vmem:[%s5077 + $0x38] sm:$0xff] %vm4968, %v4908
    %5083 = vst.msk [vmem:[%s5077 + $0x40] sm:$0xff] %vm4968, %v4909
    %5084 = vst.msk [vmem:[%s5077 + $0x50] sm:$0xff] %vm4968, %v4910
    %5085 = vst.msk [vmem:[%s5077 + $0x58] sm:$0xff] %vm4968, %v4911
    %5086 = vst.msk [vmem:[%s5077 + $0x68] sm:$0xff] %vm4968, %v4912
    %5087 = vst.msk [vmem:[%s5077 + $0x70] sm:$0xff] %vm4968, %v4913
    %5088 = vst.msk [vmem:[%s5077 + $0x80] sm:$0xff] %vm4968, %v4914
    %5089 = vst.msk [vmem:[%s5077 + $0x88] sm:$0xff] %vm4968, %v4915
    %5090 = vst.msk [vmem:[%s5077 + $0x98] sm:$0xff] %vm4968, %v4916
    %5091 = vst.msk [vmem:[%s5077 + $0xa0] sm:$0xff] %vm4968, %v4917
    %5092 = vst.msk [vmem:[%s5077 + $0xb0] sm:$0xff] %vm4968, %v4918
    %5093 = vst.msk [vmem:[%s5077 + $0xb8] sm:$0xff] %vm4968, %v4919
    %5094 = vst.msk [vmem:[%s5077 + $0xc8] sm:$0xff] %vm4968, %v4920
    %5095 = vst.msk [vmem:[%s5077 + $0xd0] sm:$0xff] %vm4968, %v4921
    %5096 = vst.msk [vmem:[%s5077 + $0xe0] sm:$0xff] %vm4968, %v4922
    %5097 = vst.msk [vmem:[%s5077 + $0xe8] sm:$0xff] %vm4968, %v4923
    %5098 = vst.msk [vmem:[%s5077 + $0xf8] sm:$0xff] %vm4968, %v4924
    %5099 = vst.msk [vmem:[%s5077 + $0x100] sm:$0xff] %vm4968, %v4925
    %5100 = vst.msk [vmem:[%s5077 + $0x110] sm:$0xff] %vm4968, %v4926
    %5101 = vst.msk [vmem:[%s5077 + $0x118] sm:$0xff] %vm4968, %v4927
    %5102 = vst.msk [vmem:[%s5077 + $0x128] sm:$0xff] %vm4968, %v4928
    %5103 = vst.msk [vmem:[%s5077 + $0x130] sm:$0xff] %vm4968, %v4929
    %5104 = vst.msk [vmem:[%s5077 + $0x140] sm:$0xff] %vm4968, %v4930
    %5105 = vst.msk [vmem:[%s5077 + $0x148] sm:$0xff] %vm4968, %v4931
    %5106 = vst.msk [vmem:[%s5077 + $0x158] sm:$0xff] %vm4968, %v4932
    %5107 = vst.msk [vmem:[%s5077 + $0x160] sm:$0xff] %vm4968, %v4933
    %5108 = vst.msk [vmem:[%s5077 + $0x170] sm:$0xff] %vm4968, %v4934
    %5109 = vst.msk [vmem:[%s5077 + $0x178] sm:$0xff] %vm4968, %v4935
    %5110 = vst.msk [vmem:[%s5077 + $0x1b8] sm:$0xff] %vm4968, %v4936
    %5111 = vst.msk [vmem:[%s5077 + $0x1c0] sm:$0xff] %vm4968, %v4937
    %5112 = vst.msk [vmem:[%s5077 + $0x1d0] sm:$0xff] %vm4968, %v4938
    %5113 = vst.msk [vmem:[%s5077 + $0x1d8] sm:$0xff] %vm4968, %v4939
    %5114 = vst.msk [vmem:[%s5077 + $0x1e8] sm:$0xff] %vm4968, %v4940
    %5115 = vst.msk [vmem:[%s5077 + $0x1f0] sm:$0xff] %vm4968, %v4941
    %5116 = vst.msk [vmem:[%s5077 + $0x200] sm:$0xff] %vm4968, %v4942
    %5117 = vst.msk [vmem:[%s5077 + $0x208] sm:$0xff] %vm4968, %v4943
    %5118 = vst.msk [vmem:[%s5077 + $0x218] sm:$0xff] %vm4968, %v4944
    %5119 = vst.msk [vmem:[%s5077 + $0x220] sm:$0xff] %vm4968, %v4945
    %5120 = vst.msk [vmem:[%s5077 + $0x230] sm:$0xff] %vm4968, %v4946
    %5121 = vst.msk [vmem:[%s5077 + $0x238] sm:$0xff] %vm4968, %v4947
    %5122 = vst.msk [vmem:[%s5077 + $0x248] sm:$0xff] %vm4968, %v4948
    %5123 = vst.msk [vmem:[%s5077 + $0x250] sm:$0xff] %vm4968, %v4949
    %5124 = vst.msk [vmem:[%s5077 + $0x260] sm:$0xff] %vm4968, %v4950
    %5125 = vst.msk [vmem:[%s5077 + $0x268] sm:$0xff] %vm4968, %v4951
    %5126 = vst.msk [vmem:[%s5077 + $0x278] sm:$0xff] %vm4968, %v4952
    %5127 = vst.msk [vmem:[%s5077 + $0x280] sm:$0xff] %vm4968, %v4953
    %5128 = vst.msk [vmem:[%s5077 + $0x290] sm:$0xff] %vm4968, %v4954
    %5129 = vst.msk [vmem:[%s5077 + $0x298] sm:$0xff] %vm4968, %v4955
    %5130 = vst.msk [vmem:[%s5077 + $0x2a8] sm:$0xff] %vm4968, %v4956
    %5131 = vst.msk [vmem:[%s5077 + $0x2b0] sm:$0xff] %vm4968, %v4957
    %5132 = vst.msk [vmem:[%s5077 + $0x2c0] sm:$0xff] %vm4968, %v4958
    %5133 = vst.msk [vmem:[%s5077 + $0x2c8] sm:$0xff] %vm4968, %v4959
    %5134 = vst.msk [vmem:[%s5077 + $0x2d8] sm:$0xff] %vm4968, %v4960
    %5135 = vst.msk [vmem:[%s5077 + $0x2e0] sm:$0xff] %vm4968, %v4961
    %5136 = vst.msk [vmem:[%s5077 + $0x2f0] sm:$0xff] %vm4968, %v4962
    %5137 = vst.msk [vmem:[%s5077 + $0x2f8] sm:$0xff] %vm4968, %v4963
    %5138 = vst.msk [vmem:[%s5077 + $0x308] sm:$0xff] %vm4968, %v4964
    %5139 = vst.msk [vmem:[%s5077 + $0x310] sm:$0xff] %vm4968, %v4965
    %5140 = vst.msk [vmem:[%s5077 + $0x320] sm:$0xff] %vm4968, %v4966
    %5141 = vst.msk [vmem:[%s5077 + $0x328] sm:$0xff] %vm4968, %v4967
    %s5142 = scalar_lea.vmem [#allocation2], 7
    %v5143 = vld [vmem:[%s5142] ss:$2 sm:$0xff]
    %s5144 = scalar_lea.vmem [#allocation2], 55
    %v5145 = vld [vmem:[%s5144] ss:$2 sm:$0xff]
    %s5146 = scalar_lea.vmem [#allocation2], 103
    %v5147 = vld [vmem:[%s5146] ss:$2 sm:$0xff]
    %s5148 = scalar_lea.vmem [#allocation2], 151
    %v5149 = vld [vmem:[%s5148] ss:$2 sm:$0xff]
    %s5150 = scalar_lea.vmem [#allocation2], 199
    %v5151 = vld [vmem:[%s5150] ss:$2 sm:$0xff]
    %s5152 = scalar_lea.vmem [#allocation2], 247
    %v5153 = vld [vmem:[%s5152] ss:$2 sm:$0xff]
    %s5154 = scalar_lea.vmem [#allocation2], 295
    %v5155 = vld [vmem:[%s5154] ss:$2 sm:$0xff]
    %s5156 = scalar_lea.vmem [#allocation2], 343
    %v5157 = vld [vmem:[%s5156] ss:$2 sm:$0xff]
    %s5158 = scalar_lea.vmem [#allocation2], 439
    %v5159 = vld [vmem:[%s5158] ss:$2 sm:$0xff]
    %s5160 = scalar_lea.vmem [#allocation2], 487
    %v5161 = vld [vmem:[%s5160] ss:$2 sm:$0xff]
    %s5162 = scalar_lea.vmem [#allocation2], 535
    %v5163 = vld [vmem:[%s5162] ss:$2 sm:$0xff]
    %s5164 = scalar_lea.vmem [#allocation2], 583
    %v5165 = vld [vmem:[%s5164] ss:$2 sm:$0xff]
    %s5166 = scalar_lea.vmem [#allocation2], 631
    %v5167 = vld [vmem:[%s5166] ss:$2 sm:$0xff]
    %s5168 = scalar_lea.vmem [#allocation2], 679
    %v5169 = vld [vmem:[%s5168] ss:$2 sm:$0xff]
    %s5170 = scalar_lea.vmem [#allocation2], 727
    %v5171 = vld [vmem:[%s5170] ss:$2 sm:$0xff]
    %s5172 = scalar_lea.vmem [#allocation2], 775
    %v5173 = vld [vmem:[%s5172] ss:$2 sm:$0xff]
    %v5174 = vld [vmem:[%s3] sm:$0xff]
    %s5175 = scalar_lea.vmem [#allocation2], 8
    %v5176 = vld [vmem:[%s5175] ss:$2 sm:$0xff]
    %s5177 = scalar_lea.vmem [#allocation2], 56
    %v5178 = vld [vmem:[%s5177] ss:$2 sm:$0xff]
    %s5179 = scalar_lea.vmem [#allocation2], 104
    %v5180 = vld [vmem:[%s5179] ss:$2 sm:$0xff]
    %s5181 = scalar_lea.vmem [#allocation2], 152
    %v5182 = vld [vmem:[%s5181] ss:$2 sm:$0xff]
    %s5183 = scalar_lea.vmem [#allocation2], 200
    %v5184 = vld [vmem:[%s5183] ss:$2 sm:$0xff]
    %s5185 = scalar_lea.vmem [#allocation2], 248
    %v5186 = vld [vmem:[%s5185] ss:$2 sm:$0xff]
    %s5187 = scalar_lea.vmem [#allocation2], 296
    %v5188 = vld [vmem:[%s5187] ss:$2 sm:$0xff]
    %s5189 = scalar_lea.vmem [#allocation2], 344
    %v5190 = vld [vmem:[%s5189] ss:$2 sm:$0xff]
    %s5191 = scalar_lea.vmem [#allocation2], 440
    %v5192 = vld [vmem:[%s5191] ss:$2 sm:$0xff]
    %s5193 = scalar_lea.vmem [#allocation2], 488
    %v5194 = vld [vmem:[%s5193] ss:$2 sm:$0xff]
    %s5195 = scalar_lea.vmem [#allocation2], 536
    %v5196 = vld [vmem:[%s5195] ss:$2 sm:$0xff]
    %s5197 = scalar_lea.vmem [#allocation2], 584
    %v5198 = vld [vmem:[%s5197] ss:$2 sm:$0xff]
    %s5199 = scalar_lea.vmem [#allocation2], 632
    %v5200 = vld [vmem:[%s5199] ss:$2 sm:$0xff]
    %s5201 = scalar_lea.vmem [#allocation2], 680
    %v5202 = vld [vmem:[%s5201] ss:$2 sm:$0xff]
    %s5203 = scalar_lea.vmem [#allocation2], 728
    %v5204 = vld [vmem:[%s5203] ss:$2 sm:$0xff]
    %s5205 = scalar_lea.vmem [#allocation2], 776
    %v5206 = vld [vmem:[%s5205] ss:$2 sm:$0xff]
    %s5207 = scalar_lea.vmem %s3, 8
    %v5208 = vld [vmem:[%s5207] sm:$0xff]
    %v5210 = vsel %vm4968, %v5176, 0
    %v5213 = vsel %vm4968, %v5178, 0
    %v5216 = vsel %vm4968, %v5180, 0
    %v5219 = vsel %vm4968, %v5182, 0
    %v5222 = vsel %vm4968, %v5184, 0
    %v5225 = vsel %vm4968, %v5186, 0
    %v5228 = vsel %vm4968, %v5188, 0
    %v5231 = vsel %vm4968, %v5190, 0
    %v5234 = vsel %vm4968, %v5192, 0
    %v5237 = vsel %vm4968, %v5194, 0
    %v5240 = vsel %vm4968, %v5196, 0
    %v5243 = vsel %vm4968, %v5198, 0
    %v5246 = vsel %vm4968, %v5200, 0
    %v5249 = vsel %vm4968, %v5202, 0
    %v5252 = vsel %vm4968, %v5204, 0
    %v5255 = vsel %vm4968, %v5206, 0
    %5257 = vmatpush.msra.mxu0 0.0
    %5258 = vmatpush.msra.mxu0 0.0
    %5259 = vmatpush.msra.mxu0 0.0
    %5260 = vmatpush.msra.mxu0 0.0
    %5261 = vmatpush.msra.mxu0 0.0
    %5262 = vmatpush.msra.mxu0 0.0
    %5263 = vmatpush.msra.mxu0 0.0
    %5264 = vmatpush.msra.mxu0 0.0
    %5265 = vmatpush.msra.mxu0 0.0
    %5266 = vmatpush.msra.mxu0 0.0
    %5267 = vmatpush.msra.mxu0 0.0
    %5268 = vmatpush.msra.mxu0 0.0
    %5269 = vmatpush.msra.mxu0 0.0
    %5270 = vmatpush.msra.mxu0 0.0
    %5271 = vmatpush.msra.mxu0 0.0
    %5272 = vmatpush.msra.mxu0 %v5208
    %5273 = vmatmul.f32.gmra.mxu0 %v5210
    %v5274 = vpop.f32.mrf.mxu0
    %v5275 = vadd.f32 0.0, %v5274
    %5276 = vmatmul.f32.gmra.mxu0 %v5213
    %v5277 = vpop.f32.mrf.mxu0
    %v5278 = vadd.f32 0.0, %v5277
    %5279 = vmatmul.f32.gmra.mxu0 %v5216
    %v5280 = vpop.f32.mrf.mxu0
    %v5281 = vadd.f32 0.0, %v5280
    %5282 = vmatmul.f32.gmra.mxu0 %v5219
    %v5283 = vpop.f32.mrf.mxu0
    %v5284 = vadd.f32 0.0, %v5283
    %5285 = vmatmul.f32.gmra.mxu0 %v5222
    %v5286 = vpop.f32.mrf.mxu0
    %v5287 = vadd.f32 0.0, %v5286
    %5288 = vmatmul.f32.gmra.mxu0 %v5225
    %v5289 = vpop.f32.mrf.mxu0
    %v5290 = vadd.f32 0.0, %v5289
    %5291 = vmatmul.f32.gmra.mxu0 %v5228
    %v5292 = vpop.f32.mrf.mxu0
    %v5293 = vadd.f32 0.0, %v5292
    %5294 = vmatmul.f32.gmra.mxu0 %v5231
    %v5295 = vpop.f32.mrf.mxu0
    %v5296 = vadd.f32 0.0, %v5295
    %5297 = vmatmul.f32.gmra.mxu0 %v5234
    %v5298 = vpop.f32.mrf.mxu0
    %v5299 = vadd.f32 0.0, %v5298
    %5300 = vmatmul.f32.gmra.mxu0 %v5237
    %v5301 = vpop.f32.mrf.mxu0
    %v5302 = vadd.f32 0.0, %v5301
    %5303 = vmatmul.f32.gmra.mxu0 %v5240
    %v5304 = vpop.f32.mrf.mxu0
    %v5305 = vadd.f32 0.0, %v5304
    %5306 = vmatmul.f32.gmra.mxu0 %v5243
    %v5307 = vpop.f32.mrf.mxu0
    %v5308 = vadd.f32 0.0, %v5307
    %5309 = vmatmul.f32.gmra.mxu0 %v5246
    %v5310 = vpop.f32.mrf.mxu0
    %v5311 = vadd.f32 0.0, %v5310
    %5312 = vmatmul.f32.gmra.mxu0 %v5249
    %v5313 = vpop.f32.mrf.mxu0
    %v5314 = vadd.f32 0.0, %v5313
    %5315 = vmatmul.f32.gmra.mxu0 %v5252
    %v5316 = vpop.f32.mrf.mxu0
    %v5317 = vadd.f32 0.0, %v5316
    %5318 = vmatmul.f32.gmra.mxu0 %v5255
    %v5319 = vpop.f32.mrf.mxu0
    %v5320 = vadd.f32 0.0, %v5319
    %5321 = vdwg.mxu0
    %v5323 = vsel %vm4968, %v5143, 0
    %v5326 = vsel %vm4968, %v5145, 0
    %v5329 = vsel %vm4968, %v5147, 0
    %v5332 = vsel %vm4968, %v5149, 0
    %v5335 = vsel %vm4968, %v5151, 0
    %v5338 = vsel %vm4968, %v5153, 0
    %v5341 = vsel %vm4968, %v5155, 0
    %v5344 = vsel %vm4968, %v5157, 0
    %v5347 = vsel %vm4968, %v5159, 0
    %v5350 = vsel %vm4968, %v5161, 0
    %v5353 = vsel %vm4968, %v5163, 0
    %v5356 = vsel %vm4968, %v5165, 0
    %v5359 = vsel %vm4968, %v5167, 0
    %v5362 = vsel %vm4968, %v5169, 0
    %v5365 = vsel %vm4968, %v5171, 0
    %v5368 = vsel %vm4968, %v5173, 0
    %5370 = vmatpush.msra.mxu0 0.0
    %5371 = vmatpush.msra.mxu0 0.0
    %5372 = vmatpush.msra.mxu0 0.0
    %5373 = vmatpush.msra.mxu0 0.0
    %5374 = vmatpush.msra.mxu0 0.0
    %5375 = vmatpush.msra.mxu0 0.0
    %5376 = vmatpush.msra.mxu0 0.0
    %5377 = vmatpush.msra.mxu0 0.0
    %5378 = vmatpush.msra.mxu0 0.0
    %5379 = vmatpush.msra.mxu0 0.0
    %5380 = vmatpush.msra.mxu0 0.0
    %5381 = vmatpush.msra.mxu0 0.0
    %5382 = vmatpush.msra.mxu0 0.0
    %5383 = vmatpush.msra.mxu0 0.0
    %5384 = vmatpush.msra.mxu0 0.0
    %5385 = vmatpush.msra.mxu0 %v5174
    %5386 = vmatmul.f32.gmra.mxu0 %v5323
    %v5387 = vpop.f32.mrf.mxu0
    %v5388 = vadd.f32 %v5275, %v5387
    %5389 = vmatmul.f32.gmra.mxu0 %v5326
    %v5390 = vpop.f32.mrf.mxu0
    %v5391 = vadd.f32 %v5278, %v5390
    %5392 = vmatmul.f32.gmra.mxu0 %v5329
    %v5393 = vpop.f32.mrf.mxu0
    %v5394 = vadd.f32 %v5281, %v5393
    %5395 = vmatmul.f32.gmra.mxu0 %v5332
    %v5396 = vpop.f32.mrf.mxu0
    %v5397 = vadd.f32 %v5284, %v5396
    %5398 = vmatmul.f32.gmra.mxu0 %v5335
    %v5399 = vpop.f32.mrf.mxu0
    %v5400 = vadd.f32 %v5287, %v5399
    %5401 = vmatmul.f32.gmra.mxu0 %v5338
    %v5402 = vpop.f32.mrf.mxu0
    %v5403 = vadd.f32 %v5290, %v5402
    %5404 = vmatmul.f32.gmra.mxu0 %v5341
    %v5405 = vpop.f32.mrf.mxu0
    %v5406 = vadd.f32 %v5293, %v5405
    %5407 = vmatmul.f32.gmra.mxu0 %v5344
    %v5408 = vpop.f32.mrf.mxu0
    %v5409 = vadd.f32 %v5296, %v5408
    %5410 = vmatmul.f32.gmra.mxu0 %v5347
    %v5411 = vpop.f32.mrf.mxu0
    %v5412 = vadd.f32 %v5299, %v5411
    %5413 = vmatmul.f32.gmra.mxu0 %v5350
    %v5414 = vpop.f32.mrf.mxu0
    %v5415 = vadd.f32 %v5302, %v5414
    %5416 = vmatmul.f32.gmra.mxu0 %v5353
    %v5417 = vpop.f32.mrf.mxu0
    %v5418 = vadd.f32 %v5305, %v5417
    %5419 = vmatmul.f32.gmra.mxu0 %v5356
    %v5420 = vpop.f32.mrf.mxu0
    %v5421 = vadd.f32 %v5308, %v5420
    %5422 = vmatmul.f32.gmra.mxu0 %v5359
    %v5423 = vpop.f32.mrf.mxu0
    %v5424 = vadd.f32 %v5311, %v5423
    %5425 = vmatmul.f32.gmra.mxu0 %v5362
    %v5426 = vpop.f32.mrf.mxu0
    %v5427 = vadd.f32 %v5314, %v5426
    %5428 = vmatmul.f32.gmra.mxu0 %v5365
    %v5429 = vpop.f32.mrf.mxu0
    %v5430 = vadd.f32 %v5317, %v5429
    %5431 = vmatmul.f32.gmra.mxu0 %v5368
    %v5432 = vpop.f32.mrf.mxu0
    %v5433 = vadd.f32 %v5320, %v5432
    %5434 = vdwg.mxu0
    %s5435 = scalar_lea.vmem [#allocation2], 9
    %v5436 = vld [vmem:[%s5435] ss:$2 sm:$0xff]
    %s5437 = scalar_lea.vmem [#allocation2], 57
    %v5438 = vld [vmem:[%s5437] ss:$2 sm:$0xff]
    %s5439 = scalar_lea.vmem [#allocation2], 105
    %v5440 = vld [vmem:[%s5439] ss:$2 sm:$0xff]
    %s5441 = scalar_lea.vmem [#allocation2], 153
    %v5442 = vld [vmem:[%s5441] ss:$2 sm:$0xff]
    %s5443 = scalar_lea.vmem [#allocation2], 201
    %v5444 = vld [vmem:[%s5443] ss:$2 sm:$0xff]
    %s5445 = scalar_lea.vmem [#allocation2], 249
    %v5446 = vld [vmem:[%s5445] ss:$2 sm:$0xff]
    %s5447 = scalar_lea.vmem [#allocation2], 297
    %v5448 = vld [vmem:[%s5447] ss:$2 sm:$0xff]
    %s5449 = scalar_lea.vmem [#allocation2], 345
    %v5450 = vld [vmem:[%s5449] ss:$2 sm:$0xff]
    %s5451 = scalar_lea.vmem [#allocation2], 441
    %v5452 = vld [vmem:[%s5451] ss:$2 sm:$0xff]
    %s5453 = scalar_lea.vmem [#allocation2], 489
    %v5454 = vld [vmem:[%s5453] ss:$2 sm:$0xff]
    %s5455 = scalar_lea.vmem [#allocation2], 537
    %v5456 = vld [vmem:[%s5455] ss:$2 sm:$0xff]
    %s5457 = scalar_lea.vmem [#allocation2], 585
    %v5458 = vld [vmem:[%s5457] ss:$2 sm:$0xff]
    %s5459 = scalar_lea.vmem [#allocation2], 633
    %v5460 = vld [vmem:[%s5459] ss:$2 sm:$0xff]
    %s5461 = scalar_lea.vmem [#allocation2], 681
    %v5462 = vld [vmem:[%s5461] ss:$2 sm:$0xff]
    %s5463 = scalar_lea.vmem [#allocation2], 729
    %v5464 = vld [vmem:[%s5463] ss:$2 sm:$0xff]
    %s5465 = scalar_lea.vmem [#allocation2], 777
    %v5466 = vld [vmem:[%s5465] ss:$2 sm:$0xff]
    %s5467 = scalar_lea.vmem %s3, 16
    %v5468 = vld [vmem:[%s5467] sm:$0xff]
    %v5470 = vsel %vm4968, %v5436, 0
    %v5473 = vsel %vm4968, %v5438, 0
    %v5476 = vsel %vm4968, %v5440, 0
    %v5479 = vsel %vm4968, %v5442, 0
    %v5482 = vsel %vm4968, %v5444, 0
    %v5485 = vsel %vm4968, %v5446, 0
    %v5488 = vsel %vm4968, %v5448, 0
    %v5491 = vsel %vm4968, %v5450, 0
    %v5494 = vsel %vm4968, %v5452, 0
    %v5497 = vsel %vm4968, %v5454, 0
    %v5500 = vsel %vm4968, %v5456, 0
    %v5503 = vsel %vm4968, %v5458, 0
    %v5506 = vsel %vm4968, %v5460, 0
    %v5509 = vsel %vm4968, %v5462, 0
    %v5512 = vsel %vm4968, %v5464, 0
    %v5515 = vsel %vm4968, %v5466, 0
    %5517 = vmatpush.msra.mxu0 0.0
    %5518 = vmatpush.msra.mxu0 0.0
    %5519 = vmatpush.msra.mxu0 0.0
    %5520 = vmatpush.msra.mxu0 0.0
    %5521 = vmatpush.msra.mxu0 0.0
    %5522 = vmatpush.msra.mxu0 0.0
    %5523 = vmatpush.msra.mxu0 0.0
    %5524 = vmatpush.msra.mxu0 0.0
    %5525 = vmatpush.msra.mxu0 0.0
    %5526 = vmatpush.msra.mxu0 0.0
    %5527 = vmatpush.msra.mxu0 0.0
    %5528 = vmatpush.msra.mxu0 0.0
    %5529 = vmatpush.msra.mxu0 0.0
    %5530 = vmatpush.msra.mxu0 0.0
    %5531 = vmatpush.msra.mxu0 0.0
    %5532 = vmatpush.msra.mxu0 %v5468
    %5533 = vmatmul.f32.gmra.mxu0 %v5470
    %v5534 = vpop.f32.mrf.mxu0
    %v5535 = vadd.f32 0.0, %v5534
    %5536 = vmatmul.f32.gmra.mxu0 %v5473
    %v5537 = vpop.f32.mrf.mxu0
    %v5538 = vadd.f32 0.0, %v5537
    %5539 = vmatmul.f32.gmra.mxu0 %v5476
    %v5540 = vpop.f32.mrf.mxu0
    %v5541 = vadd.f32 0.0, %v5540
    %5542 = vmatmul.f32.gmra.mxu0 %v5479
    %v5543 = vpop.f32.mrf.mxu0
    %v5544 = vadd.f32 0.0, %v5543
    %5545 = vmatmul.f32.gmra.mxu0 %v5482
    %v5546 = vpop.f32.mrf.mxu0
    %v5547 = vadd.f32 0.0, %v5546
    %5548 = vmatmul.f32.gmra.mxu0 %v5485
    %v5549 = vpop.f32.mrf.mxu0
    %v5550 = vadd.f32 0.0, %v5549
    %5551 = vmatmul.f32.gmra.mxu0 %v5488
    %v5552 = vpop.f32.mrf.mxu0
    %v5553 = vadd.f32 0.0, %v5552
    %5554 = vmatmul.f32.gmra.mxu0 %v5491
    %v5555 = vpop.f32.mrf.mxu0
    %v5556 = vadd.f32 0.0, %v5555
    %5557 = vmatmul.f32.gmra.mxu0 %v5494
    %v5558 = vpop.f32.mrf.mxu0
    %v5559 = vadd.f32 0.0, %v5558
    %5560 = vmatmul.f32.gmra.mxu0 %v5497
    %v5561 = vpop.f32.mrf.mxu0
    %v5562 = vadd.f32 0.0, %v5561
    %5563 = vmatmul.f32.gmra.mxu0 %v5500
    %v5564 = vpop.f32.mrf.mxu0
    %v5565 = vadd.f32 0.0, %v5564
    %5566 = vmatmul.f32.gmra.mxu0 %v5503
    %v5567 = vpop.f32.mrf.mxu0
    %v5568 = vadd.f32 0.0, %v5567
    %5569 = vmatmul.f32.gmra.mxu0 %v5506
    %v5570 = vpop.f32.mrf.mxu0
    %v5571 = vadd.f32 0.0, %v5570
    %5572 = vmatmul.f32.gmra.mxu0 %v5509
    %v5573 = vpop.f32.mrf.mxu0
    %v5574 = vadd.f32 0.0, %v5573
    %5575 = vmatmul.f32.gmra.mxu0 %v5512
    %v5576 = vpop.f32.mrf.mxu0
    %v5577 = vadd.f32 0.0, %v5576
    %5578 = vmatmul.f32.gmra.mxu0 %v5515
    %v5579 = vpop.f32.mrf.mxu0
    %v5580 = vadd.f32 0.0, %v5579
    %5581 = vdwg.mxu0
    %v5582 = vadd.f32 %v5388, %v5535
    %v5583 = vadd.f32 %v5391, %v5538
    %v5584 = vadd.f32 %v5394, %v5541
    %v5585 = vadd.f32 %v5397, %v5544
    %v5586 = vadd.f32 %v5400, %v5547
    %v5587 = vadd.f32 %v5403, %v5550
    %v5588 = vadd.f32 %v5406, %v5553
    %v5589 = vadd.f32 %v5409, %v5556
    %v5590 = vadd.f32 %v5412, %v5559
    %v5591 = vadd.f32 %v5415, %v5562
    %v5592 = vadd.f32 %v5418, %v5565
    %v5593 = vadd.f32 %v5421, %v5568
    %v5594 = vadd.f32 %v5424, %v5571
    %v5595 = vadd.f32 %v5427, %v5574
    %v5596 = vadd.f32 %v5430, %v5577
    %v5597 = vadd.f32 %v5433, %v5580
    %s5598 = scalar_lea.vmem %s5077, 7 [#allocation2]
    %v5599 = vld [vmem:[%s5598] ss:$2 sm:$0xff]
    %s5600 = scalar_lea.vmem %s5077, 55 [#allocation2]
    %v5601 = vld [vmem:[%s5600] ss:$2 sm:$0xff]
    %s5602 = scalar_lea.vmem %s5077, 103 [#allocation2]
    %v5603 = vld [vmem:[%s5602] ss:$2 sm:$0xff]
    %s5604 = scalar_lea.vmem %s5077, 151 [#allocation2]
    %v5605 = vld [vmem:[%s5604] ss:$2 sm:$0xff]
    %s5606 = scalar_lea.vmem %s5077, 199 [#allocation2]
    %v5607 = vld [vmem:[%s5606] ss:$2 sm:$0xff]
    %s5608 = scalar_lea.vmem %s5077, 247 [#allocation2]
    %v5609 = vld [vmem:[%s5608] ss:$2 sm:$0xff]
    %s5610 = scalar_lea.vmem %s5077, 295 [#allocation2]
    %v5611 = vld [vmem:[%s5610] ss:$2 sm:$0xff]
    %s5612 = scalar_lea.vmem %s5077, 343 [#allocation2]
    %v5613 = vld [vmem:[%s5612] ss:$2 sm:$0xff]
    %s5614 = scalar_lea.vmem %s5077, 439 [#allocation2]
    %v5615 = vld [vmem:[%s5614] ss:$2 sm:$0xff]
    %s5616 = scalar_lea.vmem %s5077, 487 [#allocation2]
    %v5617 = vld [vmem:[%s5616] ss:$2 sm:$0xff]
    %s5618 = scalar_lea.vmem %s5077, 535 [#allocation2]
    %v5619 = vld [vmem:[%s5618] ss:$2 sm:$0xff]
    %s5620 = scalar_lea.vmem %s5077, 583 [#allocation2]
    %v5621 = vld [vmem:[%s5620] ss:$2 sm:$0xff]
    %s5622 = scalar_lea.vmem %s5077, 631 [#allocation2]
    %v5623 = vld [vmem:[%s5622] ss:$2 sm:$0xff]
    %s5624 = scalar_lea.vmem %s5077, 679 [#allocation2]
    %v5625 = vld [vmem:[%s5624] ss:$2 sm:$0xff]
    %s5626 = scalar_lea.vmem %s5077, 727 [#allocation2]
    %v5627 = vld [vmem:[%s5626] ss:$2 sm:$0xff]
    %s5628 = scalar_lea.vmem %s5077, 775 [#allocation2]
    %v5629 = vld [vmem:[%s5628] ss:$2 sm:$0xff]
    %s5630 = scalar_lea.vmem %s3, 24
    %v5631 = vld [vmem:[%s5630] sm:$0xff]
    %v5633 = vsel %vm4968, %v5599, 0
    %v5636 = vsel %vm4968, %v5601, 0
    %v5639 = vsel %vm4968, %v5603, 0
    %v5642 = vsel %vm4968, %v5605, 0
    %v5645 = vsel %vm4968, %v5607, 0
    %v5648 = vsel %vm4968, %v5609, 0
    %v5651 = vsel %vm4968, %v5611, 0
    %v5654 = vsel %vm4968, %v5613, 0
    %v5657 = vsel %vm4968, %v5615, 0
    %v5660 = vsel %vm4968, %v5617, 0
    %v5663 = vsel %vm4968, %v5619, 0
    %v5666 = vsel %vm4968, %v5621, 0
    %v5669 = vsel %vm4968, %v5623, 0
    %v5672 = vsel %vm4968, %v5625, 0
    %v5675 = vsel %vm4968, %v5627, 0
    %v5678 = vsel %vm4968, %v5629, 0
    %5680 = vmatpush.msra.mxu0 0.0
    %5681 = vmatpush.msra.mxu0 0.0
    %5682 = vmatpush.msra.mxu0 0.0
    %5683 = vmatpush.msra.mxu0 0.0
    %5684 = vmatpush.msra.mxu0 0.0
    %5685 = vmatpush.msra.mxu0 0.0
    %5686 = vmatpush.msra.mxu0 0.0
    %5687 = vmatpush.msra.mxu0 0.0
    %5688 = vmatpush.msra.mxu0 0.0
    %5689 = vmatpush.msra.mxu0 0.0
    %5690 = vmatpush.msra.mxu0 0.0
    %5691 = vmatpush.msra.mxu0 0.0
    %5692 = vmatpush.msra.mxu0 0.0
    %5693 = vmatpush.msra.mxu0 0.0
    %5694 = vmatpush.msra.mxu0 0.0
    %5695 = vmatpush.msra.mxu0 %v5631
    %5696 = vmatmul.f32.gmra.mxu0 %v5633
    %v5697 = vpop.f32.mrf.mxu0
    %v5698 = vadd.f32 0.0, %v5697
    %5699 = vmatmul.f32.gmra.mxu0 %v5636
    %v5700 = vpop.f32.mrf.mxu0
    %v5701 = vadd.f32 0.0, %v5700
    %5702 = vmatmul.f32.gmra.mxu0 %v5639
    %v5703 = vpop.f32.mrf.mxu0
    %v5704 = vadd.f32 0.0, %v5703
    %5705 = vmatmul.f32.gmra.mxu0 %v5642
    %v5706 = vpop.f32.mrf.mxu0
    %v5707 = vadd.f32 0.0, %v5706
    %5708 = vmatmul.f32.gmra.mxu0 %v5645
    %v5709 = vpop.f32.mrf.mxu0
    %v5710 = vadd.f32 0.0, %v5709
    %5711 = vmatmul.f32.gmra.mxu0 %v5648
    %v5712 = vpop.f32.mrf.mxu0
    %v5713 = vadd.f32 0.0, %v5712
    %5714 = vmatmul.f32.gmra.mxu0 %v5651
    %v5715 = vpop.f32.mrf.mxu0
    %v5716 = vadd.f32 0.0, %v5715
    %5717 = vmatmul.f32.gmra.mxu0 %v5654
    %v5718 = vpop.f32.mrf.mxu0
    %v5719 = vadd.f32 0.0, %v5718
    %5720 = vmatmul.f32.gmra.mxu0 %v5657
    %v5721 = vpop.f32.mrf.mxu0
    %v5722 = vadd.f32 0.0, %v5721
    %5723 = vmatmul.f32.gmra.mxu0 %v5660
    %v5724 = vpop.f32.mrf.mxu0
    %v5725 = vadd.f32 0.0, %v5724
    %5726 = vmatmul.f32.gmra.mxu0 %v5663
    %v5727 = vpop.f32.mrf.mxu0
    %v5728 = vadd.f32 0.0, %v5727
    %5729 = vmatmul.f32.gmra.mxu0 %v5666
    %v5730 = vpop.f32.mrf.mxu0
    %v5731 = vadd.f32 0.0, %v5730
    %5732 = vmatmul.f32.gmra.mxu0 %v5669
    %v5733 = vpop.f32.mrf.mxu0
    %v5734 = vadd.f32 0.0, %v5733
    %5735 = vmatmul.f32.gmra.mxu0 %v5672
    %v5736 = vpop.f32.mrf.mxu0
    %v5737 = vadd.f32 0.0, %v5736
    %5738 = vmatmul.f32.gmra.mxu0 %v5675
    %v5739 = vpop.f32.mrf.mxu0
    %v5740 = vadd.f32 0.0, %v5739
    %5741 = vmatmul.f32.gmra.mxu0 %v5678
    %v5742 = vpop.f32.mrf.mxu0
    %v5743 = vadd.f32 0.0, %v5742
    %5744 = vdwg.mxu0
    %v5745 = vadd.f32 %v5582, %v5698
    %v5746 = vadd.f32 %v5583, %v5701
    %v5747 = vadd.f32 %v5584, %v5704
    %v5748 = vadd.f32 %v5585, %v5707
    %v5749 = vadd.f32 %v5586, %v5710
    %v5750 = vadd.f32 %v5587, %v5713
    %v5751 = vadd.f32 %v5588, %v5716
    %v5752 = vadd.f32 %v5589, %v5719
    %v5753 = vadd.f32 %v5590, %v5722
    %v5754 = vadd.f32 %v5591, %v5725
    %v5755 = vadd.f32 %v5592, %v5728
    %v5756 = vadd.f32 %v5593, %v5731
    %v5757 = vadd.f32 %v5594, %v5734
    %v5758 = vadd.f32 %v5595, %v5737
    %v5759 = vadd.f32 %v5596, %v5740
    %v5760 = vadd.f32 %v5597, %v5743
    %s5761 = scalar_lea.vmem %s5077, 8 [#allocation2]
    %v5762 = vld [vmem:[%s5761] ss:$2 sm:$0xff]
    %s5763 = scalar_lea.vmem %s5077, 56 [#allocation2]
    %v5764 = vld [vmem:[%s5763] ss:$2 sm:$0xff]
    %s5765 = scalar_lea.vmem %s5077, 104 [#allocation2]
    %v5766 = vld [vmem:[%s5765] ss:$2 sm:$0xff]
    %s5767 = scalar_lea.vmem %s5077, 152 [#allocation2]
    %v5768 = vld [vmem:[%s5767] ss:$2 sm:$0xff]
    %s5769 = scalar_lea.vmem %s5077, 200 [#allocation2]
    %v5770 = vld [vmem:[%s5769] ss:$2 sm:$0xff]
    %s5771 = scalar_lea.vmem %s5077, 248 [#allocation2]
    %v5772 = vld [vmem:[%s5771] ss:$2 sm:$0xff]
    %s5773 = scalar_lea.vmem %s5077, 296 [#allocation2]
    %v5774 = vld [vmem:[%s5773] ss:$2 sm:$0xff]
    %s5775 = scalar_lea.vmem %s5077, 344 [#allocation2]
    %v5776 = vld [vmem:[%s5775] ss:$2 sm:$0xff]
    %s5777 = scalar_lea.vmem %s5077, 440 [#allocation2]
    %v5778 = vld [vmem:[%s5777] ss:$2 sm:$0xff]
    %s5779 = scalar_lea.vmem %s5077, 488 [#allocation2]
    %v5780 = vld [vmem:[%s5779] ss:$2 sm:$0xff]
    %s5781 = scalar_lea.vmem %s5077, 536 [#allocation2]
    %v5782 = vld [vmem:[%s5781] ss:$2 sm:$0xff]
    %s5783 = scalar_lea.vmem %s5077, 584 [#allocation2]
    %v5784 = vld [vmem:[%s5783] ss:$2 sm:$0xff]
    %s5785 = scalar_lea.vmem %s5077, 632 [#allocation2]
    %v5786 = vld [vmem:[%s5785] ss:$2 sm:$0xff]
    %s5787 = scalar_lea.vmem %s5077, 680 [#allocation2]
    %v5788 = vld [vmem:[%s5787] ss:$2 sm:$0xff]
    %s5789 = scalar_lea.vmem %s5077, 728 [#allocation2]
    %v5790 = vld [vmem:[%s5789] ss:$2 sm:$0xff]
    %s5791 = scalar_lea.vmem %s5077, 776 [#allocation2]
    %v5792 = vld [vmem:[%s5791] ss:$2 sm:$0xff]
    %s5793 = scalar_lea.vmem %s3, 32
    %v5794 = vld [vmem:[%s5793] sm:$0xff]
    %v5796 = vsel %vm4968, %v5762, 0
    %v5799 = vsel %vm4968, %v5764, 0
    %v5802 = vsel %vm4968, %v5766, 0
    %v5805 = vsel %vm4968, %v5768, 0
    %v5808 = vsel %vm4968, %v5770, 0
    %v5811 = vsel %vm4968, %v5772, 0
    %v5814 = vsel %vm4968, %v5774, 0
    %v5817 = vsel %vm4968, %v5776, 0
    %v5820 = vsel %vm4968, %v5778, 0
    %v5823 = vsel %vm4968, %v5780, 0
    %v5826 = vsel %vm4968, %v5782, 0
    %v5829 = vsel %vm4968, %v5784, 0
    %v5832 = vsel %vm4968, %v5786, 0
    %v5835 = vsel %vm4968, %v5788, 0
    %v5838 = vsel %vm4968, %v5790, 0
    %v5841 = vsel %vm4968, %v5792, 0
    %5843 = vmatpush.msra.mxu0 0.0
    %5844 = vmatpush.msra.mxu0 0.0
    %5845 = vmatpush.msra.mxu0 0.0
    %5846 = vmatpush.msra.mxu0 0.0
    %5847 = vmatpush.msra.mxu0 0.0
    %5848 = vmatpush.msra.mxu0 0.0
    %5849 = vmatpush.msra.mxu0 0.0
    %5850 = vmatpush.msra.mxu0 0.0
    %5851 = vmatpush.msra.mxu0 0.0
    %5852 = vmatpush.msra.mxu0 0.0
    %5853 = vmatpush.msra.mxu0 0.0
    %5854 = vmatpush.msra.mxu0 0.0
    %5855 = vmatpush.msra.mxu0 0.0
    %5856 = vmatpush.msra.mxu0 0.0
    %5857 = vmatpush.msra.mxu0 0.0
    %5858 = vmatpush.msra.mxu0 %v5794
    %5859 = vmatmul.f32.gmra.mxu0 %v5796
    %v5860 = vpop.f32.mrf.mxu0
    %v5861 = vadd.f32 0.0, %v5860
    %5862 = vmatmul.f32.gmra.mxu0 %v5799
    %v5863 = vpop.f32.mrf.mxu0
    %v5864 = vadd.f32 0.0, %v5863
    %5865 = vmatmul.f32.gmra.mxu0 %v5802
    %v5866 = vpop.f32.mrf.mxu0
    %v5867 = vadd.f32 0.0, %v5866
    %5868 = vmatmul.f32.gmra.mxu0 %v5805
    %v5869 = vpop.f32.mrf.mxu0
    %v5870 = vadd.f32 0.0, %v5869
    %5871 = vmatmul.f32.gmra.mxu0 %v5808
    %v5872 = vpop.f32.mrf.mxu0
    %v5873 = vadd.f32 0.0, %v5872
    %5874 = vmatmul.f32.gmra.mxu0 %v5811
    %v5875 = vpop.f32.mrf.mxu0
    %v5876 = vadd.f32 0.0, %v5875
    %5877 = vmatmul.f32.gmra.mxu0 %v5814
    %v5878 = vpop.f32.mrf.mxu0
    %v5879 = vadd.f32 0.0, %v5878
    %5880 = vmatmul.f32.gmra.mxu0 %v5817
    %v5881 = vpop.f32.mrf.mxu0
    %v5882 = vadd.f32 0.0, %v5881
    %5883 = vmatmul.f32.gmra.mxu0 %v5820
    %v5884 = vpop.f32.mrf.mxu0
    %v5885 = vadd.f32 0.0, %v5884
    %5886 = vmatmul.f32.gmra.mxu0 %v5823
    %v5887 = vpop.f32.mrf.mxu0
    %v5888 = vadd.f32 0.0, %v5887
    %5889 = vmatmul.f32.gmra.mxu0 %v5826
    %v5890 = vpop.f32.mrf.mxu0
    %v5891 = vadd.f32 0.0, %v5890
    %5892 = vmatmul.f32.gmra.mxu0 %v5829
    %v5893 = vpop.f32.mrf.mxu0
    %v5894 = vadd.f32 0.0, %v5893
    %5895 = vmatmul.f32.gmra.mxu0 %v5832
    %v5896 = vpop.f32.mrf.mxu0
    %v5897 = vadd.f32 0.0, %v5896
    %5898 = vmatmul.f32.gmra.mxu0 %v5835
    %v5899 = vpop.f32.mrf.mxu0
    %v5900 = vadd.f32 0.0, %v5899
    %5901 = vmatmul.f32.gmra.mxu0 %v5838
    %v5902 = vpop.f32.mrf.mxu0
    %v5903 = vadd.f32 0.0, %v5902
    %5904 = vmatmul.f32.gmra.mxu0 %v5841
    %v5905 = vpop.f32.mrf.mxu0
    %v5906 = vadd.f32 0.0, %v5905
    %5907 = vdwg.mxu0
    %v5908 = vadd.f32 %v5745, %v5861
    %v5909 = vadd.f32 %v5746, %v5864
    %v5910 = vadd.f32 %v5747, %v5867
    %v5911 = vadd.f32 %v5748, %v5870
    %v5912 = vadd.f32 %v5749, %v5873
    %v5913 = vadd.f32 %v5750, %v5876
    %v5914 = vadd.f32 %v5751, %v5879
    %v5915 = vadd.f32 %v5752, %v5882
    %v5916 = vadd.f32 %v5753, %v5885
    %v5917 = vadd.f32 %v5754, %v5888
    %v5918 = vadd.f32 %v5755, %v5891
    %v5919 = vadd.f32 %v5756, %v5894
    %v5920 = vadd.f32 %v5757, %v5897
    %v5921 = vadd.f32 %v5758, %v5900
    %v5922 = vadd.f32 %v5759, %v5903
    %v5923 = vadd.f32 %v5760, %v5906
    %s5924 = scalar_lea.vmem %s5077, 9 [#allocation2]
    %v5925 = vld [vmem:[%s5924] ss:$2 sm:$0xff]
    %s5926 = scalar_lea.vmem %s5077, 57 [#allocation2]
    %v5927 = vld [vmem:[%s5926] ss:$2 sm:$0xff]
    %s5928 = scalar_lea.vmem %s5077, 105 [#allocation2]
    %v5929 = vld [vmem:[%s5928] ss:$2 sm:$0xff]
    %s5930 = scalar_lea.vmem %s5077, 153 [#allocation2]
    %v5931 = vld [vmem:[%s5930] ss:$2 sm:$0xff]
    %s5932 = scalar_lea.vmem %s5077, 201 [#allocation2]
    %v5933 = vld [vmem:[%s5932] ss:$2 sm:$0xff]
    %s5934 = scalar_lea.vmem %s5077, 249 [#allocation2]
    %v5935 = vld [vmem:[%s5934] ss:$2 sm:$0xff]
    %s5936 = scalar_lea.vmem %s5077, 297 [#allocation2]
    %v5937 = vld [vmem:[%s5936] ss:$2 sm:$0xff]
    %s5938 = scalar_lea.vmem %s5077, 345 [#allocation2]
    %v5939 = vld [vmem:[%s5938] ss:$2 sm:$0xff]
    %s5940 = scalar_lea.vmem %s5077, 441 [#allocation2]
    %v5941 = vld [vmem:[%s5940] ss:$2 sm:$0xff]
    %s5942 = scalar_lea.vmem %s5077, 489 [#allocation2]
    %v5943 = vld [vmem:[%s5942] ss:$2 sm:$0xff]
    %s5944 = scalar_lea.vmem %s5077, 537 [#allocation2]
    %v5945 = vld [vmem:[%s5944] ss:$2 sm:$0xff]
    %s5946 = scalar_lea.vmem %s5077, 585 [#allocation2]
    %v5947 = vld [vmem:[%s5946] ss:$2 sm:$0xff]
    %s5948 = scalar_lea.vmem %s5077, 633 [#allocation2]
    %v5949 = vld [vmem:[%s5948] ss:$2 sm:$0xff]
    %s5950 = scalar_lea.vmem %s5077, 681 [#allocation2]
    %v5951 = vld [vmem:[%s5950] ss:$2 sm:$0xff]
    %s5952 = scalar_lea.vmem %s5077, 729 [#allocation2]
    %v5953 = vld [vmem:[%s5952] ss:$2 sm:$0xff]
    %s5954 = scalar_lea.vmem %s5077, 777 [#allocation2]
    %v5955 = vld [vmem:[%s5954] ss:$2 sm:$0xff]
    %s5956 = scalar_lea.vmem %s3, 40
    %v5957 = vld [vmem:[%s5956] sm:$0xff]
    %v5959 = vsel %vm4968, %v5925, 0
    %v5962 = vsel %vm4968, %v5927, 0
    %v5965 = vsel %vm4968, %v5929, 0
    %v5968 = vsel %vm4968, %v5931, 0
    %v5971 = vsel %vm4968, %v5933, 0
    %v5974 = vsel %vm4968, %v5935, 0
    %v5977 = vsel %vm4968, %v5937, 0
    %v5980 = vsel %vm4968, %v5939, 0
    %v5983 = vsel %vm4968, %v5941, 0
    %v5986 = vsel %vm4968, %v5943, 0
    %v5989 = vsel %vm4968, %v5945, 0
    %v5992 = vsel %vm4968, %v5947, 0
    %v5995 = vsel %vm4968, %v5949, 0
    %v5998 = vsel %vm4968, %v5951, 0
    %v6001 = vsel %vm4968, %v5953, 0
    %v6004 = vsel %vm4968, %v5955, 0
    %6006 = vmatpush.msra.mxu0 0.0
    %6007 = vmatpush.msra.mxu0 0.0
    %6008 = vmatpush.msra.mxu0 0.0
    %6009 = vmatpush.msra.mxu0 0.0
    %6010 = vmatpush.msra.mxu0 0.0
    %6011 = vmatpush.msra.mxu0 0.0
    %6012 = vmatpush.msra.mxu0 0.0
    %6013 = vmatpush.msra.mxu0 0.0
    %6014 = vmatpush.msra.mxu0 0.0
    %6015 = vmatpush.msra.mxu0 0.0
    %6016 = vmatpush.msra.mxu0 0.0
    %6017 = vmatpush.msra.mxu0 0.0
    %6018 = vmatpush.msra.mxu0 0.0
    %6019 = vmatpush.msra.mxu0 0.0
    %6020 = vmatpush.msra.mxu0 0.0
    %6021 = vmatpush.msra.mxu0 %v5957
    %6022 = vmatmul.f32.gmra.mxu0 %v5959
    %v6023 = vpop.f32.mrf.mxu0
    %v6024 = vadd.f32 0.0, %v6023
    %6025 = vmatmul.f32.gmra.mxu0 %v5962
    %v6026 = vpop.f32.mrf.mxu0
    %v6027 = vadd.f32 0.0, %v6026
    %6028 = vmatmul.f32.gmra.mxu0 %v5965
    %v6029 = vpop.f32.mrf.mxu0
    %v6030 = vadd.f32 0.0, %v6029
    %6031 = vmatmul.f32.gmra.mxu0 %v5968
    %v6032 = vpop.f32.mrf.mxu0
    %v6033 = vadd.f32 0.0, %v6032
    %6034 = vmatmul.f32.gmra.mxu0 %v5971
    %v6035 = vpop.f32.mrf.mxu0
    %v6036 = vadd.f32 0.0, %v6035
    %6037 = vmatmul.f32.gmra.mxu0 %v5974
    %v6038 = vpop.f32.mrf.mxu0
    %v6039 = vadd.f32 0.0, %v6038
    %6040 = vmatmul.f32.gmra.mxu0 %v5977
    %v6041 = vpop.f32.mrf.mxu0
    %v6042 = vadd.f32 0.0, %v6041
    %6043 = vmatmul.f32.gmra.mxu0 %v5980
    %v6044 = vpop.f32.mrf.mxu0
    %v6045 = vadd.f32 0.0, %v6044
    %6046 = vmatmul.f32.gmra.mxu0 %v5983
    %v6047 = vpop.f32.mrf.mxu0
    %v6048 = vadd.f32 0.0, %v6047
    %6049 = vmatmul.f32.gmra.mxu0 %v5986
    %v6050 = vpop.f32.mrf.mxu0
    %v6051 = vadd.f32 0.0, %v6050
    %6052 = vmatmul.f32.gmra.mxu0 %v5989
    %v6053 = vpop.f32.mrf.mxu0
    %v6054 = vadd.f32 0.0, %v6053
    %6055 = vmatmul.f32.gmra.mxu0 %v5992
    %v6056 = vpop.f32.mrf.mxu0
    %v6057 = vadd.f32 0.0, %v6056
    %6058 = vmatmul.f32.gmra.mxu0 %v5995
    %v6059 = vpop.f32.mrf.mxu0
    %v6060 = vadd.f32 0.0, %v6059
    %6061 = vmatmul.f32.gmra.mxu0 %v5998
    %v6062 = vpop.f32.mrf.mxu0
    %v6063 = vadd.f32 0.0, %v6062
    %6064 = vmatmul.f32.gmra.mxu0 %v6001
    %v6065 = vpop.f32.mrf.mxu0
    %v6066 = vadd.f32 0.0, %v6065
    %6067 = vmatmul.f32.gmra.mxu0 %v6004
    %v6068 = vpop.f32.mrf.mxu0
    %v6069 = vadd.f32 0.0, %v6068
    %6070 = vdwg.mxu0
    %v6071 = vadd.f32 %v5908, %v6024
    %v6072 = vadd.f32 %v5909, %v6027
    %v6073 = vadd.f32 %v5910, %v6030
    %v6074 = vadd.f32 %v5911, %v6033
    %v6075 = vadd.f32 %v5912, %v6036
    %v6076 = vadd.f32 %v5913, %v6039
    %v6077 = vadd.f32 %v5914, %v6042
    %v6078 = vadd.f32 %v5915, %v6045
    %v6079 = vadd.f32 %v5916, %v6048
    %v6080 = vadd.f32 %v5917, %v6051
    %v6081 = vadd.f32 %v5918, %v6054
    %v6082 = vadd.f32 %v5919, %v6057
    %v6083 = vadd.f32 %v5920, %v6060
    %v6084 = vadd.f32 %v5921, %v6063
    %v6085 = vadd.f32 %v5922, %v6066
    %v6086 = vadd.f32 %v5923, %v6069
    %s6087 = scalar_lea.vmem [#allocation2], 48
    %s6088 = scalar_lea.vmem %s6087, 7 [#allocation2]
    %v6089 = vld [vmem:[%s6088] ss:$2 sm:$0xff]
    %s6090 = scalar_lea.vmem %s6087, 55 [#allocation2]
    %v6091 = vld [vmem:[%s6090] ss:$2 sm:$0xff]
    %s6092 = scalar_lea.vmem %s6087, 103 [#allocation2]
    %v6093 = vld [vmem:[%s6092] ss:$2 sm:$0xff]
    %s6094 = scalar_lea.vmem %s6087, 151 [#allocation2]
    %v6095 = vld [vmem:[%s6094] ss:$2 sm:$0xff]
    %s6096 = scalar_lea.vmem %s6087, 199 [#allocation2]
    %v6097 = vld [vmem:[%s6096] ss:$2 sm:$0xff]
    %s6098 = scalar_lea.vmem %s6087, 247 [#allocation2]
    %v6099 = vld [vmem:[%s6098] ss:$2 sm:$0xff]
    %s6100 = scalar_lea.vmem %s6087, 295 [#allocation2]
    %v6101 = vld [vmem:[%s6100] ss:$2 sm:$0xff]
    %s6102 = scalar_lea.vmem %s6087, 343 [#allocation2]
    %v6103 = vld [vmem:[%s6102] ss:$2 sm:$0xff]
    %s6104 = scalar_lea.vmem %s6087, 439 [#allocation2]
    %v6105 = vld [vmem:[%s6104] ss:$2 sm:$0xff]
    %s6106 = scalar_lea.vmem %s6087, 487 [#allocation2]
    %v6107 = vld [vmem:[%s6106] ss:$2 sm:$0xff]
    %s6108 = scalar_lea.vmem %s6087, 535 [#allocation2]
    %v6109 = vld [vmem:[%s6108] ss:$2 sm:$0xff]
    %s6110 = scalar_lea.vmem %s6087, 583 [#allocation2]
    %v6111 = vld [vmem:[%s6110] ss:$2 sm:$0xff]
    %s6112 = scalar_lea.vmem %s6087, 631 [#allocation2]
    %v6113 = vld [vmem:[%s6112] ss:$2 sm:$0xff]
    %s6114 = scalar_lea.vmem %s6087, 679 [#allocation2]
    %v6115 = vld [vmem:[%s6114] ss:$2 sm:$0xff]
    %s6116 = scalar_lea.vmem %s6087, 727 [#allocation2]
    %v6117 = vld [vmem:[%s6116] ss:$2 sm:$0xff]
    %s6118 = scalar_lea.vmem %s6087, 775 [#allocation2]
    %v6119 = vld [vmem:[%s6118] ss:$2 sm:$0xff]
    %s6120 = scalar_lea.vmem %s3, 48
    %v6121 = vld [vmem:[%s6120] sm:$0xff]
    %v6123 = vsel %vm4968, %v6089, 0
    %v6126 = vsel %vm4968, %v6091, 0
    %v6129 = vsel %vm4968, %v6093, 0
    %v6132 = vsel %vm4968, %v6095, 0
    %v6135 = vsel %vm4968, %v6097, 0
    %v6138 = vsel %vm4968, %v6099, 0
    %v6141 = vsel %vm4968, %v6101, 0
    %v6144 = vsel %vm4968, %v6103, 0
    %v6147 = vsel %vm4968, %v6105, 0
    %v6150 = vsel %vm4968, %v6107, 0
    %v6153 = vsel %vm4968, %v6109, 0
    %v6156 = vsel %vm4968, %v6111, 0
    %v6159 = vsel %vm4968, %v6113, 0
    %v6162 = vsel %vm4968, %v6115, 0
    %v6165 = vsel %vm4968, %v6117, 0
    %v6168 = vsel %vm4968, %v6119, 0
    %6170 = vmatpush.msra.mxu0 0.0
    %6171 = vmatpush.msra.mxu0 0.0
    %6172 = vmatpush.msra.mxu0 0.0
    %6173 = vmatpush.msra.mxu0 0.0
    %6174 = vmatpush.msra.mxu0 0.0
    %6175 = vmatpush.msra.mxu0 0.0
    %6176 = vmatpush.msra.mxu0 0.0
    %6177 = vmatpush.msra.mxu0 0.0
    %6178 = vmatpush.msra.mxu0 0.0
    %6179 = vmatpush.msra.mxu0 0.0
    %6180 = vmatpush.msra.mxu0 0.0
    %6181 = vmatpush.msra.mxu0 0.0
    %6182 = vmatpush.msra.mxu0 0.0
    %6183 = vmatpush.msra.mxu0 0.0
    %6184 = vmatpush.msra.mxu0 0.0
    %6185 = vmatpush.msra.mxu0 %v6121
    %6186 = vmatmul.f32.gmra.mxu0 %v6123
    %v6187 = vpop.f32.mrf.mxu0
    %v6188 = vadd.f32 0.0, %v6187
    %6189 = vmatmul.f32.gmra.mxu0 %v6126
    %v6190 = vpop.f32.mrf.mxu0
    %v6191 = vadd.f32 0.0, %v6190
    %6192 = vmatmul.f32.gmra.mxu0 %v6129
    %v6193 = vpop.f32.mrf.mxu0
    %v6194 = vadd.f32 0.0, %v6193
    %6195 = vmatmul.f32.gmra.mxu0 %v6132
    %v6196 = vpop.f32.mrf.mxu0
    %v6197 = vadd.f32 0.0, %v6196
    %6198 = vmatmul.f32.gmra.mxu0 %v6135
    %v6199 = vpop.f32.mrf.mxu0
    %v6200 = vadd.f32 0.0, %v6199
    %6201 = vmatmul.f32.gmra.mxu0 %v6138
    %v6202 = vpop.f32.mrf.mxu0
    %v6203 = vadd.f32 0.0, %v6202
    %6204 = vmatmul.f32.gmra.mxu0 %v6141
    %v6205 = vpop.f32.mrf.mxu0
    %v6206 = vadd.f32 0.0, %v6205
    %6207 = vmatmul.f32.gmra.mxu0 %v6144
    %v6208 = vpop.f32.mrf.mxu0
    %v6209 = vadd.f32 0.0, %v6208
    %6210 = vmatmul.f32.gmra.mxu0 %v6147
    %v6211 = vpop.f32.mrf.mxu0
    %v6212 = vadd.f32 0.0, %v6211
    %6213 = vmatmul.f32.gmra.mxu0 %v6150
    %v6214 = vpop.f32.mrf.mxu0
    %v6215 = vadd.f32 0.0, %v6214
    %6216 = vmatmul.f32.gmra.mxu0 %v6153
    %v6217 = vpop.f32.mrf.mxu0
    %v6218 = vadd.f32 0.0, %v6217
    %6219 = vmatmul.f32.gmra.mxu0 %v6156
    %v6220 = vpop.f32.mrf.mxu0
    %v6221 = vadd.f32 0.0, %v6220
    %6222 = vmatmul.f32.gmra.mxu0 %v6159
    %v6223 = vpop.f32.mrf.mxu0
    %v6224 = vadd.f32 0.0, %v6223
    %6225 = vmatmul.f32.gmra.mxu0 %v6162
    %v6226 = vpop.f32.mrf.mxu0
    %v6227 = vadd.f32 0.0, %v6226
    %6228 = vmatmul.f32.gmra.mxu0 %v6165
    %v6229 = vpop.f32.mrf.mxu0
    %v6230 = vadd.f32 0.0, %v6229
    %6231 = vmatmul.f32.gmra.mxu0 %v6168
    %v6232 = vpop.f32.mrf.mxu0
    %v6233 = vadd.f32 0.0, %v6232
    %6234 = vdwg.mxu0
    %v6235 = vadd.f32 %v6071, %v6188
    %v6236 = vadd.f32 %v6072, %v6191
    %v6237 = vadd.f32 %v6073, %v6194
    %v6238 = vadd.f32 %v6074, %v6197
    %v6239 = vadd.f32 %v6075, %v6200
    %v6240 = vadd.f32 %v6076, %v6203
    %v6241 = vadd.f32 %v6077, %v6206
    %v6242 = vadd.f32 %v6078, %v6209
    %v6243 = vadd.f32 %v6079, %v6212
    %v6244 = vadd.f32 %v6080, %v6215
    %v6245 = vadd.f32 %v6081, %v6218
    %v6246 = vadd.f32 %v6082, %v6221
    %v6247 = vadd.f32 %v6083, %v6224
    %v6248 = vadd.f32 %v6084, %v6227
    %v6249 = vadd.f32 %v6085, %v6230
    %v6250 = vadd.f32 %v6086, %v6233
    %s6251 = scalar_lea.vmem %s6087, 8 [#allocation2]
    %v6252 = vld [vmem:[%s6251] ss:$2 sm:$0xff]
    %s6253 = scalar_lea.vmem %s6087, 56 [#allocation2]
    %v6254 = vld [vmem:[%s6253] ss:$2 sm:$0xff]
    %s6255 = scalar_lea.vmem %s6087, 104 [#allocation2]
    %v6256 = vld [vmem:[%s6255] ss:$2 sm:$0xff]
    %s6257 = scalar_lea.vmem %s6087, 152 [#allocation2]
    %v6258 = vld [vmem:[%s6257] ss:$2 sm:$0xff]
    %s6259 = scalar_lea.vmem %s6087, 200 [#allocation2]
    %v6260 = vld [vmem:[%s6259] ss:$2 sm:$0xff]
    %s6261 = scalar_lea.vmem %s6087, 248 [#allocation2]
    %v6262 = vld [vmem:[%s6261] ss:$2 sm:$0xff]
    %s6263 = scalar_lea.vmem %s6087, 296 [#allocation2]
    %v6264 = vld [vmem:[%s6263] ss:$2 sm:$0xff]
    %s6265 = scalar_lea.vmem %s6087, 344 [#allocation2]
    %v6266 = vld [vmem:[%s6265] ss:$2 sm:$0xff]
    %s6267 = scalar_lea.vmem %s6087, 440 [#allocation2]
    %v6268 = vld [vmem:[%s6267] ss:$2 sm:$0xff]
    %s6269 = scalar_lea.vmem %s6087, 488 [#allocation2]
    %v6270 = vld [vmem:[%s6269] ss:$2 sm:$0xff]
    %s6271 = scalar_lea.vmem %s6087, 536 [#allocation2]
    %v6272 = vld [vmem:[%s6271] ss:$2 sm:$0xff]
    %s6273 = scalar_lea.vmem %s6087, 584 [#allocation2]
    %v6274 = vld [vmem:[%s6273] ss:$2 sm:$0xff]
    %s6275 = scalar_lea.vmem %s6087, 632 [#allocation2]
    %v6276 = vld [vmem:[%s6275] ss:$2 sm:$0xff]
    %s6277 = scalar_lea.vmem %s6087, 680 [#allocation2]
    %v6278 = vld [vmem:[%s6277] ss:$2 sm:$0xff]
    %s6279 = scalar_lea.vmem %s6087, 728 [#allocation2]
    %v6280 = vld [vmem:[%s6279] ss:$2 sm:$0xff]
    %s6281 = scalar_lea.vmem %s6087, 776 [#allocation2]
    %v6282 = vld [vmem:[%s6281] ss:$2 sm:$0xff]
    %s6283 = scalar_lea.vmem %s3, 56
    %v6284 = vld [vmem:[%s6283] sm:$0xff]
    %v6286 = vsel %vm4968, %v6252, 0
    %v6289 = vsel %vm4968, %v6254, 0
    %v6292 = vsel %vm4968, %v6256, 0
    %v6295 = vsel %vm4968, %v6258, 0
    %v6298 = vsel %vm4968, %v6260, 0
    %v6301 = vsel %vm4968, %v6262, 0
    %v6304 = vsel %vm4968, %v6264, 0
    %v6307 = vsel %vm4968, %v6266, 0
    %v6310 = vsel %vm4968, %v6268, 0
    %v6313 = vsel %vm4968, %v6270, 0
    %v6316 = vsel %vm4968, %v6272, 0
    %v6319 = vsel %vm4968, %v6274, 0
    %v6322 = vsel %vm4968, %v6276, 0
    %v6325 = vsel %vm4968, %v6278, 0
    %v6328 = vsel %vm4968, %v6280, 0
    %v6331 = vsel %vm4968, %v6282, 0
    %6333 = vmatpush.msra.mxu0 0.0
    %6334 = vmatpush.msra.mxu0 0.0
    %6335 = vmatpush.msra.mxu0 0.0
    %6336 = vmatpush.msra.mxu0 0.0
    %6337 = vmatpush.msra.mxu0 0.0
    %6338 = vmatpush.msra.mxu0 0.0
    %6339 = vmatpush.msra.mxu0 0.0
    %6340 = vmatpush.msra.mxu0 0.0
    %6341 = vmatpush.msra.mxu0 0.0
    %6342 = vmatpush.msra.mxu0 0.0
    %6343 = vmatpush.msra.mxu0 0.0
    %6344 = vmatpush.msra.mxu0 0.0
    %6345 = vmatpush.msra.mxu0 0.0
    %6346 = vmatpush.msra.mxu0 0.0
    %6347 = vmatpush.msra.mxu0 0.0
    %6348 = vmatpush.msra.mxu0 %v6284
    %6349 = vmatmul.f32.gmra.mxu0 %v6286
    %v6350 = vpop.f32.mrf.mxu0
    %v6351 = vadd.f32 0.0, %v6350
    %6352 = vmatmul.f32.gmra.mxu0 %v6289
    %v6353 = vpop.f32.mrf.mxu0
    %v6354 = vadd.f32 0.0, %v6353
    %6355 = vmatmul.f32.gmra.mxu0 %v6292
    %v6356 = vpop.f32.mrf.mxu0
    %v6357 = vadd.f32 0.0, %v6356
    %6358 = vmatmul.f32.gmra.mxu0 %v6295
    %v6359 = vpop.f32.mrf.mxu0
    %v6360 = vadd.f32 0.0, %v6359
    %6361 = vmatmul.f32.gmra.mxu0 %v6298
    %v6362 = vpop.f32.mrf.mxu0
    %v6363 = vadd.f32 0.0, %v6362
    %6364 = vmatmul.f32.gmra.mxu0 %v6301
    %v6365 = vpop.f32.mrf.mxu0
    %v6366 = vadd.f32 0.0, %v6365
    %6367 = vmatmul.f32.gmra.mxu0 %v6304
    %v6368 = vpop.f32.mrf.mxu0
    %v6369 = vadd.f32 0.0, %v6368
    %6370 = vmatmul.f32.gmra.mxu0 %v6307
    %v6371 = vpop.f32.mrf.mxu0
    %v6372 = vadd.f32 0.0, %v6371
    %6373 = vmatmul.f32.gmra.mxu0 %v6310
    %v6374 = vpop.f32.mrf.mxu0
    %v6375 = vadd.f32 0.0, %v6374
    %6376 = vmatmul.f32.gmra.mxu0 %v6313
    %v6377 = vpop.f32.mrf.mxu0
    %v6378 = vadd.f32 0.0, %v6377
    %6379 = vmatmul.f32.gmra.mxu0 %v6316
    %v6380 = vpop.f32.mrf.mxu0
    %v6381 = vadd.f32 0.0, %v6380
    %6382 = vmatmul.f32.gmra.mxu0 %v6319
    %v6383 = vpop.f32.mrf.mxu0
    %v6384 = vadd.f32 0.0, %v6383
    %6385 = vmatmul.f32.gmra.mxu0 %v6322
    %v6386 = vpop.f32.mrf.mxu0
    %v6387 = vadd.f32 0.0, %v6386
    %6388 = vmatmul.f32.gmra.mxu0 %v6325
    %v6389 = vpop.f32.mrf.mxu0
    %v6390 = vadd.f32 0.0, %v6389
    %6391 = vmatmul.f32.gmra.mxu0 %v6328
    %v6392 = vpop.f32.mrf.mxu0
    %v6393 = vadd.f32 0.0, %v6392
    %6394 = vmatmul.f32.gmra.mxu0 %v6331
    %v6395 = vpop.f32.mrf.mxu0
    %v6396 = vadd.f32 0.0, %v6395
    %6397 = vdwg.mxu0
    %v6398 = vadd.f32 %v6235, %v6351
    %v6399 = vadd.f32 %v6236, %v6354
    %v6400 = vadd.f32 %v6237, %v6357
    %v6401 = vadd.f32 %v6238, %v6360
    %v6402 = vadd.f32 %v6239, %v6363
    %v6403 = vadd.f32 %v6240, %v6366
    %v6404 = vadd.f32 %v6241, %v6369
    %v6405 = vadd.f32 %v6242, %v6372
    %v6406 = vadd.f32 %v6243, %v6375
    %v6407 = vadd.f32 %v6244, %v6378
    %v6408 = vadd.f32 %v6245, %v6381
    %v6409 = vadd.f32 %v6246, %v6384
    %v6410 = vadd.f32 %v6247, %v6387
    %v6411 = vadd.f32 %v6248, %v6390
    %v6412 = vadd.f32 %v6249, %v6393
    %v6413 = vadd.f32 %v6250, %v6396
    %s6414 = scalar_lea.vmem %s6087, 9 [#allocation2]
    %v6415 = vld [vmem:[%s6414] ss:$2 sm:$0xff]
    %s6416 = scalar_lea.vmem %s6087, 57 [#allocation2]
    %v6417 = vld [vmem:[%s6416] ss:$2 sm:$0xff]
    %s6418 = scalar_lea.vmem %s6087, 105 [#allocation2]
    %v6419 = vld [vmem:[%s6418] ss:$2 sm:$0xff]
    %s6420 = scalar_lea.vmem %s6087, 153 [#allocation2]
    %v6421 = vld [vmem:[%s6420] ss:$2 sm:$0xff]
    %s6422 = scalar_lea.vmem %s6087, 201 [#allocation2]
    %v6423 = vld [vmem:[%s6422] ss:$2 sm:$0xff]
    %s6424 = scalar_lea.vmem %s6087, 249 [#allocation2]
    %v6425 = vld [vmem:[%s6424] ss:$2 sm:$0xff]
    %s6426 = scalar_lea.vmem %s6087, 297 [#allocation2]
    %v6427 = vld [vmem:[%s6426] ss:$2 sm:$0xff]
    %s6428 = scalar_lea.vmem %s6087, 345 [#allocation2]
    %v6429 = vld [vmem:[%s6428] ss:$2 sm:$0xff]
    %s6430 = scalar_lea.vmem %s6087, 441 [#allocation2]
    %v6431 = vld [vmem:[%s6430] ss:$2 sm:$0xff]
    %s6432 = scalar_lea.vmem %s6087, 489 [#allocation2]
    %v6433 = vld [vmem:[%s6432] ss:$2 sm:$0xff]
    %s6434 = scalar_lea.vmem %s6087, 537 [#allocation2]
    %v6435 = vld [vmem:[%s6434] ss:$2 sm:$0xff]
    %s6436 = scalar_lea.vmem %s6087, 585 [#allocation2]
    %v6437 = vld [vmem:[%s6436] ss:$2 sm:$0xff]
    %s6438 = scalar_lea.vmem %s6087, 633 [#allocation2]
    %v6439 = vld [vmem:[%s6438] ss:$2 sm:$0xff]
    %s6440 = scalar_lea.vmem %s6087, 681 [#allocation2]
    %v6441 = vld [vmem:[%s6440] ss:$2 sm:$0xff]
    %s6442 = scalar_lea.vmem %s6087, 729 [#allocation2]
    %v6443 = vld [vmem:[%s6442] ss:$2 sm:$0xff]
    %s6444 = scalar_lea.vmem %s6087, 777 [#allocation2]
    %v6445 = vld [vmem:[%s6444] ss:$2 sm:$0xff]
    %s6446 = scalar_lea.vmem %s3, 64
    %v6447 = vld [vmem:[%s6446] sm:$0xff]
    %v6449 = vsel %vm4968, %v6415, 0
    %v6452 = vsel %vm4968, %v6417, 0
    %v6455 = vsel %vm4968, %v6419, 0
    %v6458 = vsel %vm4968, %v6421, 0
    %v6461 = vsel %vm4968, %v6423, 0
    %v6464 = vsel %vm4968, %v6425, 0
    %v6467 = vsel %vm4968, %v6427, 0
    %v6470 = vsel %vm4968, %v6429, 0
    %v6473 = vsel %vm4968, %v6431, 0
    %v6476 = vsel %vm4968, %v6433, 0
    %v6479 = vsel %vm4968, %v6435, 0
    %v6482 = vsel %vm4968, %v6437, 0
    %v6485 = vsel %vm4968, %v6439, 0
    %v6488 = vsel %vm4968, %v6441, 0
    %v6491 = vsel %vm4968, %v6443, 0
    %v6494 = vsel %vm4968, %v6445, 0
    %6496 = vmatpush.msra.mxu0 0.0
    %6497 = vmatpush.msra.mxu0 0.0
    %6498 = vmatpush.msra.mxu0 0.0
    %6499 = vmatpush.msra.mxu0 0.0
    %6500 = vmatpush.msra.mxu0 0.0
    %6501 = vmatpush.msra.mxu0 0.0
    %6502 = vmatpush.msra.mxu0 0.0
    %6503 = vmatpush.msra.mxu0 0.0
    %6504 = vmatpush.msra.mxu0 0.0
    %6505 = vmatpush.msra.mxu0 0.0
    %6506 = vmatpush.msra.mxu0 0.0
    %6507 = vmatpush.msra.mxu0 0.0
    %6508 = vmatpush.msra.mxu0 0.0
    %6509 = vmatpush.msra.mxu0 0.0
    %6510 = vmatpush.msra.mxu0 0.0
    %6511 = vmatpush.msra.mxu0 %v6447
    %6512 = vmatmul.f32.gmra.mxu0 %v6449
    %v6513 = vpop.f32.mrf.mxu0
    %v6514 = vadd.f32 0.0, %v6513
    %6515 = vmatmul.f32.gmra.mxu0 %v6452
    %v6516 = vpop.f32.mrf.mxu0
    %v6517 = vadd.f32 0.0, %v6516
    %6518 = vmatmul.f32.gmra.mxu0 %v6455
    %v6519 = vpop.f32.mrf.mxu0
    %v6520 = vadd.f32 0.0, %v6519
    %6521 = vmatmul.f32.gmra.mxu0 %v6458
    %v6522 = vpop.f32.mrf.mxu0
    %v6523 = vadd.f32 0.0, %v6522
    %6524 = vmatmul.f32.gmra.mxu0 %v6461
    %v6525 = vpop.f32.mrf.mxu0
    %v6526 = vadd.f32 0.0, %v6525
    %6527 = vmatmul.f32.gmra.mxu0 %v6464
    %v6528 = vpop.f32.mrf.mxu0
    %v6529 = vadd.f32 0.0, %v6528
    %6530 = vmatmul.f32.gmra.mxu0 %v6467
    %v6531 = vpop.f32.mrf.mxu0
    %v6532 = vadd.f32 0.0, %v6531
    %6533 = vmatmul.f32.gmra.mxu0 %v6470
    %v6534 = vpop.f32.mrf.mxu0
    %v6535 = vadd.f32 0.0, %v6534
    %6536 = vmatmul.f32.gmra.mxu0 %v6473
    %v6537 = vpop.f32.mrf.mxu0
    %v6538 = vadd.f32 0.0, %v6537
    %6539 = vmatmul.f32.gmra.mxu0 %v6476
    %v6540 = vpop.f32.mrf.mxu0
    %v6541 = vadd.f32 0.0, %v6540
    %6542 = vmatmul.f32.gmra.mxu0 %v6479
    %v6543 = vpop.f32.mrf.mxu0
    %v6544 = vadd.f32 0.0, %v6543
    %6545 = vmatmul.f32.gmra.mxu0 %v6482
    %v6546 = vpop.f32.mrf.mxu0
    %v6547 = vadd.f32 0.0, %v6546
    %6548 = vmatmul.f32.gmra.mxu0 %v6485
    %v6549 = vpop.f32.mrf.mxu0
    %v6550 = vadd.f32 0.0, %v6549
    %6551 = vmatmul.f32.gmra.mxu0 %v6488
    %v6552 = vpop.f32.mrf.mxu0
    %v6553 = vadd.f32 0.0, %v6552
    %6554 = vmatmul.f32.gmra.mxu0 %v6491
    %v6555 = vpop.f32.mrf.mxu0
    %v6556 = vadd.f32 0.0, %v6555
    %6557 = vmatmul.f32.gmra.mxu0 %v6494
    %v6558 = vpop.f32.mrf.mxu0
    %v6559 = vadd.f32 0.0, %v6558
    %6560 = vdwg.mxu0
    %v6561 = vadd.f32 %v6398, %v6514
    %v6562 = vadd.f32 %v6399, %v6517
    %v6563 = vadd.f32 %v6400, %v6520
    %v6564 = vadd.f32 %v6401, %v6523
    %v6565 = vadd.f32 %v6402, %v6526
    %v6566 = vadd.f32 %v6403, %v6529
    %v6567 = vadd.f32 %v6404, %v6532
    %v6568 = vadd.f32 %v6405, %v6535
    %v6569 = vadd.f32 %v6406, %v6538
    %v6570 = vadd.f32 %v6407, %v6541
    %v6571 = vadd.f32 %v6408, %v6544
    %v6572 = vadd.f32 %v6409, %v6547
    %v6573 = vadd.f32 %v6410, %v6550
    %v6574 = vadd.f32 %v6411, %v6553
    %v6575 = vadd.f32 %v6412, %v6556
    %v6576 = vadd.f32 %v6413, %v6559
    %v6577 = vld [vmem:[%s4] sm:$0x1]
    %v6579 = vperm.slane %v6577, 0
    %v6581 = vadd.f32 %v6561, %v6579
    %v6582 = vadd.f32 %v6562, %v6579
    %v6583 = vadd.f32 %v6563, %v6579
    %v6584 = vadd.f32 %v6564, %v6579
    %v6585 = vadd.f32 %v6565, %v6579
    %v6586 = vadd.f32 %v6566, %v6579
    %v6587 = vadd.f32 %v6567, %v6579
    %v6588 = vadd.f32 %v6568, %v6579
    %v6589 = vadd.f32 %v6569, %v6579
    %v6590 = vadd.f32 %v6570, %v6579
    %v6591 = vadd.f32 %v6571, %v6579
    %v6592 = vadd.f32 %v6572, %v6579
    %v6593 = vadd.f32 %v6573, %v6579
    %v6594 = vadd.f32 %v6574, %v6579
    %v6595 = vadd.f32 %v6575, %v6579
    %v6596 = vadd.f32 %v6576, %v6579
    %v6597 = vmax.f32 %v6581, 0.0
    %v6598 = vmax.f32 %v6582, 0.0
    %v6599 = vmax.f32 %v6583, 0.0
    %v6600 = vmax.f32 %v6584, 0.0
    %v6601 = vmax.f32 %v6585, 0.0
    %v6602 = vmax.f32 %v6586, 0.0
    %v6603 = vmax.f32 %v6587, 0.0
    %v6604 = vmax.f32 %v6588, 0.0
    %v6605 = vmax.f32 %v6589, 0.0
    %v6606 = vmax.f32 %v6590, 0.0
    %v6607 = vmax.f32 %v6591, 0.0
    %v6608 = vmax.f32 %v6592, 0.0
    %v6609 = vmax.f32 %v6593, 0.0
    %v6610 = vmax.f32 %v6594, 0.0
    %v6611 = vmax.f32 %v6595, 0.0
    %v6612 = vmax.f32 %v6596, 0.0
    %6613 = vxpose.xlu0.b32.start [1/16] %v6597, 128
    %6614 = vxpose.xlu0.b32.cont [2/16] %v6598, 128
    %6615 = vxpose.xlu0.b32.cont [3/16] %v6599, 128
    %6616 = vxpose.xlu0.b32.cont [4/16] %v6600, 128
    %6617 = vxpose.xlu0.b32.cont [5/16] %v6601, 128
    %6618 = vxpose.xlu0.b32.cont [6/16] %v6602, 128
    %6619 = vxpose.xlu0.b32.cont [7/16] %v6603, 128
    %6620 = vxpose.xlu0.b32.cont [8/16] %v6604, 128
    %6621 = vxpose.xlu0.b32.cont [9/16] %v6605, 128
    %6622 = vxpose.xlu0.b32.cont [10/16] %v6606, 128
    %6623 = vxpose.xlu0.b32.cont [11/16] %v6607, 128
    %6624 = vxpose.xlu0.b32.cont [12/16] %v6608, 128
    %6625 = vxpose.xlu0.b32.cont [13/16] %v6609, 128
    %6626 = vxpose.xlu0.b32.cont [14/16] %v6610, 128
    %6627 = vxpose.xlu0.b32.cont [15/16] %v6611, 128
    %6628 = vxpose.xlu0.b32.end [16/16] %v6612, 128
    %v6629 = vpop.trf.xlu0
    %v6630 = vpop.trf.xlu0
    %v6631 = vpop.trf.xlu0
    %v6632 = vpop.trf.xlu0
    %v6633 = vpop.trf.xlu0
    %v6634 = vpop.trf.xlu0
    %v6635 = vpop.trf.xlu0
    %v6636 = vpop.trf.xlu0
    %v6637 = vpop.trf.xlu0
    %v6638 = vpop.trf.xlu0
    %v6639 = vpop.trf.xlu0
    %v6640 = vpop.trf.xlu0
    %v6641 = vpop.trf.xlu0
    %v6642 = vpop.trf.xlu0
    %v6643 = vpop.trf.xlu0
    %v6644 = vpop.trf.xlu0
    %v6645 = vld [vmem:[%s6] sm:$0x1]
    %v6646 = vld [vmem:[%s5] sm:$0xff]
    %v6647 = vld [vmem:[%s5 + $0x8] sm:$0xff]
    %v6648 = vld [vmem:[%s5 + $0x10] sm:$0xff]
    %v6649 = vld [vmem:[%s5 + $0x18] sm:$0xff]
    %v6650 = vld [vmem:[%s5 + $0x20] sm:$0xff]
    %v6651 = vld [vmem:[%s5 + $0x28] sm:$0xff]
    %v6652 = vld [vmem:[%s5 + $0x30] sm:$0xff]
    %v6653 = vld [vmem:[%s5 + $0x38] sm:$0xff]
    %vm6654 = vcmask 523264
    %v6656 = vsel %vm6654, %v6629, 0
    %6658 = vmatpush.msra.mxu0 0.0
    %6659 = vmatpush.msra.mxu0 0.0
    %6660 = vmatpush.msra.mxu0 0.0
    %6661 = vmatpush.msra.mxu0 0.0
    %6662 = vmatpush.msra.mxu0 0.0
    %6663 = vmatpush.msra.mxu0 0.0
    %6664 = vmatpush.msra.mxu0 0.0
    %6665 = vmatpush.msra.mxu0 0.0
    %6666 = vmatpush.msra.mxu0 %v6653
    %6667 = vmatpush.msra.mxu0 %v6652
    %6668 = vmatpush.msra.mxu0 %v6651
    %6669 = vmatpush.msra.mxu0 %v6650
    %6670 = vmatpush.msra.mxu0 %v6649
    %6671 = vmatpush.msra.mxu0 %v6648
    %6672 = vmatpush.msra.mxu0 %v6647
    %6673 = vmatpush.msra.mxu0 %v6646
    %6674 = vmatmul.f32.gmra.mxu0 %v6656
    %v6675 = vpop.f32.mrf.mxu0
    %v6676 = vadd.f32 0.0, %v6675
    %6677 = vdwg.mxu0
    %v6678 = vadd.f32 %v6645, %v6676
    %s6679 = scalar_lea.vmem %s5, 64
    %v6680 = vld [vmem:[%s6679] sm:$0xff]
    %v6681 = vld [vmem:[%s6679 + $0x8] sm:$0xff]
    %v6682 = vld [vmem:[%s6679 + $0x10] sm:$0xff]
    %v6683 = vld [vmem:[%s6679 + $0x18] sm:$0xff]
    %v6684 = vld [vmem:[%s6679 + $0x20] sm:$0xff]
    %v6685 = vld [vmem:[%s6679 + $0x28] sm:$0xff]
    %v6686 = vld [vmem:[%s6679 + $0x30] sm:$0xff]
    %v6687 = vld [vmem:[%s6679 + $0x38] sm:$0xff]
    %v6688 = vrot.slane %v6629, 1
    %v6689 = vsel %vm6654, %v6688, 0
    %6691 = vmatpush.msra.mxu0 0.0
    %6692 = vmatpush.msra.mxu0 0.0
    %6693 = vmatpush.msra.mxu0 0.0
    %6694 = vmatpush.msra.mxu0 0.0
    %6695 = vmatpush.msra.mxu0 0.0
    %6696 = vmatpush.msra.mxu0 0.0
    %6697 = vmatpush.msra.mxu0 0.0
    %6698 = vmatpush.msra.mxu0 0.0
    %6699 = vmatpush.msra.mxu0 %v6687
    %6700 = vmatpush.msra.mxu0 %v6686
    %6701 = vmatpush.msra.mxu0 %v6685
    %6702 = vmatpush.msra.mxu0 %v6684
    %6703 = vmatpush.msra.mxu0 %v6683
    %6704 = vmatpush.msra.mxu0 %v6682
    %6705 = vmatpush.msra.mxu0 %v6681
    %6706 = vmatpush.msra.mxu0 %v6680
    %6707 = vmatmul.f32.gmra.mxu0 %v6689
    %v6708 = vpop.f32.mrf.mxu0
    %v6709 = vadd.f32 0.0, %v6708
    %6710 = vdwg.mxu0
    %v6711 = vadd.f32 %v6678, %v6709
    %s6712 = scalar_lea.vmem %s5, 128
    %v6713 = vld [vmem:[%s6712] sm:$0xff]
    %v6714 = vld [vmem:[%s6712 + $0x8] sm:$0xff]
    %v6715 = vld [vmem:[%s6712 + $0x10] sm:$0xff]
    %v6716 = vld [vmem:[%s6712 + $0x18] sm:$0xff]
    %v6717 = vld [vmem:[%s6712 + $0x20] sm:$0xff]
    %v6718 = vld [vmem:[%s6712 + $0x28] sm:$0xff]
    %v6719 = vld [vmem:[%s6712 + $0x30] sm:$0xff]
    %v6720 = vld [vmem:[%s6712 + $0x38] sm:$0xff]
    %v6721 = vrot.slane %v6629, 2
    %v6722 = vsel %vm6654, %v6721, 0
    %6724 = vmatpush.msra.mxu0 0.0
    %6725 = vmatpush.msra.mxu0 0.0
    %6726 = vmatpush.msra.mxu0 0.0
    %6727 = vmatpush.msra.mxu0 0.0
    %6728 = vmatpush.msra.mxu0 0.0
    %6729 = vmatpush.msra.mxu0 0.0
    %6730 = vmatpush.msra.mxu0 0.0
    %6731 = vmatpush.msra.mxu0 0.0
    %6732 = vmatpush.msra.mxu0 %v6720
    %6733 = vmatpush.msra.mxu0 %v6719
    %6734 = vmatpush.msra.mxu0 %v6718
    %6735 = vmatpush.msra.mxu0 %v6717
    %6736 = vmatpush.msra.mxu0 %v6716
    %6737 = vmatpush.msra.mxu0 %v6715
    %6738 = vmatpush.msra.mxu0 %v6714
    %6739 = vmatpush.msra.mxu0 %v6713
    %6740 = vmatmul.f32.gmra.mxu0 %v6722
    %v6741 = vpop.f32.mrf.mxu0
    %v6742 = vadd.f32 0.0, %v6741
    %6743 = vdwg.mxu0
    %v6744 = vadd.f32 %v6711, %v6742
    %s6745 = scalar_lea.vmem %s5, 192
    %v6746 = vld [vmem:[%s6745] sm:$0xff]
    %v6747 = vld [vmem:[%s6745 + $0x8] sm:$0xff]
    %v6748 = vld [vmem:[%s6745 + $0x10] sm:$0xff]
    %v6749 = vld [vmem:[%s6745 + $0x18] sm:$0xff]
    %v6750 = vld [vmem:[%s6745 + $0x20] sm:$0xff]
    %v6751 = vld [vmem:[%s6745 + $0x28] sm:$0xff]
    %v6752 = vld [vmem:[%s6745 + $0x30] sm:$0xff]
    %v6753 = vld [vmem:[%s6745 + $0x38] sm:$0xff]
    %v6754 = vrot.slane %v6629, 3
    %v6755 = vsel %vm6654, %v6754, 0
    %6757 = vmatpush.msra.mxu0 0.0
    %6758 = vmatpush.msra.mxu0 0.0
    %6759 = vmatpush.msra.mxu0 0.0
    %6760 = vmatpush.msra.mxu0 0.0
    %6761 = vmatpush.msra.mxu0 0.0
    %6762 = vmatpush.msra.mxu0 0.0
    %6763 = vmatpush.msra.mxu0 0.0
    %6764 = vmatpush.msra.mxu0 0.0
    %6765 = vmatpush.msra.mxu0 %v6753
    %6766 = vmatpush.msra.mxu0 %v6752
    %6767 = vmatpush.msra.mxu0 %v6751
    %6768 = vmatpush.msra.mxu0 %v6750
    %6769 = vmatpush.msra.mxu0 %v6749
    %6770 = vmatpush.msra.mxu0 %v6748
    %6771 = vmatpush.msra.mxu0 %v6747
    %6772 = vmatpush.msra.mxu0 %v6746
    %6773 = vmatmul.f32.gmra.mxu0 %v6755
    %v6774 = vpop.f32.mrf.mxu0
    %v6775 = vadd.f32 0.0, %v6774
    %6776 = vdwg.mxu0
    %v6777 = vadd.f32 %v6744, %v6775
    %s6778 = scalar_lea.vmem %s5, 256
    %v6779 = vld [vmem:[%s6778] sm:$0xff]
    %v6780 = vld [vmem:[%s6778 + $0x8] sm:$0xff]
    %v6781 = vld [vmem:[%s6778 + $0x10] sm:$0xff]
    %v6782 = vld [vmem:[%s6778 + $0x18] sm:$0xff]
    %v6783 = vld [vmem:[%s6778 + $0x20] sm:$0xff]
    %v6784 = vld [vmem:[%s6778 + $0x28] sm:$0xff]
    %v6785 = vld [vmem:[%s6778 + $0x30] sm:$0xff]
    %v6786 = vld [vmem:[%s6778 + $0x38] sm:$0xff]
    %v6787 = vrot.slane %v6629, 4
    %v6788 = vsel %vm6654, %v6787, 0
    %6790 = vmatpush.msra.mxu0 0.0
    %6791 = vmatpush.msra.mxu0 0.0
    %6792 = vmatpush.msra.mxu0 0.0
    %6793 = vmatpush.msra.mxu0 0.0
    %6794 = vmatpush.msra.mxu0 0.0
    %6795 = vmatpush.msra.mxu0 0.0
    %6796 = vmatpush.msra.mxu0 0.0
    %6797 = vmatpush.msra.mxu0 0.0
    %6798 = vmatpush.msra.mxu0 %v6786
    %6799 = vmatpush.msra.mxu0 %v6785
    %6800 = vmatpush.msra.mxu0 %v6784
    %6801 = vmatpush.msra.mxu0 %v6783
    %6802 = vmatpush.msra.mxu0 %v6782
    %6803 = vmatpush.msra.mxu0 %v6781
    %6804 = vmatpush.msra.mxu0 %v6780
    %6805 = vmatpush.msra.mxu0 %v6779
    %6806 = vmatmul.f32.gmra.mxu0 %v6788
    %v6807 = vpop.f32.mrf.mxu0
    %v6808 = vadd.f32 0.0, %v6807
    %6809 = vdwg.mxu0
    %v6810 = vadd.f32 %v6777, %v6808
    %s6811 = scalar_lea.vmem %s5, 320
    %v6812 = vld [vmem:[%s6811] sm:$0xff]
    %v6813 = vld [vmem:[%s6811 + $0x8] sm:$0xff]
    %v6814 = vld [vmem:[%s6811 + $0x10] sm:$0xff]
    %v6815 = vld [vmem:[%s6811 + $0x18] sm:$0xff]
    %v6816 = vld [vmem:[%s6811 + $0x20] sm:$0xff]
    %v6817 = vld [vmem:[%s6811 + $0x28] sm:$0xff]
    %v6818 = vld [vmem:[%s6811 + $0x30] sm:$0xff]
    %v6819 = vld [vmem:[%s6811 + $0x38] sm:$0xff]
    %v6820 = vrot.slane %v6629, 5
    %v6821 = vsel %vm6654, %v6820, 0
    %6823 = vmatpush.msra.mxu0 0.0
    %6824 = vmatpush.msra.mxu0 0.0
    %6825 = vmatpush.msra.mxu0 0.0
    %6826 = vmatpush.msra.mxu0 0.0
    %6827 = vmatpush.msra.mxu0 0.0
    %6828 = vmatpush.msra.mxu0 0.0
    %6829 = vmatpush.msra.mxu0 0.0
    %6830 = vmatpush.msra.mxu0 0.0
    %6831 = vmatpush.msra.mxu0 %v6819
    %6832 = vmatpush.msra.mxu0 %v6818
    %6833 = vmatpush.msra.mxu0 %v6817
    %6834 = vmatpush.msra.mxu0 %v6816
    %6835 = vmatpush.msra.mxu0 %v6815
    %6836 = vmatpush.msra.mxu0 %v6814
    %6837 = vmatpush.msra.mxu0 %v6813
    %6838 = vmatpush.msra.mxu0 %v6812
    %6839 = vmatmul.f32.gmra.mxu0 %v6821
    %v6840 = vpop.f32.mrf.mxu0
    %v6841 = vadd.f32 0.0, %v6840
    %6842 = vdwg.mxu0
    %v6843 = vadd.f32 %v6810, %v6841
    %s6844 = scalar_lea.vmem %s5, 384
    %v6845 = vld [vmem:[%s6844] sm:$0xff]
    %v6846 = vld [vmem:[%s6844 + $0x8] sm:$0xff]
    %v6847 = vld [vmem:[%s6844 + $0x10] sm:$0xff]
    %v6848 = vld [vmem:[%s6844 + $0x18] sm:$0xff]
    %v6849 = vld [vmem:[%s6844 + $0x20] sm:$0xff]
    %v6850 = vld [vmem:[%s6844 + $0x28] sm:$0xff]
    %v6851 = vld [vmem:[%s6844 + $0x30] sm:$0xff]
    %v6852 = vld [vmem:[%s6844 + $0x38] sm:$0xff]
    %v6853 = vrot.slane %v6629, 6
    %v6854 = vsel %vm6654, %v6853, 0
    %6856 = vmatpush.msra.mxu0 0.0
    %6857 = vmatpush.msra.mxu0 0.0
    %6858 = vmatpush.msra.mxu0 0.0
    %6859 = vmatpush.msra.mxu0 0.0
    %6860 = vmatpush.msra.mxu0 0.0
    %6861 = vmatpush.msra.mxu0 0.0
    %6862 = vmatpush.msra.mxu0 0.0
    %6863 = vmatpush.msra.mxu0 0.0
    %6864 = vmatpush.msra.mxu0 %v6852
    %6865 = vmatpush.msra.mxu0 %v6851
    %6866 = vmatpush.msra.mxu0 %v6850
    %6867 = vmatpush.msra.mxu0 %v6849
    %6868 = vmatpush.msra.mxu0 %v6848
    %6869 = vmatpush.msra.mxu0 %v6847
    %6870 = vmatpush.msra.mxu0 %v6846
    %6871 = vmatpush.msra.mxu0 %v6845
    %6872 = vmatmul.f32.gmra.mxu0 %v6854
    %v6873 = vpop.f32.mrf.mxu0
    %v6874 = vadd.f32 0.0, %v6873
    %6875 = vdwg.mxu0
    %v6876 = vadd.f32 %v6843, %v6874
    %s6877 = scalar_lea.vmem %s5, 448
    %v6878 = vld [vmem:[%s6877] sm:$0xff]
    %v6879 = vld [vmem:[%s6877 + $0x8] sm:$0xff]
    %v6880 = vld [vmem:[%s6877 + $0x10] sm:$0xff]
    %v6881 = vld [vmem:[%s6877 + $0x18] sm:$0xff]
    %v6882 = vld [vmem:[%s6877 + $0x20] sm:$0xff]
    %v6883 = vld [vmem:[%s6877 + $0x28] sm:$0xff]
    %v6884 = vld [vmem:[%s6877 + $0x30] sm:$0xff]
    %v6885 = vld [vmem:[%s6877 + $0x38] sm:$0xff]
    %v6886 = vrot.slane %v6629, 7
    %v6887 = vsel %vm6654, %v6886, 0
    %6889 = vmatpush.msra.mxu0 0.0
    %6890 = vmatpush.msra.mxu0 0.0
    %6891 = vmatpush.msra.mxu0 0.0
    %6892 = vmatpush.msra.mxu0 0.0
    %6893 = vmatpush.msra.mxu0 0.0
    %6894 = vmatpush.msra.mxu0 0.0
    %6895 = vmatpush.msra.mxu0 0.0
    %6896 = vmatpush.msra.mxu0 0.0
    %6897 = vmatpush.msra.mxu0 %v6885
    %6898 = vmatpush.msra.mxu0 %v6884
    %6899 = vmatpush.msra.mxu0 %v6883
    %6900 = vmatpush.msra.mxu0 %v6882
    %6901 = vmatpush.msra.mxu0 %v6881
    %6902 = vmatpush.msra.mxu0 %v6880
    %6903 = vmatpush.msra.mxu0 %v6879
    %6904 = vmatpush.msra.mxu0 %v6878
    %6905 = vmatmul.f32.gmra.mxu0 %v6887
    %v6906 = vpop.f32.mrf.mxu0
    %v6907 = vadd.f32 0.0, %v6906
    %6908 = vdwg.mxu0
    %v6909 = vadd.f32 %v6876, %v6907
    %v6910 = vtanh.pop %v6909
    %vm6911 = vcmask 253952
    %6912 = vst.msk [vmem:[#allocation3] sm:$0x1] %vm6911, %v6910
    %v6913 = vld [vmem:[%s6] sm:$0x1]
    %v6914 = vld [vmem:[%s5] sm:$0xff]
    %v6915 = vld [vmem:[%s5 + $0x8] sm:$0xff]
    %v6916 = vld [vmem:[%s5 + $0x10] sm:$0xff]
    %v6917 = vld [vmem:[%s5 + $0x18] sm:$0xff]
    %v6918 = vld [vmem:[%s5 + $0x20] sm:$0xff]
    %v6919 = vld [vmem:[%s5 + $0x28] sm:$0xff]
    %v6920 = vld [vmem:[%s5 + $0x30] sm:$0xff]
    %v6921 = vld [vmem:[%s5 + $0x38] sm:$0xff]
    %6922 = vrot.lane.b32.xlu0 %v6629, 64
    %v6923 = vpop.permute.xlu0 %6922
    %v6924 = vsel %vm6654, %v6923, 0
    %6926 = vmatpush.msra.mxu0 0.0
    %6927 = vmatpush.msra.mxu0 0.0
    %6928 = vmatpush.msra.mxu0 0.0
    %6929 = vmatpush.msra.mxu0 0.0
    %6930 = vmatpush.msra.mxu0 0.0
    %6931 = vmatpush.msra.mxu0 0.0
    %6932 = vmatpush.msra.mxu0 0.0
    %6933 = vmatpush.msra.mxu0 0.0
    %6934 = vmatpush.msra.mxu0 %v6921
    %6935 = vmatpush.msra.mxu0 %v6920
    %6936 = vmatpush.msra.mxu0 %v6919
    %6937 = vmatpush.msra.mxu0 %v6918
    %6938 = vmatpush.msra.mxu0 %v6917
    %6939 = vmatpush.msra.mxu0 %v6916
    %6940 = vmatpush.msra.mxu0 %v6915
    %6941 = vmatpush.msra.mxu0 %v6914
    %6942 = vmatmul.f32.gmra.mxu0 %v6924
    %v6943 = vpop.f32.mrf.mxu0
    %v6944 = vadd.f32 0.0, %v6943
    %6945 = vdwg.mxu0
    %v6946 = vadd.f32 %v6913, %v6944
    %v6947 = vld [vmem:[%s6679] sm:$0xff]
    %v6948 = vld [vmem:[%s6679 + $0x8] sm:$0xff]
    %v6949 = vld [vmem:[%s6679 + $0x10] sm:$0xff]
    %v6950 = vld [vmem:[%s6679 + $0x18] sm:$0xff]
    %v6951 = vld [vmem:[%s6679 + $0x20] sm:$0xff]
    %v6952 = vld [vmem:[%s6679 + $0x28] sm:$0xff]
    %v6953 = vld [vmem:[%s6679 + $0x30] sm:$0xff]
    %v6954 = vld [vmem:[%s6679 + $0x38] sm:$0xff]
    %6955 = vrot.lane.b32.xlu0 %v6688, 64
    %v6956 = vpop.permute.xlu0 %6955
    %v6957 = vsel %vm6654, %v6956, 0
    %6959 = vmatpush.msra.mxu0 0.0
    %6960 = vmatpush.msra.mxu0 0.0
    %6961 = vmatpush.msra.mxu0 0.0
    %6962 = vmatpush.msra.mxu0 0.0
    %6963 = vmatpush.msra.mxu0 0.0
    %6964 = vmatpush.msra.mxu0 0.0
    %6965 = vmatpush.msra.mxu0 0.0
    %6966 = vmatpush.msra.mxu0 0.0
    %6967 = vmatpush.msra.mxu0 %v6954
    %6968 = vmatpush.msra.mxu0 %v6953
    %6969 = vmatpush.msra.mxu0 %v6952
    %6970 = vmatpush.msra.mxu0 %v6951
    %6971 = vmatpush.msra.mxu0 %v6950
    %6972 = vmatpush.msra.mxu0 %v6949
    %6973 = vmatpush.msra.mxu0 %v6948
    %6974 = vmatpush.msra.mxu0 %v6947
    %6975 = vmatmul.f32.gmra.mxu0 %v6957
    %v6976 = vpop.f32.mrf.mxu0
    %v6977 = vadd.f32 0.0, %v6976
    %6978 = vdwg.mxu0
    %v6979 = vadd.f32 %v6946, %v6977
    %v6980 = vld [vmem:[%s6712] sm:$0xff]
    %v6981 = vld [vmem:[%s6712 + $0x8] sm:$0xff]
    %v6982 = vld [vmem:[%s6712 + $0x10] sm:$0xff]
    %v6983 = vld [vmem:[%s6712 + $0x18] sm:$0xff]
    %v6984 = vld [vmem:[%s6712 + $0x20] sm:$0xff]
    %v6985 = vld [vmem:[%s6712 + $0x28] sm:$0xff]
    %v6986 = vld [vmem:[%s6712 + $0x30] sm:$0xff]
    %v6987 = vld [vmem:[%s6712 + $0x38] sm:$0xff]
    %6988 = vrot.lane.b32.xlu0 %v6721, 64
    %v6989 = vpop.permute.xlu0 %6988
    %v6990 = vsel %vm6654, %v6989, 0
    %6992 = vmatpush.msra.mxu0 0.0
    %6993 = vmatpush.msra.mxu0 0.0
    %6994 = vmatpush.msra.mxu0 0.0
    %6995 = vmatpush.msra.mxu0 0.0
    %6996 = vmatpush.msra.mxu0 0.0
    %6997 = vmatpush.msra.mxu0 0.0
    %6998 = vmatpush.msra.mxu0 0.0
    %6999 = vmatpush.msra.mxu0 0.0
    %7000 = vmatpush.msra.mxu0 %v6987
    %7001 = vmatpush.msra.mxu0 %v6986
    %7002 = vmatpush.msra.mxu0 %v6985
    %7003 = vmatpush.msra.mxu0 %v6984
    %7004 = vmatpush.msra.mxu0 %v6983
    %7005 = vmatpush.msra.mxu0 %v6982
    %7006 = vmatpush.msra.mxu0 %v6981
    %7007 = vmatpush.msra.mxu0 %v6980
    %7008 = vmatmul.f32.gmra.mxu0 %v6990
    %v7009 = vpop.f32.mrf.mxu0
    %v7010 = vadd.f32 0.0, %v7009
    %7011 = vdwg.mxu0
    %v7012 = vadd.f32 %v6979, %v7010
    %v7013 = vld [vmem:[%s6745] sm:$0xff]
    %v7014 = vld [vmem:[%s6745 + $0x8] sm:$0xff]
    %v7015 = vld [vmem:[%s6745 + $0x10] sm:$0xff]
    %v7016 = vld [vmem:[%s6745 + $0x18] sm:$0xff]
    %v7017 = vld [vmem:[%s6745 + $0x20] sm:$0xff]
    %v7018 = vld [vmem:[%s6745 + $0x28] sm:$0xff]
    %v7019 = vld [vmem:[%s6745 + $0x30] sm:$0xff]
    %v7020 = vld [vmem:[%s6745 + $0x38] sm:$0xff]
    %7021 = vrot.lane.b32.xlu0 %v6754, 64
    %v7022 = vpop.permute.xlu0 %7021
    %v7023 = vsel %vm6654, %v7022, 0
    %7025 = vmatpush.msra.mxu0 0.0
    %7026 = vmatpush.msra.mxu0 0.0
    %7027 = vmatpush.msra.mxu0 0.0
    %7028 = vmatpush.msra.mxu0 0.0
    %7029 = vmatpush.msra.mxu0 0.0
    %7030 = vmatpush.msra.mxu0 0.0
    %7031 = vmatpush.msra.mxu0 0.0
    %7032 = vmatpush.msra.mxu0 0.0
    %7033 = vmatpush.msra.mxu0 %v7020
    %7034 = vmatpush.msra.mxu0 %v7019
    %7035 = vmatpush.msra.mxu0 %v7018
    %7036 = vmatpush.msra.mxu0 %v7017
    %7037 = vmatpush.msra.mxu0 %v7016
    %7038 = vmatpush.msra.mxu0 %v7015
    %7039 = vmatpush.msra.mxu0 %v7014
    %7040 = vmatpush.msra.mxu0 %v7013
    %7041 = vmatmul.f32.gmra.mxu0 %v7023
    %v7042 = vpop.f32.mrf.mxu0
    %v7043 = vadd.f32 0.0, %v7042
    %7044 = vdwg.mxu0
    %v7045 = vadd.f32 %v7012, %v7043
    %v7046 = vld [vmem:[%s6778] sm:$0xff]
    %v7047 = vld [vmem:[%s6778 + $0x8] sm:$0xff]
    %v7048 = vld [vmem:[%s6778 + $0x10] sm:$0xff]
    %v7049 = vld [vmem:[%s6778 + $0x18] sm:$0xff]
    %v7050 = vld [vmem:[%s6778 + $0x20] sm:$0xff]
    %v7051 = vld [vmem:[%s6778 + $0x28] sm:$0xff]
    %v7052 = vld [vmem:[%s6778 + $0x30] sm:$0xff]
    %v7053 = vld [vmem:[%s6778 + $0x38] sm:$0xff]
    %7054 = vrot.lane.b32.xlu0 %v6787, 64
    %v7055 = vpop.permute.xlu0 %7054
    %v7056 = vsel %vm6654, %v7055, 0
    %7058 = vmatpush.msra.mxu0 0.0
    %7059 = vmatpush.msra.mxu0 0.0
    %7060 = vmatpush.msra.mxu0 0.0
    %7061 = vmatpush.msra.mxu0 0.0
    %7062 = vmatpush.msra.mxu0 0.0
    %7063 = vmatpush.msra.mxu0 0.0
    %7064 = vmatpush.msra.mxu0 0.0
    %7065 = vmatpush.msra.mxu0 0.0
    %7066 = vmatpush.msra.mxu0 %v7053
    %7067 = vmatpush.msra.mxu0 %v7052
    %7068 = vmatpush.msra.mxu0 %v7051
    %7069 = vmatpush.msra.mxu0 %v7050
    %7070 = vmatpush.msra.mxu0 %v7049
    %7071 = vmatpush.msra.mxu0 %v7048
    %7072 = vmatpush.msra.mxu0 %v7047
    %7073 = vmatpush.msra.mxu0 %v7046
    %7074 = vmatmul.f32.gmra.mxu0 %v7056
    %v7075 = vpop.f32.mrf.mxu0
    %v7076 = vadd.f32 0.0, %v7075
    %7077 = vdwg.mxu0
    %v7078 = vadd.f32 %v7045, %v7076
    %v7079 = vld [vmem:[%s6811] sm:$0xff]
    %v7080 = vld [vmem:[%s6811 + $0x8] sm:$0xff]
    %v7081 = vld [vmem:[%s6811 + $0x10] sm:$0xff]
    %v7082 = vld [vmem:[%s6811 + $0x18] sm:$0xff]
    %v7083 = vld [vmem:[%s6811 + $0x20] sm:$0xff]
    %v7084 = vld [vmem:[%s6811 + $0x28] sm:$0xff]
    %v7085 = vld [vmem:[%s6811 + $0x30] sm:$0xff]
    %v7086 = vld [vmem:[%s6811 + $0x38] sm:$0xff]
    %7087 = vrot.lane.b32.xlu0 %v6820, 64
    %v7088 = vpop.permute.xlu0 %7087
    %v7089 = vsel %vm6654, %v7088, 0
    %7091 = vmatpush.msra.mxu0 0.0
    %7092 = vmatpush.msra.mxu0 0.0
    %7093 = vmatpush.msra.mxu0 0.0
    %7094 = vmatpush.msra.mxu0 0.0
    %7095 = vmatpush.msra.mxu0 0.0
    %7096 = vmatpush.msra.mxu0 0.0
    %7097 = vmatpush.msra.mxu0 0.0
    %7098 = vmatpush.msra.mxu0 0.0
    %7099 = vmatpush.msra.mxu0 %v7086
    %7100 = vmatpush.msra.mxu0 %v7085
    %7101 = vmatpush.msra.mxu0 %v7084
    %7102 = vmatpush.msra.mxu0 %v7083
    %7103 = vmatpush.msra.mxu0 %v7082
    %7104 = vmatpush.msra.mxu0 %v7081
    %7105 = vmatpush.msra.mxu0 %v7080
    %7106 = vmatpush.msra.mxu0 %v7079
    %7107 = vmatmul.f32.gmra.mxu0 %v7089
    %v7108 = vpop.f32.mrf.mxu0
    %v7109 = vadd.f32 0.0, %v7108
    %7110 = vdwg.mxu0
    %v7111 = vadd.f32 %v7078, %v7109
    %v7112 = vld [vmem:[%s6844] sm:$0xff]
    %v7113 = vld [vmem:[%s6844 + $0x8] sm:$0xff]
    %v7114 = vld [vmem:[%s6844 + $0x10] sm:$0xff]
    %v7115 = vld [vmem:[%s6844 + $0x18] sm:$0xff]
    %v7116 = vld [vmem:[%s6844 + $0x20] sm:$0xff]
    %v7117 = vld [vmem:[%s6844 + $0x28] sm:$0xff]
    %v7118 = vld [vmem:[%s6844 + $0x30] sm:$0xff]
    %v7119 = vld [vmem:[%s6844 + $0x38] sm:$0xff]
    %7120 = vrot.lane.b32.xlu0 %v6853, 64
    %v7121 = vpop.permute.xlu0 %7120
    %v7122 = vsel %vm6654, %v7121, 0
    %7124 = vmatpush.msra.mxu0 0.0
    %7125 = vmatpush.msra.mxu0 0.0
    %7126 = vmatpush.msra.mxu0 0.0
    %7127 = vmatpush.msra.mxu0 0.0
    %7128 = vmatpush.msra.mxu0 0.0
    %7129 = vmatpush.msra.mxu0 0.0
    %7130 = vmatpush.msra.mxu0 0.0
    %7131 = vmatpush.msra.mxu0 0.0
    %7132 = vmatpush.msra.mxu0 %v7119
    %7133 = vmatpush.msra.mxu0 %v7118
    %7134 = vmatpush.msra.mxu0 %v7117
    %7135 = vmatpush.msra.mxu0 %v7116
    %7136 = vmatpush.msra.mxu0 %v7115
    %7137 = vmatpush.msra.mxu0 %v7114
    %7138 = vmatpush.msra.mxu0 %v7113
    %7139 = vmatpush.msra.mxu0 %v7112
    %7140 = vmatmul.f32.gmra.mxu0 %v7122
    %v7141 = vpop.f32.mrf.mxu0
    %v7142 = vadd.f32 0.0, %v7141
    %7143 = vdwg.mxu0
    %v7144 = vadd.f32 %v7111, %v7142
    %v7145 = vld [vmem:[%s6877] sm:$0xff]
    %v7146 = vld [vmem:[%s6877 + $0x8] sm:$0xff]
    %v7147 = vld [vmem:[%s6877 + $0x10] sm:$0xff]
    %v7148 = vld [vmem:[%s6877 + $0x18] sm:$0xff]
    %v7149 = vld [vmem:[%s6877 + $0x20] sm:$0xff]
    %v7150 = vld [vmem:[%s6877 + $0x28] sm:$0xff]
    %v7151 = vld [vmem:[%s6877 + $0x30] sm:$0xff]
    %v7152 = vld [vmem:[%s6877 + $0x38] sm:$0xff]
    %7153 = vrot.lane.b32.xlu0 %v6886, 64
    %v7154 = vpop.permute.xlu0 %7153
    %v7155 = vsel %vm6654, %v7154, 0
    %7157 = vmatpush.msra.mxu0 0.0
    %7158 = vmatpush.msra.mxu0 0.0
    %7159 = vmatpush.msra.mxu0 0.0
    %7160 = vmatpush.msra.mxu0 0.0
    %7161 = vmatpush.msra.mxu0 0.0
    %7162 = vmatpush.msra.mxu0 0.0
    %7163 = vmatpush.msra.mxu0 0.0
    %7164 = vmatpush.msra.mxu0 0.0
    %7165 = vmatpush.msra.mxu0 %v7152
    %7166 = vmatpush.msra.mxu0 %v7151
    %7167 = vmatpush.msra.mxu0 %v7150
    %7168 = vmatpush.msra.mxu0 %v7149
    %7169 = vmatpush.msra.mxu0 %v7148
    %7170 = vmatpush.msra.mxu0 %v7147
    %7171 = vmatpush.msra.mxu0 %v7146
    %7172 = vmatpush.msra.mxu0 %v7145
    %7173 = vmatmul.f32.gmra.mxu0 %v7155
    %v7174 = vpop.f32.mrf.mxu0
    %v7175 = vadd.f32 0.0, %v7174
    %7176 = vdwg.mxu0
    %v7177 = vadd.f32 %v7144, %v7175
    %v7178 = vtanh.pop %v7177
    %7179 = vst.msk [vmem:[#allocation3 + $0x1] sm:$0x1] %vm6911, %v7178
    // Predicated region
    $region30: #{_forward_impl.1} parent=1 // pred_check
      _
    $region31: #{_forward_impl.1} parent=1 // pred_check_branch
      %7181 = sbr.rel (0) target = $region33
    $region32: #{_forward_impl.1} parent=1 // pred_region
      %7183 = vsyncadd [#allocation4], 0
      %s7185 = sshll.u32 [#allocation3], 4
      %s7186 = int_to_ptr.vmem [resolvable:$true] %s7185
      %s7187 = sshll.u32 %s7, 4
      %s7188 = int_to_ptr.hbm [resolvable:$true] %s7187
      %7190 = dma.vmem_to_hbm [thread:$0]  %s7186, 32, %s7188, [#allocation4]
    $region33: #{_forward_impl.1} parent=1 // pred_fallthru
      _
    // Predicated region
    $region34: #{_forward_impl.1} parent=1 // pred_check
      _
    $region35: #{_forward_impl.1} parent=1 // pred_check_branch
      %7192 = sbr.rel (0) target = $region37
    $region36: #{_forward_impl.1} parent=1 // pred_region
      %7194 = dma.done [#allocation4], 32
    $region37: #{_forward_impl.1} parent=1 // pred_fallthru
      _
    %7195 = vsyncpa [#allocation4], 1

</llo_original>
